<compile_context>
chip_gen: v5e
topology: v5e:2x2
jax: 0.10.0
libtpu: 0.0.40
codegen_flags: <defaults>
</compile_context>

<pallas_src>
import functools

import jax
import jax.numpy as jnp
from jax.experimental import pallas as pl
from jax.experimental.pallas import tpu as pltpu


LANES = 128  # pad all channel dims to the TPU lane width


# ----------------------------------------------------------------------------
# In-kernel conv helpers (operate on VMEM-resident values, channels = lanes).
# ----------------------------------------------------------------------------
def _conv3x3_s1(xp, w_ref, bias, h, w, cpad):
    """3x3 / stride-1 conv of the pre-padded (h+2, w+2, cpad) image `xp`
    (|.| already applied) + bias + ReLU.  Returns (h*w, cpad) f32."""
    acc = jnp.zeros((h * w, cpad), jnp.float32)
    for di in range(3):
        for dj in range(3):
            patch = xp[di:di + h, dj:dj + w, :]            # (h, w, cpad)
            if w % 8 == 0:
                a = patch.reshape(h * w, cpad)
            else:
                a = jnp.concatenate([patch[i] for i in range(h)], axis=0)
            acc = acc + jnp.dot(a.astype(jnp.bfloat16), w_ref[di * 3 + dj],
                                preferred_element_type=jnp.float32)
    return jnp.maximum(acc + bias, 0.0)


def _conv5x5_s2(y_flat, h, w, w_ref, bias, cpad, relu):
    """5x5 / stride-2 / pad-2 conv of an (h, w, cpad) image stored row-major as
    y_flat (h*w, cpad).  Returns (h//2 * w//2, cpad) f32 (+bias, optional ReLU)."""
    ho, wo = h // 2, w // 2

    # Parity decomposition of the zero-padded (h+4, w+4) image:
    #   planes[(pr, pc)][u, v, :] = pad2(y)[2u + pr, 2v + pc, :],
    # shape (ho+2, wo+2, cpad).  Built only from static slices + concats.
    y_img = y_flat.reshape(ho, 2, w, cpad)     # [i, pr, c, :] == y[2i + pr, c, :]
    planes = {}
    for pr in (0, 1):
        rows = y_img[:, pr]                    # (ho, w, cpad)
        for pc in (0, 1):
            cols = [rows[:, 2 * j + pc:2 * j + pc + 1, :] for j in range(wo)]
            core = jnp.concatenate(cols, axis=1)               # (ho, wo, cpad)
            zc = jnp.zeros((ho, 1, cpad), core.dtype)
            plane = jnp.concatenate([zc, core, zc], axis=1)    # (ho, wo+2, cpad)
            zr = jnp.zeros((1, wo + 2, cpad), core.dtype)
            planes[(pr, pc)] = jnp.concatenate([zr, plane, zr], axis=0)

    acc = jnp.zeros((ho * wo, cpad), jnp.float32)
    for di in range(5):
        ai, pr = di // 2, di % 2
        for dj in range(5):
            aj, pc = dj // 2, dj % 2
            # out[oh, ow] += pad2(y)[2oh+di, 2ow+dj] @ W[di, dj]
            #             =  planes[(pr, pc)][oh+ai, ow+aj] @ W[di, dj]
            patch = planes[(pr, pc)][ai:ai + ho, aj:aj + wo, :]   # (ho, wo, cpad)
            if wo % 8 == 0:
                a = patch.reshape(ho * wo, cpad)
            else:  # small output (e.g. 4x4): assemble rows with concat instead
                a = jnp.concatenate([patch[i] for i in range(ho)], axis=0)
            acc = acc + jnp.dot(a.astype(jnp.bfloat16), w_ref[di * 5 + dj],
                                preferred_element_type=jnp.float32)
    out = acc + bias
    if relu:
        out = jnp.maximum(out, 0.0)
    return out


# ----------------------------------------------------------------------------
# Fused encoder kernel (one grid step = one batch element, fully VMEM-resident).
# ----------------------------------------------------------------------------
def _encoder_kernel(x_ref, w1_ref, w2_ref, w3_ref, b_ref, o_ref, *, h, w, cpad):
    biases = b_ref[...]                                # (8, cpad) f32
    x = jnp.abs(x_ref[0])                              # (h+2, w+2, cpad) f32
    y1 = _conv3x3_s1(x, w1_ref, biases[0:1, :], h, w, cpad)          # (h*w, cpad)
    y2 = _conv5x5_s2(y1, h, w, w2_ref, biases[1:2, :], cpad, True)   # (h/2*w/2, cpad)
    y3 = _conv5x5_s2(y2, h // 2, w // 2, w3_ref, biases[2:3, :], cpad, False)
    o_ref[0] = y3                                      # (h/4*w/4, cpad), lane-dense


# ----------------------------------------------------------------------------
# Wrapper: layout plumbing (NCHW <-> NHWC, channel padding, weight packing).
# ----------------------------------------------------------------------------
def _pack_weight(w_oihw, cpad):
    cout, cin, kh, kw = w_oihw.shape
    # (Cout, Cin, KH, KW) -> (KH*KW, Cin, Cout), zero-padded to (KH*KW, cpad, cpad)
    wt = jnp.transpose(w_oihw, (2, 3, 1, 0)).reshape(kh * kw, cin, cout)
    wp = jnp.zeros((kh * kw, cpad, cpad), jnp.float32).at[:, :cin, :cout].set(wt)
    return wp.astype(jnp.bfloat16)


def _pack_biases(b1, b2, b3, cpad):
    bp = jnp.zeros((8, cpad), jnp.float32)
    bp = bp.at[0, :b1.shape[0]].set(b1)
    bp = bp.at[1, :b2.shape[0]].set(b2)
    bp = bp.at[2, :b3.shape[0]].set(b3)
    return bp


def prior_encoder_forward(x_nchw, params):
    b, cin, h, w = x_nchw.shape
    assert h % 4 == 0 and w % 4 == 0, "spatial dims must be multiples of 4"
    cpad = LANES
    cout = params["w3"].shape[0]

    # NCHW -> NHWC, conv1 spatial pad (p=1), channel pad to full lane width.
    x = jnp.transpose(x_nchw, (0, 2, 3, 1)).astype(jnp.float32)
    x = jnp.pad(x, ((0, 0), (1, 1), (1, 1), (0, cpad - cin)))

    w1 = _pack_weight(params["w1"], cpad)
    w2 = _pack_weight(params["w2"], cpad)
    w3 = _pack_weight(params["w3"], cpad)
    bias = _pack_biases(params["b1"], params["b2"], params["b3"], cpad)

    ho, wo = h // 4, w // 4
    flops = 2 * b * (h * w * 9 + (h // 2) * (w // 2) * 25 + ho * wo * 25) * cpad * cpad
    bytes_accessed = (x.size * 4 + w1.size * 2 + w2.size * 2 + w3.size * 2
                      + bias.size * 4 + b * ho * wo * cpad * 4)

    out_flat = pl.pallas_call(
        functools.partial(_encoder_kernel, h=h, w=w, cpad=cpad),
        out_shape=jax.ShapeDtypeStruct((b, ho * wo, cpad), jnp.float32),
        grid_spec=pltpu.PrefetchScalarGridSpec(
            num_scalar_prefetch=0,
            grid=(b,),
            in_specs=[
                pl.BlockSpec((1, h + 2, w + 2, cpad), lambda i: (i, 0, 0, 0)),
                pl.BlockSpec((9, cpad, cpad), lambda i: (0, 0, 0)),
                pl.BlockSpec((25, cpad, cpad), lambda i: (0, 0, 0)),
                pl.BlockSpec((25, cpad, cpad), lambda i: (0, 0, 0)),
                pl.BlockSpec((8, cpad), lambda i: (0, 0)),
            ],
            out_specs=pl.BlockSpec((1, ho * wo, cpad), lambda i: (i, 0, 0)),
        ),
        compiler_params=pltpu.CompilerParams(
            dimension_semantics=("parallel",),
        ),
        cost_estimate=pl.CostEstimate(
            flops=flops, transcendentals=0, bytes_accessed=bytes_accessed),
    )(x, w1, w2, w3, bias)

    out = out_flat.reshape(b, ho, wo, cpad)[..., :cout]   # drop padded channels
    return jnp.transpose(out, (0, 3, 1, 2))               # back to NCHW


def init_params(key, out_channel_N=8, out_channel_M=12):
    """Deterministic synthetic init matching the module's conv shapes:
       conv1: Conv2d(M, N, 3, s1, p1); conv2/3: Conv2d(N, N, 5, s2, p2)."""
    k1, k2, k3 = jax.random.split(key, 3)
    n, m = out_channel_N, out_channel_M
    scale = 0.05
    return {
        "w1": scale * jax.random.normal(k1, (n, m, 3, 3), jnp.float32),
        "b1": jnp.linspace(-0.1, 0.1, n, dtype=jnp.float32),
        "w2": scale * jax.random.normal(k2, (n, n, 5, 5), jnp.float32),
        "b2": jnp.linspace(-0.05, 0.05, n, dtype=jnp.float32),
        "w3": scale * jax.random.normal(k3, (n, n, 5, 5), jnp.float32),
        "b3": jnp.linspace(0.0, 0.1, n, dtype=jnp.float32),
    }


if __name__ == "__main__":
    key = jax.random.PRNGKey(0)
    k_x, k_p = jax.random.split(key)

    B, M_ch, N_ch, H, W = 2, 12, 8, 16, 16
    x = jax.random.normal(k_x, (B, M_ch, H, W), jnp.float32)   # NCHW, like PyTorch
    params = init_params(k_p, out_channel_N=N_ch, out_channel_M=M_ch)

    out = jax.jit(prior_encoder_forward)(x, params)
    out = jax.block_until_ready(out)

    assert out.shape == (B, N_ch, H // 4, W // 4), out.shape
    assert bool(jnp.all(jnp.isfinite(out)))

    # Cross-check the fused Pallas path against XLA's f32 conv on same params.
    def ref_forward(x_nchw, p):
        y = jnp.abs(x_nchw)

        def conv(y, wgt, bia, s, pad):
            o = jax.lax.conv_general_dilated(
                y, wgt, window_strides=(s, s), padding=[(pad, pad), (pad, pad)],
                dimension_numbers=("NCHW", "OIHW", "NCHW"))
            return o + bia[None, :, None, None]

        y = jax.nn.relu(conv(y, p["w1"], p["b1"], 1, 1))
        y = jax.nn.relu(conv(y, p["w2"], p["b2"], 2, 2))
        return conv(y, p["w3"], p["b3"], 2, 2)

    ref = ref_forward(x, params)
    # bf16 MXU operands with f32 accumulation: allow a small absolute slack.
    max_err = float(jnp.max(jnp.abs(out - ref)))
    assert max_err < 3e-2, max_err

    print("KERNEL_OK")
</pallas_src>

<mosaic_0001>
module attributes {stable_mosaic.version = 11 : i64} {
  func.func @_encoder_kernel(%arg0: i32, %arg1: memref<1x18x18x128xf32, #tpu.memory_space<vmem>>, %arg2: memref<9x128x128xbf16, #tpu.memory_space<vmem>>, %arg3: memref<25x128x128xbf16, #tpu.memory_space<vmem>>, %arg4: memref<25x128x128xbf16, #tpu.memory_space<vmem>>, %arg5: memref<8x128xf32, #tpu.memory_space<vmem>>, %arg6: memref<1x16x128xf32, #tpu.memory_space<vmem>>) attributes {dimension_semantics = [#tpu.dimension_semantics<parallel>], iteration_bounds = array<i64: 2>, scalar_prefetch = 0 : i64, scratch_operands = 0 : i64, tpu.core_type = #tpu.core_type<tc>, window_params = [{transform_indices = @transform_0, window_bounds = array<i64: 1, 18, 18, 128>}, {pipeline_mode = #tpu.pipeline_mode<synchronous>, transform_indices = @transform_1, window_bounds = array<i64: 9, 128, 128>}, {pipeline_mode = #tpu.pipeline_mode<synchronous>, transform_indices = @transform_2, window_bounds = array<i64: 25, 128, 128>}, {pipeline_mode = #tpu.pipeline_mode<synchronous>, transform_indices = @transform_3, window_bounds = array<i64: 25, 128, 128>}, {pipeline_mode = #tpu.pipeline_mode<synchronous>, transform_indices = @transform_4, window_bounds = array<i64: 8, 128>}, {transform_indices = @transform_5, window_bounds = array<i64: 1, 16, 128>}]} {
    %c0 = arith.constant 0 : index
    %c0_0 = arith.constant 0 : index
    %0 = vector.load %arg5[%c0, %c0_0] : memref<8x128xf32, #tpu.memory_space<vmem>>, vector<8x128xf32>
    %c0_1 = arith.constant 0 : index
    %c0_2 = arith.constant 0 : index
    %c0_3 = arith.constant 0 : index
    %c0_4 = arith.constant 0 : index
    %1 = vector.load %arg1[%c0_1, %c0_2, %c0_3, %c0_4] : memref<1x18x18x128xf32, #tpu.memory_space<vmem>>, vector<1x18x18x128xf32>
    %2 = vector.shape_cast %1 : vector<1x18x18x128xf32> to vector<18x18x128xf32>
    %3 = math.absf %2 : vector<18x18x128xf32>
    %4 = vector.extract_strided_slice %0 {offsets = [0, 0], sizes = [1, 128], strides = [1, 1]} : vector<8x128xf32> to vector<1x128xf32>
    %cst = arith.constant 0.000000e+00 : f32
    %5 = vector.broadcast %cst : f32 to vector<256x128xf32>
    %6 = vector.extract_strided_slice %3 {offsets = [0, 0, 0], sizes = [16, 16, 128], strides = [1, 1, 1]} : vector<18x18x128xf32> to vector<16x16x128xf32>
    %7 = vector.shape_cast %6 : vector<16x16x128xf32> to vector<256x128xf32>
    %8 = arith.truncf %7 : vector<256x128xf32> to vector<256x128xbf16>
    %c0_5 = arith.constant 0 : index
    %c0_6 = arith.constant 0 : index
    %c0_7 = arith.constant 0 : index
    %9 = vector.load %arg2[%c0_5, %c0_6, %c0_7] : memref<9x128x128xbf16, #tpu.memory_space<vmem>>, vector<1x128x128xbf16>
    %10 = vector.shape_cast %9 : vector<1x128x128xbf16> to vector<128x128xbf16>
    %cst_8 = arith.constant dense<0.000000e+00> : vector<256x128xf32>
    %11 = tpu.matmul %8, %10, %cst_8 {dimension_numbers = #tpu.dot_dimension_numbers<[1], [0], [0], [1], [0, 0, 1, 1], [], []>} : vector<256x128xbf16>, vector<128x128xbf16>, vector<256x128xf32> -> vector<256x128xf32>
    %12 = arith.addf %5, %11 : vector<256x128xf32>
    %13 = vector.extract_strided_slice %3 {offsets = [0, 1, 0], sizes = [16, 16, 128], strides = [1, 1, 1]} : vector<18x18x128xf32> to vector<16x16x128xf32>
    %14 = vector.shape_cast %13 : vector<16x16x128xf32> to vector<256x128xf32>
    %15 = arith.truncf %14 : vector<256x128xf32> to vector<256x128xbf16>
    %c1 = arith.constant 1 : index
    %c0_9 = arith.constant 0 : index
    %c0_10 = arith.constant 0 : index
    %16 = vector.load %arg2[%c1, %c0_9, %c0_10] : memref<9x128x128xbf16, #tpu.memory_space<vmem>>, vector<1x128x128xbf16>
    %17 = vector.shape_cast %16 : vector<1x128x128xbf16> to vector<128x128xbf16>
    %cst_11 = arith.constant dense<0.000000e+00> : vector<256x128xf32>
    %18 = tpu.matmul %15, %17, %cst_11 {dimension_numbers = #tpu.dot_dimension_numbers<[1], [0], [0], [1], [0, 0, 1, 1], [], []>} : vector<256x128xbf16>, vector<128x128xbf16>, vector<256x128xf32> -> vector<256x128xf32>
    %19 = arith.addf %12, %18 : vector<256x128xf32>
    %20 = vector.extract_strided_slice %3 {offsets = [0, 2, 0], sizes = [16, 16, 128], strides = [1, 1, 1]} : vector<18x18x128xf32> to vector<16x16x128xf32>
    %21 = vector.shape_cast %20 : vector<16x16x128xf32> to vector<256x128xf32>
    %22 = arith.truncf %21 : vector<256x128xf32> to vector<256x128xbf16>
    %c2 = arith.constant 2 : index
    %c0_12 = arith.constant 0 : index
    %c0_13 = arith.constant 0 : index
    %23 = vector.load %arg2[%c2, %c0_12, %c0_13] : memref<9x128x128xbf16, #tpu.memory_space<vmem>>, vector<1x128x128xbf16>
    %24 = vector.shape_cast %23 : vector<1x128x128xbf16> to vector<128x128xbf16>
    %cst_14 = arith.constant dense<0.000000e+00> : vector<256x128xf32>
    %25 = tpu.matmul %22, %24, %cst_14 {dimension_numbers = #tpu.dot_dimension_numbers<[1], [0], [0], [1], [0, 0, 1, 1], [], []>} : vector<256x128xbf16>, vector<128x128xbf16>, vector<256x128xf32> -> vector<256x128xf32>
    %26 = arith.addf %19, %25 : vector<256x128xf32>
    %27 = vector.extract_strided_slice %3 {offsets = [1, 0, 0], sizes = [16, 16, 128], strides = [1, 1, 1]} : vector<18x18x128xf32> to vector<16x16x128xf32>
    %28 = vector.shape_cast %27 : vector<16x16x128xf32> to vector<256x128xf32>
    %29 = arith.truncf %28 : vector<256x128xf32> to vector<256x128xbf16>
    %c3 = arith.constant 3 : index
    %c0_15 = arith.constant 0 : index
    %c0_16 = arith.constant 0 : index
    %30 = vector.load %arg2[%c3, %c0_15, %c0_16] : memref<9x128x128xbf16, #tpu.memory_space<vmem>>, vector<1x128x128xbf16>
    %31 = vector.shape_cast %30 : vector<1x128x128xbf16> to vector<128x128xbf16>
    %cst_17 = arith.constant dense<0.000000e+00> : vector<256x128xf32>
    %32 = tpu.matmul %29, %31, %cst_17 {dimension_numbers = #tpu.dot_dimension_numbers<[1], [0], [0], [1], [0, 0, 1, 1], [], []>} : vector<256x128xbf16>, vector<128x128xbf16>, vector<256x128xf32> -> vector<256x128xf32>
    %33 = arith.addf %26, %32 : vector<256x128xf32>
    %34 = vector.extract_strided_slice %3 {offsets = [1, 1, 0], sizes = [16, 16, 128], strides = [1, 1, 1]} : vector<18x18x128xf32> to vector<16x16x128xf32>
    %35 = vector.shape_cast %34 : vector<16x16x128xf32> to vector<256x128xf32>
    %36 = arith.truncf %35 : vector<256x128xf32> to vector<256x128xbf16>
    %c4 = arith.constant 4 : index
    %c0_18 = arith.constant 0 : index
    %c0_19 = arith.constant 0 : index
    %37 = vector.load %arg2[%c4, %c0_18, %c0_19] : memref<9x128x128xbf16, #tpu.memory_space<vmem>>, vector<1x128x128xbf16>
    %38 = vector.shape_cast %37 : vector<1x128x128xbf16> to vector<128x128xbf16>
    %cst_20 = arith.constant dense<0.000000e+00> : vector<256x128xf32>
    %39 = tpu.matmul %36, %38, %cst_20 {dimension_numbers = #tpu.dot_dimension_numbers<[1], [0], [0], [1], [0, 0, 1, 1], [], []>} : vector<256x128xbf16>, vector<128x128xbf16>, vector<256x128xf32> -> vector<256x128xf32>
    %40 = arith.addf %33, %39 : vector<256x128xf32>
    %41 = vector.extract_strided_slice %3 {offsets = [1, 2, 0], sizes = [16, 16, 128], strides = [1, 1, 1]} : vector<18x18x128xf32> to vector<16x16x128xf32>
    %42 = vector.shape_cast %41 : vector<16x16x128xf32> to vector<256x128xf32>
    %43 = arith.truncf %42 : vector<256x128xf32> to vector<256x128xbf16>
    %c5 = arith.constant 5 : index
    %c0_21 = arith.constant 0 : index
    %c0_22 = arith.constant 0 : index
    %44 = vector.load %arg2[%c5, %c0_21, %c0_22] : memref<9x128x128xbf16, #tpu.memory_space<vmem>>, vector<1x128x128xbf16>
    %45 = vector.shape_cast %44 : vector<1x128x128xbf16> to vector<128x128xbf16>
    %cst_23 = arith.constant dense<0.000000e+00> : vector<256x128xf32>
    %46 = tpu.matmul %43, %45, %cst_23 {dimension_numbers = #tpu.dot_dimension_numbers<[1], [0], [0], [1], [0, 0, 1, 1], [], []>} : vector<256x128xbf16>, vector<128x128xbf16>, vector<256x128xf32> -> vector<256x128xf32>
    %47 = arith.addf %40, %46 : vector<256x128xf32>
    %48 = vector.extract_strided_slice %3 {offsets = [2, 0, 0], sizes = [16, 16, 128], strides = [1, 1, 1]} : vector<18x18x128xf32> to vector<16x16x128xf32>
    %49 = vector.shape_cast %48 : vector<16x16x128xf32> to vector<256x128xf32>
    %50 = arith.truncf %49 : vector<256x128xf32> to vector<256x128xbf16>
    %c6 = arith.constant 6 : index
    %c0_24 = arith.constant 0 : index
    %c0_25 = arith.constant 0 : index
    %51 = vector.load %arg2[%c6, %c0_24, %c0_25] : memref<9x128x128xbf16, #tpu.memory_space<vmem>>, vector<1x128x128xbf16>
    %52 = vector.shape_cast %51 : vector<1x128x128xbf16> to vector<128x128xbf16>
    %cst_26 = arith.constant dense<0.000000e+00> : vector<256x128xf32>
    %53 = tpu.matmul %50, %52, %cst_26 {dimension_numbers = #tpu.dot_dimension_numbers<[1], [0], [0], [1], [0, 0, 1, 1], [], []>} : vector<256x128xbf16>, vector<128x128xbf16>, vector<256x128xf32> -> vector<256x128xf32>
    %54 = arith.addf %47, %53 : vector<256x128xf32>
    %55 = vector.extract_strided_slice %3 {offsets = [2, 1, 0], sizes = [16, 16, 128], strides = [1, 1, 1]} : vector<18x18x128xf32> to vector<16x16x128xf32>
    %56 = vector.shape_cast %55 : vector<16x16x128xf32> to vector<256x128xf32>
    %57 = arith.truncf %56 : vector<256x128xf32> to vector<256x128xbf16>
    %c7 = arith.constant 7 : index
    %c0_27 = arith.constant 0 : index
    %c0_28 = arith.constant 0 : index
    %58 = vector.load %arg2[%c7, %c0_27, %c0_28] : memref<9x128x128xbf16, #tpu.memory_space<vmem>>, vector<1x128x128xbf16>
    %59 = vector.shape_cast %58 : vector<1x128x128xbf16> to vector<128x128xbf16>
    %cst_29 = arith.constant dense<0.000000e+00> : vector<256x128xf32>
    %60 = tpu.matmul %57, %59, %cst_29 {dimension_numbers = #tpu.dot_dimension_numbers<[1], [0], [0], [1], [0, 0, 1, 1], [], []>} : vector<256x128xbf16>, vector<128x128xbf16>, vector<256x128xf32> -> vector<256x128xf32>
    %61 = arith.addf %54, %60 : vector<256x128xf32>
    %62 = vector.extract_strided_slice %3 {offsets = [2, 2, 0], sizes = [16, 16, 128], strides = [1, 1, 1]} : vector<18x18x128xf32> to vector<16x16x128xf32>
    %63 = vector.shape_cast %62 : vector<16x16x128xf32> to vector<256x128xf32>
    %64 = arith.truncf %63 : vector<256x128xf32> to vector<256x128xbf16>
    %c8 = arith.constant 8 : index
    %c0_30 = arith.constant 0 : index
    %c0_31 = arith.constant 0 : index
    %65 = vector.load %arg2[%c8, %c0_30, %c0_31] : memref<9x128x128xbf16, #tpu.memory_space<vmem>>, vector<1x128x128xbf16>
    %66 = vector.shape_cast %65 : vector<1x128x128xbf16> to vector<128x128xbf16>
    %cst_32 = arith.constant dense<0.000000e+00> : vector<256x128xf32>
    %67 = tpu.matmul %64, %66, %cst_32 {dimension_numbers = #tpu.dot_dimension_numbers<[1], [0], [0], [1], [0, 0, 1, 1], [], []>} : vector<256x128xbf16>, vector<128x128xbf16>, vector<256x128xf32> -> vector<256x128xf32>
    %68 = arith.addf %61, %67 : vector<256x128xf32>
    %69 = vector.broadcast %4 : vector<1x128xf32> to vector<256x128xf32>
    %70 = arith.addf %68, %69 : vector<256x128xf32>
    %cst_33 = arith.constant 0.000000e+00 : f32
    %71 = vector.broadcast %cst_33 : f32 to vector<256x128xf32>
    %72 = arith.maximumf %70, %71 : vector<256x128xf32>
    %73 = vector.extract_strided_slice %0 {offsets = [1, 0], sizes = [1, 128], strides = [1, 1]} : vector<8x128xf32> to vector<1x128xf32>
    %74 = vector.shape_cast %72 : vector<256x128xf32> to vector<8x2x16x128xf32>
    %75 = vector.extract_strided_slice %74 {offsets = [0, 0, 0, 0], sizes = [8, 1, 16, 128], strides = [1, 1, 1, 1]} : vector<8x2x16x128xf32> to vector<8x1x16x128xf32>
    %76 = vector.shape_cast %75 : vector<8x1x16x128xf32> to vector<8x16x128xf32>
    %77 = vector.extract_strided_slice %76 {offsets = [0, 0, 0], sizes = [8, 1, 128], strides = [1, 1, 1]} : vector<8x16x128xf32> to vector<8x1x128xf32>
    %78 = vector.extract_strided_slice %76 {offsets = [0, 2, 0], sizes = [8, 1, 128], strides = [1, 1, 1]} : vector<8x16x128xf32> to vector<8x1x128xf32>
    %79 = vector.extract_strided_slice %76 {offsets = [0, 4, 0], sizes = [8, 1, 128], strides = [1, 1, 1]} : vector<8x16x128xf32> to vector<8x1x128xf32>
    %80 = vector.extract_strided_slice %76 {offsets = [0, 6, 0], sizes = [8, 1, 128], strides = [1, 1, 1]} : vector<8x16x128xf32> to vector<8x1x128xf32>
    %81 = vector.extract_strided_slice %76 {offsets = [0, 8, 0], sizes = [8, 1, 128], strides = [1, 1, 1]} : vector<8x16x128xf32> to vector<8x1x128xf32>
    %82 = vector.extract_strided_slice %76 {offsets = [0, 10, 0], sizes = [8, 1, 128], strides = [1, 1, 1]} : vector<8x16x128xf32> to vector<8x1x128xf32>
    %83 = vector.extract_strided_slice %76 {offsets = [0, 12, 0], sizes = [8, 1, 128], strides = [1, 1, 1]} : vector<8x16x128xf32> to vector<8x1x128xf32>
    %84 = vector.extract_strided_slice %76 {offsets = [0, 14, 0], sizes = [8, 1, 128], strides = [1, 1, 1]} : vector<8x16x128xf32> to vector<8x1x128xf32>
    %85 = tpu.concatenate %77, %78, %79, %80, %81, %82, %83, %84 in 1 : vector<8x1x128xf32>, vector<8x1x128xf32>, vector<8x1x128xf32>, vector<8x1x128xf32>, vector<8x1x128xf32>, vector<8x1x128xf32>, vector<8x1x128xf32>, vector<8x1x128xf32> -> vector<8x8x128xf32>
    %cst_34 = arith.constant 0.000000e+00 : f32
    %86 = vector.broadcast %cst_34 : f32 to vector<8x1x128xf32>
    %87 = tpu.concatenate %86, %85, %86 in 1 : vector<8x1x128xf32>, vector<8x8x128xf32>, vector<8x1x128xf32> -> vector<8x10x128xf32>
    %cst_35 = arith.constant 0.000000e+00 : f32
    %88 = vector.broadcast %cst_35 : f32 to vector<1x10x128xf32>
    %89 = tpu.concatenate %88, %87, %88 in 0 : vector<1x10x128xf32>, vector<8x10x128xf32>, vector<1x10x128xf32> -> vector<10x10x128xf32>
    %90 = vector.extract_strided_slice %76 {offsets = [0, 1, 0], sizes = [8, 1, 128], strides = [1, 1, 1]} : vector<8x16x128xf32> to vector<8x1x128xf32>
    %91 = vector.extract_strided_slice %76 {offsets = [0, 3, 0], sizes = [8, 1, 128], strides = [1, 1, 1]} : vector<8x16x128xf32> to vector<8x1x128xf32>
    %92 = vector.extract_strided_slice %76 {offsets = [0, 5, 0], sizes = [8, 1, 128], strides = [1, 1, 1]} : vector<8x16x128xf32> to vector<8x1x128xf32>
    %93 = vector.extract_strided_slice %76 {offsets = [0, 7, 0], sizes = [8, 1, 128], strides = [1, 1, 1]} : vector<8x16x128xf32> to vector<8x1x128xf32>
    %94 = vector.extract_strided_slice %76 {offsets = [0, 9, 0], sizes = [8, 1, 128], strides = [1, 1, 1]} : vector<8x16x128xf32> to vector<8x1x128xf32>
    %95 = vector.extract_strided_slice %76 {offsets = [0, 11, 0], sizes = [8, 1, 128], strides = [1, 1, 1]} : vector<8x16x128xf32> to vector<8x1x128xf32>
    %96 = vector.extract_strided_slice %76 {offsets = [0, 13, 0], sizes = [8, 1, 128], strides = [1, 1, 1]} : vector<8x16x128xf32> to vector<8x1x128xf32>
    %97 = vector.extract_strided_slice %76 {offsets = [0, 15, 0], sizes = [8, 1, 128], strides = [1, 1, 1]} : vector<8x16x128xf32> to vector<8x1x128xf32>
    %98 = tpu.concatenate %90, %91, %92, %93, %94, %95, %96, %97 in 1 : vector<8x1x128xf32>, vector<8x1x128xf32>, vector<8x1x128xf32>, vector<8x1x128xf32>, vector<8x1x128xf32>, vector<8x1x128xf32>, vector<8x1x128xf32>, vector<8x1x128xf32> -> vector<8x8x128xf32>
    %cst_36 = arith.constant 0.000000e+00 : f32
    %99 = vector.broadcast %cst_36 : f32 to vector<8x1x128xf32>
    %100 = tpu.concatenate %99, %98, %99 in 1 : vector<8x1x128xf32>, vector<8x8x128xf32>, vector<8x1x128xf32> -> vector<8x10x128xf32>
    %cst_37 = arith.constant 0.000000e+00 : f32
    %101 = vector.broadcast %cst_37 : f32 to vector<1x10x128xf32>
    %102 = tpu.concatenate %101, %100, %101 in 0 : vector<1x10x128xf32>, vector<8x10x128xf32>, vector<1x10x128xf32> -> vector<10x10x128xf32>
    %103 = vector.extract_strided_slice %74 {offsets = [0, 1, 0, 0], sizes = [8, 1, 16, 128], strides = [1, 1, 1, 1]} : vector<8x2x16x128xf32> to vector<8x1x16x128xf32>
    %104 = vector.shape_cast %103 : vector<8x1x16x128xf32> to vector<8x16x128xf32>
    %105 = vector.extract_strided_slice %104 {offsets = [0, 0, 0], sizes = [8, 1, 128], strides = [1, 1, 1]} : vector<8x16x128xf32> to vector<8x1x128xf32>
    %106 = vector.extract_strided_slice %104 {offsets = [0, 2, 0], sizes = [8, 1, 128], strides = [1, 1, 1]} : vector<8x16x128xf32> to vector<8x1x128xf32>
    %107 = vector.extract_strided_slice %104 {offsets = [0, 4, 0], sizes = [8, 1, 128], strides = [1, 1, 1]} : vector<8x16x128xf32> to vector<8x1x128xf32>
    %108 = vector.extract_strided_slice %104 {offsets = [0, 6, 0], sizes = [8, 1, 128], strides = [1, 1, 1]} : vector<8x16x128xf32> to vector<8x1x128xf32>
    %109 = vector.extract_strided_slice %104 {offsets = [0, 8, 0], sizes = [8, 1, 128], strides = [1, 1, 1]} : vector<8x16x128xf32> to vector<8x1x128xf32>
    %110 = vector.extract_strided_slice %104 {offsets = [0, 10, 0], sizes = [8, 1, 128], strides = [1, 1, 1]} : vector<8x16x128xf32> to vector<8x1x128xf32>
    %111 = vector.extract_strided_slice %104 {offsets = [0, 12, 0], sizes = [8, 1, 128], strides = [1, 1, 1]} : vector<8x16x128xf32> to vector<8x1x128xf32>
    %112 = vector.extract_strided_slice %104 {offsets = [0, 14, 0], sizes = [8, 1, 128], strides = [1, 1, 1]} : vector<8x16x128xf32> to vector<8x1x128xf32>
    %113 = tpu.concatenate %105, %106, %107, %108, %109, %110, %111, %112 in 1 : vector<8x1x128xf32>, vector<8x1x128xf32>, vector<8x1x128xf32>, vector<8x1x128xf32>, vector<8x1x128xf32>, vector<8x1x128xf32>, vector<8x1x128xf32>, vector<8x1x128xf32> -> vector<8x8x128xf32>
    %cst_38 = arith.constant 0.000000e+00 : f32
    %114 = vector.broadcast %cst_38 : f32 to vector<8x1x128xf32>
    %115 = tpu.concatenate %114, %113, %114 in 1 : vector<8x1x128xf32>, vector<8x8x128xf32>, vector<8x1x128xf32> -> vector<8x10x128xf32>
    %cst_39 = arith.constant 0.000000e+00 : f32
    %116 = vector.broadcast %cst_39 : f32 to vector<1x10x128xf32>
    %117 = tpu.concatenate %116, %115, %116 in 0 : vector<1x10x128xf32>, vector<8x10x128xf32>, vector<1x10x128xf32> -> vector<10x10x128xf32>
    %118 = vector.extract_strided_slice %104 {offsets = [0, 1, 0], sizes = [8, 1, 128], strides = [1, 1, 1]} : vector<8x16x128xf32> to vector<8x1x128xf32>
    %119 = vector.extract_strided_slice %104 {offsets = [0, 3, 0], sizes = [8, 1, 128], strides = [1, 1, 1]} : vector<8x16x128xf32> to vector<8x1x128xf32>
    %120 = vector.extract_strided_slice %104 {offsets = [0, 5, 0], sizes = [8, 1, 128], strides = [1, 1, 1]} : vector<8x16x128xf32> to vector<8x1x128xf32>
    %121 = vector.extract_strided_slice %104 {offsets = [0, 7, 0], sizes = [8, 1, 128], strides = [1, 1, 1]} : vector<8x16x128xf32> to vector<8x1x128xf32>
    %122 = vector.extract_strided_slice %104 {offsets = [0, 9, 0], sizes = [8, 1, 128], strides = [1, 1, 1]} : vector<8x16x128xf32> to vector<8x1x128xf32>
    %123 = vector.extract_strided_slice %104 {offsets = [0, 11, 0], sizes = [8, 1, 128], strides = [1, 1, 1]} : vector<8x16x128xf32> to vector<8x1x128xf32>
    %124 = vector.extract_strided_slice %104 {offsets = [0, 13, 0], sizes = [8, 1, 128], strides = [1, 1, 1]} : vector<8x16x128xf32> to vector<8x1x128xf32>
    %125 = vector.extract_strided_slice %104 {offsets = [0, 15, 0], sizes = [8, 1, 128], strides = [1, 1, 1]} : vector<8x16x128xf32> to vector<8x1x128xf32>
    %126 = tpu.concatenate %118, %119, %120, %121, %122, %123, %124, %125 in 1 : vector<8x1x128xf32>, vector<8x1x128xf32>, vector<8x1x128xf32>, vector<8x1x128xf32>, vector<8x1x128xf32>, vector<8x1x128xf32>, vector<8x1x128xf32>, vector<8x1x128xf32> -> vector<8x8x128xf32>
    %cst_40 = arith.constant 0.000000e+00 : f32
    %127 = vector.broadcast %cst_40 : f32 to vector<8x1x128xf32>
    %128 = tpu.concatenate %127, %126, %127 in 1 : vector<8x1x128xf32>, vector<8x8x128xf32>, vector<8x1x128xf32> -> vector<8x10x128xf32>
    %cst_41 = arith.constant 0.000000e+00 : f32
    %129 = vector.broadcast %cst_41 : f32 to vector<1x10x128xf32>
    %130 = tpu.concatenate %129, %128, %129 in 0 : vector<1x10x128xf32>, vector<8x10x128xf32>, vector<1x10x128xf32> -> vector<10x10x128xf32>
    %cst_42 = arith.constant 0.000000e+00 : f32
    %131 = vector.broadcast %cst_42 : f32 to vector<64x128xf32>
    %132 = vector.extract_strided_slice %89 {offsets = [0, 0, 0], sizes = [8, 8, 128], strides = [1, 1, 1]} : vector<10x10x128xf32> to vector<8x8x128xf32>
    %133 = vector.shape_cast %132 : vector<8x8x128xf32> to vector<64x128xf32>
    %134 = arith.truncf %133 : vector<64x128xf32> to vector<64x128xbf16>
    %c0_43 = arith.constant 0 : index
    %c0_44 = arith.constant 0 : index
    %c0_45 = arith.constant 0 : index
    %135 = vector.load %arg3[%c0_43, %c0_44, %c0_45] : memref<25x128x128xbf16, #tpu.memory_space<vmem>>, vector<1x128x128xbf16>
    %136 = vector.shape_cast %135 : vector<1x128x128xbf16> to vector<128x128xbf16>
    %cst_46 = arith.constant dense<0.000000e+00> : vector<64x128xf32>
    %137 = tpu.matmul %134, %136, %cst_46 {dimension_numbers = #tpu.dot_dimension_numbers<[1], [0], [0], [1], [0, 0, 1, 1], [], []>} : vector<64x128xbf16>, vector<128x128xbf16>, vector<64x128xf32> -> vector<64x128xf32>
    %138 = arith.addf %131, %137 : vector<64x128xf32>
    %139 = vector.extract_strided_slice %102 {offsets = [0, 0, 0], sizes = [8, 8, 128], strides = [1, 1, 1]} : vector<10x10x128xf32> to vector<8x8x128xf32>
    %140 = vector.shape_cast %139 : vector<8x8x128xf32> to vector<64x128xf32>
    %141 = arith.truncf %140 : vector<64x128xf32> to vector<64x128xbf16>
    %c1_47 = arith.constant 1 : index
    %c0_48 = arith.constant 0 : index
    %c0_49 = arith.constant 0 : index
    %142 = vector.load %arg3[%c1_47, %c0_48, %c0_49] : memref<25x128x128xbf16, #tpu.memory_space<vmem>>, vector<1x128x128xbf16>
    %143 = vector.shape_cast %142 : vector<1x128x128xbf16> to vector<128x128xbf16>
    %cst_50 = arith.constant dense<0.000000e+00> : vector<64x128xf32>
    %144 = tpu.matmul %141, %143, %cst_50 {dimension_numbers = #tpu.dot_dimension_numbers<[1], [0], [0], [1], [0, 0, 1, 1], [], []>} : vector<64x128xbf16>, vector<128x128xbf16>, vector<64x128xf32> -> vector<64x128xf32>
    %145 = arith.addf %138, %144 : vector<64x128xf32>
    %146 = vector.extract_strided_slice %89 {offsets = [0, 1, 0], sizes = [8, 8, 128], strides = [1, 1, 1]} : vector<10x10x128xf32> to vector<8x8x128xf32>
    %147 = vector.shape_cast %146 : vector<8x8x128xf32> to vector<64x128xf32>
    %148 = arith.truncf %147 : vector<64x128xf32> to vector<64x128xbf16>
    %c2_51 = arith.constant 2 : index
    %c0_52 = arith.constant 0 : index
    %c0_53 = arith.constant 0 : index
    %149 = vector.load %arg3[%c2_51, %c0_52, %c0_53] : memref<25x128x128xbf16, #tpu.memory_space<vmem>>, vector<1x128x128xbf16>
    %150 = vector.shape_cast %149 : vector<1x128x128xbf16> to vector<128x128xbf16>
    %cst_54 = arith.constant dense<0.000000e+00> : vector<64x128xf32>
    %151 = tpu.matmul %148, %150, %cst_54 {dimension_numbers = #tpu.dot_dimension_numbers<[1], [0], [0], [1], [0, 0, 1, 1], [], []>} : vector<64x128xbf16>, vector<128x128xbf16>, vector<64x128xf32> -> vector<64x128xf32>
    %152 = arith.addf %145, %151 : vector<64x128xf32>
    %153 = vector.extract_strided_slice %102 {offsets = [0, 1, 0], sizes = [8, 8, 128], strides = [1, 1, 1]} : vector<10x10x128xf32> to vector<8x8x128xf32>
    %154 = vector.shape_cast %153 : vector<8x8x128xf32> to vector<64x128xf32>
    %155 = arith.truncf %154 : vector<64x128xf32> to vector<64x128xbf16>
    %c3_55 = arith.constant 3 : index
    %c0_56 = arith.constant 0 : index
    %c0_57 = arith.constant 0 : index
    %156 = vector.load %arg3[%c3_55, %c0_56, %c0_57] : memref<25x128x128xbf16, #tpu.memory_space<vmem>>, vector<1x128x128xbf16>
    %157 = vector.shape_cast %156 : vector<1x128x128xbf16> to vector<128x128xbf16>
    %cst_58 = arith.constant dense<0.000000e+00> : vector<64x128xf32>
    %158 = tpu.matmul %155, %157, %cst_58 {dimension_numbers = #tpu.dot_dimension_numbers<[1], [0], [0], [1], [0, 0, 1, 1], [], []>} : vector<64x128xbf16>, vector<128x128xbf16>, vector<64x128xf32> -> vector<64x128xf32>
    %159 = arith.addf %152, %158 : vector<64x128xf32>
    %160 = vector.extract_strided_slice %89 {offsets = [0, 2, 0], sizes = [8, 8, 128], strides = [1, 1, 1]} : vector<10x10x128xf32> to vector<8x8x128xf32>
    %161 = vector.shape_cast %160 : vector<8x8x128xf32> to vector<64x128xf32>
    %162 = arith.truncf %161 : vector<64x128xf32> to vector<64x128xbf16>
    %c4_59 = arith.constant 4 : index
    %c0_60 = arith.constant 0 : index
    %c0_61 = arith.constant 0 : index
    %163 = vector.load %arg3[%c4_59, %c0_60, %c0_61] : memref<25x128x128xbf16, #tpu.memory_space<vmem>>, vector<1x128x128xbf16>
    %164 = vector.shape_cast %163 : vector<1x128x128xbf16> to vector<128x128xbf16>
    %cst_62 = arith.constant dense<0.000000e+00> : vector<64x128xf32>
    %165 = tpu.matmul %162, %164, %cst_62 {dimension_numbers = #tpu.dot_dimension_numbers<[1], [0], [0], [1], [0, 0, 1, 1], [], []>} : vector<64x128xbf16>, vector<128x128xbf16>, vector<64x128xf32> -> vector<64x128xf32>
    %166 = arith.addf %159, %165 : vector<64x128xf32>
    %167 = vector.extract_strided_slice %117 {offsets = [0, 0, 0], sizes = [8, 8, 128], strides = [1, 1, 1]} : vector<10x10x128xf32> to vector<8x8x128xf32>
    %168 = vector.shape_cast %167 : vector<8x8x128xf32> to vector<64x128xf32>
    %169 = arith.truncf %168 : vector<64x128xf32> to vector<64x128xbf16>
    %c5_63 = arith.constant 5 : index
    %c0_64 = arith.constant 0 : index
    %c0_65 = arith.constant 0 : index
    %170 = vector.load %arg3[%c5_63, %c0_64, %c0_65] : memref<25x128x128xbf16, #tpu.memory_space<vmem>>, vector<1x128x128xbf16>
    %171 = vector.shape_cast %170 : vector<1x128x128xbf16> to vector<128x128xbf16>
    %cst_66 = arith.constant dense<0.000000e+00> : vector<64x128xf32>
    %172 = tpu.matmul %169, %171, %cst_66 {dimension_numbers = #tpu.dot_dimension_numbers<[1], [0], [0], [1], [0, 0, 1, 1], [], []>} : vector<64x128xbf16>, vector<128x128xbf16>, vector<64x128xf32> -> vector<64x128xf32>
    %173 = arith.addf %166, %172 : vector<64x128xf32>
    %174 = vector.extract_strided_slice %130 {offsets = [0, 0, 0], sizes = [8, 8, 128], strides = [1, 1, 1]} : vector<10x10x128xf32> to vector<8x8x128xf32>
    %175 = vector.shape_cast %174 : vector<8x8x128xf32> to vector<64x128xf32>
    %176 = arith.truncf %175 : vector<64x128xf32> to vector<64x128xbf16>
    %c6_67 = arith.constant 6 : index
    %c0_68 = arith.constant 0 : index
    %c0_69 = arith.constant 0 : index
    %177 = vector.load %arg3[%c6_67, %c0_68, %c0_69] : memref<25x128x128xbf16, #tpu.memory_space<vmem>>, vector<1x128x128xbf16>
    %178 = vector.shape_cast %177 : vector<1x128x128xbf16> to vector<128x128xbf16>
    %cst_70 = arith.constant dense<0.000000e+00> : vector<64x128xf32>
    %179 = tpu.matmul %176, %178, %cst_70 {dimension_numbers = #tpu.dot_dimension_numbers<[1], [0], [0], [1], [0, 0, 1, 1], [], []>} : vector<64x128xbf16>, vector<128x128xbf16>, vector<64x128xf32> -> vector<64x128xf32>
    %180 = arith.addf %173, %179 : vector<64x128xf32>
    %181 = vector.extract_strided_slice %117 {offsets = [0, 1, 0], sizes = [8, 8, 128], strides = [1, 1, 1]} : vector<10x10x128xf32> to vector<8x8x128xf32>
    %182 = vector.shape_cast %181 : vector<8x8x128xf32> to vector<64x128xf32>
    %183 = arith.truncf %182 : vector<64x128xf32> to vector<64x128xbf16>
    %c7_71 = arith.constant 7 : index
    %c0_72 = arith.constant 0 : index
    %c0_73 = arith.constant 0 : index
    %184 = vector.load %arg3[%c7_71, %c0_72, %c0_73] : memref<25x128x128xbf16, #tpu.memory_space<vmem>>, vector<1x128x128xbf16>
    %185 = vector.shape_cast %184 : vector<1x128x128xbf16> to vector<128x128xbf16>
    %cst_74 = arith.constant dense<0.000000e+00> : vector<64x128xf32>
    %186 = tpu.matmul %183, %185, %cst_74 {dimension_numbers = #tpu.dot_dimension_numbers<[1], [0], [0], [1], [0, 0, 1, 1], [], []>} : vector<64x128xbf16>, vector<128x128xbf16>, vector<64x128xf32> -> vector<64x128xf32>
    %187 = arith.addf %180, %186 : vector<64x128xf32>
    %188 = vector.extract_strided_slice %130 {offsets = [0, 1, 0], sizes = [8, 8, 128], strides = [1, 1, 1]} : vector<10x10x128xf32> to vector<8x8x128xf32>
    %189 = vector.shape_cast %188 : vector<8x8x128xf32> to vector<64x128xf32>
    %190 = arith.truncf %189 : vector<64x128xf32> to vector<64x128xbf16>
    %c8_75 = arith.constant 8 : index
    %c0_76 = arith.constant 0 : index
    %c0_77 = arith.constant 0 : index
    %191 = vector.load %arg3[%c8_75, %c0_76, %c0_77] : memref<25x128x128xbf16, #tpu.memory_space<vmem>>, vector<1x128x128xbf16>
    %192 = vector.shape_cast %191 : vector<1x128x128xbf16> to vector<128x128xbf16>
    %cst_78 = arith.constant dense<0.000000e+00> : vector<64x128xf32>
    %193 = tpu.matmul %190, %192, %cst_78 {dimension_numbers = #tpu.dot_dimension_numbers<[1], [0], [0], [1], [0, 0, 1, 1], [], []>} : vector<64x128xbf16>, vector<128x128xbf16>, vector<64x128xf32> -> vector<64x128xf32>
    %194 = arith.addf %187, %193 : vector<64x128xf32>
    %195 = vector.extract_strided_slice %117 {offsets = [0, 2, 0], sizes = [8, 8, 128], strides = [1, 1, 1]} : vector<10x10x128xf32> to vector<8x8x128xf32>
    %196 = vector.shape_cast %195 : vector<8x8x128xf32> to vector<64x128xf32>
    %197 = arith.truncf %196 : vector<64x128xf32> to vector<64x128xbf16>
    %c9 = arith.constant 9 : index
    %c0_79 = arith.constant 0 : index
    %c0_80 = arith.constant 0 : index
    %198 = vector.load %arg3[%c9, %c0_79, %c0_80] : memref<25x128x128xbf16, #tpu.memory_space<vmem>>, vector<1x128x128xbf16>
    %199 = vector.shape_cast %198 : vector<1x128x128xbf16> to vector<128x128xbf16>
    %cst_81 = arith.constant dense<0.000000e+00> : vector<64x128xf32>
    %200 = tpu.matmul %197, %199, %cst_81 {dimension_numbers = #tpu.dot_dimension_numbers<[1], [0], [0], [1], [0, 0, 1, 1], [], []>} : vector<64x128xbf16>, vector<128x128xbf16>, vector<64x128xf32> -> vector<64x128xf32>
    %201 = arith.addf %194, %200 : vector<64x128xf32>
    %202 = vector.extract_strided_slice %89 {offsets = [1, 0, 0], sizes = [8, 8, 128], strides = [1, 1, 1]} : vector<10x10x128xf32> to vector<8x8x128xf32>
    %203 = vector.shape_cast %202 : vector<8x8x128xf32> to vector<64x128xf32>
    %204 = arith.truncf %203 : vector<64x128xf32> to vector<64x128xbf16>
    %c10 = arith.constant 10 : index
    %c0_82 = arith.constant 0 : index
    %c0_83 = arith.constant 0 : index
    %205 = vector.load %arg3[%c10, %c0_82, %c0_83] : memref<25x128x128xbf16, #tpu.memory_space<vmem>>, vector<1x128x128xbf16>
    %206 = vector.shape_cast %205 : vector<1x128x128xbf16> to vector<128x128xbf16>
    %cst_84 = arith.constant dense<0.000000e+00> : vector<64x128xf32>
    %207 = tpu.matmul %204, %206, %cst_84 {dimension_numbers = #tpu.dot_dimension_numbers<[1], [0], [0], [1], [0, 0, 1, 1], [], []>} : vector<64x128xbf16>, vector<128x128xbf16>, vector<64x128xf32> -> vector<64x128xf32>
    %208 = arith.addf %201, %207 : vector<64x128xf32>
    %209 = vector.extract_strided_slice %102 {offsets = [1, 0, 0], sizes = [8, 8, 128], strides = [1, 1, 1]} : vector<10x10x128xf32> to vector<8x8x128xf32>
    %210 = vector.shape_cast %209 : vector<8x8x128xf32> to vector<64x128xf32>
    %211 = arith.truncf %210 : vector<64x128xf32> to vector<64x128xbf16>
    %c11 = arith.constant 11 : index
    %c0_85 = arith.constant 0 : index
    %c0_86 = arith.constant 0 : index
    %212 = vector.load %arg3[%c11, %c0_85, %c0_86] : memref<25x128x128xbf16, #tpu.memory_space<vmem>>, vector<1x128x128xbf16>
    %213 = vector.shape_cast %212 : vector<1x128x128xbf16> to vector<128x128xbf16>
    %cst_87 = arith.constant dense<0.000000e+00> : vector<64x128xf32>
    %214 = tpu.matmul %211, %213, %cst_87 {dimension_numbers = #tpu.dot_dimension_numbers<[1], [0], [0], [1], [0, 0, 1, 1], [], []>} : vector<64x128xbf16>, vector<128x128xbf16>, vector<64x128xf32> -> vector<64x128xf32>
    %215 = arith.addf %208, %214 : vector<64x128xf32>
    %216 = vector.extract_strided_slice %89 {offsets = [1, 1, 0], sizes = [8, 8, 128], strides = [1, 1, 1]} : vector<10x10x128xf32> to vector<8x8x128xf32>
    %217 = vector.shape_cast %216 : vector<8x8x128xf32> to vector<64x128xf32>
    %218 = arith.truncf %217 : vector<64x128xf32> to vector<64x128xbf16>
    %c12 = arith.constant 12 : index
    %c0_88 = arith.constant 0 : index
    %c0_89 = arith.constant 0 : index
    %219 = vector.load %arg3[%c12, %c0_88, %c0_89] : memref<25x128x128xbf16, #tpu.memory_space<vmem>>, vector<1x128x128xbf16>
    %220 = vector.shape_cast %219 : vector<1x128x128xbf16> to vector<128x128xbf16>
    %cst_90 = arith.constant dense<0.000000e+00> : vector<64x128xf32>
    %221 = tpu.matmul %218, %220, %cst_90 {dimension_numbers = #tpu.dot_dimension_numbers<[1], [0], [0], [1], [0, 0, 1, 1], [], []>} : vector<64x128xbf16>, vector<128x128xbf16>, vector<64x128xf32> -> vector<64x128xf32>
    %222 = arith.addf %215, %221 : vector<64x128xf32>
    %223 = vector.extract_strided_slice %102 {offsets = [1, 1, 0], sizes = [8, 8, 128], strides = [1, 1, 1]} : vector<10x10x128xf32> to vector<8x8x128xf32>
    %224 = vector.shape_cast %223 : vector<8x8x128xf32> to vector<64x128xf32>
    %225 = arith.truncf %224 : vector<64x128xf32> to vector<64x128xbf16>
    %c13 = arith.constant 13 : index
    %c0_91 = arith.constant 0 : index
    %c0_92 = arith.constant 0 : index
    %226 = vector.load %arg3[%c13, %c0_91, %c0_92] : memref<25x128x128xbf16, #tpu.memory_space<vmem>>, vector<1x128x128xbf16>
    %227 = vector.shape_cast %226 : vector<1x128x128xbf16> to vector<128x128xbf16>
    %cst_93 = arith.constant dense<0.000000e+00> : vector<64x128xf32>
    %228 = tpu.matmul %225, %227, %cst_93 {dimension_numbers = #tpu.dot_dimension_numbers<[1], [0], [0], [1], [0, 0, 1, 1], [], []>} : vector<64x128xbf16>, vector<128x128xbf16>, vector<64x128xf32> -> vector<64x128xf32>
    %229 = arith.addf %222, %228 : vector<64x128xf32>
    %230 = vector.extract_strided_slice %89 {offsets = [1, 2, 0], sizes = [8, 8, 128], strides = [1, 1, 1]} : vector<10x10x128xf32> to vector<8x8x128xf32>
    %231 = vector.shape_cast %230 : vector<8x8x128xf32> to vector<64x128xf32>
    %232 = arith.truncf %231 : vector<64x128xf32> to vector<64x128xbf16>
    %c14 = arith.constant 14 : index
    %c0_94 = arith.constant 0 : index
    %c0_95 = arith.constant 0 : index
    %233 = vector.load %arg3[%c14, %c0_94, %c0_95] : memref<25x128x128xbf16, #tpu.memory_space<vmem>>, vector<1x128x128xbf16>
    %234 = vector.shape_cast %233 : vector<1x128x128xbf16> to vector<128x128xbf16>
    %cst_96 = arith.constant dense<0.000000e+00> : vector<64x128xf32>
    %235 = tpu.matmul %232, %234, %cst_96 {dimension_numbers = #tpu.dot_dimension_numbers<[1], [0], [0], [1], [0, 0, 1, 1], [], []>} : vector<64x128xbf16>, vector<128x128xbf16>, vector<64x128xf32> -> vector<64x128xf32>
    %236 = arith.addf %229, %235 : vector<64x128xf32>
    %237 = vector.extract_strided_slice %117 {offsets = [1, 0, 0], sizes = [8, 8, 128], strides = [1, 1, 1]} : vector<10x10x128xf32> to vector<8x8x128xf32>
    %238 = vector.shape_cast %237 : vector<8x8x128xf32> to vector<64x128xf32>
    %239 = arith.truncf %238 : vector<64x128xf32> to vector<64x128xbf16>
    %c15 = arith.constant 15 : index
    %c0_97 = arith.constant 0 : index
    %c0_98 = arith.constant 0 : index
    %240 = vector.load %arg3[%c15, %c0_97, %c0_98] : memref<25x128x128xbf16, #tpu.memory_space<vmem>>, vector<1x128x128xbf16>
    %241 = vector.shape_cast %240 : vector<1x128x128xbf16> to vector<128x128xbf16>
    %cst_99 = arith.constant dense<0.000000e+00> : vector<64x128xf32>
    %242 = tpu.matmul %239, %241, %cst_99 {dimension_numbers = #tpu.dot_dimension_numbers<[1], [0], [0], [1], [0, 0, 1, 1], [], []>} : vector<64x128xbf16>, vector<128x128xbf16>, vector<64x128xf32> -> vector<64x128xf32>
    %243 = arith.addf %236, %242 : vector<64x128xf32>
    %244 = vector.extract_strided_slice %130 {offsets = [1, 0, 0], sizes = [8, 8, 128], strides = [1, 1, 1]} : vector<10x10x128xf32> to vector<8x8x128xf32>
    %245 = vector.shape_cast %244 : vector<8x8x128xf32> to vector<64x128xf32>
    %246 = arith.truncf %245 : vector<64x128xf32> to vector<64x128xbf16>
    %c16 = arith.constant 16 : index
    %c0_100 = arith.constant 0 : index
    %c0_101 = arith.constant 0 : index
    %247 = vector.load %arg3[%c16, %c0_100, %c0_101] : memref<25x128x128xbf16, #tpu.memory_space<vmem>>, vector<1x128x128xbf16>
    %248 = vector.shape_cast %247 : vector<1x128x128xbf16> to vector<128x128xbf16>
    %cst_102 = arith.constant dense<0.000000e+00> : vector<64x128xf32>
    %249 = tpu.matmul %246, %248, %cst_102 {dimension_numbers = #tpu.dot_dimension_numbers<[1], [0], [0], [1], [0, 0, 1, 1], [], []>} : vector<64x128xbf16>, vector<128x128xbf16>, vector<64x128xf32> -> vector<64x128xf32>
    %250 = arith.addf %243, %249 : vector<64x128xf32>
    %251 = vector.extract_strided_slice %117 {offsets = [1, 1, 0], sizes = [8, 8, 128], strides = [1, 1, 1]} : vector<10x10x128xf32> to vector<8x8x128xf32>
    %252 = vector.shape_cast %251 : vector<8x8x128xf32> to vector<64x128xf32>
    %253 = arith.truncf %252 : vector<64x128xf32> to vector<64x128xbf16>
    %c17 = arith.constant 17 : index
    %c0_103 = arith.constant 0 : index
    %c0_104 = arith.constant 0 : index
    %254 = vector.load %arg3[%c17, %c0_103, %c0_104] : memref<25x128x128xbf16, #tpu.memory_space<vmem>>, vector<1x128x128xbf16>
    %255 = vector.shape_cast %254 : vector<1x128x128xbf16> to vector<128x128xbf16>
    %cst_105 = arith.constant dense<0.000000e+00> : vector<64x128xf32>
    %256 = tpu.matmul %253, %255, %cst_105 {dimension_numbers = #tpu.dot_dimension_numbers<[1], [0], [0], [1], [0, 0, 1, 1], [], []>} : vector<64x128xbf16>, vector<128x128xbf16>, vector<64x128xf32> -> vector<64x128xf32>
    %257 = arith.addf %250, %256 : vector<64x128xf32>
    %258 = vector.extract_strided_slice %130 {offsets = [1, 1, 0], sizes = [8, 8, 128], strides = [1, 1, 1]} : vector<10x10x128xf32> to vector<8x8x128xf32>
    %259 = vector.shape_cast %258 : vector<8x8x128xf32> to vector<64x128xf32>
    %260 = arith.truncf %259 : vector<64x128xf32> to vector<64x128xbf16>
    %c18 = arith.constant 18 : index
    %c0_106 = arith.constant 0 : index
    %c0_107 = arith.constant 0 : index
    %261 = vector.load %arg3[%c18, %c0_106, %c0_107] : memref<25x128x128xbf16, #tpu.memory_space<vmem>>, vector<1x128x128xbf16>
    %262 = vector.shape_cast %261 : vector<1x128x128xbf16> to vector<128x128xbf16>
    %cst_108 = arith.constant dense<0.000000e+00> : vector<64x128xf32>
    %263 = tpu.matmul %260, %262, %cst_108 {dimension_numbers = #tpu.dot_dimension_numbers<[1], [0], [0], [1], [0, 0, 1, 1], [], []>} : vector<64x128xbf16>, vector<128x128xbf16>, vector<64x128xf32> -> vector<64x128xf32>
    %264 = arith.addf %257, %263 : vector<64x128xf32>
    %265 = vector.extract_strided_slice %117 {offsets = [1, 2, 0], sizes = [8, 8, 128], strides = [1, 1, 1]} : vector<10x10x128xf32> to vector<8x8x128xf32>
    %266 = vector.shape_cast %265 : vector<8x8x128xf32> to vector<64x128xf32>
    %267 = arith.truncf %266 : vector<64x128xf32> to vector<64x128xbf16>
    %c19 = arith.constant 19 : index
    %c0_109 = arith.constant 0 : index
    %c0_110 = arith.constant 0 : index
    %268 = vector.load %arg3[%c19, %c0_109, %c0_110] : memref<25x128x128xbf16, #tpu.memory_space<vmem>>, vector<1x128x128xbf16>
    %269 = vector.shape_cast %268 : vector<1x128x128xbf16> to vector<128x128xbf16>
    %cst_111 = arith.constant dense<0.000000e+00> : vector<64x128xf32>
    %270 = tpu.matmul %267, %269, %cst_111 {dimension_numbers = #tpu.dot_dimension_numbers<[1], [0], [0], [1], [0, 0, 1, 1], [], []>} : vector<64x128xbf16>, vector<128x128xbf16>, vector<64x128xf32> -> vector<64x128xf32>
    %271 = arith.addf %264, %270 : vector<64x128xf32>
    %272 = vector.extract_strided_slice %89 {offsets = [2, 0, 0], sizes = [8, 8, 128], strides = [1, 1, 1]} : vector<10x10x128xf32> to vector<8x8x128xf32>
    %273 = vector.shape_cast %272 : vector<8x8x128xf32> to vector<64x128xf32>
    %274 = arith.truncf %273 : vector<64x128xf32> to vector<64x128xbf16>
    %c20 = arith.constant 20 : index
    %c0_112 = arith.constant 0 : index
    %c0_113 = arith.constant 0 : index
    %275 = vector.load %arg3[%c20, %c0_112, %c0_113] : memref<25x128x128xbf16, #tpu.memory_space<vmem>>, vector<1x128x128xbf16>
    %276 = vector.shape_cast %275 : vector<1x128x128xbf16> to vector<128x128xbf16>
    %cst_114 = arith.constant dense<0.000000e+00> : vector<64x128xf32>
    %277 = tpu.matmul %274, %276, %cst_114 {dimension_numbers = #tpu.dot_dimension_numbers<[1], [0], [0], [1], [0, 0, 1, 1], [], []>} : vector<64x128xbf16>, vector<128x128xbf16>, vector<64x128xf32> -> vector<64x128xf32>
    %278 = arith.addf %271, %277 : vector<64x128xf32>
    %279 = vector.extract_strided_slice %102 {offsets = [2, 0, 0], sizes = [8, 8, 128], strides = [1, 1, 1]} : vector<10x10x128xf32> to vector<8x8x128xf32>
    %280 = vector.shape_cast %279 : vector<8x8x128xf32> to vector<64x128xf32>
    %281 = arith.truncf %280 : vector<64x128xf32> to vector<64x128xbf16>
    %c21 = arith.constant 21 : index
    %c0_115 = arith.constant 0 : index
    %c0_116 = arith.constant 0 : index
    %282 = vector.load %arg3[%c21, %c0_115, %c0_116] : memref<25x128x128xbf16, #tpu.memory_space<vmem>>, vector<1x128x128xbf16>
    %283 = vector.shape_cast %282 : vector<1x128x128xbf16> to vector<128x128xbf16>
    %cst_117 = arith.constant dense<0.000000e+00> : vector<64x128xf32>
    %284 = tpu.matmul %281, %283, %cst_117 {dimension_numbers = #tpu.dot_dimension_numbers<[1], [0], [0], [1], [0, 0, 1, 1], [], []>} : vector<64x128xbf16>, vector<128x128xbf16>, vector<64x128xf32> -> vector<64x128xf32>
    %285 = arith.addf %278, %284 : vector<64x128xf32>
    %286 = vector.extract_strided_slice %89 {offsets = [2, 1, 0], sizes = [8, 8, 128], strides = [1, 1, 1]} : vector<10x10x128xf32> to vector<8x8x128xf32>
    %287 = vector.shape_cast %286 : vector<8x8x128xf32> to vector<64x128xf32>
    %288 = arith.truncf %287 : vector<64x128xf32> to vector<64x128xbf16>
    %c22 = arith.constant 22 : index
    %c0_118 = arith.constant 0 : index
    %c0_119 = arith.constant 0 : index
    %289 = vector.load %arg3[%c22, %c0_118, %c0_119] : memref<25x128x128xbf16, #tpu.memory_space<vmem>>, vector<1x128x128xbf16>
    %290 = vector.shape_cast %289 : vector<1x128x128xbf16> to vector<128x128xbf16>
    %cst_120 = arith.constant dense<0.000000e+00> : vector<64x128xf32>
    %291 = tpu.matmul %288, %290, %cst_120 {dimension_numbers = #tpu.dot_dimension_numbers<[1], [0], [0], [1], [0, 0, 1, 1], [], []>} : vector<64x128xbf16>, vector<128x128xbf16>, vector<64x128xf32> -> vector<64x128xf32>
    %292 = arith.addf %285, %291 : vector<64x128xf32>
    %293 = vector.extract_strided_slice %102 {offsets = [2, 1, 0], sizes = [8, 8, 128], strides = [1, 1, 1]} : vector<10x10x128xf32> to vector<8x8x128xf32>
    %294 = vector.shape_cast %293 : vector<8x8x128xf32> to vector<64x128xf32>
    %295 = arith.truncf %294 : vector<64x128xf32> to vector<64x128xbf16>
    %c23 = arith.constant 23 : index
    %c0_121 = arith.constant 0 : index
    %c0_122 = arith.constant 0 : index
    %296 = vector.load %arg3[%c23, %c0_121, %c0_122] : memref<25x128x128xbf16, #tpu.memory_space<vmem>>, vector<1x128x128xbf16>
    %297 = vector.shape_cast %296 : vector<1x128x128xbf16> to vector<128x128xbf16>
    %cst_123 = arith.constant dense<0.000000e+00> : vector<64x128xf32>
    %298 = tpu.matmul %295, %297, %cst_123 {dimension_numbers = #tpu.dot_dimension_numbers<[1], [0], [0], [1], [0, 0, 1, 1], [], []>} : vector<64x128xbf16>, vector<128x128xbf16>, vector<64x128xf32> -> vector<64x128xf32>
    %299 = arith.addf %292, %298 : vector<64x128xf32>
    %300 = vector.extract_strided_slice %89 {offsets = [2, 2, 0], sizes = [8, 8, 128], strides = [1, 1, 1]} : vector<10x10x128xf32> to vector<8x8x128xf32>
    %301 = vector.shape_cast %300 : vector<8x8x128xf32> to vector<64x128xf32>
    %302 = arith.truncf %301 : vector<64x128xf32> to vector<64x128xbf16>
    %c24 = arith.constant 24 : index
    %c0_124 = arith.constant 0 : index
    %c0_125 = arith.constant 0 : index
    %303 = vector.load %arg3[%c24, %c0_124, %c0_125] : memref<25x128x128xbf16, #tpu.memory_space<vmem>>, vector<1x128x128xbf16>
    %304 = vector.shape_cast %303 : vector<1x128x128xbf16> to vector<128x128xbf16>
    %cst_126 = arith.constant dense<0.000000e+00> : vector<64x128xf32>
    %305 = tpu.matmul %302, %304, %cst_126 {dimension_numbers = #tpu.dot_dimension_numbers<[1], [0], [0], [1], [0, 0, 1, 1], [], []>} : vector<64x128xbf16>, vector<128x128xbf16>, vector<64x128xf32> -> vector<64x128xf32>
    %306 = arith.addf %299, %305 : vector<64x128xf32>
    %307 = vector.broadcast %73 : vector<1x128xf32> to vector<64x128xf32>
    %308 = arith.addf %306, %307 : vector<64x128xf32>
    %cst_127 = arith.constant 0.000000e+00 : f32
    %309 = vector.broadcast %cst_127 : f32 to vector<64x128xf32>
    %310 = arith.maximumf %308, %309 : vector<64x128xf32>
    %311 = vector.extract_strided_slice %0 {offsets = [2, 0], sizes = [1, 128], strides = [1, 1]} : vector<8x128xf32> to vector<1x128xf32>
    %312 = vector.shape_cast %310 : vector<64x128xf32> to vector<4x2x8x128xf32>
    %313 = vector.extract_strided_slice %312 {offsets = [0, 0, 0, 0], sizes = [4, 1, 8, 128], strides = [1, 1, 1, 1]} : vector<4x2x8x128xf32> to vector<4x1x8x128xf32>
    %314 = vector.shape_cast %313 : vector<4x1x8x128xf32> to vector<4x8x128xf32>
    %315 = vector.extract_strided_slice %314 {offsets = [0, 0, 0], sizes = [4, 1, 128], strides = [1, 1, 1]} : vector<4x8x128xf32> to vector<4x1x128xf32>
    %316 = vector.extract_strided_slice %314 {offsets = [0, 2, 0], sizes = [4, 1, 128], strides = [1, 1, 1]} : vector<4x8x128xf32> to vector<4x1x128xf32>
    %317 = vector.extract_strided_slice %314 {offsets = [0, 4, 0], sizes = [4, 1, 128], strides = [1, 1, 1]} : vector<4x8x128xf32> to vector<4x1x128xf32>
    %318 = vector.extract_strided_slice %314 {offsets = [0, 6, 0], sizes = [4, 1, 128], strides = [1, 1, 1]} : vector<4x8x128xf32> to vector<4x1x128xf32>
    %319 = tpu.concatenate %315, %316, %317, %318 in 1 : vector<4x1x128xf32>, vector<4x1x128xf32>, vector<4x1x128xf32>, vector<4x1x128xf32> -> vector<4x4x128xf32>
    %cst_128 = arith.constant 0.000000e+00 : f32
    %320 = vector.broadcast %cst_128 : f32 to vector<4x1x128xf32>
    %321 = tpu.concatenate %320, %319, %320 in 1 : vector<4x1x128xf32>, vector<4x4x128xf32>, vector<4x1x128xf32> -> vector<4x6x128xf32>
    %cst_129 = arith.constant 0.000000e+00 : f32
    %322 = vector.broadcast %cst_129 : f32 to vector<1x6x128xf32>
    %323 = tpu.concatenate %322, %321, %322 in 0 : vector<1x6x128xf32>, vector<4x6x128xf32>, vector<1x6x128xf32> -> vector<6x6x128xf32>
    %324 = vector.extract_strided_slice %314 {offsets = [0, 1, 0], sizes = [4, 1, 128], strides = [1, 1, 1]} : vector<4x8x128xf32> to vector<4x1x128xf32>
    %325 = vector.extract_strided_slice %314 {offsets = [0, 3, 0], sizes = [4, 1, 128], strides = [1, 1, 1]} : vector<4x8x128xf32> to vector<4x1x128xf32>
    %326 = vector.extract_strided_slice %314 {offsets = [0, 5, 0], sizes = [4, 1, 128], strides = [1, 1, 1]} : vector<4x8x128xf32> to vector<4x1x128xf32>
    %327 = vector.extract_strided_slice %314 {offsets = [0, 7, 0], sizes = [4, 1, 128], strides = [1, 1, 1]} : vector<4x8x128xf32> to vector<4x1x128xf32>
    %328 = tpu.concatenate %324, %325, %326, %327 in 1 : vector<4x1x128xf32>, vector<4x1x128xf32>, vector<4x1x128xf32>, vector<4x1x128xf32> -> vector<4x4x128xf32>
    %cst_130 = arith.constant 0.000000e+00 : f32
    %329 = vector.broadcast %cst_130 : f32 to vector<4x1x128xf32>
    %330 = tpu.concatenate %329, %328, %329 in 1 : vector<4x1x128xf32>, vector<4x4x128xf32>, vector<4x1x128xf32> -> vector<4x6x128xf32>
    %cst_131 = arith.constant 0.000000e+00 : f32
    %331 = vector.broadcast %cst_131 : f32 to vector<1x6x128xf32>
    %332 = tpu.concatenate %331, %330, %331 in 0 : vector<1x6x128xf32>, vector<4x6x128xf32>, vector<1x6x128xf32> -> vector<6x6x128xf32>
    %333 = vector.extract_strided_slice %312 {offsets = [0, 1, 0, 0], sizes = [4, 1, 8, 128], strides = [1, 1, 1, 1]} : vector<4x2x8x128xf32> to vector<4x1x8x128xf32>
    %334 = vector.shape_cast %333 : vector<4x1x8x128xf32> to vector<4x8x128xf32>
    %335 = vector.extract_strided_slice %334 {offsets = [0, 0, 0], sizes = [4, 1, 128], strides = [1, 1, 1]} : vector<4x8x128xf32> to vector<4x1x128xf32>
    %336 = vector.extract_strided_slice %334 {offsets = [0, 2, 0], sizes = [4, 1, 128], strides = [1, 1, 1]} : vector<4x8x128xf32> to vector<4x1x128xf32>
    %337 = vector.extract_strided_slice %334 {offsets = [0, 4, 0], sizes = [4, 1, 128], strides = [1, 1, 1]} : vector<4x8x128xf32> to vector<4x1x128xf32>
    %338 = vector.extract_strided_slice %334 {offsets = [0, 6, 0], sizes = [4, 1, 128], strides = [1, 1, 1]} : vector<4x8x128xf32> to vector<4x1x128xf32>
    %339 = tpu.concatenate %335, %336, %337, %338 in 1 : vector<4x1x128xf32>, vector<4x1x128xf32>, vector<4x1x128xf32>, vector<4x1x128xf32> -> vector<4x4x128xf32>
    %cst_132 = arith.constant 0.000000e+00 : f32
    %340 = vector.broadcast %cst_132 : f32 to vector<4x1x128xf32>
    %341 = tpu.concatenate %340, %339, %340 in 1 : vector<4x1x128xf32>, vector<4x4x128xf32>, vector<4x1x128xf32> -> vector<4x6x128xf32>
    %cst_133 = arith.constant 0.000000e+00 : f32
    %342 = vector.broadcast %cst_133 : f32 to vector<1x6x128xf32>
    %343 = tpu.concatenate %342, %341, %342 in 0 : vector<1x6x128xf32>, vector<4x6x128xf32>, vector<1x6x128xf32> -> vector<6x6x128xf32>
    %344 = vector.extract_strided_slice %334 {offsets = [0, 1, 0], sizes = [4, 1, 128], strides = [1, 1, 1]} : vector<4x8x128xf32> to vector<4x1x128xf32>
    %345 = vector.extract_strided_slice %334 {offsets = [0, 3, 0], sizes = [4, 1, 128], strides = [1, 1, 1]} : vector<4x8x128xf32> to vector<4x1x128xf32>
    %346 = vector.extract_strided_slice %334 {offsets = [0, 5, 0], sizes = [4, 1, 128], strides = [1, 1, 1]} : vector<4x8x128xf32> to vector<4x1x128xf32>
    %347 = vector.extract_strided_slice %334 {offsets = [0, 7, 0], sizes = [4, 1, 128], strides = [1, 1, 1]} : vector<4x8x128xf32> to vector<4x1x128xf32>
    %348 = tpu.concatenate %344, %345, %346, %347 in 1 : vector<4x1x128xf32>, vector<4x1x128xf32>, vector<4x1x128xf32>, vector<4x1x128xf32> -> vector<4x4x128xf32>
    %cst_134 = arith.constant 0.000000e+00 : f32
    %349 = vector.broadcast %cst_134 : f32 to vector<4x1x128xf32>
    %350 = tpu.concatenate %349, %348, %349 in 1 : vector<4x1x128xf32>, vector<4x4x128xf32>, vector<4x1x128xf32> -> vector<4x6x128xf32>
    %cst_135 = arith.constant 0.000000e+00 : f32
    %351 = vector.broadcast %cst_135 : f32 to vector<1x6x128xf32>
    %352 = tpu.concatenate %351, %350, %351 in 0 : vector<1x6x128xf32>, vector<4x6x128xf32>, vector<1x6x128xf32> -> vector<6x6x128xf32>
    %cst_136 = arith.constant 0.000000e+00 : f32
    %353 = vector.broadcast %cst_136 : f32 to vector<16x128xf32>
    %354 = vector.extract_strided_slice %323 {offsets = [0, 0, 0], sizes = [4, 4, 128], strides = [1, 1, 1]} : vector<6x6x128xf32> to vector<4x4x128xf32>
    %355 = vector.extract_strided_slice %354 {offsets = [0, 0, 0], sizes = [1, 4, 128], strides = [1, 1, 1]} : vector<4x4x128xf32> to vector<1x4x128xf32>
    %356 = vector.shape_cast %355 : vector<1x4x128xf32> to vector<4x128xf32>
    %357 = vector.extract_strided_slice %354 {offsets = [1, 0, 0], sizes = [1, 4, 128], strides = [1, 1, 1]} : vector<4x4x128xf32> to vector<1x4x128xf32>
    %358 = vector.shape_cast %357 : vector<1x4x128xf32> to vector<4x128xf32>
    %359 = vector.extract_strided_slice %354 {offsets = [2, 0, 0], sizes = [1, 4, 128], strides = [1, 1, 1]} : vector<4x4x128xf32> to vector<1x4x128xf32>
    %360 = vector.shape_cast %359 : vector<1x4x128xf32> to vector<4x128xf32>
    %361 = vector.extract_strided_slice %354 {offsets = [3, 0, 0], sizes = [1, 4, 128], strides = [1, 1, 1]} : vector<4x4x128xf32> to vector<1x4x128xf32>
    %362 = vector.shape_cast %361 : vector<1x4x128xf32> to vector<4x128xf32>
    %363 = tpu.concatenate %356, %358, %360, %362 in 0 : vector<4x128xf32>, vector<4x128xf32>, vector<4x128xf32>, vector<4x128xf32> -> vector<16x128xf32>
    %364 = arith.truncf %363 : vector<16x128xf32> to vector<16x128xbf16>
    %c0_137 = arith.constant 0 : index
    %c0_138 = arith.constant 0 : index
    %c0_139 = arith.constant 0 : index
    %365 = vector.load %arg4[%c0_137, %c0_138, %c0_139] : memref<25x128x128xbf16, #tpu.memory_space<vmem>>, vector<1x128x128xbf16>
    %366 = vector.shape_cast %365 : vector<1x128x128xbf16> to vector<128x128xbf16>
    %cst_140 = arith.constant dense<0.000000e+00> : vector<16x128xf32>
    %367 = tpu.matmul %364, %366, %cst_140 {dimension_numbers = #tpu.dot_dimension_numbers<[1], [0], [0], [1], [0, 0, 1, 1], [], []>} : vector<16x128xbf16>, vector<128x128xbf16>, vector<16x128xf32> -> vector<16x128xf32>
    %368 = arith.addf %353, %367 : vector<16x128xf32>
    %369 = vector.extract_strided_slice %332 {offsets = [0, 0, 0], sizes = [4, 4, 128], strides = [1, 1, 1]} : vector<6x6x128xf32> to vector<4x4x128xf32>
    %370 = vector.extract_strided_slice %369 {offsets = [0, 0, 0], sizes = [1, 4, 128], strides = [1, 1, 1]} : vector<4x4x128xf32> to vector<1x4x128xf32>
    %371 = vector.shape_cast %370 : vector<1x4x128xf32> to vector<4x128xf32>
    %372 = vector.extract_strided_slice %369 {offsets = [1, 0, 0], sizes = [1, 4, 128], strides = [1, 1, 1]} : vector<4x4x128xf32> to vector<1x4x128xf32>
    %373 = vector.shape_cast %372 : vector<1x4x128xf32> to vector<4x128xf32>
    %374 = vector.extract_strided_slice %369 {offsets = [2, 0, 0], sizes = [1, 4, 128], strides = [1, 1, 1]} : vector<4x4x128xf32> to vector<1x4x128xf32>
    %375 = vector.shape_cast %374 : vector<1x4x128xf32> to vector<4x128xf32>
    %376 = vector.extract_strided_slice %369 {offsets = [3, 0, 0], sizes = [1, 4, 128], strides = [1, 1, 1]} : vector<4x4x128xf32> to vector<1x4x128xf32>
    %377 = vector.shape_cast %376 : vector<1x4x128xf32> to vector<4x128xf32>
    %378 = tpu.concatenate %371, %373, %375, %377 in 0 : vector<4x128xf32>, vector<4x128xf32>, vector<4x128xf32>, vector<4x128xf32> -> vector<16x128xf32>
    %379 = arith.truncf %378 : vector<16x128xf32> to vector<16x128xbf16>
    %c1_141 = arith.constant 1 : index
    %c0_142 = arith.constant 0 : index
    %c0_143 = arith.constant 0 : index
    %380 = vector.load %arg4[%c1_141, %c0_142, %c0_143] : memref<25x128x128xbf16, #tpu.memory_space<vmem>>, vector<1x128x128xbf16>
    %381 = vector.shape_cast %380 : vector<1x128x128xbf16> to vector<128x128xbf16>
    %cst_144 = arith.constant dense<0.000000e+00> : vector<16x128xf32>
    %382 = tpu.matmul %379, %381, %cst_144 {dimension_numbers = #tpu.dot_dimension_numbers<[1], [0], [0], [1], [0, 0, 1, 1], [], []>} : vector<16x128xbf16>, vector<128x128xbf16>, vector<16x128xf32> -> vector<16x128xf32>
    %383 = arith.addf %368, %382 : vector<16x128xf32>
    %384 = vector.extract_strided_slice %323 {offsets = [0, 1, 0], sizes = [4, 4, 128], strides = [1, 1, 1]} : vector<6x6x128xf32> to vector<4x4x128xf32>
    %385 = vector.extract_strided_slice %384 {offsets = [0, 0, 0], sizes = [1, 4, 128], strides = [1, 1, 1]} : vector<4x4x128xf32> to vector<1x4x128xf32>
    %386 = vector.shape_cast %385 : vector<1x4x128xf32> to vector<4x128xf32>
    %387 = vector.extract_strided_slice %384 {offsets = [1, 0, 0], sizes = [1, 4, 128], strides = [1, 1, 1]} : vector<4x4x128xf32> to vector<1x4x128xf32>
    %388 = vector.shape_cast %387 : vector<1x4x128xf32> to vector<4x128xf32>
    %389 = vector.extract_strided_slice %384 {offsets = [2, 0, 0], sizes = [1, 4, 128], strides = [1, 1, 1]} : vector<4x4x128xf32> to vector<1x4x128xf32>
    %390 = vector.shape_cast %389 : vector<1x4x128xf32> to vector<4x128xf32>
    %391 = vector.extract_strided_slice %384 {offsets = [3, 0, 0], sizes = [1, 4, 128], strides = [1, 1, 1]} : vector<4x4x128xf32> to vector<1x4x128xf32>
    %392 = vector.shape_cast %391 : vector<1x4x128xf32> to vector<4x128xf32>
    %393 = tpu.concatenate %386, %388, %390, %392 in 0 : vector<4x128xf32>, vector<4x128xf32>, vector<4x128xf32>, vector<4x128xf32> -> vector<16x128xf32>
    %394 = arith.truncf %393 : vector<16x128xf32> to vector<16x128xbf16>
    %c2_145 = arith.constant 2 : index
    %c0_146 = arith.constant 0 : index
    %c0_147 = arith.constant 0 : index
    %395 = vector.load %arg4[%c2_145, %c0_146, %c0_147] : memref<25x128x128xbf16, #tpu.memory_space<vmem>>, vector<1x128x128xbf16>
    %396 = vector.shape_cast %395 : vector<1x128x128xbf16> to vector<128x128xbf16>
    %cst_148 = arith.constant dense<0.000000e+00> : vector<16x128xf32>
    %397 = tpu.matmul %394, %396, %cst_148 {dimension_numbers = #tpu.dot_dimension_numbers<[1], [0], [0], [1], [0, 0, 1, 1], [], []>} : vector<16x128xbf16>, vector<128x128xbf16>, vector<16x128xf32> -> vector<16x128xf32>
    %398 = arith.addf %383, %397 : vector<16x128xf32>
    %399 = vector.extract_strided_slice %332 {offsets = [0, 1, 0], sizes = [4, 4, 128], strides = [1, 1, 1]} : vector<6x6x128xf32> to vector<4x4x128xf32>
    %400 = vector.extract_strided_slice %399 {offsets = [0, 0, 0], sizes = [1, 4, 128], strides = [1, 1, 1]} : vector<4x4x128xf32> to vector<1x4x128xf32>
    %401 = vector.shape_cast %400 : vector<1x4x128xf32> to vector<4x128xf32>
    %402 = vector.extract_strided_slice %399 {offsets = [1, 0, 0], sizes = [1, 4, 128], strides = [1, 1, 1]} : vector<4x4x128xf32> to vector<1x4x128xf32>
    %403 = vector.shape_cast %402 : vector<1x4x128xf32> to vector<4x128xf32>
    %404 = vector.extract_strided_slice %399 {offsets = [2, 0, 0], sizes = [1, 4, 128], strides = [1, 1, 1]} : vector<4x4x128xf32> to vector<1x4x128xf32>
    %405 = vector.shape_cast %404 : vector<1x4x128xf32> to vector<4x128xf32>
    %406 = vector.extract_strided_slice %399 {offsets = [3, 0, 0], sizes = [1, 4, 128], strides = [1, 1, 1]} : vector<4x4x128xf32> to vector<1x4x128xf32>
    %407 = vector.shape_cast %406 : vector<1x4x128xf32> to vector<4x128xf32>
    %408 = tpu.concatenate %401, %403, %405, %407 in 0 : vector<4x128xf32>, vector<4x128xf32>, vector<4x128xf32>, vector<4x128xf32> -> vector<16x128xf32>
    %409 = arith.truncf %408 : vector<16x128xf32> to vector<16x128xbf16>
    %c3_149 = arith.constant 3 : index
    %c0_150 = arith.constant 0 : index
    %c0_151 = arith.constant 0 : index
    %410 = vector.load %arg4[%c3_149, %c0_150, %c0_151] : memref<25x128x128xbf16, #tpu.memory_space<vmem>>, vector<1x128x128xbf16>
    %411 = vector.shape_cast %410 : vector<1x128x128xbf16> to vector<128x128xbf16>
    %cst_152 = arith.constant dense<0.000000e+00> : vector<16x128xf32>
    %412 = tpu.matmul %409, %411, %cst_152 {dimension_numbers = #tpu.dot_dimension_numbers<[1], [0], [0], [1], [0, 0, 1, 1], [], []>} : vector<16x128xbf16>, vector<128x128xbf16>, vector<16x128xf32> -> vector<16x128xf32>
    %413 = arith.addf %398, %412 : vector<16x128xf32>
    %414 = vector.extract_strided_slice %323 {offsets = [0, 2, 0], sizes = [4, 4, 128], strides = [1, 1, 1]} : vector<6x6x128xf32> to vector<4x4x128xf32>
    %415 = vector.extract_strided_slice %414 {offsets = [0, 0, 0], sizes = [1, 4, 128], strides = [1, 1, 1]} : vector<4x4x128xf32> to vector<1x4x128xf32>
    %416 = vector.shape_cast %415 : vector<1x4x128xf32> to vector<4x128xf32>
    %417 = vector.extract_strided_slice %414 {offsets = [1, 0, 0], sizes = [1, 4, 128], strides = [1, 1, 1]} : vector<4x4x128xf32> to vector<1x4x128xf32>
    %418 = vector.shape_cast %417 : vector<1x4x128xf32> to vector<4x128xf32>
    %419 = vector.extract_strided_slice %414 {offsets = [2, 0, 0], sizes = [1, 4, 128], strides = [1, 1, 1]} : vector<4x4x128xf32> to vector<1x4x128xf32>
    %420 = vector.shape_cast %419 : vector<1x4x128xf32> to vector<4x128xf32>
    %421 = vector.extract_strided_slice %414 {offsets = [3, 0, 0], sizes = [1, 4, 128], strides = [1, 1, 1]} : vector<4x4x128xf32> to vector<1x4x128xf32>
    %422 = vector.shape_cast %421 : vector<1x4x128xf32> to vector<4x128xf32>
    %423 = tpu.concatenate %416, %418, %420, %422 in 0 : vector<4x128xf32>, vector<4x128xf32>, vector<4x128xf32>, vector<4x128xf32> -> vector<16x128xf32>
    %424 = arith.truncf %423 : vector<16x128xf32> to vector<16x128xbf16>
    %c4_153 = arith.constant 4 : index
    %c0_154 = arith.constant 0 : index
    %c0_155 = arith.constant 0 : index
    %425 = vector.load %arg4[%c4_153, %c0_154, %c0_155] : memref<25x128x128xbf16, #tpu.memory_space<vmem>>, vector<1x128x128xbf16>
    %426 = vector.shape_cast %425 : vector<1x128x128xbf16> to vector<128x128xbf16>
    %cst_156 = arith.constant dense<0.000000e+00> : vector<16x128xf32>
    %427 = tpu.matmul %424, %426, %cst_156 {dimension_numbers = #tpu.dot_dimension_numbers<[1], [0], [0], [1], [0, 0, 1, 1], [], []>} : vector<16x128xbf16>, vector<128x128xbf16>, vector<16x128xf32> -> vector<16x128xf32>
    %428 = arith.addf %413, %427 : vector<16x128xf32>
    %429 = vector.extract_strided_slice %343 {offsets = [0, 0, 0], sizes = [4, 4, 128], strides = [1, 1, 1]} : vector<6x6x128xf32> to vector<4x4x128xf32>
    %430 = vector.extract_strided_slice %429 {offsets = [0, 0, 0], sizes = [1, 4, 128], strides = [1, 1, 1]} : vector<4x4x128xf32> to vector<1x4x128xf32>
    %431 = vector.shape_cast %430 : vector<1x4x128xf32> to vector<4x128xf32>
    %432 = vector.extract_strided_slice %429 {offsets = [1, 0, 0], sizes = [1, 4, 128], strides = [1, 1, 1]} : vector<4x4x128xf32> to vector<1x4x128xf32>
    %433 = vector.shape_cast %432 : vector<1x4x128xf32> to vector<4x128xf32>
    %434 = vector.extract_strided_slice %429 {offsets = [2, 0, 0], sizes = [1, 4, 128], strides = [1, 1, 1]} : vector<4x4x128xf32> to vector<1x4x128xf32>
    %435 = vector.shape_cast %434 : vector<1x4x128xf32> to vector<4x128xf32>
    %436 = vector.extract_strided_slice %429 {offsets = [3, 0, 0], sizes = [1, 4, 128], strides = [1, 1, 1]} : vector<4x4x128xf32> to vector<1x4x128xf32>
    %437 = vector.shape_cast %436 : vector<1x4x128xf32> to vector<4x128xf32>
    %438 = tpu.concatenate %431, %433, %435, %437 in 0 : vector<4x128xf32>, vector<4x128xf32>, vector<4x128xf32>, vector<4x128xf32> -> vector<16x128xf32>
    %439 = arith.truncf %438 : vector<16x128xf32> to vector<16x128xbf16>
    %c5_157 = arith.constant 5 : index
    %c0_158 = arith.constant 0 : index
    %c0_159 = arith.constant 0 : index
    %440 = vector.load %arg4[%c5_157, %c0_158, %c0_159] : memref<25x128x128xbf16, #tpu.memory_space<vmem>>, vector<1x128x128xbf16>
    %441 = vector.shape_cast %440 : vector<1x128x128xbf16> to vector<128x128xbf16>
    %cst_160 = arith.constant dense<0.000000e+00> : vector<16x128xf32>
    %442 = tpu.matmul %439, %441, %cst_160 {dimension_numbers = #tpu.dot_dimension_numbers<[1], [0], [0], [1], [0, 0, 1, 1], [], []>} : vector<16x128xbf16>, vector<128x128xbf16>, vector<16x128xf32> -> vector<16x128xf32>
    %443 = arith.addf %428, %442 : vector<16x128xf32>
    %444 = vector.extract_strided_slice %352 {offsets = [0, 0, 0], sizes = [4, 4, 128], strides = [1, 1, 1]} : vector<6x6x128xf32> to vector<4x4x128xf32>
    %445 = vector.extract_strided_slice %444 {offsets = [0, 0, 0], sizes = [1, 4, 128], strides = [1, 1, 1]} : vector<4x4x128xf32> to vector<1x4x128xf32>
    %446 = vector.shape_cast %445 : vector<1x4x128xf32> to vector<4x128xf32>
    %447 = vector.extract_strided_slice %444 {offsets = [1, 0, 0], sizes = [1, 4, 128], strides = [1, 1, 1]} : vector<4x4x128xf32> to vector<1x4x128xf32>
    %448 = vector.shape_cast %447 : vector<1x4x128xf32> to vector<4x128xf32>
    %449 = vector.extract_strided_slice %444 {offsets = [2, 0, 0], sizes = [1, 4, 128], strides = [1, 1, 1]} : vector<4x4x128xf32> to vector<1x4x128xf32>
    %450 = vector.shape_cast %449 : vector<1x4x128xf32> to vector<4x128xf32>
    %451 = vector.extract_strided_slice %444 {offsets = [3, 0, 0], sizes = [1, 4, 128], strides = [1, 1, 1]} : vector<4x4x128xf32> to vector<1x4x128xf32>
    %452 = vector.shape_cast %451 : vector<1x4x128xf32> to vector<4x128xf32>
    %453 = tpu.concatenate %446, %448, %450, %452 in 0 : vector<4x128xf32>, vector<4x128xf32>, vector<4x128xf32>, vector<4x128xf32> -> vector<16x128xf32>
    %454 = arith.truncf %453 : vector<16x128xf32> to vector<16x128xbf16>
    %c6_161 = arith.constant 6 : index
    %c0_162 = arith.constant 0 : index
    %c0_163 = arith.constant 0 : index
    %455 = vector.load %arg4[%c6_161, %c0_162, %c0_163] : memref<25x128x128xbf16, #tpu.memory_space<vmem>>, vector<1x128x128xbf16>
    %456 = vector.shape_cast %455 : vector<1x128x128xbf16> to vector<128x128xbf16>
    %cst_164 = arith.constant dense<0.000000e+00> : vector<16x128xf32>
    %457 = tpu.matmul %454, %456, %cst_164 {dimension_numbers = #tpu.dot_dimension_numbers<[1], [0], [0], [1], [0, 0, 1, 1], [], []>} : vector<16x128xbf16>, vector<128x128xbf16>, vector<16x128xf32> -> vector<16x128xf32>
    %458 = arith.addf %443, %457 : vector<16x128xf32>
    %459 = vector.extract_strided_slice %343 {offsets = [0, 1, 0], sizes = [4, 4, 128], strides = [1, 1, 1]} : vector<6x6x128xf32> to vector<4x4x128xf32>
    %460 = vector.extract_strided_slice %459 {offsets = [0, 0, 0], sizes = [1, 4, 128], strides = [1, 1, 1]} : vector<4x4x128xf32> to vector<1x4x128xf32>
    %461 = vector.shape_cast %460 : vector<1x4x128xf32> to vector<4x128xf32>
    %462 = vector.extract_strided_slice %459 {offsets = [1, 0, 0], sizes = [1, 4, 128], strides = [1, 1, 1]} : vector<4x4x128xf32> to vector<1x4x128xf32>
    %463 = vector.shape_cast %462 : vector<1x4x128xf32> to vector<4x128xf32>
    %464 = vector.extract_strided_slice %459 {offsets = [2, 0, 0], sizes = [1, 4, 128], strides = [1, 1, 1]} : vector<4x4x128xf32> to vector<1x4x128xf32>
    %465 = vector.shape_cast %464 : vector<1x4x128xf32> to vector<4x128xf32>
    %466 = vector.extract_strided_slice %459 {offsets = [3, 0, 0], sizes = [1, 4, 128], strides = [1, 1, 1]} : vector<4x4x128xf32> to vector<1x4x128xf32>
    %467 = vector.shape_cast %466 : vector<1x4x128xf32> to vector<4x128xf32>
    %468 = tpu.concatenate %461, %463, %465, %467 in 0 : vector<4x128xf32>, vector<4x128xf32>, vector<4x128xf32>, vector<4x128xf32> -> vector<16x128xf32>
    %469 = arith.truncf %468 : vector<16x128xf32> to vector<16x128xbf16>
    %c7_165 = arith.constant 7 : index
    %c0_166 = arith.constant 0 : index
    %c0_167 = arith.constant 0 : index
    %470 = vector.load %arg4[%c7_165, %c0_166, %c0_167] : memref<25x128x128xbf16, #tpu.memory_space<vmem>>, vector<1x128x128xbf16>
    %471 = vector.shape_cast %470 : vector<1x128x128xbf16> to vector<128x128xbf16>
    %cst_168 = arith.constant dense<0.000000e+00> : vector<16x128xf32>
    %472 = tpu.matmul %469, %471, %cst_168 {dimension_numbers = #tpu.dot_dimension_numbers<[1], [0], [0], [1], [0, 0, 1, 1], [], []>} : vector<16x128xbf16>, vector<128x128xbf16>, vector<16x128xf32> -> vector<16x128xf32>
    %473 = arith.addf %458, %472 : vector<16x128xf32>
    %474 = vector.extract_strided_slice %352 {offsets = [0, 1, 0], sizes = [4, 4, 128], strides = [1, 1, 1]} : vector<6x6x128xf32> to vector<4x4x128xf32>
    %475 = vector.extract_strided_slice %474 {offsets = [0, 0, 0], sizes = [1, 4, 128], strides = [1, 1, 1]} : vector<4x4x128xf32> to vector<1x4x128xf32>
    %476 = vector.shape_cast %475 : vector<1x4x128xf32> to vector<4x128xf32>
    %477 = vector.extract_strided_slice %474 {offsets = [1, 0, 0], sizes = [1, 4, 128], strides = [1, 1, 1]} : vector<4x4x128xf32> to vector<1x4x128xf32>
    %478 = vector.shape_cast %477 : vector<1x4x128xf32> to vector<4x128xf32>
    %479 = vector.extract_strided_slice %474 {offsets = [2, 0, 0], sizes = [1, 4, 128], strides = [1, 1, 1]} : vector<4x4x128xf32> to vector<1x4x128xf32>
    %480 = vector.shape_cast %479 : vector<1x4x128xf32> to vector<4x128xf32>
    %481 = vector.extract_strided_slice %474 {offsets = [3, 0, 0], sizes = [1, 4, 128], strides = [1, 1, 1]} : vector<4x4x128xf32> to vector<1x4x128xf32>
    %482 = vector.shape_cast %481 : vector<1x4x128xf32> to vector<4x128xf32>
    %483 = tpu.concatenate %476, %478, %480, %482 in 0 : vector<4x128xf32>, vector<4x128xf32>, vector<4x128xf32>, vector<4x128xf32> -> vector<16x128xf32>
    %484 = arith.truncf %483 : vector<16x128xf32> to vector<16x128xbf16>
    %c8_169 = arith.constant 8 : index
    %c0_170 = arith.constant 0 : index
    %c0_171 = arith.constant 0 : index
    %485 = vector.load %arg4[%c8_169, %c0_170, %c0_171] : memref<25x128x128xbf16, #tpu.memory_space<vmem>>, vector<1x128x128xbf16>
    %486 = vector.shape_cast %485 : vector<1x128x128xbf16> to vector<128x128xbf16>
    %cst_172 = arith.constant dense<0.000000e+00> : vector<16x128xf32>
    %487 = tpu.matmul %484, %486, %cst_172 {dimension_numbers = #tpu.dot_dimension_numbers<[1], [0], [0], [1], [0, 0, 1, 1], [], []>} : vector<16x128xbf16>, vector<128x128xbf16>, vector<16x128xf32> -> vector<16x128xf32>
    %488 = arith.addf %473, %487 : vector<16x128xf32>
    %489 = vector.extract_strided_slice %343 {offsets = [0, 2, 0], sizes = [4, 4, 128], strides = [1, 1, 1]} : vector<6x6x128xf32> to vector<4x4x128xf32>
    %490 = vector.extract_strided_slice %489 {offsets = [0, 0, 0], sizes = [1, 4, 128], strides = [1, 1, 1]} : vector<4x4x128xf32> to vector<1x4x128xf32>
    %491 = vector.shape_cast %490 : vector<1x4x128xf32> to vector<4x128xf32>
    %492 = vector.extract_strided_slice %489 {offsets = [1, 0, 0], sizes = [1, 4, 128], strides = [1, 1, 1]} : vector<4x4x128xf32> to vector<1x4x128xf32>
    %493 = vector.shape_cast %492 : vector<1x4x128xf32> to vector<4x128xf32>
    %494 = vector.extract_strided_slice %489 {offsets = [2, 0, 0], sizes = [1, 4, 128], strides = [1, 1, 1]} : vector<4x4x128xf32> to vector<1x4x128xf32>
    %495 = vector.shape_cast %494 : vector<1x4x128xf32> to vector<4x128xf32>
    %496 = vector.extract_strided_slice %489 {offsets = [3, 0, 0], sizes = [1, 4, 128], strides = [1, 1, 1]} : vector<4x4x128xf32> to vector<1x4x128xf32>
    %497 = vector.shape_cast %496 : vector<1x4x128xf32> to vector<4x128xf32>
    %498 = tpu.concatenate %491, %493, %495, %497 in 0 : vector<4x128xf32>, vector<4x128xf32>, vector<4x128xf32>, vector<4x128xf32> -> vector<16x128xf32>
    %499 = arith.truncf %498 : vector<16x128xf32> to vector<16x128xbf16>
    %c9_173 = arith.constant 9 : index
    %c0_174 = arith.constant 0 : index
    %c0_175 = arith.constant 0 : index
    %500 = vector.load %arg4[%c9_173, %c0_174, %c0_175] : memref<25x128x128xbf16, #tpu.memory_space<vmem>>, vector<1x128x128xbf16>
    %501 = vector.shape_cast %500 : vector<1x128x128xbf16> to vector<128x128xbf16>
    %cst_176 = arith.constant dense<0.000000e+00> : vector<16x128xf32>
    %502 = tpu.matmul %499, %501, %cst_176 {dimension_numbers = #tpu.dot_dimension_numbers<[1], [0], [0], [1], [0, 0, 1, 1], [], []>} : vector<16x128xbf16>, vector<128x128xbf16>, vector<16x128xf32> -> vector<16x128xf32>
    %503 = arith.addf %488, %502 : vector<16x128xf32>
    %504 = vector.extract_strided_slice %323 {offsets = [1, 0, 0], sizes = [4, 4, 128], strides = [1, 1, 1]} : vector<6x6x128xf32> to vector<4x4x128xf32>
    %505 = vector.extract_strided_slice %504 {offsets = [0, 0, 0], sizes = [1, 4, 128], strides = [1, 1, 1]} : vector<4x4x128xf32> to vector<1x4x128xf32>
    %506 = vector.shape_cast %505 : vector<1x4x128xf32> to vector<4x128xf32>
    %507 = vector.extract_strided_slice %504 {offsets = [1, 0, 0], sizes = [1, 4, 128], strides = [1, 1, 1]} : vector<4x4x128xf32> to vector<1x4x128xf32>
    %508 = vector.shape_cast %507 : vector<1x4x128xf32> to vector<4x128xf32>
    %509 = vector.extract_strided_slice %504 {offsets = [2, 0, 0], sizes = [1, 4, 128], strides = [1, 1, 1]} : vector<4x4x128xf32> to vector<1x4x128xf32>
    %510 = vector.shape_cast %509 : vector<1x4x128xf32> to vector<4x128xf32>
    %511 = vector.extract_strided_slice %504 {offsets = [3, 0, 0], sizes = [1, 4, 128], strides = [1, 1, 1]} : vector<4x4x128xf32> to vector<1x4x128xf32>
    %512 = vector.shape_cast %511 : vector<1x4x128xf32> to vector<4x128xf32>
    %513 = tpu.concatenate %506, %508, %510, %512 in 0 : vector<4x128xf32>, vector<4x128xf32>, vector<4x128xf32>, vector<4x128xf32> -> vector<16x128xf32>
    %514 = arith.truncf %513 : vector<16x128xf32> to vector<16x128xbf16>
    %c10_177 = arith.constant 10 : index
    %c0_178 = arith.constant 0 : index
    %c0_179 = arith.constant 0 : index
    %515 = vector.load %arg4[%c10_177, %c0_178, %c0_179] : memref<25x128x128xbf16, #tpu.memory_space<vmem>>, vector<1x128x128xbf16>
    %516 = vector.shape_cast %515 : vector<1x128x128xbf16> to vector<128x128xbf16>
    %cst_180 = arith.constant dense<0.000000e+00> : vector<16x128xf32>
    %517 = tpu.matmul %514, %516, %cst_180 {dimension_numbers = #tpu.dot_dimension_numbers<[1], [0], [0], [1], [0, 0, 1, 1], [], []>} : vector<16x128xbf16>, vector<128x128xbf16>, vector<16x128xf32> -> vector<16x128xf32>
    %518 = arith.addf %503, %517 : vector<16x128xf32>
    %519 = vector.extract_strided_slice %332 {offsets = [1, 0, 0], sizes = [4, 4, 128], strides = [1, 1, 1]} : vector<6x6x128xf32> to vector<4x4x128xf32>
    %520 = vector.extract_strided_slice %519 {offsets = [0, 0, 0], sizes = [1, 4, 128], strides = [1, 1, 1]} : vector<4x4x128xf32> to vector<1x4x128xf32>
    %521 = vector.shape_cast %520 : vector<1x4x128xf32> to vector<4x128xf32>
    %522 = vector.extract_strided_slice %519 {offsets = [1, 0, 0], sizes = [1, 4, 128], strides = [1, 1, 1]} : vector<4x4x128xf32> to vector<1x4x128xf32>
    %523 = vector.shape_cast %522 : vector<1x4x128xf32> to vector<4x128xf32>
    %524 = vector.extract_strided_slice %519 {offsets = [2, 0, 0], sizes = [1, 4, 128], strides = [1, 1, 1]} : vector<4x4x128xf32> to vector<1x4x128xf32>
    %525 = vector.shape_cast %524 : vector<1x4x128xf32> to vector<4x128xf32>
    %526 = vector.extract_strided_slice %519 {offsets = [3, 0, 0], sizes = [1, 4, 128], strides = [1, 1, 1]} : vector<4x4x128xf32> to vector<1x4x128xf32>
    %527 = vector.shape_cast %526 : vector<1x4x128xf32> to vector<4x128xf32>
    %528 = tpu.concatenate %521, %523, %525, %527 in 0 : vector<4x128xf32>, vector<4x128xf32>, vector<4x128xf32>, vector<4x128xf32> -> vector<16x128xf32>
    %529 = arith.truncf %528 : vector<16x128xf32> to vector<16x128xbf16>
    %c11_181 = arith.constant 11 : index
    %c0_182 = arith.constant 0 : index
    %c0_183 = arith.constant 0 : index
    %530 = vector.load %arg4[%c11_181, %c0_182, %c0_183] : memref<25x128x128xbf16, #tpu.memory_space<vmem>>, vector<1x128x128xbf16>
    %531 = vector.shape_cast %530 : vector<1x128x128xbf16> to vector<128x128xbf16>
    %cst_184 = arith.constant dense<0.000000e+00> : vector<16x128xf32>
    %532 = tpu.matmul %529, %531, %cst_184 {dimension_numbers = #tpu.dot_dimension_numbers<[1], [0], [0], [1], [0, 0, 1, 1], [], []>} : vector<16x128xbf16>, vector<128x128xbf16>, vector<16x128xf32> -> vector<16x128xf32>
    %533 = arith.addf %518, %532 : vector<16x128xf32>
    %534 = vector.extract_strided_slice %323 {offsets = [1, 1, 0], sizes = [4, 4, 128], strides = [1, 1, 1]} : vector<6x6x128xf32> to vector<4x4x128xf32>
    %535 = vector.extract_strided_slice %534 {offsets = [0, 0, 0], sizes = [1, 4, 128], strides = [1, 1, 1]} : vector<4x4x128xf32> to vector<1x4x128xf32>
    %536 = vector.shape_cast %535 : vector<1x4x128xf32> to vector<4x128xf32>
    %537 = vector.extract_strided_slice %534 {offsets = [1, 0, 0], sizes = [1, 4, 128], strides = [1, 1, 1]} : vector<4x4x128xf32> to vector<1x4x128xf32>
    %538 = vector.shape_cast %537 : vector<1x4x128xf32> to vector<4x128xf32>
    %539 = vector.extract_strided_slice %534 {offsets = [2, 0, 0], sizes = [1, 4, 128], strides = [1, 1, 1]} : vector<4x4x128xf32> to vector<1x4x128xf32>
    %540 = vector.shape_cast %539 : vector<1x4x128xf32> to vector<4x128xf32>
    %541 = vector.extract_strided_slice %534 {offsets = [3, 0, 0], sizes = [1, 4, 128], strides = [1, 1, 1]} : vector<4x4x128xf32> to vector<1x4x128xf32>
    %542 = vector.shape_cast %541 : vector<1x4x128xf32> to vector<4x128xf32>
    %543 = tpu.concatenate %536, %538, %540, %542 in 0 : vector<4x128xf32>, vector<4x128xf32>, vector<4x128xf32>, vector<4x128xf32> -> vector<16x128xf32>
    %544 = arith.truncf %543 : vector<16x128xf32> to vector<16x128xbf16>
    %c12_185 = arith.constant 12 : index
    %c0_186 = arith.constant 0 : index
    %c0_187 = arith.constant 0 : index
    %545 = vector.load %arg4[%c12_185, %c0_186, %c0_187] : memref<25x128x128xbf16, #tpu.memory_space<vmem>>, vector<1x128x128xbf16>
    %546 = vector.shape_cast %545 : vector<1x128x128xbf16> to vector<128x128xbf16>
    %cst_188 = arith.constant dense<0.000000e+00> : vector<16x128xf32>
    %547 = tpu.matmul %544, %546, %cst_188 {dimension_numbers = #tpu.dot_dimension_numbers<[1], [0], [0], [1], [0, 0, 1, 1], [], []>} : vector<16x128xbf16>, vector<128x128xbf16>, vector<16x128xf32> -> vector<16x128xf32>
    %548 = arith.addf %533, %547 : vector<16x128xf32>
    %549 = vector.extract_strided_slice %332 {offsets = [1, 1, 0], sizes = [4, 4, 128], strides = [1, 1, 1]} : vector<6x6x128xf32> to vector<4x4x128xf32>
    %550 = vector.extract_strided_slice %549 {offsets = [0, 0, 0], sizes = [1, 4, 128], strides = [1, 1, 1]} : vector<4x4x128xf32> to vector<1x4x128xf32>
    %551 = vector.shape_cast %550 : vector<1x4x128xf32> to vector<4x128xf32>
    %552 = vector.extract_strided_slice %549 {offsets = [1, 0, 0], sizes = [1, 4, 128], strides = [1, 1, 1]} : vector<4x4x128xf32> to vector<1x4x128xf32>
    %553 = vector.shape_cast %552 : vector<1x4x128xf32> to vector<4x128xf32>
    %554 = vector.extract_strided_slice %549 {offsets = [2, 0, 0], sizes = [1, 4, 128], strides = [1, 1, 1]} : vector<4x4x128xf32> to vector<1x4x128xf32>
    %555 = vector.shape_cast %554 : vector<1x4x128xf32> to vector<4x128xf32>
    %556 = vector.extract_strided_slice %549 {offsets = [3, 0, 0], sizes = [1, 4, 128], strides = [1, 1, 1]} : vector<4x4x128xf32> to vector<1x4x128xf32>
    %557 = vector.shape_cast %556 : vector<1x4x128xf32> to vector<4x128xf32>
    %558 = tpu.concatenate %551, %553, %555, %557 in 0 : vector<4x128xf32>, vector<4x128xf32>, vector<4x128xf32>, vector<4x128xf32> -> vector<16x128xf32>
    %559 = arith.truncf %558 : vector<16x128xf32> to vector<16x128xbf16>
    %c13_189 = arith.constant 13 : index
    %c0_190 = arith.constant 0 : index
    %c0_191 = arith.constant 0 : index
    %560 = vector.load %arg4[%c13_189, %c0_190, %c0_191] : memref<25x128x128xbf16, #tpu.memory_space<vmem>>, vector<1x128x128xbf16>
    %561 = vector.shape_cast %560 : vector<1x128x128xbf16> to vector<128x128xbf16>
    %cst_192 = arith.constant dense<0.000000e+00> : vector<16x128xf32>
    %562 = tpu.matmul %559, %561, %cst_192 {dimension_numbers = #tpu.dot_dimension_numbers<[1], [0], [0], [1], [0, 0, 1, 1], [], []>} : vector<16x128xbf16>, vector<128x128xbf16>, vector<16x128xf32> -> vector<16x128xf32>
    %563 = arith.addf %548, %562 : vector<16x128xf32>
    %564 = vector.extract_strided_slice %323 {offsets = [1, 2, 0], sizes = [4, 4, 128], strides = [1, 1, 1]} : vector<6x6x128xf32> to vector<4x4x128xf32>
    %565 = vector.extract_strided_slice %564 {offsets = [0, 0, 0], sizes = [1, 4, 128], strides = [1, 1, 1]} : vector<4x4x128xf32> to vector<1x4x128xf32>
    %566 = vector.shape_cast %565 : vector<1x4x128xf32> to vector<4x128xf32>
    %567 = vector.extract_strided_slice %564 {offsets = [1, 0, 0], sizes = [1, 4, 128], strides = [1, 1, 1]} : vector<4x4x128xf32> to vector<1x4x128xf32>
    %568 = vector.shape_cast %567 : vector<1x4x128xf32> to vector<4x128xf32>
    %569 = vector.extract_strided_slice %564 {offsets = [2, 0, 0], sizes = [1, 4, 128], strides = [1, 1, 1]} : vector<4x4x128xf32> to vector<1x4x128xf32>
    %570 = vector.shape_cast %569 : vector<1x4x128xf32> to vector<4x128xf32>
    %571 = vector.extract_strided_slice %564 {offsets = [3, 0, 0], sizes = [1, 4, 128], strides = [1, 1, 1]} : vector<4x4x128xf32> to vector<1x4x128xf32>
    %572 = vector.shape_cast %571 : vector<1x4x128xf32> to vector<4x128xf32>
    %573 = tpu.concatenate %566, %568, %570, %572 in 0 : vector<4x128xf32>, vector<4x128xf32>, vector<4x128xf32>, vector<4x128xf32> -> vector<16x128xf32>
    %574 = arith.truncf %573 : vector<16x128xf32> to vector<16x128xbf16>
    %c14_193 = arith.constant 14 : index
    %c0_194 = arith.constant 0 : index
    %c0_195 = arith.constant 0 : index
    %575 = vector.load %arg4[%c14_193, %c0_194, %c0_195] : memref<25x128x128xbf16, #tpu.memory_space<vmem>>, vector<1x128x128xbf16>
    %576 = vector.shape_cast %575 : vector<1x128x128xbf16> to vector<128x128xbf16>
    %cst_196 = arith.constant dense<0.000000e+00> : vector<16x128xf32>
    %577 = tpu.matmul %574, %576, %cst_196 {dimension_numbers = #tpu.dot_dimension_numbers<[1], [0], [0], [1], [0, 0, 1, 1], [], []>} : vector<16x128xbf16>, vector<128x128xbf16>, vector<16x128xf32> -> vector<16x128xf32>
    %578 = arith.addf %563, %577 : vector<16x128xf32>
    %579 = vector.extract_strided_slice %343 {offsets = [1, 0, 0], sizes = [4, 4, 128], strides = [1, 1, 1]} : vector<6x6x128xf32> to vector<4x4x128xf32>
    %580 = vector.extract_strided_slice %579 {offsets = [0, 0, 0], sizes = [1, 4, 128], strides = [1, 1, 1]} : vector<4x4x128xf32> to vector<1x4x128xf32>
    %581 = vector.shape_cast %580 : vector<1x4x128xf32> to vector<4x128xf32>
    %582 = vector.extract_strided_slice %579 {offsets = [1, 0, 0], sizes = [1, 4, 128], strides = [1, 1, 1]} : vector<4x4x128xf32> to vector<1x4x128xf32>
    %583 = vector.shape_cast %582 : vector<1x4x128xf32> to vector<4x128xf32>
    %584 = vector.extract_strided_slice %579 {offsets = [2, 0, 0], sizes = [1, 4, 128], strides = [1, 1, 1]} : vector<4x4x128xf32> to vector<1x4x128xf32>
    %585 = vector.shape_cast %584 : vector<1x4x128xf32> to vector<4x128xf32>
    %586 = vector.extract_strided_slice %579 {offsets = [3, 0, 0], sizes = [1, 4, 128], strides = [1, 1, 1]} : vector<4x4x128xf32> to vector<1x4x128xf32>
    %587 = vector.shape_cast %586 : vector<1x4x128xf32> to vector<4x128xf32>
    %588 = tpu.concatenate %581, %583, %585, %587 in 0 : vector<4x128xf32>, vector<4x128xf32>, vector<4x128xf32>, vector<4x128xf32> -> vector<16x128xf32>
    %589 = arith.truncf %588 : vector<16x128xf32> to vector<16x128xbf16>
    %c15_197 = arith.constant 15 : index
    %c0_198 = arith.constant 0 : index
    %c0_199 = arith.constant 0 : index
    %590 = vector.load %arg4[%c15_197, %c0_198, %c0_199] : memref<25x128x128xbf16, #tpu.memory_space<vmem>>, vector<1x128x128xbf16>
    %591 = vector.shape_cast %590 : vector<1x128x128xbf16> to vector<128x128xbf16>
    %cst_200 = arith.constant dense<0.000000e+00> : vector<16x128xf32>
    %592 = tpu.matmul %589, %591, %cst_200 {dimension_numbers = #tpu.dot_dimension_numbers<[1], [0], [0], [1], [0, 0, 1, 1], [], []>} : vector<16x128xbf16>, vector<128x128xbf16>, vector<16x128xf32> -> vector<16x128xf32>
    %593 = arith.addf %578, %592 : vector<16x128xf32>
    %594 = vector.extract_strided_slice %352 {offsets = [1, 0, 0], sizes = [4, 4, 128], strides = [1, 1, 1]} : vector<6x6x128xf32> to vector<4x4x128xf32>
    %595 = vector.extract_strided_slice %594 {offsets = [0, 0, 0], sizes = [1, 4, 128], strides = [1, 1, 1]} : vector<4x4x128xf32> to vector<1x4x128xf32>
    %596 = vector.shape_cast %595 : vector<1x4x128xf32> to vector<4x128xf32>
    %597 = vector.extract_strided_slice %594 {offsets = [1, 0, 0], sizes = [1, 4, 128], strides = [1, 1, 1]} : vector<4x4x128xf32> to vector<1x4x128xf32>
    %598 = vector.shape_cast %597 : vector<1x4x128xf32> to vector<4x128xf32>
    %599 = vector.extract_strided_slice %594 {offsets = [2, 0, 0], sizes = [1, 4, 128], strides = [1, 1, 1]} : vector<4x4x128xf32> to vector<1x4x128xf32>
    %600 = vector.shape_cast %599 : vector<1x4x128xf32> to vector<4x128xf32>
    %601 = vector.extract_strided_slice %594 {offsets = [3, 0, 0], sizes = [1, 4, 128], strides = [1, 1, 1]} : vector<4x4x128xf32> to vector<1x4x128xf32>
    %602 = vector.shape_cast %601 : vector<1x4x128xf32> to vector<4x128xf32>
    %603 = tpu.concatenate %596, %598, %600, %602 in 0 : vector<4x128xf32>, vector<4x128xf32>, vector<4x128xf32>, vector<4x128xf32> -> vector<16x128xf32>
    %604 = arith.truncf %603 : vector<16x128xf32> to vector<16x128xbf16>
    %c16_201 = arith.constant 16 : index
    %c0_202 = arith.constant 0 : index
    %c0_203 = arith.constant 0 : index
    %605 = vector.load %arg4[%c16_201, %c0_202, %c0_203] : memref<25x128x128xbf16, #tpu.memory_space<vmem>>, vector<1x128x128xbf16>
    %606 = vector.shape_cast %605 : vector<1x128x128xbf16> to vector<128x128xbf16>
    %cst_204 = arith.constant dense<0.000000e+00> : vector<16x128xf32>
    %607 = tpu.matmul %604, %606, %cst_204 {dimension_numbers = #tpu.dot_dimension_numbers<[1], [0], [0], [1], [0, 0, 1, 1], [], []>} : vector<16x128xbf16>, vector<128x128xbf16>, vector<16x128xf32> -> vector<16x128xf32>
    %608 = arith.addf %593, %607 : vector<16x128xf32>
    %609 = vector.extract_strided_slice %343 {offsets = [1, 1, 0], sizes = [4, 4, 128], strides = [1, 1, 1]} : vector<6x6x128xf32> to vector<4x4x128xf32>
    %610 = vector.extract_strided_slice %609 {offsets = [0, 0, 0], sizes = [1, 4, 128], strides = [1, 1, 1]} : vector<4x4x128xf32> to vector<1x4x128xf32>
    %611 = vector.shape_cast %610 : vector<1x4x128xf32> to vector<4x128xf32>
    %612 = vector.extract_strided_slice %609 {offsets = [1, 0, 0], sizes = [1, 4, 128], strides = [1, 1, 1]} : vector<4x4x128xf32> to vector<1x4x128xf32>
    %613 = vector.shape_cast %612 : vector<1x4x128xf32> to vector<4x128xf32>
    %614 = vector.extract_strided_slice %609 {offsets = [2, 0, 0], sizes = [1, 4, 128], strides = [1, 1, 1]} : vector<4x4x128xf32> to vector<1x4x128xf32>
    %615 = vector.shape_cast %614 : vector<1x4x128xf32> to vector<4x128xf32>
    %616 = vector.extract_strided_slice %609 {offsets = [3, 0, 0], sizes = [1, 4, 128], strides = [1, 1, 1]} : vector<4x4x128xf32> to vector<1x4x128xf32>
    %617 = vector.shape_cast %616 : vector<1x4x128xf32> to vector<4x128xf32>
    %618 = tpu.concatenate %611, %613, %615, %617 in 0 : vector<4x128xf32>, vector<4x128xf32>, vector<4x128xf32>, vector<4x128xf32> -> vector<16x128xf32>
    %619 = arith.truncf %618 : vector<16x128xf32> to vector<16x128xbf16>
    %c17_205 = arith.constant 17 : index
    %c0_206 = arith.constant 0 : index
    %c0_207 = arith.constant 0 : index
    %620 = vector.load %arg4[%c17_205, %c0_206, %c0_207] : memref<25x128x128xbf16, #tpu.memory_space<vmem>>, vector<1x128x128xbf16>
    %621 = vector.shape_cast %620 : vector<1x128x128xbf16> to vector<128x128xbf16>
    %cst_208 = arith.constant dense<0.000000e+00> : vector<16x128xf32>
    %622 = tpu.matmul %619, %621, %cst_208 {dimension_numbers = #tpu.dot_dimension_numbers<[1], [0], [0], [1], [0, 0, 1, 1], [], []>} : vector<16x128xbf16>, vector<128x128xbf16>, vector<16x128xf32> -> vector<16x128xf32>
    %623 = arith.addf %608, %622 : vector<16x128xf32>
    %624 = vector.extract_strided_slice %352 {offsets = [1, 1, 0], sizes = [4, 4, 128], strides = [1, 1, 1]} : vector<6x6x128xf32> to vector<4x4x128xf32>
    %625 = vector.extract_strided_slice %624 {offsets = [0, 0, 0], sizes = [1, 4, 128], strides = [1, 1, 1]} : vector<4x4x128xf32> to vector<1x4x128xf32>
    %626 = vector.shape_cast %625 : vector<1x4x128xf32> to vector<4x128xf32>
    %627 = vector.extract_strided_slice %624 {offsets = [1, 0, 0], sizes = [1, 4, 128], strides = [1, 1, 1]} : vector<4x4x128xf32> to vector<1x4x128xf32>
    %628 = vector.shape_cast %627 : vector<1x4x128xf32> to vector<4x128xf32>
    %629 = vector.extract_strided_slice %624 {offsets = [2, 0, 0], sizes = [1, 4, 128], strides = [1, 1, 1]} : vector<4x4x128xf32> to vector<1x4x128xf32>
    %630 = vector.shape_cast %629 : vector<1x4x128xf32> to vector<4x128xf32>
    %631 = vector.extract_strided_slice %624 {offsets = [3, 0, 0], sizes = [1, 4, 128], strides = [1, 1, 1]} : vector<4x4x128xf32> to vector<1x4x128xf32>
    %632 = vector.shape_cast %631 : vector<1x4x128xf32> to vector<4x128xf32>
    %633 = tpu.concatenate %626, %628, %630, %632 in 0 : vector<4x128xf32>, vector<4x128xf32>, vector<4x128xf32>, vector<4x128xf32> -> vector<16x128xf32>
    %634 = arith.truncf %633 : vector<16x128xf32> to vector<16x128xbf16>
    %c18_209 = arith.constant 18 : index
    %c0_210 = arith.constant 0 : index
    %c0_211 = arith.constant 0 : index
    %635 = vector.load %arg4[%c18_209, %c0_210, %c0_211] : memref<25x128x128xbf16, #tpu.memory_space<vmem>>, vector<1x128x128xbf16>
    %636 = vector.shape_cast %635 : vector<1x128x128xbf16> to vector<128x128xbf16>
    %cst_212 = arith.constant dense<0.000000e+00> : vector<16x128xf32>
    %637 = tpu.matmul %634, %636, %cst_212 {dimension_numbers = #tpu.dot_dimension_numbers<[1], [0], [0], [1], [0, 0, 1, 1], [], []>} : vector<16x128xbf16>, vector<128x128xbf16>, vector<16x128xf32> -> vector<16x128xf32>
    %638 = arith.addf %623, %637 : vector<16x128xf32>
    %639 = vector.extract_strided_slice %343 {offsets = [1, 2, 0], sizes = [4, 4, 128], strides = [1, 1, 1]} : vector<6x6x128xf32> to vector<4x4x128xf32>
    %640 = vector.extract_strided_slice %639 {offsets = [0, 0, 0], sizes = [1, 4, 128], strides = [1, 1, 1]} : vector<4x4x128xf32> to vector<1x4x128xf32>
    %641 = vector.shape_cast %640 : vector<1x4x128xf32> to vector<4x128xf32>
    %642 = vector.extract_strided_slice %639 {offsets = [1, 0, 0], sizes = [1, 4, 128], strides = [1, 1, 1]} : vector<4x4x128xf32> to vector<1x4x128xf32>
    %643 = vector.shape_cast %642 : vector<1x4x128xf32> to vector<4x128xf32>
    %644 = vector.extract_strided_slice %639 {offsets = [2, 0, 0], sizes = [1, 4, 128], strides = [1, 1, 1]} : vector<4x4x128xf32> to vector<1x4x128xf32>
    %645 = vector.shape_cast %644 : vector<1x4x128xf32> to vector<4x128xf32>
    %646 = vector.extract_strided_slice %639 {offsets = [3, 0, 0], sizes = [1, 4, 128], strides = [1, 1, 1]} : vector<4x4x128xf32> to vector<1x4x128xf32>
    %647 = vector.shape_cast %646 : vector<1x4x128xf32> to vector<4x128xf32>
    %648 = tpu.concatenate %641, %643, %645, %647 in 0 : vector<4x128xf32>, vector<4x128xf32>, vector<4x128xf32>, vector<4x128xf32> -> vector<16x128xf32>
    %649 = arith.truncf %648 : vector<16x128xf32> to vector<16x128xbf16>
    %c19_213 = arith.constant 19 : index
    %c0_214 = arith.constant 0 : index
    %c0_215 = arith.constant 0 : index
    %650 = vector.load %arg4[%c19_213, %c0_214, %c0_215] : memref<25x128x128xbf16, #tpu.memory_space<vmem>>, vector<1x128x128xbf16>
    %651 = vector.shape_cast %650 : vector<1x128x128xbf16> to vector<128x128xbf16>
    %cst_216 = arith.constant dense<0.000000e+00> : vector<16x128xf32>
    %652 = tpu.matmul %649, %651, %cst_216 {dimension_numbers = #tpu.dot_dimension_numbers<[1], [0], [0], [1], [0, 0, 1, 1], [], []>} : vector<16x128xbf16>, vector<128x128xbf16>, vector<16x128xf32> -> vector<16x128xf32>
    %653 = arith.addf %638, %652 : vector<16x128xf32>
    %654 = vector.extract_strided_slice %323 {offsets = [2, 0, 0], sizes = [4, 4, 128], strides = [1, 1, 1]} : vector<6x6x128xf32> to vector<4x4x128xf32>
    %655 = vector.extract_strided_slice %654 {offsets = [0, 0, 0], sizes = [1, 4, 128], strides = [1, 1, 1]} : vector<4x4x128xf32> to vector<1x4x128xf32>
    %656 = vector.shape_cast %655 : vector<1x4x128xf32> to vector<4x128xf32>
    %657 = vector.extract_strided_slice %654 {offsets = [1, 0, 0], sizes = [1, 4, 128], strides = [1, 1, 1]} : vector<4x4x128xf32> to vector<1x4x128xf32>
    %658 = vector.shape_cast %657 : vector<1x4x128xf32> to vector<4x128xf32>
    %659 = vector.extract_strided_slice %654 {offsets = [2, 0, 0], sizes = [1, 4, 128], strides = [1, 1, 1]} : vector<4x4x128xf32> to vector<1x4x128xf32>
    %660 = vector.shape_cast %659 : vector<1x4x128xf32> to vector<4x128xf32>
    %661 = vector.extract_strided_slice %654 {offsets = [3, 0, 0], sizes = [1, 4, 128], strides = [1, 1, 1]} : vector<4x4x128xf32> to vector<1x4x128xf32>
    %662 = vector.shape_cast %661 : vector<1x4x128xf32> to vector<4x128xf32>
    %663 = tpu.concatenate %656, %658, %660, %662 in 0 : vector<4x128xf32>, vector<4x128xf32>, vector<4x128xf32>, vector<4x128xf32> -> vector<16x128xf32>
    %664 = arith.truncf %663 : vector<16x128xf32> to vector<16x128xbf16>
    %c20_217 = arith.constant 20 : index
    %c0_218 = arith.constant 0 : index
    %c0_219 = arith.constant 0 : index
    %665 = vector.load %arg4[%c20_217, %c0_218, %c0_219] : memref<25x128x128xbf16, #tpu.memory_space<vmem>>, vector<1x128x128xbf16>
    %666 = vector.shape_cast %665 : vector<1x128x128xbf16> to vector<128x128xbf16>
    %cst_220 = arith.constant dense<0.000000e+00> : vector<16x128xf32>
    %667 = tpu.matmul %664, %666, %cst_220 {dimension_numbers = #tpu.dot_dimension_numbers<[1], [0], [0], [1], [0, 0, 1, 1], [], []>} : vector<16x128xbf16>, vector<128x128xbf16>, vector<16x128xf32> -> vector<16x128xf32>
    %668 = arith.addf %653, %667 : vector<16x128xf32>
    %669 = vector.extract_strided_slice %332 {offsets = [2, 0, 0], sizes = [4, 4, 128], strides = [1, 1, 1]} : vector<6x6x128xf32> to vector<4x4x128xf32>
    %670 = vector.extract_strided_slice %669 {offsets = [0, 0, 0], sizes = [1, 4, 128], strides = [1, 1, 1]} : vector<4x4x128xf32> to vector<1x4x128xf32>
    %671 = vector.shape_cast %670 : vector<1x4x128xf32> to vector<4x128xf32>
    %672 = vector.extract_strided_slice %669 {offsets = [1, 0, 0], sizes = [1, 4, 128], strides = [1, 1, 1]} : vector<4x4x128xf32> to vector<1x4x128xf32>
    %673 = vector.shape_cast %672 : vector<1x4x128xf32> to vector<4x128xf32>
    %674 = vector.extract_strided_slice %669 {offsets = [2, 0, 0], sizes = [1, 4, 128], strides = [1, 1, 1]} : vector<4x4x128xf32> to vector<1x4x128xf32>
    %675 = vector.shape_cast %674 : vector<1x4x128xf32> to vector<4x128xf32>
    %676 = vector.extract_strided_slice %669 {offsets = [3, 0, 0], sizes = [1, 4, 128], strides = [1, 1, 1]} : vector<4x4x128xf32> to vector<1x4x128xf32>
    %677 = vector.shape_cast %676 : vector<1x4x128xf32> to vector<4x128xf32>
    %678 = tpu.concatenate %671, %673, %675, %677 in 0 : vector<4x128xf32>, vector<4x128xf32>, vector<4x128xf32>, vector<4x128xf32> -> vector<16x128xf32>
    %679 = arith.truncf %678 : vector<16x128xf32> to vector<16x128xbf16>
    %c21_221 = arith.constant 21 : index
    %c0_222 = arith.constant 0 : index
    %c0_223 = arith.constant 0 : index
    %680 = vector.load %arg4[%c21_221, %c0_222, %c0_223] : memref<25x128x128xbf16, #tpu.memory_space<vmem>>, vector<1x128x128xbf16>
    %681 = vector.shape_cast %680 : vector<1x128x128xbf16> to vector<128x128xbf16>
    %cst_224 = arith.constant dense<0.000000e+00> : vector<16x128xf32>
    %682 = tpu.matmul %679, %681, %cst_224 {dimension_numbers = #tpu.dot_dimension_numbers<[1], [0], [0], [1], [0, 0, 1, 1], [], []>} : vector<16x128xbf16>, vector<128x128xbf16>, vector<16x128xf32> -> vector<16x128xf32>
    %683 = arith.addf %668, %682 : vector<16x128xf32>
    %684 = vector.extract_strided_slice %323 {offsets = [2, 1, 0], sizes = [4, 4, 128], strides = [1, 1, 1]} : vector<6x6x128xf32> to vector<4x4x128xf32>
    %685 = vector.extract_strided_slice %684 {offsets = [0, 0, 0], sizes = [1, 4, 128], strides = [1, 1, 1]} : vector<4x4x128xf32> to vector<1x4x128xf32>
    %686 = vector.shape_cast %685 : vector<1x4x128xf32> to vector<4x128xf32>
    %687 = vector.extract_strided_slice %684 {offsets = [1, 0, 0], sizes = [1, 4, 128], strides = [1, 1, 1]} : vector<4x4x128xf32> to vector<1x4x128xf32>
    %688 = vector.shape_cast %687 : vector<1x4x128xf32> to vector<4x128xf32>
    %689 = vector.extract_strided_slice %684 {offsets = [2, 0, 0], sizes = [1, 4, 128], strides = [1, 1, 1]} : vector<4x4x128xf32> to vector<1x4x128xf32>
    %690 = vector.shape_cast %689 : vector<1x4x128xf32> to vector<4x128xf32>
    %691 = vector.extract_strided_slice %684 {offsets = [3, 0, 0], sizes = [1, 4, 128], strides = [1, 1, 1]} : vector<4x4x128xf32> to vector<1x4x128xf32>
    %692 = vector.shape_cast %691 : vector<1x4x128xf32> to vector<4x128xf32>
    %693 = tpu.concatenate %686, %688, %690, %692 in 0 : vector<4x128xf32>, vector<4x128xf32>, vector<4x128xf32>, vector<4x128xf32> -> vector<16x128xf32>
    %694 = arith.truncf %693 : vector<16x128xf32> to vector<16x128xbf16>
    %c22_225 = arith.constant 22 : index
    %c0_226 = arith.constant 0 : index
    %c0_227 = arith.constant 0 : index
    %695 = vector.load %arg4[%c22_225, %c0_226, %c0_227] : memref<25x128x128xbf16, #tpu.memory_space<vmem>>, vector<1x128x128xbf16>
    %696 = vector.shape_cast %695 : vector<1x128x128xbf16> to vector<128x128xbf16>
    %cst_228 = arith.constant dense<0.000000e+00> : vector<16x128xf32>
    %697 = tpu.matmul %694, %696, %cst_228 {dimension_numbers = #tpu.dot_dimension_numbers<[1], [0], [0], [1], [0, 0, 1, 1], [], []>} : vector<16x128xbf16>, vector<128x128xbf16>, vector<16x128xf32> -> vector<16x128xf32>
    %698 = arith.addf %683, %697 : vector<16x128xf32>
    %699 = vector.extract_strided_slice %332 {offsets = [2, 1, 0], sizes = [4, 4, 128], strides = [1, 1, 1]} : vector<6x6x128xf32> to vector<4x4x128xf32>
    %700 = vector.extract_strided_slice %699 {offsets = [0, 0, 0], sizes = [1, 4, 128], strides = [1, 1, 1]} : vector<4x4x128xf32> to vector<1x4x128xf32>
    %701 = vector.shape_cast %700 : vector<1x4x128xf32> to vector<4x128xf32>
    %702 = vector.extract_strided_slice %699 {offsets = [1, 0, 0], sizes = [1, 4, 128], strides = [1, 1, 1]} : vector<4x4x128xf32> to vector<1x4x128xf32>
    %703 = vector.shape_cast %702 : vector<1x4x128xf32> to vector<4x128xf32>
    %704 = vector.extract_strided_slice %699 {offsets = [2, 0, 0], sizes = [1, 4, 128], strides = [1, 1, 1]} : vector<4x4x128xf32> to vector<1x4x128xf32>
    %705 = vector.shape_cast %704 : vector<1x4x128xf32> to vector<4x128xf32>
    %706 = vector.extract_strided_slice %699 {offsets = [3, 0, 0], sizes = [1, 4, 128], strides = [1, 1, 1]} : vector<4x4x128xf32> to vector<1x4x128xf32>
    %707 = vector.shape_cast %706 : vector<1x4x128xf32> to vector<4x128xf32>
    %708 = tpu.concatenate %701, %703, %705, %707 in 0 : vector<4x128xf32>, vector<4x128xf32>, vector<4x128xf32>, vector<4x128xf32> -> vector<16x128xf32>
    %709 = arith.truncf %708 : vector<16x128xf32> to vector<16x128xbf16>
    %c23_229 = arith.constant 23 : index
    %c0_230 = arith.constant 0 : index
    %c0_231 = arith.constant 0 : index
    %710 = vector.load %arg4[%c23_229, %c0_230, %c0_231] : memref<25x128x128xbf16, #tpu.memory_space<vmem>>, vector<1x128x128xbf16>
    %711 = vector.shape_cast %710 : vector<1x128x128xbf16> to vector<128x128xbf16>
    %cst_232 = arith.constant dense<0.000000e+00> : vector<16x128xf32>
    %712 = tpu.matmul %709, %711, %cst_232 {dimension_numbers = #tpu.dot_dimension_numbers<[1], [0], [0], [1], [0, 0, 1, 1], [], []>} : vector<16x128xbf16>, vector<128x128xbf16>, vector<16x128xf32> -> vector<16x128xf32>
    %713 = arith.addf %698, %712 : vector<16x128xf32>
    %714 = vector.extract_strided_slice %323 {offsets = [2, 2, 0], sizes = [4, 4, 128], strides = [1, 1, 1]} : vector<6x6x128xf32> to vector<4x4x128xf32>
    %715 = vector.extract_strided_slice %714 {offsets = [0, 0, 0], sizes = [1, 4, 128], strides = [1, 1, 1]} : vector<4x4x128xf32> to vector<1x4x128xf32>
    %716 = vector.shape_cast %715 : vector<1x4x128xf32> to vector<4x128xf32>
    %717 = vector.extract_strided_slice %714 {offsets = [1, 0, 0], sizes = [1, 4, 128], strides = [1, 1, 1]} : vector<4x4x128xf32> to vector<1x4x128xf32>
    %718 = vector.shape_cast %717 : vector<1x4x128xf32> to vector<4x128xf32>
    %719 = vector.extract_strided_slice %714 {offsets = [2, 0, 0], sizes = [1, 4, 128], strides = [1, 1, 1]} : vector<4x4x128xf32> to vector<1x4x128xf32>
    %720 = vector.shape_cast %719 : vector<1x4x128xf32> to vector<4x128xf32>
    %721 = vector.extract_strided_slice %714 {offsets = [3, 0, 0], sizes = [1, 4, 128], strides = [1, 1, 1]} : vector<4x4x128xf32> to vector<1x4x128xf32>
    %722 = vector.shape_cast %721 : vector<1x4x128xf32> to vector<4x128xf32>
    %723 = tpu.concatenate %716, %718, %720, %722 in 0 : vector<4x128xf32>, vector<4x128xf32>, vector<4x128xf32>, vector<4x128xf32> -> vector<16x128xf32>
    %724 = arith.truncf %723 : vector<16x128xf32> to vector<16x128xbf16>
    %c24_233 = arith.constant 24 : index
    %c0_234 = arith.constant 0 : index
    %c0_235 = arith.constant 0 : index
    %725 = vector.load %arg4[%c24_233, %c0_234, %c0_235] : memref<25x128x128xbf16, #tpu.memory_space<vmem>>, vector<1x128x128xbf16>
    %726 = vector.shape_cast %725 : vector<1x128x128xbf16> to vector<128x128xbf16>
    %cst_236 = arith.constant dense<0.000000e+00> : vector<16x128xf32>
    %727 = tpu.matmul %724, %726, %cst_236 {dimension_numbers = #tpu.dot_dimension_numbers<[1], [0], [0], [1], [0, 0, 1, 1], [], []>} : vector<16x128xbf16>, vector<128x128xbf16>, vector<16x128xf32> -> vector<16x128xf32>
    %728 = arith.addf %713, %727 : vector<16x128xf32>
    %729 = vector.broadcast %311 : vector<1x128xf32> to vector<16x128xf32>
    %730 = arith.addf %728, %729 : vector<16x128xf32>
    %c0_237 = arith.constant 0 : index
    %c0_238 = arith.constant 0 : index
    %c0_239 = arith.constant 0 : index
    %731 = vector.load %arg6[%c0_237, %c0_238, %c0_239] : memref<1x16x128xf32, #tpu.memory_space<vmem>>, vector<1x16x128xf32>
    %732 = vector.shape_cast %731 : vector<1x16x128xf32> to vector<16x128xf32>
    %733 = vector.shape_cast %730 : vector<16x128xf32> to vector<1x16x128xf32>
    tpu.vector_store %arg6[%c0_237, %c0_238, %c0_239], %733 {strides = array<i32>} : memref<1x16x128xf32, #tpu.memory_space<vmem>>, vector<1x16x128xf32>,
    return
  }
  func.func @transform_0(%arg0: i32) -> (i32, i32, i32, i32) {
    %c0_i32 = arith.constant 0 : i32
    %c0_i32_0 = arith.constant 0 : i32
    %c0_i32_1 = arith.constant 0 : i32
    %c0_i32_2 = arith.constant 0 : i32
    return %arg0, %c0_i32, %c0_i32_0, %c0_i32_1 : i32, i32, i32, i32
  }
  func.func @transform_1(%arg0: i32) -> (i32, i32, i32) {
    %c0_i32 = arith.constant 0 : i32
    %c0_i32_0 = arith.constant 0 : i32
    %c0_i32_1 = arith.constant 0 : i32
    %c0_i32_2 = arith.constant 0 : i32
    return %c0_i32, %c0_i32_0, %c0_i32_1 : i32, i32, i32
  }
  func.func @transform_2(%arg0: i32) -> (i32, i32, i32) {
    %c0_i32 = arith.constant 0 : i32
    %c0_i32_0 = arith.constant 0 : i32
    %c0_i32_1 = arith.constant 0 : i32
    %c0_i32_2 = arith.constant 0 : i32
    return %c0_i32, %c0_i32_0, %c0_i32_1 : i32, i32, i32
  }
  func.func @transform_3(%arg0: i32) -> (i32, i32, i32) {
    %c0_i32 = arith.constant 0 : i32
    %c0_i32_0 = arith.constant 0 : i32
    %c0_i32_1 = arith.constant 0 : i32
    %c0_i32_2 = arith.constant 0 : i32
    return %c0_i32, %c0_i32_0, %c0_i32_1 : i32, i32, i32
  }
  func.func @transform_4(%arg0: i32) -> (i32, i32) {
    %c0_i32 = arith.constant 0 : i32
    %c0_i32_0 = arith.constant 0 : i32
    %c0_i32_1 = arith.constant 0 : i32
    return %c0_i32, %c0_i32_0 : i32, i32
  }
  func.func @transform_5(%arg0: i32) -> (i32, i32, i32) {
    %c0_i32 = arith.constant 0 : i32
    %c0_i32_0 = arith.constant 0 : i32
    %c0_i32_1 = arith.constant 0 : i32
    return %arg0, %c0_i32, %c0_i32_0 : i32, i32, i32
  }
}

</mosaic_0001>

<llo_original>
// kernel: prior_encoder_forward.1
$region0: #{prior_encoder_forward.1}
  #allocation0 [shape = 'u32[]', space=smem, size = 0x4, offset = 0x4, fixed_abs, tag = 'smem constant byte address 0x4 - core index']
  #allocation1 [shape = 'u32[72,128]{1,0:T(1,128)}', space=vmem, size = 0x9000, scoped, tag = 'internal scratch']
  %s0 = inlined_call_operand.vmem [shape: f32[2,18,18,128], index: 0, kind: input, shape index: {}]
  %s1 = inlined_call_operand.vmem [shape: bf16[9,128,128], index: 1, kind: input, shape index: {}]
  %s2 = inlined_call_operand.vmem [shape: bf16[25,128,128], index: 2, kind: input, shape index: {}]
  %s3 = inlined_call_operand.vmem [shape: bf16[25,128,128], index: 3, kind: input, shape index: {}]
  %s4 = inlined_call_operand.vmem [shape: f32[8,128], index: 4, kind: input, shape index: {}]
  %s5 = inlined_call_operand.vmem [shape: f32[2,16,128], index: 5, kind: output, shape index: {}]
  %s6 = sld [smem:[#allocation0]]
  $region53: #{prior_encoder_forward.1} parent=0
    _
  %s8 = ssub.s32 1, %s6
  %s9 = scalar_select 0, %s8, %s6
  loop: start=0, step=1, limit=4
  $region2: #{prior_encoder_forward.1} parent=0 // loop_pre_header
    _
  $region3: #{prior_encoder_forward.1} parent=0 // loop_header
    %s11 = sphi 0, %s15
    %p12 = scmp.ge.s32.totalorder %s11, 4
    %s21 = sphi 0, %s23
    %s24 = sphi 0, %s21
    %s25 = sphi 0, %s24
    %s41 = sphi 0, %s25
    %s45 = sphi 0, %s45
    %s47 = sphi 0, %s45
    %s48 = sphi 0, %s47
    %s62 = sphi 0, %s48
    %s66 = sphi 0, %s66
    %s68 = sphi 0, %s66
    %s69 = sphi 0, %s68
    %s83 = sphi 0, %s69
    %s87 = sphi 0, %s87
    %s89 = sphi 0, %s87
    %s90 = sphi 0, %s89
    %s104 = sphi 0, %s90
    %s108 = sphi 0, %s108
    %s110 = sphi 0, %s108
    %s111 = sphi 0, %s110
    %s125 = sphi 0, %s111
    %s131 = sphi 0, %s133
    %s134 = sphi 0, %s131
    %s135 = sphi 0, %s134
    %s151 = sphi 0, %s135
  $region4: #{prior_encoder_forward.1} parent=0 // loop_header_branch
    %14 = sbr.rel (%p12) target = $region8
  $region5: #{prior_encoder_forward.1} parent=0 // loop_body
    %s16 = ssub.s32 %s11, 1
    %s17 = ssub.s32 %s11, 2
    %s18 = sadd.s32 %s11, 1
    %s19 = ssub.s32 %s11, %s18
    %p20 = scmp.eq.s32.totalorder %s19, 0
    %s22 = sadd.s32 %s21, 1
    %s23 = scalar_select %p20, %s21, %s22
    %p26 = pneg %p20
    %p27 = scmp.eq.s32.totalorder %s11, 1
    %p28 = por %p26, %p27
    %p29 = scmp.ne.s32.totalorder %s21, %s24
    %p30 = scmp.eq.s32.totalorder %s11, 0
    %p31 = por %p29, %p30
    %p32 = scmp.ne.s32.totalorder %s21, %s24
    %p33 = scmp.eq.s32.totalorder %s16, 1
    %p34 = por %p32, %p33
    %p35 = scmp.ne.s32.totalorder %s24, %s25
    %p36 = scmp.eq.s32.totalorder %s16, 0
    %p37 = por %p35, %p36
    %p38 = scmp.ne.s32.totalorder %s24, %s25
    %p39 = scmp.eq.s32.totalorder %s17, 1
    %p40 = por %p38, %p39
    %p42 = scmp.ne.s32.totalorder %s25, %s41
    %p43 = scmp.eq.s32.totalorder %s17, 0
    %p44 = por %p42, %p43
    %s46 = sadd.s32 %s45, 1
    %p49 = scmp.eq.s32.totalorder %s11, 1
    %p50 = scmp.ne.s32.totalorder %s45, %s47
    %p51 = scmp.eq.s32.totalorder %s11, 0
    %p52 = por %p50, %p51
    %p53 = scmp.ne.s32.totalorder %s45, %s47
    %p54 = scmp.eq.s32.totalorder %s16, 1
    %p55 = por %p53, %p54
    %p56 = scmp.ne.s32.totalorder %s47, %s48
    %p57 = scmp.eq.s32.totalorder %s16, 0
    %p58 = por %p56, %p57
    %p59 = scmp.ne.s32.totalorder %s47, %s48
    %p60 = scmp.eq.s32.totalorder %s17, 1
    %p61 = por %p59, %p60
    %p63 = scmp.ne.s32.totalorder %s48, %s62
    %p64 = scmp.eq.s32.totalorder %s17, 0
    %p65 = por %p63, %p64
    %s67 = sadd.s32 %s66, 1
    %p70 = scmp.eq.s32.totalorder %s11, 1
    %p71 = scmp.ne.s32.totalorder %s66, %s68
    %p72 = scmp.eq.s32.totalorder %s11, 0
    %p73 = por %p71, %p72
    %p74 = scmp.ne.s32.totalorder %s66, %s68
    %p75 = scmp.eq.s32.totalorder %s16, 1
    %p76 = por %p74, %p75
    %p77 = scmp.ne.s32.totalorder %s68, %s69
    %p78 = scmp.eq.s32.totalorder %s16, 0
    %p79 = por %p77, %p78
    %p80 = scmp.ne.s32.totalorder %s68, %s69
    %p81 = scmp.eq.s32.totalorder %s17, 1
    %p82 = por %p80, %p81
    %p84 = scmp.ne.s32.totalorder %s69, %s83
    %p85 = scmp.eq.s32.totalorder %s17, 0
    %p86 = por %p84, %p85
    %s88 = sadd.s32 %s87, 1
    %p91 = scmp.eq.s32.totalorder %s11, 1
    %p92 = scmp.ne.s32.totalorder %s87, %s89
    %p93 = scmp.eq.s32.totalorder %s11, 0
    %p94 = por %p92, %p93
    %p95 = scmp.ne.s32.totalorder %s87, %s89
    %p96 = scmp.eq.s32.totalorder %s16, 1
    %p97 = por %p95, %p96
    %p98 = scmp.ne.s32.totalorder %s89, %s90
    %p99 = scmp.eq.s32.totalorder %s16, 0
    %p100 = por %p98, %p99
    %p101 = scmp.ne.s32.totalorder %s89, %s90
    %p102 = scmp.eq.s32.totalorder %s17, 1
    %p103 = por %p101, %p102
    %p105 = scmp.ne.s32.totalorder %s90, %s104
    %p106 = scmp.eq.s32.totalorder %s17, 0
    %p107 = por %p105, %p106
    %s109 = sadd.s32 %s108, 1
    %p112 = scmp.eq.s32.totalorder %s11, 1
    %p113 = scmp.ne.s32.totalorder %s108, %s110
    %p114 = scmp.eq.s32.totalorder %s11, 0
    %p115 = por %p113, %p114
    %p116 = scmp.ne.s32.totalorder %s108, %s110
    %p117 = scmp.eq.s32.totalorder %s16, 1
    %p118 = por %p116, %p117
    %p119 = scmp.ne.s32.totalorder %s110, %s111
    %p120 = scmp.eq.s32.totalorder %s16, 0
    %p121 = por %p119, %p120
    %p122 = scmp.ne.s32.totalorder %s110, %s111
    %p123 = scmp.eq.s32.totalorder %s17, 1
    %p124 = por %p122, %p123
    %p126 = scmp.ne.s32.totalorder %s111, %s125
    %p127 = scmp.eq.s32.totalorder %s17, 0
    %p128 = por %p126, %p127
    %s129 = ssub.s32 %s11, %s18
    %p130 = scmp.eq.s32.totalorder %s129, 0
    %s132 = sadd.s32 %s131, 1
    %s133 = scalar_select %p130, %s131, %s132
    %p136 = pneg %p130
    %p137 = scmp.eq.s32.totalorder %s11, 1
    %p138 = por %p136, %p137
    %p139 = scmp.ne.s32.totalorder %s131, %s134
    %p140 = scmp.eq.s32.totalorder %s11, 0
    %p141 = por %p139, %p140
    %p142 = scmp.ne.s32.totalorder %s131, %s134
    %p143 = scmp.eq.s32.totalorder %s16, 1
    %p144 = por %p142, %p143
    %p145 = scmp.ne.s32.totalorder %s134, %s135
    %p146 = scmp.eq.s32.totalorder %s16, 0
    %p147 = por %p145, %p146
    %p148 = scmp.ne.s32.totalorder %s134, %s135
    %p149 = scmp.eq.s32.totalorder %s17, 1
    %p150 = por %p148, %p149
    %p152 = scmp.ne.s32.totalorder %s135, %s151
    %p153 = scmp.eq.s32.totalorder %s17, 0
    %p154 = por %p152, %p153
    %p155 = scmp.le.s32.totalorder 1, %s11
    %p156 = scmp.lt.s32.totalorder %s11, 3
    %p157 = pnand %p155, %p156
    %p158 = pneg %p157
    // Predicated region
    $region9: #{prior_encoder_forward.1} parent=5 // pred_check
      _
    $region10: #{prior_encoder_forward.1} parent=5 // pred_check_branch
      %160 = sbr.rel (%p157) target = $region12
    $region11: #{prior_encoder_forward.1} parent=5 // pred_region
      %s161 = ssub.s32 %s11, 1
      // Predicated region
      $region13: #{prior_encoder_forward.1} parent=11 // pred_check
        %p162 = pneg %p58
      $region14: #{prior_encoder_forward.1} parent=11 // pred_check_branch
        %164 = sbr.rel (%p162) target = $region16
      $region15: #{prior_encoder_forward.1} parent=11 // pred_region
        _
      $region16: #{prior_encoder_forward.1} parent=11 // pred_fallthru
        _
      // Predicated region
      $region17: #{prior_encoder_forward.1} parent=11 // pred_check
        %p165 = pneg %p79
      $region18: #{prior_encoder_forward.1} parent=11 // pred_check_branch
        %167 = sbr.rel (%p165) target = $region20
      $region19: #{prior_encoder_forward.1} parent=11 // pred_region
        _
      $region20: #{prior_encoder_forward.1} parent=11 // pred_fallthru
        _
      // Predicated region
      $region21: #{prior_encoder_forward.1} parent=11 // pred_check
        %p168 = pneg %p100
      $region22: #{prior_encoder_forward.1} parent=11 // pred_check_branch
        %170 = sbr.rel (%p168) target = $region24
      $region23: #{prior_encoder_forward.1} parent=11 // pred_region
        _
      $region24: #{prior_encoder_forward.1} parent=11 // pred_fallthru
        _
      // Predicated region
      $region25: #{prior_encoder_forward.1} parent=11 // pred_check
        %p171 = pneg %p121
      $region26: #{prior_encoder_forward.1} parent=11 // pred_check_branch
        %173 = sbr.rel (%p171) target = $region28
      $region27: #{prior_encoder_forward.1} parent=11 // pred_region
        _
      $region28: #{prior_encoder_forward.1} parent=11 // pred_fallthru
        _
    $region12: #{prior_encoder_forward.1} parent=5 // pred_fallthru
      _
    %p174 = scmp.lt.s32.totalorder %s11, 2
    // Predicated region
    $region29: #{prior_encoder_forward.1} parent=5 // pred_check
      %p175 = pneg %p174
    $region30: #{prior_encoder_forward.1} parent=5 // pred_check_branch
      %177 = sbr.rel (%p175) target = $region32
    $region31: #{prior_encoder_forward.1} parent=5 // pred_region
      // Predicated region
      $region33: #{prior_encoder_forward.1} parent=31 // pred_check
        %p178 = pneg %p31
      $region34: #{prior_encoder_forward.1} parent=31 // pred_check_branch
        %180 = sbr.rel (%p178) target = $region36
      $region35: #{prior_encoder_forward.1} parent=31 // pred_region
        %p181 = scmp.lt.s32.totalorder %s11, 1
        %s182 = scalar_select %p181, %s11, 1
        %s183 = smul.addr %s182, 54
        %s184 = smul.addr %s183, 8
        %s185 = scalar_lea.vmem %s0, %s184
      $region36: #{prior_encoder_forward.1} parent=31 // pred_fallthru
        _
    $region32: #{prior_encoder_forward.1} parent=5 // pred_fallthru
      _
    %p186 = scmp.le.s32.totalorder 1, %s11
    %p187 = scmp.lt.s32.totalorder %s11, 3
    %p188 = pnand %p186, %p187
    %p189 = pneg %p188
    // Predicated region
    $region37: #{prior_encoder_forward.1} parent=5 // pred_check
      _
    $region38: #{prior_encoder_forward.1} parent=5 // pred_check_branch
      %191 = sbr.rel (%p188) target = $region40
    $region39: #{prior_encoder_forward.1} parent=5 // pred_region
      %s192 = ssub.s32 %s11, 1
      %p193 = scmp.lt.s32.totalorder %s16, 1
      %s194 = scalar_select %p193, %s16, 1
      %s195 = smul.addr %s194, 54
      %s196 = smul.addr %s195, 8
      %s197 = scalar_lea.vmem %s0, %s196
      %p198 = pneg %p37
      %p199 = pneg %p34
      %p200 = pneg %p58
      %p201 = pneg %p55
      %p202 = pneg %p79
      %p203 = pneg %p76
      %p204 = pneg %p100
      %p205 = pneg %p97
      %p206 = pneg %p121
      %p207 = pneg %p118
      %p208 = pneg %p147
      %p209 = pneg %p144
      %p210 = scmp.lt.s32.totalorder %s16, 1
      %s211 = scalar_select %p210, %s16, 1
      %s212 = smul.addr %s211, 2
      %s213 = smul.addr %s212, 8
      %s214 = scalar_lea.vmem %s5, %s213
      %p215 = scmp.lt.s32.totalorder %s16, 1
      %s216 = scalar_select %p215, %s16, 1
      %s217 = smul.addr %s216, 54
      %s218 = smul.addr %s217, 8
      %s219 = scalar_lea.vmem %s0, %s218
      %p220 = scmp.lt.s32.totalorder %s16, 1
      %s221 = scalar_select %p220, %s16, 1
      %s222 = smul.addr %s221, 2
      %s223 = smul.addr %s222, 8
      %s224 = scalar_lea.vmem %s5, %s223
      %v225 = vld [vmem:[%s4] sm:$0xff]
      %v226 = vld [vmem:[%s219] sm:$0xff]
      %v227 = vld [vmem:[%s219 + $0x8] sm:$0xff]
      %v228 = vld [vmem:[%s219 + $0x10] sm:$0x3]
      %v229 = vld [vmem:[%s219 + $0x18] sm:$0xff]
      %v230 = vld [vmem:[%s219 + $0x20] sm:$0xff]
      %v231 = vld [vmem:[%s219 + $0x28] sm:$0x3]
      %v232 = vld [vmem:[%s219 + $0x30] sm:$0xff]
      %v233 = vld [vmem:[%s219 + $0x38] sm:$0xff]
      %v234 = vld [vmem:[%s219 + $0x40] sm:$0x3]
      %v235 = vld [vmem:[%s219 + $0x48] sm:$0xff]
      %v236 = vld [vmem:[%s219 + $0x50] sm:$0xff]
      %v237 = vld [vmem:[%s219 + $0x58] sm:$0x3]
      %v238 = vld [vmem:[%s219 + $0x60] sm:$0xff]
      %v239 = vld [vmem:[%s219 + $0x68] sm:$0xff]
      %v240 = vld [vmem:[%s219 + $0x70] sm:$0x3]
      %v241 = vld [vmem:[%s219 + $0x78] sm:$0xff]
      %v242 = vld [vmem:[%s219 + $0x80] sm:$0xff]
      %v243 = vld [vmem:[%s219 + $0x88] sm:$0x3]
      %v244 = vld [vmem:[%s219 + $0x90] sm:$0xff]
      %v245 = vld [vmem:[%s219 + $0x98] sm:$0xff]
      %v246 = vld [vmem:[%s219 + $0xa0] sm:$0x3]
      %v247 = vld [vmem:[%s219 + $0xa8] sm:$0xff]
      %v248 = vld [vmem:[%s219 + $0xb0] sm:$0xff]
      %v249 = vld [vmem:[%s219 + $0xb8] sm:$0x3]
      %v250 = vld [vmem:[%s219 + $0xc0] sm:$0xff]
      %v251 = vld [vmem:[%s219 + $0xc8] sm:$0xff]
      %v252 = vld [vmem:[%s219 + $0xd0] sm:$0x3]
      %v253 = vld [vmem:[%s219 + $0xd8] sm:$0xff]
      %v254 = vld [vmem:[%s219 + $0xe0] sm:$0xff]
      %v255 = vld [vmem:[%s219 + $0xe8] sm:$0x3]
      %v256 = vld [vmem:[%s219 + $0xf0] sm:$0xff]
      %v257 = vld [vmem:[%s219 + $0xf8] sm:$0xff]
      %v258 = vld [vmem:[%s219 + $0x100] sm:$0x3]
      %v259 = vld [vmem:[%s219 + $0x108] sm:$0xff]
      %v260 = vld [vmem:[%s219 + $0x110] sm:$0xff]
      %v261 = vld [vmem:[%s219 + $0x118] sm:$0x3]
      %v262 = vld [vmem:[%s219 + $0x120] sm:$0xff]
      %v263 = vld [vmem:[%s219 + $0x128] sm:$0xff]
      %v264 = vld [vmem:[%s219 + $0x130] sm:$0x3]
      %v265 = vld [vmem:[%s219 + $0x138] sm:$0xff]
      %v266 = vld [vmem:[%s219 + $0x140] sm:$0xff]
      %v267 = vld [vmem:[%s219 + $0x148] sm:$0x3]
      %v268 = vld [vmem:[%s219 + $0x150] sm:$0xff]
      %v269 = vld [vmem:[%s219 + $0x158] sm:$0xff]
      %v270 = vld [vmem:[%s219 + $0x160] sm:$0x3]
      %v271 = vld [vmem:[%s219 + $0x168] sm:$0xff]
      %v272 = vld [vmem:[%s219 + $0x170] sm:$0xff]
      %v273 = vld [vmem:[%s219 + $0x178] sm:$0x3]
      %v274 = vld [vmem:[%s219 + $0x180] sm:$0xff]
      %v275 = vld [vmem:[%s219 + $0x188] sm:$0xff]
      %v276 = vld [vmem:[%s219 + $0x190] sm:$0x3]
      %v277 = vld [vmem:[%s219 + $0x198] sm:$0xff]
      %v278 = vld [vmem:[%s219 + $0x1a0] sm:$0xff]
      %v279 = vld [vmem:[%s219 + $0x1a8] sm:$0x3]
      %v280 = vand.u32 2147483647, %v226
      %v281 = vand.u32 2147483647, %v227
      %v282 = vand.u32 2147483647, %v228
      %v283 = vand.u32 2147483647, %v229
      %v284 = vand.u32 2147483647, %v230
      %v285 = vand.u32 2147483647, %v231
      %v286 = vand.u32 2147483647, %v232
      %v287 = vand.u32 2147483647, %v233
      %v288 = vand.u32 2147483647, %v234
      %v289 = vand.u32 2147483647, %v235
      %v290 = vand.u32 2147483647, %v236
      %v291 = vand.u32 2147483647, %v237
      %v292 = vand.u32 2147483647, %v238
      %v293 = vand.u32 2147483647, %v239
      %v294 = vand.u32 2147483647, %v240
      %v295 = vand.u32 2147483647, %v241
      %v296 = vand.u32 2147483647, %v242
      %v297 = vand.u32 2147483647, %v243
      %v298 = vand.u32 2147483647, %v244
      %v299 = vand.u32 2147483647, %v245
      %v300 = vand.u32 2147483647, %v246
      %v301 = vand.u32 2147483647, %v247
      %v302 = vand.u32 2147483647, %v248
      %v303 = vand.u32 2147483647, %v249
      %v304 = vand.u32 2147483647, %v250
      %v305 = vand.u32 2147483647, %v251
      %v306 = vand.u32 2147483647, %v252
      %v307 = vand.u32 2147483647, %v253
      %v308 = vand.u32 2147483647, %v254
      %v309 = vand.u32 2147483647, %v255
      %v310 = vand.u32 2147483647, %v256
      %v311 = vand.u32 2147483647, %v257
      %v312 = vand.u32 2147483647, %v258
      %v313 = vand.u32 2147483647, %v259
      %v314 = vand.u32 2147483647, %v260
      %v315 = vand.u32 2147483647, %v261
      %v316 = vand.u32 2147483647, %v262
      %v317 = vand.u32 2147483647, %v263
      %v318 = vand.u32 2147483647, %v264
      %v319 = vand.u32 2147483647, %v265
      %v320 = vand.u32 2147483647, %v266
      %v321 = vand.u32 2147483647, %v267
      %v322 = vand.u32 2147483647, %v268
      %v323 = vand.u32 2147483647, %v269
      %v324 = vand.u32 2147483647, %v270
      %v325 = vand.u32 2147483647, %v271
      %v326 = vand.u32 2147483647, %v272
      %v327 = vand.u32 2147483647, %v273
      %v328 = vand.u32 2147483647, %v274
      %v329 = vand.u32 2147483647, %v275
      %v330 = vand.u32 2147483647, %v276
      %v331 = vand.u32 2147483647, %v277
      %v332 = vand.u32 2147483647, %v278
      %v333 = vand.u32 2147483647, %v279
      %v334 = vpack.c.bf16 %v281, %v280
      %v335 = vpack.c.bf16 %v284, %v283
      %v336 = vpack.c.bf16 %v287, %v286
      %v337 = vpack.c.bf16 %v290, %v289
      %v338 = vpack.c.bf16 %v293, %v292
      %v339 = vpack.c.bf16 %v296, %v295
      %v340 = vpack.c.bf16 %v299, %v298
      %v341 = vpack.c.bf16 %v302, %v301
      %v342 = vpack.c.bf16 %v305, %v304
      %v343 = vpack.c.bf16 %v308, %v307
      %v344 = vpack.c.bf16 %v311, %v310
      %v345 = vpack.c.bf16 %v314, %v313
      %v346 = vpack.c.bf16 %v317, %v316
      %v347 = vpack.c.bf16 %v320, %v319
      %v348 = vpack.c.bf16 %v323, %v322
      %v349 = vpack.c.bf16 %v326, %v325
      %v350 = vld [vmem:[%s1] sm:$0xf]
      %v351 = vld [vmem:[%s1 + $0x4] sm:$0xf]
      %v352 = vld [vmem:[%s1 + $0x8] sm:$0xf]
      %v353 = vld [vmem:[%s1 + $0xc] sm:$0xf]
      %v354 = vld [vmem:[%s1 + $0x10] sm:$0xf]
      %v355 = vld [vmem:[%s1 + $0x14] sm:$0xf]
      %v356 = vld [vmem:[%s1 + $0x18] sm:$0xf]
      %v357 = vld [vmem:[%s1 + $0x1c] sm:$0xf]
      %v358 = vld [vmem:[%s1 + $0x20] sm:$0xf]
      %v359 = vld [vmem:[%s1 + $0x24] sm:$0xf]
      %v360 = vld [vmem:[%s1 + $0x28] sm:$0xf]
      %v361 = vld [vmem:[%s1 + $0x2c] sm:$0xf]
      %v362 = vld [vmem:[%s1 + $0x30] sm:$0xf]
      %v363 = vld [vmem:[%s1 + $0x34] sm:$0xf]
      %v364 = vld [vmem:[%s1 + $0x38] sm:$0xf]
      %v365 = vld [vmem:[%s1 + $0x3c] sm:$0xf]
      %vm414 = vcmask 1046528
      %v415 = vrot.slane %v280, 1
      %v416 = vrot.slane %v281, 1
      %v417 = vsel %vm414, %v415, %v416
      %v418 = vrot.slane %v282, 1
      %v419 = vsel %vm414, %v416, %v418
      %v420 = vrot.slane %v283, 1
      %v421 = vrot.slane %v284, 1
      %v422 = vsel %vm414, %v420, %v421
      %v423 = vrot.slane %v285, 1
      %v424 = vsel %vm414, %v421, %v423
      %v425 = vrot.slane %v286, 1
      %v426 = vrot.slane %v287, 1
      %v427 = vsel %vm414, %v425, %v426
      %v428 = vrot.slane %v288, 1
      %v429 = vsel %vm414, %v426, %v428
      %v430 = vrot.slane %v289, 1
      %v431 = vrot.slane %v290, 1
      %v432 = vsel %vm414, %v430, %v431
      %v433 = vrot.slane %v291, 1
      %v434 = vsel %vm414, %v431, %v433
      %v435 = vrot.slane %v292, 1
      %v436 = vrot.slane %v293, 1
      %v437 = vsel %vm414, %v435, %v436
      %v438 = vrot.slane %v294, 1
      %v439 = vsel %vm414, %v436, %v438
      %v440 = vrot.slane %v295, 1
      %v441 = vrot.slane %v296, 1
      %v442 = vsel %vm414, %v440, %v441
      %v443 = vrot.slane %v297, 1
      %v444 = vsel %vm414, %v441, %v443
      %v445 = vrot.slane %v298, 1
      %v446 = vrot.slane %v299, 1
      %v447 = vsel %vm414, %v445, %v446
      %v448 = vrot.slane %v300, 1
      %v449 = vsel %vm414, %v446, %v448
      %v450 = vrot.slane %v301, 1
      %v451 = vrot.slane %v302, 1
      %v452 = vsel %vm414, %v450, %v451
      %v453 = vrot.slane %v303, 1
      %v454 = vsel %vm414, %v451, %v453
      %v455 = vrot.slane %v304, 1
      %v456 = vrot.slane %v305, 1
      %v457 = vsel %vm414, %v455, %v456
      %v458 = vrot.slane %v306, 1
      %v459 = vsel %vm414, %v456, %v458
      %v460 = vrot.slane %v307, 1
      %v461 = vrot.slane %v308, 1
      %v462 = vsel %vm414, %v460, %v461
      %v463 = vrot.slane %v309, 1
      %v464 = vsel %vm414, %v461, %v463
      %v465 = vrot.slane %v310, 1
      %v466 = vrot.slane %v311, 1
      %v467 = vsel %vm414, %v465, %v466
      %v468 = vrot.slane %v312, 1
      %v469 = vsel %vm414, %v466, %v468
      %v470 = vrot.slane %v313, 1
      %v471 = vrot.slane %v314, 1
      %v472 = vsel %vm414, %v470, %v471
      %v473 = vrot.slane %v315, 1
      %v474 = vsel %vm414, %v471, %v473
      %v475 = vrot.slane %v316, 1
      %v476 = vrot.slane %v317, 1
      %v477 = vsel %vm414, %v475, %v476
      %v478 = vrot.slane %v318, 1
      %v479 = vsel %vm414, %v476, %v478
      %v480 = vrot.slane %v319, 1
      %v481 = vrot.slane %v320, 1
      %v482 = vsel %vm414, %v480, %v481
      %v483 = vrot.slane %v321, 1
      %v484 = vsel %vm414, %v481, %v483
      %v485 = vrot.slane %v322, 1
      %v486 = vrot.slane %v323, 1
      %v487 = vsel %vm414, %v485, %v486
      %v488 = vrot.slane %v324, 1
      %v489 = vsel %vm414, %v486, %v488
      %v490 = vrot.slane %v325, 1
      %v491 = vrot.slane %v326, 1
      %v492 = vsel %vm414, %v490, %v491
      %v493 = vrot.slane %v327, 1
      %v494 = vsel %vm414, %v491, %v493
      %v527 = vpack.c.bf16 %v419, %v417
      %v528 = vpack.c.bf16 %v424, %v422
      %v529 = vpack.c.bf16 %v429, %v427
      %v530 = vpack.c.bf16 %v434, %v432
      %v531 = vpack.c.bf16 %v439, %v437
      %v532 = vpack.c.bf16 %v444, %v442
      %v533 = vpack.c.bf16 %v449, %v447
      %v534 = vpack.c.bf16 %v454, %v452
      %v535 = vpack.c.bf16 %v459, %v457
      %v536 = vpack.c.bf16 %v464, %v462
      %v537 = vpack.c.bf16 %v469, %v467
      %v538 = vpack.c.bf16 %v474, %v472
      %v539 = vpack.c.bf16 %v479, %v477
      %v540 = vpack.c.bf16 %v484, %v482
      %v541 = vpack.c.bf16 %v489, %v487
      %v542 = vpack.c.bf16 %v494, %v492
      %s543 = scalar_lea.vmem %s1, 64
      %v544 = vld [vmem:[%s543] sm:$0xf]
      %v545 = vld [vmem:[%s543 + $0x4] sm:$0xf]
      %v546 = vld [vmem:[%s543 + $0x8] sm:$0xf]
      %v547 = vld [vmem:[%s543 + $0xc] sm:$0xf]
      %v548 = vld [vmem:[%s543 + $0x10] sm:$0xf]
      %v549 = vld [vmem:[%s543 + $0x14] sm:$0xf]
      %v550 = vld [vmem:[%s543 + $0x18] sm:$0xf]
      %v551 = vld [vmem:[%s543 + $0x1c] sm:$0xf]
      %v552 = vld [vmem:[%s543 + $0x20] sm:$0xf]
      %v553 = vld [vmem:[%s543 + $0x24] sm:$0xf]
      %v554 = vld [vmem:[%s543 + $0x28] sm:$0xf]
      %v555 = vld [vmem:[%s543 + $0x2c] sm:$0xf]
      %v556 = vld [vmem:[%s543 + $0x30] sm:$0xf]
      %v557 = vld [vmem:[%s543 + $0x34] sm:$0xf]
      %v558 = vld [vmem:[%s543 + $0x38] sm:$0xf]
      %v559 = vld [vmem:[%s543 + $0x3c] sm:$0xf]
      %v576 = vunpack.c.l.b16 %v544
      %v577 = vunpack.c.l.b16 %v545
      %v578 = vunpack.c.l.b16 %v546
      %v579 = vunpack.c.l.b16 %v547
      %v580 = vunpack.c.l.b16 %v548
      %v581 = vunpack.c.l.b16 %v549
      %v582 = vunpack.c.l.b16 %v550
      %v583 = vunpack.c.l.b16 %v551
      %v584 = vunpack.c.l.b16 %v552
      %v585 = vunpack.c.l.b16 %v553
      %v586 = vunpack.c.l.b16 %v554
      %v587 = vunpack.c.l.b16 %v555
      %v588 = vunpack.c.l.b16 %v556
      %v589 = vunpack.c.l.b16 %v557
      %v590 = vunpack.c.l.b16 %v558
      %v591 = vunpack.c.l.b16 %v559
      %v592 = vpack.c.b16 %v577, %v576
      %v593 = vpack.c.b16 %v579, %v578
      %v594 = vpack.c.b16 %v581, %v580
      %v595 = vpack.c.b16 %v583, %v582
      %v596 = vpack.c.b16 %v585, %v584
      %v597 = vpack.c.b16 %v587, %v586
      %v598 = vpack.c.b16 %v589, %v588
      %v599 = vpack.c.b16 %v591, %v590
      %608 = vmatpush.bf16.msra.mxu0 %v599
      %609 = vmatpush.bf16.msra.mxu0 %v598
      %610 = vmatpush.bf16.msra.mxu0 %v597
      %611 = vmatpush.bf16.msra.mxu0 %v596
      %612 = vmatpush.bf16.msra.mxu0 %v595
      %613 = vmatpush.bf16.msra.mxu0 %v594
      %614 = vmatpush.bf16.msra.mxu0 %v593
      %615 = vmatpush.bf16.msra.mxu0 %v592
      %616 = vmatmul.bf16.gmra.mxu0 %v527
      %v617 = vpop.f32.mrf.mxu0
      %v618 = vadd.f32 0.0, %v617
      %v619 = vpop.f32.mrf.mxu0
      %v620 = vadd.f32 0.0, %v619
      %621 = vmatmul.bf16.gmra.mxu0 %v528
      %v622 = vpop.f32.mrf.mxu0
      %v623 = vadd.f32 0.0, %v622
      %v624 = vpop.f32.mrf.mxu0
      %v625 = vadd.f32 0.0, %v624
      %626 = vmatmul.bf16.gmra.mxu0 %v529
      %v627 = vpop.f32.mrf.mxu0
      %v628 = vadd.f32 0.0, %v627
      %v629 = vpop.f32.mrf.mxu0
      %v630 = vadd.f32 0.0, %v629
      %631 = vmatmul.bf16.gmra.mxu0 %v530
      %v632 = vpop.f32.mrf.mxu0
      %v633 = vadd.f32 0.0, %v632
      %v634 = vpop.f32.mrf.mxu0
      %v635 = vadd.f32 0.0, %v634
      %636 = vmatmul.bf16.gmra.mxu0 %v531
      %v637 = vpop.f32.mrf.mxu0
      %v638 = vadd.f32 0.0, %v637
      %v639 = vpop.f32.mrf.mxu0
      %v640 = vadd.f32 0.0, %v639
      %641 = vmatmul.bf16.gmra.mxu0 %v532
      %v642 = vpop.f32.mrf.mxu0
      %v643 = vadd.f32 0.0, %v642
      %v644 = vpop.f32.mrf.mxu0
      %v645 = vadd.f32 0.0, %v644
      %646 = vmatmul.bf16.gmra.mxu0 %v533
      %v647 = vpop.f32.mrf.mxu0
      %v648 = vadd.f32 0.0, %v647
      %v649 = vpop.f32.mrf.mxu0
      %v650 = vadd.f32 0.0, %v649
      %651 = vmatmul.bf16.gmra.mxu0 %v534
      %v652 = vpop.f32.mrf.mxu0
      %v653 = vadd.f32 0.0, %v652
      %v654 = vpop.f32.mrf.mxu0
      %v655 = vadd.f32 0.0, %v654
      %656 = vmatmul.bf16.gmra.mxu0 %v535
      %v657 = vpop.f32.mrf.mxu0
      %v658 = vadd.f32 0.0, %v657
      %v659 = vpop.f32.mrf.mxu0
      %v660 = vadd.f32 0.0, %v659
      %661 = vmatmul.bf16.gmra.mxu0 %v536
      %v662 = vpop.f32.mrf.mxu0
      %v663 = vadd.f32 0.0, %v662
      %v664 = vpop.f32.mrf.mxu0
      %v665 = vadd.f32 0.0, %v664
      %666 = vmatmul.bf16.gmra.mxu0 %v537
      %v667 = vpop.f32.mrf.mxu0
      %v668 = vadd.f32 0.0, %v667
      %v669 = vpop.f32.mrf.mxu0
      %v670 = vadd.f32 0.0, %v669
      %671 = vmatmul.bf16.gmra.mxu0 %v538
      %v672 = vpop.f32.mrf.mxu0
      %v673 = vadd.f32 0.0, %v672
      %v674 = vpop.f32.mrf.mxu0
      %v675 = vadd.f32 0.0, %v674
      %676 = vmatmul.bf16.gmra.mxu0 %v539
      %v677 = vpop.f32.mrf.mxu0
      %v678 = vadd.f32 0.0, %v677
      %v679 = vpop.f32.mrf.mxu0
      %v680 = vadd.f32 0.0, %v679
      %681 = vmatmul.bf16.gmra.mxu0 %v540
      %v682 = vpop.f32.mrf.mxu0
      %v683 = vadd.f32 0.0, %v682
      %v684 = vpop.f32.mrf.mxu0
      %v685 = vadd.f32 0.0, %v684
      %686 = vmatmul.bf16.gmra.mxu0 %v541
      %v687 = vpop.f32.mrf.mxu0
      %v688 = vadd.f32 0.0, %v687
      %v689 = vpop.f32.mrf.mxu0
      %v690 = vadd.f32 0.0, %v689
      %691 = vmatmul.bf16.gmra.mxu0 %v542
      %v692 = vpop.f32.mrf.mxu0
      %v693 = vadd.f32 0.0, %v692
      %v694 = vpop.f32.mrf.mxu0
      %v695 = vadd.f32 0.0, %v694
      %696 = vdwg.mxu0
      %v713 = vunpack.c.l.b16 %v350
      %v714 = vunpack.c.l.b16 %v351
      %v715 = vunpack.c.l.b16 %v352
      %v716 = vunpack.c.l.b16 %v353
      %v717 = vunpack.c.l.b16 %v354
      %v718 = vunpack.c.l.b16 %v355
      %v719 = vunpack.c.l.b16 %v356
      %v720 = vunpack.c.l.b16 %v357
      %v721 = vunpack.c.l.b16 %v358
      %v722 = vunpack.c.l.b16 %v359
      %v723 = vunpack.c.l.b16 %v360
      %v724 = vunpack.c.l.b16 %v361
      %v725 = vunpack.c.l.b16 %v362
      %v726 = vunpack.c.l.b16 %v363
      %v727 = vunpack.c.l.b16 %v364
      %v728 = vunpack.c.l.b16 %v365
      %v729 = vpack.c.b16 %v714, %v713
      %v730 = vpack.c.b16 %v716, %v715
      %v731 = vpack.c.b16 %v718, %v717
      %v732 = vpack.c.b16 %v720, %v719
      %v733 = vpack.c.b16 %v722, %v721
      %v734 = vpack.c.b16 %v724, %v723
      %v735 = vpack.c.b16 %v726, %v725
      %v736 = vpack.c.b16 %v728, %v727
      %745 = vmatpush.bf16.msra.mxu0 %v736
      %746 = vmatpush.bf16.msra.mxu0 %v735
      %747 = vmatpush.bf16.msra.mxu0 %v734
      %748 = vmatpush.bf16.msra.mxu0 %v733
      %749 = vmatpush.bf16.msra.mxu0 %v732
      %750 = vmatpush.bf16.msra.mxu0 %v731
      %751 = vmatpush.bf16.msra.mxu0 %v730
      %752 = vmatpush.bf16.msra.mxu0 %v729
      %753 = vmatmul.bf16.gmra.mxu0 %v334
      %v754 = vpop.f32.mrf.mxu0
      %v755 = vadd.f32 %v618, %v754
      %v756 = vpop.f32.mrf.mxu0
      %v757 = vadd.f32 %v620, %v756
      %758 = vmatmul.bf16.gmra.mxu0 %v335
      %v759 = vpop.f32.mrf.mxu0
      %v760 = vadd.f32 %v623, %v759
      %v761 = vpop.f32.mrf.mxu0
      %v762 = vadd.f32 %v625, %v761
      %763 = vmatmul.bf16.gmra.mxu0 %v336
      %v764 = vpop.f32.mrf.mxu0
      %v765 = vadd.f32 %v628, %v764
      %v766 = vpop.f32.mrf.mxu0
      %v767 = vadd.f32 %v630, %v766
      %768 = vmatmul.bf16.gmra.mxu0 %v337
      %v769 = vpop.f32.mrf.mxu0
      %v770 = vadd.f32 %v633, %v769
      %v771 = vpop.f32.mrf.mxu0
      %v772 = vadd.f32 %v635, %v771
      %773 = vmatmul.bf16.gmra.mxu0 %v338
      %v774 = vpop.f32.mrf.mxu0
      %v775 = vadd.f32 %v638, %v774
      %v776 = vpop.f32.mrf.mxu0
      %v777 = vadd.f32 %v640, %v776
      %778 = vmatmul.bf16.gmra.mxu0 %v339
      %v779 = vpop.f32.mrf.mxu0
      %v780 = vadd.f32 %v643, %v779
      %v781 = vpop.f32.mrf.mxu0
      %v782 = vadd.f32 %v645, %v781
      %783 = vmatmul.bf16.gmra.mxu0 %v340
      %v784 = vpop.f32.mrf.mxu0
      %v785 = vadd.f32 %v648, %v784
      %v786 = vpop.f32.mrf.mxu0
      %v787 = vadd.f32 %v650, %v786
      %788 = vmatmul.bf16.gmra.mxu0 %v341
      %v789 = vpop.f32.mrf.mxu0
      %v790 = vadd.f32 %v653, %v789
      %v791 = vpop.f32.mrf.mxu0
      %v792 = vadd.f32 %v655, %v791
      %793 = vmatmul.bf16.gmra.mxu0 %v342
      %v794 = vpop.f32.mrf.mxu0
      %v795 = vadd.f32 %v658, %v794
      %v796 = vpop.f32.mrf.mxu0
      %v797 = vadd.f32 %v660, %v796
      %798 = vmatmul.bf16.gmra.mxu0 %v343
      %v799 = vpop.f32.mrf.mxu0
      %v800 = vadd.f32 %v663, %v799
      %v801 = vpop.f32.mrf.mxu0
      %v802 = vadd.f32 %v665, %v801
      %803 = vmatmul.bf16.gmra.mxu0 %v344
      %v804 = vpop.f32.mrf.mxu0
      %v805 = vadd.f32 %v668, %v804
      %v806 = vpop.f32.mrf.mxu0
      %v807 = vadd.f32 %v670, %v806
      %808 = vmatmul.bf16.gmra.mxu0 %v345
      %v809 = vpop.f32.mrf.mxu0
      %v810 = vadd.f32 %v673, %v809
      %v811 = vpop.f32.mrf.mxu0
      %v812 = vadd.f32 %v675, %v811
      %813 = vmatmul.bf16.gmra.mxu0 %v346
      %v814 = vpop.f32.mrf.mxu0
      %v815 = vadd.f32 %v678, %v814
      %v816 = vpop.f32.mrf.mxu0
      %v817 = vadd.f32 %v680, %v816
      %818 = vmatmul.bf16.gmra.mxu0 %v347
      %v819 = vpop.f32.mrf.mxu0
      %v820 = vadd.f32 %v683, %v819
      %v821 = vpop.f32.mrf.mxu0
      %v822 = vadd.f32 %v685, %v821
      %823 = vmatmul.bf16.gmra.mxu0 %v348
      %v824 = vpop.f32.mrf.mxu0
      %v825 = vadd.f32 %v688, %v824
      %v826 = vpop.f32.mrf.mxu0
      %v827 = vadd.f32 %v690, %v826
      %828 = vmatmul.bf16.gmra.mxu0 %v349
      %v829 = vpop.f32.mrf.mxu0
      %v830 = vadd.f32 %v693, %v829
      %v831 = vpop.f32.mrf.mxu0
      %v832 = vadd.f32 %v695, %v831
      %833 = vdwg.mxu0
      %vm834 = vcmask 1045504
      %v835 = vrot.slane %v280, 2
      %v836 = vrot.slane %v281, 2
      %v837 = vsel %vm834, %v835, %v836
      %v838 = vrot.slane %v282, 2
      %v839 = vsel %vm834, %v836, %v838
      %v840 = vrot.slane %v283, 2
      %v841 = vrot.slane %v284, 2
      %v842 = vsel %vm834, %v840, %v841
      %v843 = vrot.slane %v285, 2
      %v844 = vsel %vm834, %v841, %v843
      %v845 = vrot.slane %v286, 2
      %v846 = vrot.slane %v287, 2
      %v847 = vsel %vm834, %v845, %v846
      %v848 = vrot.slane %v288, 2
      %v849 = vsel %vm834, %v846, %v848
      %v850 = vrot.slane %v289, 2
      %v851 = vrot.slane %v290, 2
      %v852 = vsel %vm834, %v850, %v851
      %v853 = vrot.slane %v291, 2
      %v854 = vsel %vm834, %v851, %v853
      %v855 = vrot.slane %v292, 2
      %v856 = vrot.slane %v293, 2
      %v857 = vsel %vm834, %v855, %v856
      %v858 = vrot.slane %v294, 2
      %v859 = vsel %vm834, %v856, %v858
      %v860 = vrot.slane %v295, 2
      %v861 = vrot.slane %v296, 2
      %v862 = vsel %vm834, %v860, %v861
      %v863 = vrot.slane %v297, 2
      %v864 = vsel %vm834, %v861, %v863
      %v865 = vrot.slane %v298, 2
      %v866 = vrot.slane %v299, 2
      %v867 = vsel %vm834, %v865, %v866
      %v868 = vrot.slane %v300, 2
      %v869 = vsel %vm834, %v866, %v868
      %v870 = vrot.slane %v301, 2
      %v871 = vrot.slane %v302, 2
      %v872 = vsel %vm834, %v870, %v871
      %v873 = vrot.slane %v303, 2
      %v874 = vsel %vm834, %v871, %v873
      %v875 = vrot.slane %v304, 2
      %v876 = vrot.slane %v305, 2
      %v877 = vsel %vm834, %v875, %v876
      %v878 = vrot.slane %v306, 2
      %v879 = vsel %vm834, %v876, %v878
      %v880 = vrot.slane %v307, 2
      %v881 = vrot.slane %v308, 2
      %v882 = vsel %vm834, %v880, %v881
      %v883 = vrot.slane %v309, 2
      %v884 = vsel %vm834, %v881, %v883
      %v885 = vrot.slane %v310, 2
      %v886 = vrot.slane %v311, 2
      %v887 = vsel %vm834, %v885, %v886
      %v888 = vrot.slane %v312, 2
      %v889 = vsel %vm834, %v886, %v888
      %v890 = vrot.slane %v313, 2
      %v891 = vrot.slane %v314, 2
      %v892 = vsel %vm834, %v890, %v891
      %v893 = vrot.slane %v315, 2
      %v894 = vsel %vm834, %v891, %v893
      %v895 = vrot.slane %v316, 2
      %v896 = vrot.slane %v317, 2
      %v897 = vsel %vm834, %v895, %v896
      %v898 = vrot.slane %v318, 2
      %v899 = vsel %vm834, %v896, %v898
      %v900 = vrot.slane %v319, 2
      %v901 = vrot.slane %v320, 2
      %v902 = vsel %vm834, %v900, %v901
      %v903 = vrot.slane %v321, 2
      %v904 = vsel %vm834, %v901, %v903
      %v905 = vrot.slane %v322, 2
      %v906 = vrot.slane %v323, 2
      %v907 = vsel %vm834, %v905, %v906
      %v908 = vrot.slane %v324, 2
      %v909 = vsel %vm834, %v906, %v908
      %v910 = vrot.slane %v325, 2
      %v911 = vrot.slane %v326, 2
      %v912 = vsel %vm834, %v910, %v911
      %v913 = vrot.slane %v327, 2
      %v914 = vsel %vm834, %v911, %v913
      %v947 = vpack.c.bf16 %v839, %v837
      %v948 = vpack.c.bf16 %v844, %v842
      %v949 = vpack.c.bf16 %v849, %v847
      %v950 = vpack.c.bf16 %v854, %v852
      %v951 = vpack.c.bf16 %v859, %v857
      %v952 = vpack.c.bf16 %v864, %v862
      %v953 = vpack.c.bf16 %v869, %v867
      %v954 = vpack.c.bf16 %v874, %v872
      %v955 = vpack.c.bf16 %v879, %v877
      %v956 = vpack.c.bf16 %v884, %v882
      %v957 = vpack.c.bf16 %v889, %v887
      %v958 = vpack.c.bf16 %v894, %v892
      %v959 = vpack.c.bf16 %v899, %v897
      %v960 = vpack.c.bf16 %v904, %v902
      %v961 = vpack.c.bf16 %v909, %v907
      %v962 = vpack.c.bf16 %v914, %v912
      %s963 = scalar_lea.vmem %s1, 128
      %v964 = vld [vmem:[%s963] sm:$0xf]
      %v965 = vld [vmem:[%s963 + $0x4] sm:$0xf]
      %v966 = vld [vmem:[%s963 + $0x8] sm:$0xf]
      %v967 = vld [vmem:[%s963 + $0xc] sm:$0xf]
      %v968 = vld [vmem:[%s963 + $0x10] sm:$0xf]
      %v969 = vld [vmem:[%s963 + $0x14] sm:$0xf]
      %v970 = vld [vmem:[%s963 + $0x18] sm:$0xf]
      %v971 = vld [vmem:[%s963 + $0x1c] sm:$0xf]
      %v972 = vld [vmem:[%s963 + $0x20] sm:$0xf]
      %v973 = vld [vmem:[%s963 + $0x24] sm:$0xf]
      %v974 = vld [vmem:[%s963 + $0x28] sm:$0xf]
      %v975 = vld [vmem:[%s963 + $0x2c] sm:$0xf]
      %v976 = vld [vmem:[%s963 + $0x30] sm:$0xf]
      %v977 = vld [vmem:[%s963 + $0x34] sm:$0xf]
      %v978 = vld [vmem:[%s963 + $0x38] sm:$0xf]
      %v979 = vld [vmem:[%s963 + $0x3c] sm:$0xf]
      %v996 = vunpack.c.l.b16 %v964
      %v997 = vunpack.c.l.b16 %v965
      %v998 = vunpack.c.l.b16 %v966
      %v999 = vunpack.c.l.b16 %v967
      %v1000 = vunpack.c.l.b16 %v968
      %v1001 = vunpack.c.l.b16 %v969
      %v1002 = vunpack.c.l.b16 %v970
      %v1003 = vunpack.c.l.b16 %v971
      %v1004 = vunpack.c.l.b16 %v972
      %v1005 = vunpack.c.l.b16 %v973
      %v1006 = vunpack.c.l.b16 %v974
      %v1007 = vunpack.c.l.b16 %v975
      %v1008 = vunpack.c.l.b16 %v976
      %v1009 = vunpack.c.l.b16 %v977
      %v1010 = vunpack.c.l.b16 %v978
      %v1011 = vunpack.c.l.b16 %v979
      %v1012 = vpack.c.b16 %v997, %v996
      %v1013 = vpack.c.b16 %v999, %v998
      %v1014 = vpack.c.b16 %v1001, %v1000
      %v1015 = vpack.c.b16 %v1003, %v1002
      %v1016 = vpack.c.b16 %v1005, %v1004
      %v1017 = vpack.c.b16 %v1007, %v1006
      %v1018 = vpack.c.b16 %v1009, %v1008
      %v1019 = vpack.c.b16 %v1011, %v1010
      %1028 = vmatpush.bf16.msra.mxu0 %v1019
      %1029 = vmatpush.bf16.msra.mxu0 %v1018
      %1030 = vmatpush.bf16.msra.mxu0 %v1017
      %1031 = vmatpush.bf16.msra.mxu0 %v1016
      %1032 = vmatpush.bf16.msra.mxu0 %v1015
      %1033 = vmatpush.bf16.msra.mxu0 %v1014
      %1034 = vmatpush.bf16.msra.mxu0 %v1013
      %1035 = vmatpush.bf16.msra.mxu0 %v1012
      %1036 = vmatmul.bf16.gmra.mxu0 %v947
      %v1037 = vpop.f32.mrf.mxu0
      %v1038 = vadd.f32 0.0, %v1037
      %v1039 = vpop.f32.mrf.mxu0
      %v1040 = vadd.f32 0.0, %v1039
      %1041 = vmatmul.bf16.gmra.mxu0 %v948
      %v1042 = vpop.f32.mrf.mxu0
      %v1043 = vadd.f32 0.0, %v1042
      %v1044 = vpop.f32.mrf.mxu0
      %v1045 = vadd.f32 0.0, %v1044
      %1046 = vmatmul.bf16.gmra.mxu0 %v949
      %v1047 = vpop.f32.mrf.mxu0
      %v1048 = vadd.f32 0.0, %v1047
      %v1049 = vpop.f32.mrf.mxu0
      %v1050 = vadd.f32 0.0, %v1049
      %1051 = vmatmul.bf16.gmra.mxu0 %v950
      %v1052 = vpop.f32.mrf.mxu0
      %v1053 = vadd.f32 0.0, %v1052
      %v1054 = vpop.f32.mrf.mxu0
      %v1055 = vadd.f32 0.0, %v1054
      %1056 = vmatmul.bf16.gmra.mxu0 %v951
      %v1057 = vpop.f32.mrf.mxu0
      %v1058 = vadd.f32 0.0, %v1057
      %v1059 = vpop.f32.mrf.mxu0
      %v1060 = vadd.f32 0.0, %v1059
      %1061 = vmatmul.bf16.gmra.mxu0 %v952
      %v1062 = vpop.f32.mrf.mxu0
      %v1063 = vadd.f32 0.0, %v1062
      %v1064 = vpop.f32.mrf.mxu0
      %v1065 = vadd.f32 0.0, %v1064
      %1066 = vmatmul.bf16.gmra.mxu0 %v953
      %v1067 = vpop.f32.mrf.mxu0
      %v1068 = vadd.f32 0.0, %v1067
      %v1069 = vpop.f32.mrf.mxu0
      %v1070 = vadd.f32 0.0, %v1069
      %1071 = vmatmul.bf16.gmra.mxu0 %v954
      %v1072 = vpop.f32.mrf.mxu0
      %v1073 = vadd.f32 0.0, %v1072
      %v1074 = vpop.f32.mrf.mxu0
      %v1075 = vadd.f32 0.0, %v1074
      %1076 = vmatmul.bf16.gmra.mxu0 %v955
      %v1077 = vpop.f32.mrf.mxu0
      %v1078 = vadd.f32 0.0, %v1077
      %v1079 = vpop.f32.mrf.mxu0
      %v1080 = vadd.f32 0.0, %v1079
      %1081 = vmatmul.bf16.gmra.mxu0 %v956
      %v1082 = vpop.f32.mrf.mxu0
      %v1083 = vadd.f32 0.0, %v1082
      %v1084 = vpop.f32.mrf.mxu0
      %v1085 = vadd.f32 0.0, %v1084
      %1086 = vmatmul.bf16.gmra.mxu0 %v957
      %v1087 = vpop.f32.mrf.mxu0
      %v1088 = vadd.f32 0.0, %v1087
      %v1089 = vpop.f32.mrf.mxu0
      %v1090 = vadd.f32 0.0, %v1089
      %1091 = vmatmul.bf16.gmra.mxu0 %v958
      %v1092 = vpop.f32.mrf.mxu0
      %v1093 = vadd.f32 0.0, %v1092
      %v1094 = vpop.f32.mrf.mxu0
      %v1095 = vadd.f32 0.0, %v1094
      %1096 = vmatmul.bf16.gmra.mxu0 %v959
      %v1097 = vpop.f32.mrf.mxu0
      %v1098 = vadd.f32 0.0, %v1097
      %v1099 = vpop.f32.mrf.mxu0
      %v1100 = vadd.f32 0.0, %v1099
      %1101 = vmatmul.bf16.gmra.mxu0 %v960
      %v1102 = vpop.f32.mrf.mxu0
      %v1103 = vadd.f32 0.0, %v1102
      %v1104 = vpop.f32.mrf.mxu0
      %v1105 = vadd.f32 0.0, %v1104
      %1106 = vmatmul.bf16.gmra.mxu0 %v961
      %v1107 = vpop.f32.mrf.mxu0
      %v1108 = vadd.f32 0.0, %v1107
      %v1109 = vpop.f32.mrf.mxu0
      %v1110 = vadd.f32 0.0, %v1109
      %1111 = vmatmul.bf16.gmra.mxu0 %v962
      %v1112 = vpop.f32.mrf.mxu0
      %v1113 = vadd.f32 0.0, %v1112
      %v1114 = vpop.f32.mrf.mxu0
      %v1115 = vadd.f32 0.0, %v1114
      %1116 = vdwg.mxu0
      %v1117 = vadd.f32 %v755, %v1038
      %v1118 = vadd.f32 %v757, %v1040
      %v1119 = vadd.f32 %v760, %v1043
      %v1120 = vadd.f32 %v762, %v1045
      %v1121 = vadd.f32 %v765, %v1048
      %v1122 = vadd.f32 %v767, %v1050
      %v1123 = vadd.f32 %v770, %v1053
      %v1124 = vadd.f32 %v772, %v1055
      %v1125 = vadd.f32 %v775, %v1058
      %v1126 = vadd.f32 %v777, %v1060
      %v1127 = vadd.f32 %v780, %v1063
      %v1128 = vadd.f32 %v782, %v1065
      %v1129 = vadd.f32 %v785, %v1068
      %v1130 = vadd.f32 %v787, %v1070
      %v1131 = vadd.f32 %v790, %v1073
      %v1132 = vadd.f32 %v792, %v1075
      %v1133 = vadd.f32 %v795, %v1078
      %v1134 = vadd.f32 %v797, %v1080
      %v1135 = vadd.f32 %v800, %v1083
      %v1136 = vadd.f32 %v802, %v1085
      %v1137 = vadd.f32 %v805, %v1088
      %v1138 = vadd.f32 %v807, %v1090
      %v1139 = vadd.f32 %v810, %v1093
      %v1140 = vadd.f32 %v812, %v1095
      %v1141 = vadd.f32 %v815, %v1098
      %v1142 = vadd.f32 %v817, %v1100
      %v1143 = vadd.f32 %v820, %v1103
      %v1144 = vadd.f32 %v822, %v1105
      %v1145 = vadd.f32 %v825, %v1108
      %v1146 = vadd.f32 %v827, %v1110
      %v1147 = vadd.f32 %v830, %v1113
      %v1148 = vadd.f32 %v832, %v1115
      %v1149 = vpack.c.bf16 %v329, %v328
      %s1150 = scalar_lea.vmem %s1, 192
      %v1151 = vld [vmem:[%s1150] sm:$0xf]
      %v1152 = vld [vmem:[%s1150 + $0x4] sm:$0xf]
      %v1153 = vld [vmem:[%s1150 + $0x8] sm:$0xf]
      %v1154 = vld [vmem:[%s1150 + $0xc] sm:$0xf]
      %v1155 = vld [vmem:[%s1150 + $0x10] sm:$0xf]
      %v1156 = vld [vmem:[%s1150 + $0x14] sm:$0xf]
      %v1157 = vld [vmem:[%s1150 + $0x18] sm:$0xf]
      %v1158 = vld [vmem:[%s1150 + $0x1c] sm:$0xf]
      %v1159 = vld [vmem:[%s1150 + $0x20] sm:$0xf]
      %v1160 = vld [vmem:[%s1150 + $0x24] sm:$0xf]
      %v1161 = vld [vmem:[%s1150 + $0x28] sm:$0xf]
      %v1162 = vld [vmem:[%s1150 + $0x2c] sm:$0xf]
      %v1163 = vld [vmem:[%s1150 + $0x30] sm:$0xf]
      %v1164 = vld [vmem:[%s1150 + $0x34] sm:$0xf]
      %v1165 = vld [vmem:[%s1150 + $0x38] sm:$0xf]
      %v1166 = vld [vmem:[%s1150 + $0x3c] sm:$0xf]
      %v1183 = vunpack.c.l.b16 %v1151
      %v1184 = vunpack.c.l.b16 %v1152
      %v1185 = vunpack.c.l.b16 %v1153
      %v1186 = vunpack.c.l.b16 %v1154
      %v1187 = vunpack.c.l.b16 %v1155
      %v1188 = vunpack.c.l.b16 %v1156
      %v1189 = vunpack.c.l.b16 %v1157
      %v1190 = vunpack.c.l.b16 %v1158
      %v1191 = vunpack.c.l.b16 %v1159
      %v1192 = vunpack.c.l.b16 %v1160
      %v1193 = vunpack.c.l.b16 %v1161
      %v1194 = vunpack.c.l.b16 %v1162
      %v1195 = vunpack.c.l.b16 %v1163
      %v1196 = vunpack.c.l.b16 %v1164
      %v1197 = vunpack.c.l.b16 %v1165
      %v1198 = vunpack.c.l.b16 %v1166
      %v1199 = vpack.c.b16 %v1184, %v1183
      %v1200 = vpack.c.b16 %v1186, %v1185
      %v1201 = vpack.c.b16 %v1188, %v1187
      %v1202 = vpack.c.b16 %v1190, %v1189
      %v1203 = vpack.c.b16 %v1192, %v1191
      %v1204 = vpack.c.b16 %v1194, %v1193
      %v1205 = vpack.c.b16 %v1196, %v1195
      %v1206 = vpack.c.b16 %v1198, %v1197
      %1215 = vmatpush.bf16.msra.mxu0 %v1206
      %1216 = vmatpush.bf16.msra.mxu0 %v1205
      %1217 = vmatpush.bf16.msra.mxu0 %v1204
      %1218 = vmatpush.bf16.msra.mxu0 %v1203
      %1219 = vmatpush.bf16.msra.mxu0 %v1202
      %1220 = vmatpush.bf16.msra.mxu0 %v1201
      %1221 = vmatpush.bf16.msra.mxu0 %v1200
      %1222 = vmatpush.bf16.msra.mxu0 %v1199
      %1223 = vmatmul.bf16.gmra.mxu0 %v335
      %v1224 = vpop.f32.mrf.mxu0
      %v1225 = vadd.f32 0.0, %v1224
      %v1226 = vpop.f32.mrf.mxu0
      %v1227 = vadd.f32 0.0, %v1226
      %1228 = vmatmul.bf16.gmra.mxu0 %v336
      %v1229 = vpop.f32.mrf.mxu0
      %v1230 = vadd.f32 0.0, %v1229
      %v1231 = vpop.f32.mrf.mxu0
      %v1232 = vadd.f32 0.0, %v1231
      %1233 = vmatmul.bf16.gmra.mxu0 %v337
      %v1234 = vpop.f32.mrf.mxu0
      %v1235 = vadd.f32 0.0, %v1234
      %v1236 = vpop.f32.mrf.mxu0
      %v1237 = vadd.f32 0.0, %v1236
      %1238 = vmatmul.bf16.gmra.mxu0 %v338
      %v1239 = vpop.f32.mrf.mxu0
      %v1240 = vadd.f32 0.0, %v1239
      %v1241 = vpop.f32.mrf.mxu0
      %v1242 = vadd.f32 0.0, %v1241
      %1243 = vmatmul.bf16.gmra.mxu0 %v339
      %v1244 = vpop.f32.mrf.mxu0
      %v1245 = vadd.f32 0.0, %v1244
      %v1246 = vpop.f32.mrf.mxu0
      %v1247 = vadd.f32 0.0, %v1246
      %1248 = vmatmul.bf16.gmra.mxu0 %v340
      %v1249 = vpop.f32.mrf.mxu0
      %v1250 = vadd.f32 0.0, %v1249
      %v1251 = vpop.f32.mrf.mxu0
      %v1252 = vadd.f32 0.0, %v1251
      %1253 = vmatmul.bf16.gmra.mxu0 %v341
      %v1254 = vpop.f32.mrf.mxu0
      %v1255 = vadd.f32 0.0, %v1254
      %v1256 = vpop.f32.mrf.mxu0
      %v1257 = vadd.f32 0.0, %v1256
      %1258 = vmatmul.bf16.gmra.mxu0 %v342
      %v1259 = vpop.f32.mrf.mxu0
      %v1260 = vadd.f32 0.0, %v1259
      %v1261 = vpop.f32.mrf.mxu0
      %v1262 = vadd.f32 0.0, %v1261
      %1263 = vmatmul.bf16.gmra.mxu0 %v343
      %v1264 = vpop.f32.mrf.mxu0
      %v1265 = vadd.f32 0.0, %v1264
      %v1266 = vpop.f32.mrf.mxu0
      %v1267 = vadd.f32 0.0, %v1266
      %1268 = vmatmul.bf16.gmra.mxu0 %v344
      %v1269 = vpop.f32.mrf.mxu0
      %v1270 = vadd.f32 0.0, %v1269
      %v1271 = vpop.f32.mrf.mxu0
      %v1272 = vadd.f32 0.0, %v1271
      %1273 = vmatmul.bf16.gmra.mxu0 %v345
      %v1274 = vpop.f32.mrf.mxu0
      %v1275 = vadd.f32 0.0, %v1274
      %v1276 = vpop.f32.mrf.mxu0
      %v1277 = vadd.f32 0.0, %v1276
      %1278 = vmatmul.bf16.gmra.mxu0 %v346
      %v1279 = vpop.f32.mrf.mxu0
      %v1280 = vadd.f32 0.0, %v1279
      %v1281 = vpop.f32.mrf.mxu0
      %v1282 = vadd.f32 0.0, %v1281
      %1283 = vmatmul.bf16.gmra.mxu0 %v347
      %v1284 = vpop.f32.mrf.mxu0
      %v1285 = vadd.f32 0.0, %v1284
      %v1286 = vpop.f32.mrf.mxu0
      %v1287 = vadd.f32 0.0, %v1286
      %1288 = vmatmul.bf16.gmra.mxu0 %v348
      %v1289 = vpop.f32.mrf.mxu0
      %v1290 = vadd.f32 0.0, %v1289
      %v1291 = vpop.f32.mrf.mxu0
      %v1292 = vadd.f32 0.0, %v1291
      %1293 = vmatmul.bf16.gmra.mxu0 %v349
      %v1294 = vpop.f32.mrf.mxu0
      %v1295 = vadd.f32 0.0, %v1294
      %v1296 = vpop.f32.mrf.mxu0
      %v1297 = vadd.f32 0.0, %v1296
      %1298 = vmatmul.bf16.gmra.mxu0 %v1149
      %v1299 = vpop.f32.mrf.mxu0
      %v1300 = vadd.f32 0.0, %v1299
      %v1301 = vpop.f32.mrf.mxu0
      %v1302 = vadd.f32 0.0, %v1301
      %1303 = vdwg.mxu0
      %v1304 = vadd.f32 %v1117, %v1225
      %v1305 = vadd.f32 %v1118, %v1227
      %v1306 = vadd.f32 %v1119, %v1230
      %v1307 = vadd.f32 %v1120, %v1232
      %v1308 = vadd.f32 %v1121, %v1235
      %v1309 = vadd.f32 %v1122, %v1237
      %v1310 = vadd.f32 %v1123, %v1240
      %v1311 = vadd.f32 %v1124, %v1242
      %v1312 = vadd.f32 %v1125, %v1245
      %v1313 = vadd.f32 %v1126, %v1247
      %v1314 = vadd.f32 %v1127, %v1250
      %v1315 = vadd.f32 %v1128, %v1252
      %v1316 = vadd.f32 %v1129, %v1255
      %v1317 = vadd.f32 %v1130, %v1257
      %v1318 = vadd.f32 %v1131, %v1260
      %v1319 = vadd.f32 %v1132, %v1262
      %v1320 = vadd.f32 %v1133, %v1265
      %v1321 = vadd.f32 %v1134, %v1267
      %v1322 = vadd.f32 %v1135, %v1270
      %v1323 = vadd.f32 %v1136, %v1272
      %v1324 = vadd.f32 %v1137, %v1275
      %v1325 = vadd.f32 %v1138, %v1277
      %v1326 = vadd.f32 %v1139, %v1280
      %v1327 = vadd.f32 %v1140, %v1282
      %v1328 = vadd.f32 %v1141, %v1285
      %v1329 = vadd.f32 %v1142, %v1287
      %v1330 = vadd.f32 %v1143, %v1290
      %v1331 = vadd.f32 %v1144, %v1292
      %v1332 = vadd.f32 %v1145, %v1295
      %v1333 = vadd.f32 %v1146, %v1297
      %v1334 = vadd.f32 %v1147, %v1300
      %v1335 = vadd.f32 %v1148, %v1302
      %v1339 = vrot.slane %v328, 1
      %v1340 = vrot.slane %v329, 1
      %v1341 = vsel %vm414, %v1339, %v1340
      %v1342 = vrot.slane %v330, 1
      %v1343 = vsel %vm414, %v1340, %v1342
      %v1346 = vpack.c.bf16 %v1343, %v1341
      %s1347 = scalar_lea.vmem %s1, 256
      %v1348 = vld [vmem:[%s1347] sm:$0xf]
      %v1349 = vld [vmem:[%s1347 + $0x4] sm:$0xf]
      %v1350 = vld [vmem:[%s1347 + $0x8] sm:$0xf]
      %v1351 = vld [vmem:[%s1347 + $0xc] sm:$0xf]
      %v1352 = vld [vmem:[%s1347 + $0x10] sm:$0xf]
      %v1353 = vld [vmem:[%s1347 + $0x14] sm:$0xf]
      %v1354 = vld [vmem:[%s1347 + $0x18] sm:$0xf]
      %v1355 = vld [vmem:[%s1347 + $0x1c] sm:$0xf]
      %v1356 = vld [vmem:[%s1347 + $0x20] sm:$0xf]
      %v1357 = vld [vmem:[%s1347 + $0x24] sm:$0xf]
      %v1358 = vld [vmem:[%s1347 + $0x28] sm:$0xf]
      %v1359 = vld [vmem:[%s1347 + $0x2c] sm:$0xf]
      %v1360 = vld [vmem:[%s1347 + $0x30] sm:$0xf]
      %v1361 = vld [vmem:[%s1347 + $0x34] sm:$0xf]
      %v1362 = vld [vmem:[%s1347 + $0x38] sm:$0xf]
      %v1363 = vld [vmem:[%s1347 + $0x3c] sm:$0xf]
      %v1380 = vunpack.c.l.b16 %v1348
      %v1381 = vunpack.c.l.b16 %v1349
      %v1382 = vunpack.c.l.b16 %v1350
      %v1383 = vunpack.c.l.b16 %v1351
      %v1384 = vunpack.c.l.b16 %v1352
      %v1385 = vunpack.c.l.b16 %v1353
      %v1386 = vunpack.c.l.b16 %v1354
      %v1387 = vunpack.c.l.b16 %v1355
      %v1388 = vunpack.c.l.b16 %v1356
      %v1389 = vunpack.c.l.b16 %v1357
      %v1390 = vunpack.c.l.b16 %v1358
      %v1391 = vunpack.c.l.b16 %v1359
      %v1392 = vunpack.c.l.b16 %v1360
      %v1393 = vunpack.c.l.b16 %v1361
      %v1394 = vunpack.c.l.b16 %v1362
      %v1395 = vunpack.c.l.b16 %v1363
      %v1396 = vpack.c.b16 %v1381, %v1380
      %v1397 = vpack.c.b16 %v1383, %v1382
      %v1398 = vpack.c.b16 %v1385, %v1384
      %v1399 = vpack.c.b16 %v1387, %v1386
      %v1400 = vpack.c.b16 %v1389, %v1388
      %v1401 = vpack.c.b16 %v1391, %v1390
      %v1402 = vpack.c.b16 %v1393, %v1392
      %v1403 = vpack.c.b16 %v1395, %v1394
      %1412 = vmatpush.bf16.msra.mxu0 %v1403
      %1413 = vmatpush.bf16.msra.mxu0 %v1402
      %1414 = vmatpush.bf16.msra.mxu0 %v1401
      %1415 = vmatpush.bf16.msra.mxu0 %v1400
      %1416 = vmatpush.bf16.msra.mxu0 %v1399
      %1417 = vmatpush.bf16.msra.mxu0 %v1398
      %1418 = vmatpush.bf16.msra.mxu0 %v1397
      %1419 = vmatpush.bf16.msra.mxu0 %v1396
      %1420 = vmatmul.bf16.gmra.mxu0 %v528
      %v1421 = vpop.f32.mrf.mxu0
      %v1422 = vadd.f32 0.0, %v1421
      %v1423 = vpop.f32.mrf.mxu0
      %v1424 = vadd.f32 0.0, %v1423
      %1425 = vmatmul.bf16.gmra.mxu0 %v529
      %v1426 = vpop.f32.mrf.mxu0
      %v1427 = vadd.f32 0.0, %v1426
      %v1428 = vpop.f32.mrf.mxu0
      %v1429 = vadd.f32 0.0, %v1428
      %1430 = vmatmul.bf16.gmra.mxu0 %v530
      %v1431 = vpop.f32.mrf.mxu0
      %v1432 = vadd.f32 0.0, %v1431
      %v1433 = vpop.f32.mrf.mxu0
      %v1434 = vadd.f32 0.0, %v1433
      %1435 = vmatmul.bf16.gmra.mxu0 %v531
      %v1436 = vpop.f32.mrf.mxu0
      %v1437 = vadd.f32 0.0, %v1436
      %v1438 = vpop.f32.mrf.mxu0
      %v1439 = vadd.f32 0.0, %v1438
      %1440 = vmatmul.bf16.gmra.mxu0 %v532
      %v1441 = vpop.f32.mrf.mxu0
      %v1442 = vadd.f32 0.0, %v1441
      %v1443 = vpop.f32.mrf.mxu0
      %v1444 = vadd.f32 0.0, %v1443
      %1445 = vmatmul.bf16.gmra.mxu0 %v533
      %v1446 = vpop.f32.mrf.mxu0
      %v1447 = vadd.f32 0.0, %v1446
      %v1448 = vpop.f32.mrf.mxu0
      %v1449 = vadd.f32 0.0, %v1448
      %1450 = vmatmul.bf16.gmra.mxu0 %v534
      %v1451 = vpop.f32.mrf.mxu0
      %v1452 = vadd.f32 0.0, %v1451
      %v1453 = vpop.f32.mrf.mxu0
      %v1454 = vadd.f32 0.0, %v1453
      %1455 = vmatmul.bf16.gmra.mxu0 %v535
      %v1456 = vpop.f32.mrf.mxu0
      %v1457 = vadd.f32 0.0, %v1456
      %v1458 = vpop.f32.mrf.mxu0
      %v1459 = vadd.f32 0.0, %v1458
      %1460 = vmatmul.bf16.gmra.mxu0 %v536
      %v1461 = vpop.f32.mrf.mxu0
      %v1462 = vadd.f32 0.0, %v1461
      %v1463 = vpop.f32.mrf.mxu0
      %v1464 = vadd.f32 0.0, %v1463
      %1465 = vmatmul.bf16.gmra.mxu0 %v537
      %v1466 = vpop.f32.mrf.mxu0
      %v1467 = vadd.f32 0.0, %v1466
      %v1468 = vpop.f32.mrf.mxu0
      %v1469 = vadd.f32 0.0, %v1468
      %1470 = vmatmul.bf16.gmra.mxu0 %v538
      %v1471 = vpop.f32.mrf.mxu0
      %v1472 = vadd.f32 0.0, %v1471
      %v1473 = vpop.f32.mrf.mxu0
      %v1474 = vadd.f32 0.0, %v1473
      %1475 = vmatmul.bf16.gmra.mxu0 %v539
      %v1476 = vpop.f32.mrf.mxu0
      %v1477 = vadd.f32 0.0, %v1476
      %v1478 = vpop.f32.mrf.mxu0
      %v1479 = vadd.f32 0.0, %v1478
      %1480 = vmatmul.bf16.gmra.mxu0 %v540
      %v1481 = vpop.f32.mrf.mxu0
      %v1482 = vadd.f32 0.0, %v1481
      %v1483 = vpop.f32.mrf.mxu0
      %v1484 = vadd.f32 0.0, %v1483
      %1485 = vmatmul.bf16.gmra.mxu0 %v541
      %v1486 = vpop.f32.mrf.mxu0
      %v1487 = vadd.f32 0.0, %v1486
      %v1488 = vpop.f32.mrf.mxu0
      %v1489 = vadd.f32 0.0, %v1488
      %1490 = vmatmul.bf16.gmra.mxu0 %v542
      %v1491 = vpop.f32.mrf.mxu0
      %v1492 = vadd.f32 0.0, %v1491
      %v1493 = vpop.f32.mrf.mxu0
      %v1494 = vadd.f32 0.0, %v1493
      %1495 = vmatmul.bf16.gmra.mxu0 %v1346
      %v1496 = vpop.f32.mrf.mxu0
      %v1497 = vadd.f32 0.0, %v1496
      %v1498 = vpop.f32.mrf.mxu0
      %v1499 = vadd.f32 0.0, %v1498
      %1500 = vdwg.mxu0
      %v1501 = vadd.f32 %v1304, %v1422
      %v1502 = vadd.f32 %v1305, %v1424
      %v1503 = vadd.f32 %v1306, %v1427
      %v1504 = vadd.f32 %v1307, %v1429
      %v1505 = vadd.f32 %v1308, %v1432
      %v1506 = vadd.f32 %v1309, %v1434
      %v1507 = vadd.f32 %v1310, %v1437
      %v1508 = vadd.f32 %v1311, %v1439
      %v1509 = vadd.f32 %v1312, %v1442
      %v1510 = vadd.f32 %v1313, %v1444
      %v1511 = vadd.f32 %v1314, %v1447
      %v1512 = vadd.f32 %v1315, %v1449
      %v1513 = vadd.f32 %v1316, %v1452
      %v1514 = vadd.f32 %v1317, %v1454
      %v1515 = vadd.f32 %v1318, %v1457
      %v1516 = vadd.f32 %v1319, %v1459
      %v1517 = vadd.f32 %v1320, %v1462
      %v1518 = vadd.f32 %v1321, %v1464
      %v1519 = vadd.f32 %v1322, %v1467
      %v1520 = vadd.f32 %v1323, %v1469
      %v1521 = vadd.f32 %v1324, %v1472
      %v1522 = vadd.f32 %v1325, %v1474
      %v1523 = vadd.f32 %v1326, %v1477
      %v1524 = vadd.f32 %v1327, %v1479
      %v1525 = vadd.f32 %v1328, %v1482
      %v1526 = vadd.f32 %v1329, %v1484
      %v1527 = vadd.f32 %v1330, %v1487
      %v1528 = vadd.f32 %v1331, %v1489
      %v1529 = vadd.f32 %v1332, %v1492
      %v1530 = vadd.f32 %v1333, %v1494
      %v1531 = vadd.f32 %v1334, %v1497
      %v1532 = vadd.f32 %v1335, %v1499
      %v1533 = vrot.slane %v328, 2
      %v1534 = vrot.slane %v329, 2
      %v1535 = vsel %vm834, %v1533, %v1534
      %v1536 = vrot.slane %v330, 2
      %v1537 = vsel %vm834, %v1534, %v1536
      %v1540 = vpack.c.bf16 %v1537, %v1535
      %s1541 = scalar_lea.vmem %s1, 320
      %v1542 = vld [vmem:[%s1541] sm:$0xf]
      %v1543 = vld [vmem:[%s1541 + $0x4] sm:$0xf]
      %v1544 = vld [vmem:[%s1541 + $0x8] sm:$0xf]
      %v1545 = vld [vmem:[%s1541 + $0xc] sm:$0xf]
      %v1546 = vld [vmem:[%s1541 + $0x10] sm:$0xf]
      %v1547 = vld [vmem:[%s1541 + $0x14] sm:$0xf]
      %v1548 = vld [vmem:[%s1541 + $0x18] sm:$0xf]
      %v1549 = vld [vmem:[%s1541 + $0x1c] sm:$0xf]
      %v1550 = vld [vmem:[%s1541 + $0x20] sm:$0xf]
      %v1551 = vld [vmem:[%s1541 + $0x24] sm:$0xf]
      %v1552 = vld [vmem:[%s1541 + $0x28] sm:$0xf]
      %v1553 = vld [vmem:[%s1541 + $0x2c] sm:$0xf]
      %v1554 = vld [vmem:[%s1541 + $0x30] sm:$0xf]
      %v1555 = vld [vmem:[%s1541 + $0x34] sm:$0xf]
      %v1556 = vld [vmem:[%s1541 + $0x38] sm:$0xf]
      %v1557 = vld [vmem:[%s1541 + $0x3c] sm:$0xf]
      %v1574 = vunpack.c.l.b16 %v1542
      %v1575 = vunpack.c.l.b16 %v1543
      %v1576 = vunpack.c.l.b16 %v1544
      %v1577 = vunpack.c.l.b16 %v1545
      %v1578 = vunpack.c.l.b16 %v1546
      %v1579 = vunpack.c.l.b16 %v1547
      %v1580 = vunpack.c.l.b16 %v1548
      %v1581 = vunpack.c.l.b16 %v1549
      %v1582 = vunpack.c.l.b16 %v1550
      %v1583 = vunpack.c.l.b16 %v1551
      %v1584 = vunpack.c.l.b16 %v1552
      %v1585 = vunpack.c.l.b16 %v1553
      %v1586 = vunpack.c.l.b16 %v1554
      %v1587 = vunpack.c.l.b16 %v1555
      %v1588 = vunpack.c.l.b16 %v1556
      %v1589 = vunpack.c.l.b16 %v1557
      %v1590 = vpack.c.b16 %v1575, %v1574
      %v1591 = vpack.c.b16 %v1577, %v1576
      %v1592 = vpack.c.b16 %v1579, %v1578
      %v1593 = vpack.c.b16 %v1581, %v1580
      %v1594 = vpack.c.b16 %v1583, %v1582
      %v1595 = vpack.c.b16 %v1585, %v1584
      %v1596 = vpack.c.b16 %v1587, %v1586
      %v1597 = vpack.c.b16 %v1589, %v1588
      %1606 = vmatpush.bf16.msra.mxu0 %v1597
      %1607 = vmatpush.bf16.msra.mxu0 %v1596
      %1608 = vmatpush.bf16.msra.mxu0 %v1595
      %1609 = vmatpush.bf16.msra.mxu0 %v1594
      %1610 = vmatpush.bf16.msra.mxu0 %v1593
      %1611 = vmatpush.bf16.msra.mxu0 %v1592
      %1612 = vmatpush.bf16.msra.mxu0 %v1591
      %1613 = vmatpush.bf16.msra.mxu0 %v1590
      %1614 = vmatmul.bf16.gmra.mxu0 %v948
      %v1615 = vpop.f32.mrf.mxu0
      %v1616 = vadd.f32 0.0, %v1615
      %v1617 = vpop.f32.mrf.mxu0
      %v1618 = vadd.f32 0.0, %v1617
      %1619 = vmatmul.bf16.gmra.mxu0 %v949
      %v1620 = vpop.f32.mrf.mxu0
      %v1621 = vadd.f32 0.0, %v1620
      %v1622 = vpop.f32.mrf.mxu0
      %v1623 = vadd.f32 0.0, %v1622
      %1624 = vmatmul.bf16.gmra.mxu0 %v950
      %v1625 = vpop.f32.mrf.mxu0
      %v1626 = vadd.f32 0.0, %v1625
      %v1627 = vpop.f32.mrf.mxu0
      %v1628 = vadd.f32 0.0, %v1627
      %1629 = vmatmul.bf16.gmra.mxu0 %v951
      %v1630 = vpop.f32.mrf.mxu0
      %v1631 = vadd.f32 0.0, %v1630
      %v1632 = vpop.f32.mrf.mxu0
      %v1633 = vadd.f32 0.0, %v1632
      %1634 = vmatmul.bf16.gmra.mxu0 %v952
      %v1635 = vpop.f32.mrf.mxu0
      %v1636 = vadd.f32 0.0, %v1635
      %v1637 = vpop.f32.mrf.mxu0
      %v1638 = vadd.f32 0.0, %v1637
      %1639 = vmatmul.bf16.gmra.mxu0 %v953
      %v1640 = vpop.f32.mrf.mxu0
      %v1641 = vadd.f32 0.0, %v1640
      %v1642 = vpop.f32.mrf.mxu0
      %v1643 = vadd.f32 0.0, %v1642
      %1644 = vmatmul.bf16.gmra.mxu0 %v954
      %v1645 = vpop.f32.mrf.mxu0
      %v1646 = vadd.f32 0.0, %v1645
      %v1647 = vpop.f32.mrf.mxu0
      %v1648 = vadd.f32 0.0, %v1647
      %1649 = vmatmul.bf16.gmra.mxu0 %v955
      %v1650 = vpop.f32.mrf.mxu0
      %v1651 = vadd.f32 0.0, %v1650
      %v1652 = vpop.f32.mrf.mxu0
      %v1653 = vadd.f32 0.0, %v1652
      %1654 = vmatmul.bf16.gmra.mxu0 %v956
      %v1655 = vpop.f32.mrf.mxu0
      %v1656 = vadd.f32 0.0, %v1655
      %v1657 = vpop.f32.mrf.mxu0
      %v1658 = vadd.f32 0.0, %v1657
      %1659 = vmatmul.bf16.gmra.mxu0 %v957
      %v1660 = vpop.f32.mrf.mxu0
      %v1661 = vadd.f32 0.0, %v1660
      %v1662 = vpop.f32.mrf.mxu0
      %v1663 = vadd.f32 0.0, %v1662
      %1664 = vmatmul.bf16.gmra.mxu0 %v958
      %v1665 = vpop.f32.mrf.mxu0
      %v1666 = vadd.f32 0.0, %v1665
      %v1667 = vpop.f32.mrf.mxu0
      %v1668 = vadd.f32 0.0, %v1667
      %1669 = vmatmul.bf16.gmra.mxu0 %v959
      %v1670 = vpop.f32.mrf.mxu0
      %v1671 = vadd.f32 0.0, %v1670
      %v1672 = vpop.f32.mrf.mxu0
      %v1673 = vadd.f32 0.0, %v1672
      %1674 = vmatmul.bf16.gmra.mxu0 %v960
      %v1675 = vpop.f32.mrf.mxu0
      %v1676 = vadd.f32 0.0, %v1675
      %v1677 = vpop.f32.mrf.mxu0
      %v1678 = vadd.f32 0.0, %v1677
      %1679 = vmatmul.bf16.gmra.mxu0 %v961
      %v1680 = vpop.f32.mrf.mxu0
      %v1681 = vadd.f32 0.0, %v1680
      %v1682 = vpop.f32.mrf.mxu0
      %v1683 = vadd.f32 0.0, %v1682
      %1684 = vmatmul.bf16.gmra.mxu0 %v962
      %v1685 = vpop.f32.mrf.mxu0
      %v1686 = vadd.f32 0.0, %v1685
      %v1687 = vpop.f32.mrf.mxu0
      %v1688 = vadd.f32 0.0, %v1687
      %1689 = vmatmul.bf16.gmra.mxu0 %v1540
      %v1690 = vpop.f32.mrf.mxu0
      %v1691 = vadd.f32 0.0, %v1690
      %v1692 = vpop.f32.mrf.mxu0
      %v1693 = vadd.f32 0.0, %v1692
      %1694 = vdwg.mxu0
      %v1695 = vadd.f32 %v1501, %v1616
      %v1696 = vadd.f32 %v1502, %v1618
      %v1697 = vadd.f32 %v1503, %v1621
      %v1698 = vadd.f32 %v1504, %v1623
      %v1699 = vadd.f32 %v1505, %v1626
      %v1700 = vadd.f32 %v1506, %v1628
      %v1701 = vadd.f32 %v1507, %v1631
      %v1702 = vadd.f32 %v1508, %v1633
      %v1703 = vadd.f32 %v1509, %v1636
      %v1704 = vadd.f32 %v1510, %v1638
      %v1705 = vadd.f32 %v1511, %v1641
      %v1706 = vadd.f32 %v1512, %v1643
      %v1707 = vadd.f32 %v1513, %v1646
      %v1708 = vadd.f32 %v1514, %v1648
      %v1709 = vadd.f32 %v1515, %v1651
      %v1710 = vadd.f32 %v1516, %v1653
      %v1711 = vadd.f32 %v1517, %v1656
      %v1712 = vadd.f32 %v1518, %v1658
      %v1713 = vadd.f32 %v1519, %v1661
      %v1714 = vadd.f32 %v1520, %v1663
      %v1715 = vadd.f32 %v1521, %v1666
      %v1716 = vadd.f32 %v1522, %v1668
      %v1717 = vadd.f32 %v1523, %v1671
      %v1718 = vadd.f32 %v1524, %v1673
      %v1719 = vadd.f32 %v1525, %v1676
      %v1720 = vadd.f32 %v1526, %v1678
      %v1721 = vadd.f32 %v1527, %v1681
      %v1722 = vadd.f32 %v1528, %v1683
      %v1723 = vadd.f32 %v1529, %v1686
      %v1724 = vadd.f32 %v1530, %v1688
      %v1725 = vadd.f32 %v1531, %v1691
      %v1726 = vadd.f32 %v1532, %v1693
      %v1727 = vpack.c.bf16 %v332, %v331
      %s1728 = scalar_lea.vmem %s1, 384
      %v1729 = vld [vmem:[%s1728] sm:$0xf]
      %v1730 = vld [vmem:[%s1728 + $0x4] sm:$0xf]
      %v1731 = vld [vmem:[%s1728 + $0x8] sm:$0xf]
      %v1732 = vld [vmem:[%s1728 + $0xc] sm:$0xf]
      %v1733 = vld [vmem:[%s1728 + $0x10] sm:$0xf]
      %v1734 = vld [vmem:[%s1728 + $0x14] sm:$0xf]
      %v1735 = vld [vmem:[%s1728 + $0x18] sm:$0xf]
      %v1736 = vld [vmem:[%s1728 + $0x1c] sm:$0xf]
      %v1737 = vld [vmem:[%s1728 + $0x20] sm:$0xf]
      %v1738 = vld [vmem:[%s1728 + $0x24] sm:$0xf]
      %v1739 = vld [vmem:[%s1728 + $0x28] sm:$0xf]
      %v1740 = vld [vmem:[%s1728 + $0x2c] sm:$0xf]
      %v1741 = vld [vmem:[%s1728 + $0x30] sm:$0xf]
      %v1742 = vld [vmem:[%s1728 + $0x34] sm:$0xf]
      %v1743 = vld [vmem:[%s1728 + $0x38] sm:$0xf]
      %v1744 = vld [vmem:[%s1728 + $0x3c] sm:$0xf]
      %v1761 = vunpack.c.l.b16 %v1729
      %v1762 = vunpack.c.l.b16 %v1730
      %v1763 = vunpack.c.l.b16 %v1731
      %v1764 = vunpack.c.l.b16 %v1732
      %v1765 = vunpack.c.l.b16 %v1733
      %v1766 = vunpack.c.l.b16 %v1734
      %v1767 = vunpack.c.l.b16 %v1735
      %v1768 = vunpack.c.l.b16 %v1736
      %v1769 = vunpack.c.l.b16 %v1737
      %v1770 = vunpack.c.l.b16 %v1738
      %v1771 = vunpack.c.l.b16 %v1739
      %v1772 = vunpack.c.l.b16 %v1740
      %v1773 = vunpack.c.l.b16 %v1741
      %v1774 = vunpack.c.l.b16 %v1742
      %v1775 = vunpack.c.l.b16 %v1743
      %v1776 = vunpack.c.l.b16 %v1744
      %v1777 = vpack.c.b16 %v1762, %v1761
      %v1778 = vpack.c.b16 %v1764, %v1763
      %v1779 = vpack.c.b16 %v1766, %v1765
      %v1780 = vpack.c.b16 %v1768, %v1767
      %v1781 = vpack.c.b16 %v1770, %v1769
      %v1782 = vpack.c.b16 %v1772, %v1771
      %v1783 = vpack.c.b16 %v1774, %v1773
      %v1784 = vpack.c.b16 %v1776, %v1775
      %1793 = vmatpush.bf16.msra.mxu0 %v1784
      %1794 = vmatpush.bf16.msra.mxu0 %v1783
      %1795 = vmatpush.bf16.msra.mxu0 %v1782
      %1796 = vmatpush.bf16.msra.mxu0 %v1781
      %1797 = vmatpush.bf16.msra.mxu0 %v1780
      %1798 = vmatpush.bf16.msra.mxu0 %v1779
      %1799 = vmatpush.bf16.msra.mxu0 %v1778
      %1800 = vmatpush.bf16.msra.mxu0 %v1777
      %1801 = vmatmul.bf16.gmra.mxu0 %v336
      %v1802 = vpop.f32.mrf.mxu0
      %v1803 = vadd.f32 0.0, %v1802
      %v1804 = vpop.f32.mrf.mxu0
      %v1805 = vadd.f32 0.0, %v1804
      %1806 = vmatmul.bf16.gmra.mxu0 %v337
      %v1807 = vpop.f32.mrf.mxu0
      %v1808 = vadd.f32 0.0, %v1807
      %v1809 = vpop.f32.mrf.mxu0
      %v1810 = vadd.f32 0.0, %v1809
      %1811 = vmatmul.bf16.gmra.mxu0 %v338
      %v1812 = vpop.f32.mrf.mxu0
      %v1813 = vadd.f32 0.0, %v1812
      %v1814 = vpop.f32.mrf.mxu0
      %v1815 = vadd.f32 0.0, %v1814
      %1816 = vmatmul.bf16.gmra.mxu0 %v339
      %v1817 = vpop.f32.mrf.mxu0
      %v1818 = vadd.f32 0.0, %v1817
      %v1819 = vpop.f32.mrf.mxu0
      %v1820 = vadd.f32 0.0, %v1819
      %1821 = vmatmul.bf16.gmra.mxu0 %v340
      %v1822 = vpop.f32.mrf.mxu0
      %v1823 = vadd.f32 0.0, %v1822
      %v1824 = vpop.f32.mrf.mxu0
      %v1825 = vadd.f32 0.0, %v1824
      %1826 = vmatmul.bf16.gmra.mxu0 %v341
      %v1827 = vpop.f32.mrf.mxu0
      %v1828 = vadd.f32 0.0, %v1827
      %v1829 = vpop.f32.mrf.mxu0
      %v1830 = vadd.f32 0.0, %v1829
      %1831 = vmatmul.bf16.gmra.mxu0 %v342
      %v1832 = vpop.f32.mrf.mxu0
      %v1833 = vadd.f32 0.0, %v1832
      %v1834 = vpop.f32.mrf.mxu0
      %v1835 = vadd.f32 0.0, %v1834
      %1836 = vmatmul.bf16.gmra.mxu0 %v343
      %v1837 = vpop.f32.mrf.mxu0
      %v1838 = vadd.f32 0.0, %v1837
      %v1839 = vpop.f32.mrf.mxu0
      %v1840 = vadd.f32 0.0, %v1839
      %1841 = vmatmul.bf16.gmra.mxu0 %v344
      %v1842 = vpop.f32.mrf.mxu0
      %v1843 = vadd.f32 0.0, %v1842
      %v1844 = vpop.f32.mrf.mxu0
      %v1845 = vadd.f32 0.0, %v1844
      %1846 = vmatmul.bf16.gmra.mxu0 %v345
      %v1847 = vpop.f32.mrf.mxu0
      %v1848 = vadd.f32 0.0, %v1847
      %v1849 = vpop.f32.mrf.mxu0
      %v1850 = vadd.f32 0.0, %v1849
      %1851 = vmatmul.bf16.gmra.mxu0 %v346
      %v1852 = vpop.f32.mrf.mxu0
      %v1853 = vadd.f32 0.0, %v1852
      %v1854 = vpop.f32.mrf.mxu0
      %v1855 = vadd.f32 0.0, %v1854
      %1856 = vmatmul.bf16.gmra.mxu0 %v347
      %v1857 = vpop.f32.mrf.mxu0
      %v1858 = vadd.f32 0.0, %v1857
      %v1859 = vpop.f32.mrf.mxu0
      %v1860 = vadd.f32 0.0, %v1859
      %1861 = vmatmul.bf16.gmra.mxu0 %v348
      %v1862 = vpop.f32.mrf.mxu0
      %v1863 = vadd.f32 0.0, %v1862
      %v1864 = vpop.f32.mrf.mxu0
      %v1865 = vadd.f32 0.0, %v1864
      %1866 = vmatmul.bf16.gmra.mxu0 %v349
      %v1867 = vpop.f32.mrf.mxu0
      %v1868 = vadd.f32 0.0, %v1867
      %v1869 = vpop.f32.mrf.mxu0
      %v1870 = vadd.f32 0.0, %v1869
      %1871 = vmatmul.bf16.gmra.mxu0 %v1149
      %v1872 = vpop.f32.mrf.mxu0
      %v1873 = vadd.f32 0.0, %v1872
      %v1874 = vpop.f32.mrf.mxu0
      %v1875 = vadd.f32 0.0, %v1874
      %1876 = vmatmul.bf16.gmra.mxu0 %v1727
      %v1877 = vpop.f32.mrf.mxu0
      %v1878 = vadd.f32 0.0, %v1877
      %v1879 = vpop.f32.mrf.mxu0
      %v1880 = vadd.f32 0.0, %v1879
      %1881 = vdwg.mxu0
      %v1882 = vadd.f32 %v1695, %v1803
      %v1883 = vadd.f32 %v1696, %v1805
      %v1884 = vadd.f32 %v1697, %v1808
      %v1885 = vadd.f32 %v1698, %v1810
      %v1886 = vadd.f32 %v1699, %v1813
      %v1887 = vadd.f32 %v1700, %v1815
      %v1888 = vadd.f32 %v1701, %v1818
      %v1889 = vadd.f32 %v1702, %v1820
      %v1890 = vadd.f32 %v1703, %v1823
      %v1891 = vadd.f32 %v1704, %v1825
      %v1892 = vadd.f32 %v1705, %v1828
      %v1893 = vadd.f32 %v1706, %v1830
      %v1894 = vadd.f32 %v1707, %v1833
      %v1895 = vadd.f32 %v1708, %v1835
      %v1896 = vadd.f32 %v1709, %v1838
      %v1897 = vadd.f32 %v1710, %v1840
      %v1898 = vadd.f32 %v1711, %v1843
      %v1899 = vadd.f32 %v1712, %v1845
      %v1900 = vadd.f32 %v1713, %v1848
      %v1901 = vadd.f32 %v1714, %v1850
      %v1902 = vadd.f32 %v1715, %v1853
      %v1903 = vadd.f32 %v1716, %v1855
      %v1904 = vadd.f32 %v1717, %v1858
      %v1905 = vadd.f32 %v1718, %v1860
      %v1906 = vadd.f32 %v1719, %v1863
      %v1907 = vadd.f32 %v1720, %v1865
      %v1908 = vadd.f32 %v1721, %v1868
      %v1909 = vadd.f32 %v1722, %v1870
      %v1910 = vadd.f32 %v1723, %v1873
      %v1911 = vadd.f32 %v1724, %v1875
      %v1912 = vadd.f32 %v1725, %v1878
      %v1913 = vadd.f32 %v1726, %v1880
      %v1917 = vrot.slane %v331, 1
      %v1918 = vrot.slane %v332, 1
      %v1919 = vsel %vm414, %v1917, %v1918
      %v1920 = vrot.slane %v333, 1
      %v1921 = vsel %vm414, %v1918, %v1920
      %v1924 = vpack.c.bf16 %v1921, %v1919
      %s1925 = scalar_lea.vmem %s1, 448
      %v1926 = vld [vmem:[%s1925] sm:$0xf]
      %v1927 = vld [vmem:[%s1925 + $0x4] sm:$0xf]
      %v1928 = vld [vmem:[%s1925 + $0x8] sm:$0xf]
      %v1929 = vld [vmem:[%s1925 + $0xc] sm:$0xf]
      %v1930 = vld [vmem:[%s1925 + $0x10] sm:$0xf]
      %v1931 = vld [vmem:[%s1925 + $0x14] sm:$0xf]
      %v1932 = vld [vmem:[%s1925 + $0x18] sm:$0xf]
      %v1933 = vld [vmem:[%s1925 + $0x1c] sm:$0xf]
      %v1934 = vld [vmem:[%s1925 + $0x20] sm:$0xf]
      %v1935 = vld [vmem:[%s1925 + $0x24] sm:$0xf]
      %v1936 = vld [vmem:[%s1925 + $0x28] sm:$0xf]
      %v1937 = vld [vmem:[%s1925 + $0x2c] sm:$0xf]
      %v1938 = vld [vmem:[%s1925 + $0x30] sm:$0xf]
      %v1939 = vld [vmem:[%s1925 + $0x34] sm:$0xf]
      %v1940 = vld [vmem:[%s1925 + $0x38] sm:$0xf]
      %v1941 = vld [vmem:[%s1925 + $0x3c] sm:$0xf]
      %v1958 = vunpack.c.l.b16 %v1926
      %v1959 = vunpack.c.l.b16 %v1927
      %v1960 = vunpack.c.l.b16 %v1928
      %v1961 = vunpack.c.l.b16 %v1929
      %v1962 = vunpack.c.l.b16 %v1930
      %v1963 = vunpack.c.l.b16 %v1931
      %v1964 = vunpack.c.l.b16 %v1932
      %v1965 = vunpack.c.l.b16 %v1933
      %v1966 = vunpack.c.l.b16 %v1934
      %v1967 = vunpack.c.l.b16 %v1935
      %v1968 = vunpack.c.l.b16 %v1936
      %v1969 = vunpack.c.l.b16 %v1937
      %v1970 = vunpack.c.l.b16 %v1938
      %v1971 = vunpack.c.l.b16 %v1939
      %v1972 = vunpack.c.l.b16 %v1940
      %v1973 = vunpack.c.l.b16 %v1941
      %v1974 = vpack.c.b16 %v1959, %v1958
      %v1975 = vpack.c.b16 %v1961, %v1960
      %v1976 = vpack.c.b16 %v1963, %v1962
      %v1977 = vpack.c.b16 %v1965, %v1964
      %v1978 = vpack.c.b16 %v1967, %v1966
      %v1979 = vpack.c.b16 %v1969, %v1968
      %v1980 = vpack.c.b16 %v1971, %v1970
      %v1981 = vpack.c.b16 %v1973, %v1972
      %1990 = vmatpush.bf16.msra.mxu0 %v1981
      %1991 = vmatpush.bf16.msra.mxu0 %v1980
      %1992 = vmatpush.bf16.msra.mxu0 %v1979
      %1993 = vmatpush.bf16.msra.mxu0 %v1978
      %1994 = vmatpush.bf16.msra.mxu0 %v1977
      %1995 = vmatpush.bf16.msra.mxu0 %v1976
      %1996 = vmatpush.bf16.msra.mxu0 %v1975
      %1997 = vmatpush.bf16.msra.mxu0 %v1974
      %1998 = vmatmul.bf16.gmra.mxu0 %v529
      %v1999 = vpop.f32.mrf.mxu0
      %v2000 = vadd.f32 0.0, %v1999
      %v2001 = vpop.f32.mrf.mxu0
      %v2002 = vadd.f32 0.0, %v2001
      %2003 = vmatmul.bf16.gmra.mxu0 %v530
      %v2004 = vpop.f32.mrf.mxu0
      %v2005 = vadd.f32 0.0, %v2004
      %v2006 = vpop.f32.mrf.mxu0
      %v2007 = vadd.f32 0.0, %v2006
      %2008 = vmatmul.bf16.gmra.mxu0 %v531
      %v2009 = vpop.f32.mrf.mxu0
      %v2010 = vadd.f32 0.0, %v2009
      %v2011 = vpop.f32.mrf.mxu0
      %v2012 = vadd.f32 0.0, %v2011
      %2013 = vmatmul.bf16.gmra.mxu0 %v532
      %v2014 = vpop.f32.mrf.mxu0
      %v2015 = vadd.f32 0.0, %v2014
      %v2016 = vpop.f32.mrf.mxu0
      %v2017 = vadd.f32 0.0, %v2016
      %2018 = vmatmul.bf16.gmra.mxu0 %v533
      %v2019 = vpop.f32.mrf.mxu0
      %v2020 = vadd.f32 0.0, %v2019
      %v2021 = vpop.f32.mrf.mxu0
      %v2022 = vadd.f32 0.0, %v2021
      %2023 = vmatmul.bf16.gmra.mxu0 %v534
      %v2024 = vpop.f32.mrf.mxu0
      %v2025 = vadd.f32 0.0, %v2024
      %v2026 = vpop.f32.mrf.mxu0
      %v2027 = vadd.f32 0.0, %v2026
      %2028 = vmatmul.bf16.gmra.mxu0 %v535
      %v2029 = vpop.f32.mrf.mxu0
      %v2030 = vadd.f32 0.0, %v2029
      %v2031 = vpop.f32.mrf.mxu0
      %v2032 = vadd.f32 0.0, %v2031
      %2033 = vmatmul.bf16.gmra.mxu0 %v536
      %v2034 = vpop.f32.mrf.mxu0
      %v2035 = vadd.f32 0.0, %v2034
      %v2036 = vpop.f32.mrf.mxu0
      %v2037 = vadd.f32 0.0, %v2036
      %2038 = vmatmul.bf16.gmra.mxu0 %v537
      %v2039 = vpop.f32.mrf.mxu0
      %v2040 = vadd.f32 0.0, %v2039
      %v2041 = vpop.f32.mrf.mxu0
      %v2042 = vadd.f32 0.0, %v2041
      %2043 = vmatmul.bf16.gmra.mxu0 %v538
      %v2044 = vpop.f32.mrf.mxu0
      %v2045 = vadd.f32 0.0, %v2044
      %v2046 = vpop.f32.mrf.mxu0
      %v2047 = vadd.f32 0.0, %v2046
      %2048 = vmatmul.bf16.gmra.mxu0 %v539
      %v2049 = vpop.f32.mrf.mxu0
      %v2050 = vadd.f32 0.0, %v2049
      %v2051 = vpop.f32.mrf.mxu0
      %v2052 = vadd.f32 0.0, %v2051
      %2053 = vmatmul.bf16.gmra.mxu0 %v540
      %v2054 = vpop.f32.mrf.mxu0
      %v2055 = vadd.f32 0.0, %v2054
      %v2056 = vpop.f32.mrf.mxu0
      %v2057 = vadd.f32 0.0, %v2056
      %2058 = vmatmul.bf16.gmra.mxu0 %v541
      %v2059 = vpop.f32.mrf.mxu0
      %v2060 = vadd.f32 0.0, %v2059
      %v2061 = vpop.f32.mrf.mxu0
      %v2062 = vadd.f32 0.0, %v2061
      %2063 = vmatmul.bf16.gmra.mxu0 %v542
      %v2064 = vpop.f32.mrf.mxu0
      %v2065 = vadd.f32 0.0, %v2064
      %v2066 = vpop.f32.mrf.mxu0
      %v2067 = vadd.f32 0.0, %v2066
      %2068 = vmatmul.bf16.gmra.mxu0 %v1346
      %v2069 = vpop.f32.mrf.mxu0
      %v2070 = vadd.f32 0.0, %v2069
      %v2071 = vpop.f32.mrf.mxu0
      %v2072 = vadd.f32 0.0, %v2071
      %2073 = vmatmul.bf16.gmra.mxu0 %v1924
      %v2074 = vpop.f32.mrf.mxu0
      %v2075 = vadd.f32 0.0, %v2074
      %v2076 = vpop.f32.mrf.mxu0
      %v2077 = vadd.f32 0.0, %v2076
      %2078 = vdwg.mxu0
      %v2079 = vadd.f32 %v1882, %v2000
      %v2080 = vadd.f32 %v1883, %v2002
      %v2081 = vadd.f32 %v1884, %v2005
      %v2082 = vadd.f32 %v1885, %v2007
      %v2083 = vadd.f32 %v1886, %v2010
      %v2084 = vadd.f32 %v1887, %v2012
      %v2085 = vadd.f32 %v1888, %v2015
      %v2086 = vadd.f32 %v1889, %v2017
      %v2087 = vadd.f32 %v1890, %v2020
      %v2088 = vadd.f32 %v1891, %v2022
      %v2089 = vadd.f32 %v1892, %v2025
      %v2090 = vadd.f32 %v1893, %v2027
      %v2091 = vadd.f32 %v1894, %v2030
      %v2092 = vadd.f32 %v1895, %v2032
      %v2093 = vadd.f32 %v1896, %v2035
      %v2094 = vadd.f32 %v1897, %v2037
      %v2095 = vadd.f32 %v1898, %v2040
      %v2096 = vadd.f32 %v1899, %v2042
      %v2097 = vadd.f32 %v1900, %v2045
      %v2098 = vadd.f32 %v1901, %v2047
      %v2099 = vadd.f32 %v1902, %v2050
      %v2100 = vadd.f32 %v1903, %v2052
      %v2101 = vadd.f32 %v1904, %v2055
      %v2102 = vadd.f32 %v1905, %v2057
      %v2103 = vadd.f32 %v1906, %v2060
      %v2104 = vadd.f32 %v1907, %v2062
      %v2105 = vadd.f32 %v1908, %v2065
      %v2106 = vadd.f32 %v1909, %v2067
      %v2107 = vadd.f32 %v1910, %v2070
      %v2108 = vadd.f32 %v1911, %v2072
      %v2109 = vadd.f32 %v1912, %v2075
      %v2110 = vadd.f32 %v1913, %v2077
      %v2111 = vrot.slane %v331, 2
      %v2112 = vrot.slane %v332, 2
      %v2113 = vsel %vm834, %v2111, %v2112
      %v2114 = vrot.slane %v333, 2
      %v2115 = vsel %vm834, %v2112, %v2114
      %v2118 = vpack.c.bf16 %v2115, %v2113
      %s2119 = scalar_lea.vmem %s1, 512
      %v2120 = vld [vmem:[%s2119] sm:$0xf]
      %v2121 = vld [vmem:[%s2119 + $0x4] sm:$0xf]
      %v2122 = vld [vmem:[%s2119 + $0x8] sm:$0xf]
      %v2123 = vld [vmem:[%s2119 + $0xc] sm:$0xf]
      %v2124 = vld [vmem:[%s2119 + $0x10] sm:$0xf]
      %v2125 = vld [vmem:[%s2119 + $0x14] sm:$0xf]
      %v2126 = vld [vmem:[%s2119 + $0x18] sm:$0xf]
      %v2127 = vld [vmem:[%s2119 + $0x1c] sm:$0xf]
      %v2128 = vld [vmem:[%s2119 + $0x20] sm:$0xf]
      %v2129 = vld [vmem:[%s2119 + $0x24] sm:$0xf]
      %v2130 = vld [vmem:[%s2119 + $0x28] sm:$0xf]
      %v2131 = vld [vmem:[%s2119 + $0x2c] sm:$0xf]
      %v2132 = vld [vmem:[%s2119 + $0x30] sm:$0xf]
      %v2133 = vld [vmem:[%s2119 + $0x34] sm:$0xf]
      %v2134 = vld [vmem:[%s2119 + $0x38] sm:$0xf]
      %v2135 = vld [vmem:[%s2119 + $0x3c] sm:$0xf]
      %v2152 = vunpack.c.l.b16 %v2120
      %v2153 = vunpack.c.l.b16 %v2121
      %v2154 = vunpack.c.l.b16 %v2122
      %v2155 = vunpack.c.l.b16 %v2123
      %v2156 = vunpack.c.l.b16 %v2124
      %v2157 = vunpack.c.l.b16 %v2125
      %v2158 = vunpack.c.l.b16 %v2126
      %v2159 = vunpack.c.l.b16 %v2127
      %v2160 = vunpack.c.l.b16 %v2128
      %v2161 = vunpack.c.l.b16 %v2129
      %v2162 = vunpack.c.l.b16 %v2130
      %v2163 = vunpack.c.l.b16 %v2131
      %v2164 = vunpack.c.l.b16 %v2132
      %v2165 = vunpack.c.l.b16 %v2133
      %v2166 = vunpack.c.l.b16 %v2134
      %v2167 = vunpack.c.l.b16 %v2135
      %v2168 = vpack.c.b16 %v2153, %v2152
      %v2169 = vpack.c.b16 %v2155, %v2154
      %v2170 = vpack.c.b16 %v2157, %v2156
      %v2171 = vpack.c.b16 %v2159, %v2158
      %v2172 = vpack.c.b16 %v2161, %v2160
      %v2173 = vpack.c.b16 %v2163, %v2162
      %v2174 = vpack.c.b16 %v2165, %v2164
      %v2175 = vpack.c.b16 %v2167, %v2166
      %2184 = vmatpush.bf16.msra.mxu0 %v2175
      %2185 = vmatpush.bf16.msra.mxu0 %v2174
      %2186 = vmatpush.bf16.msra.mxu0 %v2173
      %2187 = vmatpush.bf16.msra.mxu0 %v2172
      %2188 = vmatpush.bf16.msra.mxu0 %v2171
      %2189 = vmatpush.bf16.msra.mxu0 %v2170
      %2190 = vmatpush.bf16.msra.mxu0 %v2169
      %2191 = vmatpush.bf16.msra.mxu0 %v2168
      %2192 = vmatmul.bf16.gmra.mxu0 %v949
      %v2193 = vpop.f32.mrf.mxu0
      %v2194 = vadd.f32 0.0, %v2193
      %v2195 = vpop.f32.mrf.mxu0
      %v2196 = vadd.f32 0.0, %v2195
      %2197 = vmatmul.bf16.gmra.mxu0 %v950
      %v2198 = vpop.f32.mrf.mxu0
      %v2199 = vadd.f32 0.0, %v2198
      %v2200 = vpop.f32.mrf.mxu0
      %v2201 = vadd.f32 0.0, %v2200
      %2202 = vmatmul.bf16.gmra.mxu0 %v951
      %v2203 = vpop.f32.mrf.mxu0
      %v2204 = vadd.f32 0.0, %v2203
      %v2205 = vpop.f32.mrf.mxu0
      %v2206 = vadd.f32 0.0, %v2205
      %2207 = vmatmul.bf16.gmra.mxu0 %v952
      %v2208 = vpop.f32.mrf.mxu0
      %v2209 = vadd.f32 0.0, %v2208
      %v2210 = vpop.f32.mrf.mxu0
      %v2211 = vadd.f32 0.0, %v2210
      %2212 = vmatmul.bf16.gmra.mxu0 %v953
      %v2213 = vpop.f32.mrf.mxu0
      %v2214 = vadd.f32 0.0, %v2213
      %v2215 = vpop.f32.mrf.mxu0
      %v2216 = vadd.f32 0.0, %v2215
      %2217 = vmatmul.bf16.gmra.mxu0 %v954
      %v2218 = vpop.f32.mrf.mxu0
      %v2219 = vadd.f32 0.0, %v2218
      %v2220 = vpop.f32.mrf.mxu0
      %v2221 = vadd.f32 0.0, %v2220
      %2222 = vmatmul.bf16.gmra.mxu0 %v955
      %v2223 = vpop.f32.mrf.mxu0
      %v2224 = vadd.f32 0.0, %v2223
      %v2225 = vpop.f32.mrf.mxu0
      %v2226 = vadd.f32 0.0, %v2225
      %2227 = vmatmul.bf16.gmra.mxu0 %v956
      %v2228 = vpop.f32.mrf.mxu0
      %v2229 = vadd.f32 0.0, %v2228
      %v2230 = vpop.f32.mrf.mxu0
      %v2231 = vadd.f32 0.0, %v2230
      %2232 = vmatmul.bf16.gmra.mxu0 %v957
      %v2233 = vpop.f32.mrf.mxu0
      %v2234 = vadd.f32 0.0, %v2233
      %v2235 = vpop.f32.mrf.mxu0
      %v2236 = vadd.f32 0.0, %v2235
      %2237 = vmatmul.bf16.gmra.mxu0 %v958
      %v2238 = vpop.f32.mrf.mxu0
      %v2239 = vadd.f32 0.0, %v2238
      %v2240 = vpop.f32.mrf.mxu0
      %v2241 = vadd.f32 0.0, %v2240
      %2242 = vmatmul.bf16.gmra.mxu0 %v959
      %v2243 = vpop.f32.mrf.mxu0
      %v2244 = vadd.f32 0.0, %v2243
      %v2245 = vpop.f32.mrf.mxu0
      %v2246 = vadd.f32 0.0, %v2245
      %2247 = vmatmul.bf16.gmra.mxu0 %v960
      %v2248 = vpop.f32.mrf.mxu0
      %v2249 = vadd.f32 0.0, %v2248
      %v2250 = vpop.f32.mrf.mxu0
      %v2251 = vadd.f32 0.0, %v2250
      %2252 = vmatmul.bf16.gmra.mxu0 %v961
      %v2253 = vpop.f32.mrf.mxu0
      %v2254 = vadd.f32 0.0, %v2253
      %v2255 = vpop.f32.mrf.mxu0
      %v2256 = vadd.f32 0.0, %v2255
      %2257 = vmatmul.bf16.gmra.mxu0 %v962
      %v2258 = vpop.f32.mrf.mxu0
      %v2259 = vadd.f32 0.0, %v2258
      %v2260 = vpop.f32.mrf.mxu0
      %v2261 = vadd.f32 0.0, %v2260
      %2262 = vmatmul.bf16.gmra.mxu0 %v1540
      %v2263 = vpop.f32.mrf.mxu0
      %v2264 = vadd.f32 0.0, %v2263
      %v2265 = vpop.f32.mrf.mxu0
      %v2266 = vadd.f32 0.0, %v2265
      %2267 = vmatmul.bf16.gmra.mxu0 %v2118
      %v2268 = vpop.f32.mrf.mxu0
      %v2269 = vadd.f32 0.0, %v2268
      %v2270 = vpop.f32.mrf.mxu0
      %v2271 = vadd.f32 0.0, %v2270
      %2272 = vdwg.mxu0
      %v2273 = vadd.f32 %v2079, %v2194
      %v2274 = vadd.f32 %v2080, %v2196
      %v2275 = vadd.f32 %v2081, %v2199
      %v2276 = vadd.f32 %v2082, %v2201
      %v2277 = vadd.f32 %v2083, %v2204
      %v2278 = vadd.f32 %v2084, %v2206
      %v2279 = vadd.f32 %v2085, %v2209
      %v2280 = vadd.f32 %v2086, %v2211
      %v2281 = vadd.f32 %v2087, %v2214
      %v2282 = vadd.f32 %v2088, %v2216
      %v2283 = vadd.f32 %v2089, %v2219
      %v2284 = vadd.f32 %v2090, %v2221
      %v2285 = vadd.f32 %v2091, %v2224
      %v2286 = vadd.f32 %v2092, %v2226
      %v2287 = vadd.f32 %v2093, %v2229
      %v2288 = vadd.f32 %v2094, %v2231
      %v2289 = vadd.f32 %v2095, %v2234
      %v2290 = vadd.f32 %v2096, %v2236
      %v2291 = vadd.f32 %v2097, %v2239
      %v2292 = vadd.f32 %v2098, %v2241
      %v2293 = vadd.f32 %v2099, %v2244
      %v2294 = vadd.f32 %v2100, %v2246
      %v2295 = vadd.f32 %v2101, %v2249
      %v2296 = vadd.f32 %v2102, %v2251
      %v2297 = vadd.f32 %v2103, %v2254
      %v2298 = vadd.f32 %v2104, %v2256
      %v2299 = vadd.f32 %v2105, %v2259
      %v2300 = vadd.f32 %v2106, %v2261
      %v2301 = vadd.f32 %v2107, %v2264
      %v2302 = vadd.f32 %v2108, %v2266
      %v2303 = vadd.f32 %v2109, %v2269
      %v2304 = vadd.f32 %v2110, %v2271
      %v2305 = vperm.slane %v225, 0
      %v2306 = vadd.f32 %v2273, %v2305
      %v2307 = vadd.f32 %v2274, %v2305
      %v2308 = vadd.f32 %v2275, %v2305
      %v2309 = vadd.f32 %v2276, %v2305
      %v2310 = vadd.f32 %v2277, %v2305
      %v2311 = vadd.f32 %v2278, %v2305
      %v2312 = vadd.f32 %v2279, %v2305
      %v2313 = vadd.f32 %v2280, %v2305
      %v2314 = vadd.f32 %v2281, %v2305
      %v2315 = vadd.f32 %v2282, %v2305
      %v2316 = vadd.f32 %v2283, %v2305
      %v2317 = vadd.f32 %v2284, %v2305
      %v2318 = vadd.f32 %v2285, %v2305
      %v2319 = vadd.f32 %v2286, %v2305
      %v2320 = vadd.f32 %v2287, %v2305
      %v2321 = vadd.f32 %v2288, %v2305
      %v2322 = vadd.f32 %v2289, %v2305
      %v2323 = vadd.f32 %v2290, %v2305
      %v2324 = vadd.f32 %v2291, %v2305
      %v2325 = vadd.f32 %v2292, %v2305
      %v2326 = vadd.f32 %v2293, %v2305
      %v2327 = vadd.f32 %v2294, %v2305
      %v2328 = vadd.f32 %v2295, %v2305
      %v2329 = vadd.f32 %v2296, %v2305
      %v2330 = vadd.f32 %v2297, %v2305
      %v2331 = vadd.f32 %v2298, %v2305
      %v2332 = vadd.f32 %v2299, %v2305
      %v2333 = vadd.f32 %v2300, %v2305
      %v2334 = vadd.f32 %v2301, %v2305
      %v2335 = vadd.f32 %v2302, %v2305
      %v2336 = vadd.f32 %v2303, %v2305
      %v2337 = vadd.f32 %v2304, %v2305
      %v2338 = vmax.f32 %v2306, 0.0
      %v2339 = vmax.f32 %v2307, 0.0
      %v2340 = vmax.f32 %v2308, 0.0
      %v2341 = vmax.f32 %v2309, 0.0
      %v2342 = vmax.f32 %v2310, 0.0
      %v2343 = vmax.f32 %v2311, 0.0
      %v2344 = vmax.f32 %v2312, 0.0
      %v2345 = vmax.f32 %v2313, 0.0
      %v2346 = vmax.f32 %v2314, 0.0
      %v2347 = vmax.f32 %v2315, 0.0
      %v2348 = vmax.f32 %v2316, 0.0
      %v2349 = vmax.f32 %v2317, 0.0
      %v2350 = vmax.f32 %v2318, 0.0
      %v2351 = vmax.f32 %v2319, 0.0
      %v2352 = vmax.f32 %v2320, 0.0
      %v2353 = vmax.f32 %v2321, 0.0
      %v2354 = vmax.f32 %v2322, 0.0
      %v2355 = vmax.f32 %v2323, 0.0
      %v2356 = vmax.f32 %v2324, 0.0
      %v2357 = vmax.f32 %v2325, 0.0
      %v2358 = vmax.f32 %v2326, 0.0
      %v2359 = vmax.f32 %v2327, 0.0
      %v2360 = vmax.f32 %v2328, 0.0
      %v2361 = vmax.f32 %v2329, 0.0
      %v2362 = vmax.f32 %v2330, 0.0
      %v2363 = vmax.f32 %v2331, 0.0
      %v2364 = vmax.f32 %v2332, 0.0
      %v2365 = vmax.f32 %v2333, 0.0
      %v2366 = vmax.f32 %v2334, 0.0
      %v2367 = vmax.f32 %v2335, 0.0
      %v2368 = vmax.f32 %v2336, 0.0
      %v2369 = vmax.f32 %v2337, 0.0
      %v2378 = vrot.slane %v2338, 1
      %v2379 = vrot.slane %v2342, 1
      %v2380 = vrot.slane %v2346, 1
      %v2381 = vrot.slane %v2350, 1
      %v2382 = vrot.slane %v2354, 1
      %v2383 = vrot.slane %v2358, 1
      %v2384 = vrot.slane %v2362, 1
      %v2385 = vrot.slane %v2366, 1
      %v2394 = vrot.slane %v2338, 2
      %v2395 = vrot.slane %v2342, 2
      %v2396 = vrot.slane %v2346, 2
      %v2397 = vrot.slane %v2350, 2
      %v2398 = vrot.slane %v2354, 2
      %v2399 = vrot.slane %v2358, 2
      %v2400 = vrot.slane %v2362, 2
      %v2401 = vrot.slane %v2366, 2
      %v2410 = vrot.slane %v2338, 3
      %v2411 = vrot.slane %v2342, 3
      %v2412 = vrot.slane %v2346, 3
      %v2413 = vrot.slane %v2350, 3
      %v2414 = vrot.slane %v2354, 3
      %v2415 = vrot.slane %v2358, 3
      %v2416 = vrot.slane %v2362, 3
      %v2417 = vrot.slane %v2366, 3
      %v2434 = vrot.slane %v2339, 4
      %v2435 = vrot.slane %v2343, 4
      %v2436 = vrot.slane %v2347, 4
      %v2437 = vrot.slane %v2351, 4
      %v2438 = vrot.slane %v2355, 4
      %v2439 = vrot.slane %v2359, 4
      %v2440 = vrot.slane %v2363, 4
      %v2441 = vrot.slane %v2367, 4
      %v2450 = vrot.slane %v2339, 5
      %v2451 = vrot.slane %v2343, 5
      %v2452 = vrot.slane %v2347, 5
      %v2453 = vrot.slane %v2351, 5
      %v2454 = vrot.slane %v2355, 5
      %v2455 = vrot.slane %v2359, 5
      %v2456 = vrot.slane %v2363, 5
      %v2457 = vrot.slane %v2367, 5
      %v2466 = vrot.slane %v2339, 6
      %v2467 = vrot.slane %v2343, 6
      %v2468 = vrot.slane %v2347, 6
      %v2469 = vrot.slane %v2351, 6
      %v2470 = vrot.slane %v2355, 6
      %v2471 = vrot.slane %v2359, 6
      %v2472 = vrot.slane %v2363, 6
      %v2473 = vrot.slane %v2367, 6
      %v2482 = vrot.slane %v2339, 7
      %v2483 = vrot.slane %v2343, 7
      %v2484 = vrot.slane %v2347, 7
      %v2485 = vrot.slane %v2351, 7
      %v2486 = vrot.slane %v2355, 7
      %v2487 = vrot.slane %v2359, 7
      %v2488 = vrot.slane %v2363, 7
      %v2489 = vrot.slane %v2367, 7
      %vm2498 = vcmask 1040384
      %v2499 = vsel %vm2498, %v2338, %v2378
      %v2500 = vsel %vm2498, %v2342, %v2379
      %v2501 = vsel %vm2498, %v2346, %v2380
      %v2502 = vsel %vm2498, %v2350, %v2381
      %v2503 = vsel %vm2498, %v2354, %v2382
      %v2504 = vsel %vm2498, %v2358, %v2383
      %v2505 = vsel %vm2498, %v2362, %v2384
      %v2506 = vsel %vm2498, %v2366, %v2385
      %vm2507 = vcmask 1041408
      %v2508 = vsel %vm2507, %v2499, %v2394
      %v2509 = vsel %vm2507, %v2500, %v2395
      %v2510 = vsel %vm2507, %v2501, %v2396
      %v2511 = vsel %vm2507, %v2502, %v2397
      %v2512 = vsel %vm2507, %v2503, %v2398
      %v2513 = vsel %vm2507, %v2504, %v2399
      %v2514 = vsel %vm2507, %v2505, %v2400
      %v2515 = vsel %vm2507, %v2506, %v2401
      %vm2516 = vcmask 1042432
      %v2517 = vsel %vm2516, %v2508, %v2410
      %v2518 = vsel %vm2516, %v2509, %v2411
      %v2519 = vsel %vm2516, %v2510, %v2412
      %v2520 = vsel %vm2516, %v2511, %v2413
      %v2521 = vsel %vm2516, %v2512, %v2414
      %v2522 = vsel %vm2516, %v2513, %v2415
      %v2523 = vsel %vm2516, %v2514, %v2416
      %v2524 = vsel %vm2516, %v2515, %v2417
      %vm2525 = vcmask 1043456
      %v2526 = vsel %vm2525, %v2517, %v2434
      %v2527 = vsel %vm2525, %v2518, %v2435
      %v2528 = vsel %vm2525, %v2519, %v2436
      %v2529 = vsel %vm2525, %v2520, %v2437
      %v2530 = vsel %vm2525, %v2521, %v2438
      %v2531 = vsel %vm2525, %v2522, %v2439
      %v2532 = vsel %vm2525, %v2523, %v2440
      %v2533 = vsel %vm2525, %v2524, %v2441
      %vm2534 = vcmask 1044480
      %v2535 = vsel %vm2534, %v2526, %v2450
      %v2536 = vsel %vm2534, %v2527, %v2451
      %v2537 = vsel %vm2534, %v2528, %v2452
      %v2538 = vsel %vm2534, %v2529, %v2453
      %v2539 = vsel %vm2534, %v2530, %v2454
      %v2540 = vsel %vm2534, %v2531, %v2455
      %v2541 = vsel %vm2534, %v2532, %v2456
      %v2542 = vsel %vm2534, %v2533, %v2457
      %v2543 = vsel %vm834, %v2535, %v2466
      %v2544 = vsel %vm834, %v2536, %v2467
      %v2545 = vsel %vm834, %v2537, %v2468
      %v2546 = vsel %vm834, %v2538, %v2469
      %v2547 = vsel %vm834, %v2539, %v2470
      %v2548 = vsel %vm834, %v2540, %v2471
      %v2549 = vsel %vm834, %v2541, %v2472
      %v2550 = vsel %vm834, %v2542, %v2473
      %v2551 = vsel %vm414, %v2543, %v2482
      %v2552 = vsel %vm414, %v2544, %v2483
      %v2553 = vsel %vm414, %v2545, %v2484
      %v2554 = vsel %vm414, %v2546, %v2485
      %v2555 = vsel %vm414, %v2547, %v2486
      %v2556 = vsel %vm414, %v2548, %v2487
      %v2557 = vsel %vm414, %v2549, %v2488
      %v2558 = vsel %vm414, %v2550, %v2489
      %v2567 = vrot.slane %v2551, 7
      %v2568 = vrot.slane %v2552, 7
      %v2569 = vrot.slane %v2553, 7
      %v2570 = vrot.slane %v2554, 7
      %v2571 = vrot.slane %v2555, 7
      %v2572 = vrot.slane %v2556, 7
      %v2573 = vrot.slane %v2557, 7
      %v2574 = vrot.slane %v2558, 7
      %v2583 = vsel %vm2498, 0.0, %v2567
      %v2584 = vsel %vm2498, 0.0, %v2568
      %v2585 = vsel %vm2498, 0.0, %v2569
      %v2586 = vsel %vm2498, 0.0, %v2570
      %v2587 = vsel %vm2498, 0.0, %v2571
      %v2588 = vsel %vm2498, 0.0, %v2572
      %v2589 = vsel %vm2498, 0.0, %v2573
      %v2590 = vsel %vm2498, 0.0, %v2574
      %v2591 = vsel %vm2498, %v2567, 0.0
      %v2592 = vsel %vm2498, %v2568, 0.0
      %v2593 = vsel %vm2498, %v2569, 0.0
      %v2594 = vsel %vm2498, %v2570, 0.0
      %v2595 = vsel %vm2498, %v2571, 0.0
      %v2596 = vsel %vm2498, %v2572, 0.0
      %v2597 = vsel %vm2498, %v2573, 0.0
      %v2598 = vsel %vm2498, %v2574, 0.0
      %v2599 = vrot.slane %v2338, 4
      %v2600 = vrot.slane %v2342, 4
      %v2601 = vrot.slane %v2346, 4
      %v2602 = vrot.slane %v2350, 4
      %v2603 = vrot.slane %v2354, 4
      %v2604 = vrot.slane %v2358, 4
      %v2605 = vrot.slane %v2362, 4
      %v2606 = vrot.slane %v2366, 4
      %v2615 = vsel %vm2498, %v2378, %v2394
      %v2616 = vsel %vm2498, %v2379, %v2395
      %v2617 = vsel %vm2498, %v2380, %v2396
      %v2618 = vsel %vm2498, %v2381, %v2397
      %v2619 = vsel %vm2498, %v2382, %v2398
      %v2620 = vsel %vm2498, %v2383, %v2399
      %v2621 = vsel %vm2498, %v2384, %v2400
      %v2622 = vsel %vm2498, %v2385, %v2401
      %v2623 = vsel %vm2507, %v2615, %v2410
      %v2624 = vsel %vm2507, %v2616, %v2411
      %v2625 = vsel %vm2507, %v2617, %v2412
      %v2626 = vsel %vm2507, %v2618, %v2413
      %v2627 = vsel %vm2507, %v2619, %v2414
      %v2628 = vsel %vm2507, %v2620, %v2415
      %v2629 = vsel %vm2507, %v2621, %v2416
      %v2630 = vsel %vm2507, %v2622, %v2417
      %v2631 = vsel %vm2516, %v2623, %v2599
      %v2632 = vsel %vm2516, %v2624, %v2600
      %v2633 = vsel %vm2516, %v2625, %v2601
      %v2634 = vsel %vm2516, %v2626, %v2602
      %v2635 = vsel %vm2516, %v2627, %v2603
      %v2636 = vsel %vm2516, %v2628, %v2604
      %v2637 = vsel %vm2516, %v2629, %v2605
      %v2638 = vsel %vm2516, %v2630, %v2606
      %v2639 = vsel %vm2525, %v2631, %v2450
      %v2640 = vsel %vm2525, %v2632, %v2451
      %v2641 = vsel %vm2525, %v2633, %v2452
      %v2642 = vsel %vm2525, %v2634, %v2453
      %v2643 = vsel %vm2525, %v2635, %v2454
      %v2644 = vsel %vm2525, %v2636, %v2455
      %v2645 = vsel %vm2525, %v2637, %v2456
      %v2646 = vsel %vm2525, %v2638, %v2457
      %v2647 = vsel %vm2534, %v2639, %v2466
      %v2648 = vsel %vm2534, %v2640, %v2467
      %v2649 = vsel %vm2534, %v2641, %v2468
      %v2650 = vsel %vm2534, %v2642, %v2469
      %v2651 = vsel %vm2534, %v2643, %v2470
      %v2652 = vsel %vm2534, %v2644, %v2471
      %v2653 = vsel %vm2534, %v2645, %v2472
      %v2654 = vsel %vm2534, %v2646, %v2473
      %v2655 = vsel %vm834, %v2647, %v2482
      %v2656 = vsel %vm834, %v2648, %v2483
      %v2657 = vsel %vm834, %v2649, %v2484
      %v2658 = vsel %vm834, %v2650, %v2485
      %v2659 = vsel %vm834, %v2651, %v2486
      %v2660 = vsel %vm834, %v2652, %v2487
      %v2661 = vsel %vm834, %v2653, %v2488
      %v2662 = vsel %vm834, %v2654, %v2489
      %v2663 = vsel %vm414, %v2655, %v2339
      %v2664 = vsel %vm414, %v2656, %v2343
      %v2665 = vsel %vm414, %v2657, %v2347
      %v2666 = vsel %vm414, %v2658, %v2351
      %v2667 = vsel %vm414, %v2659, %v2355
      %v2668 = vsel %vm414, %v2660, %v2359
      %v2669 = vsel %vm414, %v2661, %v2363
      %v2670 = vsel %vm414, %v2662, %v2367
      %v2679 = vrot.slane %v2663, 7
      %v2680 = vrot.slane %v2664, 7
      %v2681 = vrot.slane %v2665, 7
      %v2682 = vrot.slane %v2666, 7
      %v2683 = vrot.slane %v2667, 7
      %v2684 = vrot.slane %v2668, 7
      %v2685 = vrot.slane %v2669, 7
      %v2686 = vrot.slane %v2670, 7
      %v2695 = vsel %vm2498, 0.0, %v2679
      %v2696 = vsel %vm2498, 0.0, %v2680
      %v2697 = vsel %vm2498, 0.0, %v2681
      %v2698 = vsel %vm2498, 0.0, %v2682
      %v2699 = vsel %vm2498, 0.0, %v2683
      %v2700 = vsel %vm2498, 0.0, %v2684
      %v2701 = vsel %vm2498, 0.0, %v2685
      %v2702 = vsel %vm2498, 0.0, %v2686
      %v2703 = vsel %vm2498, %v2679, 0.0
      %v2704 = vsel %vm2498, %v2680, 0.0
      %v2705 = vsel %vm2498, %v2681, 0.0
      %v2706 = vsel %vm2498, %v2682, 0.0
      %v2707 = vsel %vm2498, %v2683, 0.0
      %v2708 = vsel %vm2498, %v2684, 0.0
      %v2709 = vsel %vm2498, %v2685, 0.0
      %v2710 = vsel %vm2498, %v2686, 0.0
      %v2719 = vrot.slane %v2340, 1
      %v2720 = vrot.slane %v2344, 1
      %v2721 = vrot.slane %v2348, 1
      %v2722 = vrot.slane %v2352, 1
      %v2723 = vrot.slane %v2356, 1
      %v2724 = vrot.slane %v2360, 1
      %v2725 = vrot.slane %v2364, 1
      %v2726 = vrot.slane %v2368, 1
      %v2735 = vrot.slane %v2340, 2
      %v2736 = vrot.slane %v2344, 2
      %v2737 = vrot.slane %v2348, 2
      %v2738 = vrot.slane %v2352, 2
      %v2739 = vrot.slane %v2356, 2
      %v2740 = vrot.slane %v2360, 2
      %v2741 = vrot.slane %v2364, 2
      %v2742 = vrot.slane %v2368, 2
      %v2751 = vrot.slane %v2340, 3
      %v2752 = vrot.slane %v2344, 3
      %v2753 = vrot.slane %v2348, 3
      %v2754 = vrot.slane %v2352, 3
      %v2755 = vrot.slane %v2356, 3
      %v2756 = vrot.slane %v2360, 3
      %v2757 = vrot.slane %v2364, 3
      %v2758 = vrot.slane %v2368, 3
      %v2775 = vrot.slane %v2341, 4
      %v2776 = vrot.slane %v2345, 4
      %v2777 = vrot.slane %v2349, 4
      %v2778 = vrot.slane %v2353, 4
      %v2779 = vrot.slane %v2357, 4
      %v2780 = vrot.slane %v2361, 4
      %v2781 = vrot.slane %v2365, 4
      %v2782 = vrot.slane %v2369, 4
      %v2791 = vrot.slane %v2341, 5
      %v2792 = vrot.slane %v2345, 5
      %v2793 = vrot.slane %v2349, 5
      %v2794 = vrot.slane %v2353, 5
      %v2795 = vrot.slane %v2357, 5
      %v2796 = vrot.slane %v2361, 5
      %v2797 = vrot.slane %v2365, 5
      %v2798 = vrot.slane %v2369, 5
      %v2807 = vrot.slane %v2341, 6
      %v2808 = vrot.slane %v2345, 6
      %v2809 = vrot.slane %v2349, 6
      %v2810 = vrot.slane %v2353, 6
      %v2811 = vrot.slane %v2357, 6
      %v2812 = vrot.slane %v2361, 6
      %v2813 = vrot.slane %v2365, 6
      %v2814 = vrot.slane %v2369, 6
      %v2823 = vrot.slane %v2341, 7
      %v2824 = vrot.slane %v2345, 7
      %v2825 = vrot.slane %v2349, 7
      %v2826 = vrot.slane %v2353, 7
      %v2827 = vrot.slane %v2357, 7
      %v2828 = vrot.slane %v2361, 7
      %v2829 = vrot.slane %v2365, 7
      %v2830 = vrot.slane %v2369, 7
      %v2839 = vsel %vm2498, %v2340, %v2719
      %v2840 = vsel %vm2498, %v2344, %v2720
      %v2841 = vsel %vm2498, %v2348, %v2721
      %v2842 = vsel %vm2498, %v2352, %v2722
      %v2843 = vsel %vm2498, %v2356, %v2723
      %v2844 = vsel %vm2498, %v2360, %v2724
      %v2845 = vsel %vm2498, %v2364, %v2725
      %v2846 = vsel %vm2498, %v2368, %v2726
      %v2847 = vsel %vm2507, %v2839, %v2735
      %v2848 = vsel %vm2507, %v2840, %v2736
      %v2849 = vsel %vm2507, %v2841, %v2737
      %v2850 = vsel %vm2507, %v2842, %v2738
      %v2851 = vsel %vm2507, %v2843, %v2739
      %v2852 = vsel %vm2507, %v2844, %v2740
      %v2853 = vsel %vm2507, %v2845, %v2741
      %v2854 = vsel %vm2507, %v2846, %v2742
      %v2855 = vsel %vm2516, %v2847, %v2751
      %v2856 = vsel %vm2516, %v2848, %v2752
      %v2857 = vsel %vm2516, %v2849, %v2753
      %v2858 = vsel %vm2516, %v2850, %v2754
      %v2859 = vsel %vm2516, %v2851, %v2755
      %v2860 = vsel %vm2516, %v2852, %v2756
      %v2861 = vsel %vm2516, %v2853, %v2757
      %v2862 = vsel %vm2516, %v2854, %v2758
      %v2863 = vsel %vm2525, %v2855, %v2775
      %v2864 = vsel %vm2525, %v2856, %v2776
      %v2865 = vsel %vm2525, %v2857, %v2777
      %v2866 = vsel %vm2525, %v2858, %v2778
      %v2867 = vsel %vm2525, %v2859, %v2779
      %v2868 = vsel %vm2525, %v2860, %v2780
      %v2869 = vsel %vm2525, %v2861, %v2781
      %v2870 = vsel %vm2525, %v2862, %v2782
      %v2871 = vsel %vm2534, %v2863, %v2791
      %v2872 = vsel %vm2534, %v2864, %v2792
      %v2873 = vsel %vm2534, %v2865, %v2793
      %v2874 = vsel %vm2534, %v2866, %v2794
      %v2875 = vsel %vm2534, %v2867, %v2795
      %v2876 = vsel %vm2534, %v2868, %v2796
      %v2877 = vsel %vm2534, %v2869, %v2797
      %v2878 = vsel %vm2534, %v2870, %v2798
      %v2879 = vsel %vm834, %v2871, %v2807
      %v2880 = vsel %vm834, %v2872, %v2808
      %v2881 = vsel %vm834, %v2873, %v2809
      %v2882 = vsel %vm834, %v2874, %v2810
      %v2883 = vsel %vm834, %v2875, %v2811
      %v2884 = vsel %vm834, %v2876, %v2812
      %v2885 = vsel %vm834, %v2877, %v2813
      %v2886 = vsel %vm834, %v2878, %v2814
      %v2887 = vsel %vm414, %v2879, %v2823
      %v2888 = vsel %vm414, %v2880, %v2824
      %v2889 = vsel %vm414, %v2881, %v2825
      %v2890 = vsel %vm414, %v2882, %v2826
      %v2891 = vsel %vm414, %v2883, %v2827
      %v2892 = vsel %vm414, %v2884, %v2828
      %v2893 = vsel %vm414, %v2885, %v2829
      %v2894 = vsel %vm414, %v2886, %v2830
      %v2903 = vrot.slane %v2887, 7
      %v2904 = vrot.slane %v2888, 7
      %v2905 = vrot.slane %v2889, 7
      %v2906 = vrot.slane %v2890, 7
      %v2907 = vrot.slane %v2891, 7
      %v2908 = vrot.slane %v2892, 7
      %v2909 = vrot.slane %v2893, 7
      %v2910 = vrot.slane %v2894, 7
      %v2919 = vsel %vm2498, 0.0, %v2903
      %v2920 = vsel %vm2498, 0.0, %v2904
      %v2921 = vsel %vm2498, 0.0, %v2905
      %v2922 = vsel %vm2498, 0.0, %v2906
      %v2923 = vsel %vm2498, 0.0, %v2907
      %v2924 = vsel %vm2498, 0.0, %v2908
      %v2925 = vsel %vm2498, 0.0, %v2909
      %v2926 = vsel %vm2498, 0.0, %v2910
      %v2927 = vsel %vm2498, %v2903, 0.0
      %v2928 = vsel %vm2498, %v2904, 0.0
      %v2929 = vsel %vm2498, %v2905, 0.0
      %v2930 = vsel %vm2498, %v2906, 0.0
      %v2931 = vsel %vm2498, %v2907, 0.0
      %v2932 = vsel %vm2498, %v2908, 0.0
      %v2933 = vsel %vm2498, %v2909, 0.0
      %v2934 = vsel %vm2498, %v2910, 0.0
      %v2935 = vrot.slane %v2340, 4
      %v2936 = vrot.slane %v2344, 4
      %v2937 = vrot.slane %v2348, 4
      %v2938 = vrot.slane %v2352, 4
      %v2939 = vrot.slane %v2356, 4
      %v2940 = vrot.slane %v2360, 4
      %v2941 = vrot.slane %v2364, 4
      %v2942 = vrot.slane %v2368, 4
      %v2951 = vsel %vm2498, %v2719, %v2735
      %v2952 = vsel %vm2498, %v2720, %v2736
      %v2953 = vsel %vm2498, %v2721, %v2737
      %v2954 = vsel %vm2498, %v2722, %v2738
      %v2955 = vsel %vm2498, %v2723, %v2739
      %v2956 = vsel %vm2498, %v2724, %v2740
      %v2957 = vsel %vm2498, %v2725, %v2741
      %v2958 = vsel %vm2498, %v2726, %v2742
      %v2959 = vsel %vm2507, %v2951, %v2751
      %v2960 = vsel %vm2507, %v2952, %v2752
      %v2961 = vsel %vm2507, %v2953, %v2753
      %v2962 = vsel %vm2507, %v2954, %v2754
      %v2963 = vsel %vm2507, %v2955, %v2755
      %v2964 = vsel %vm2507, %v2956, %v2756
      %v2965 = vsel %vm2507, %v2957, %v2757
      %v2966 = vsel %vm2507, %v2958, %v2758
      %v2967 = vsel %vm2516, %v2959, %v2935
      %v2968 = vsel %vm2516, %v2960, %v2936
      %v2969 = vsel %vm2516, %v2961, %v2937
      %v2970 = vsel %vm2516, %v2962, %v2938
      %v2971 = vsel %vm2516, %v2963, %v2939
      %v2972 = vsel %vm2516, %v2964, %v2940
      %v2973 = vsel %vm2516, %v2965, %v2941
      %v2974 = vsel %vm2516, %v2966, %v2942
      %v2975 = vsel %vm2525, %v2967, %v2791
      %v2976 = vsel %vm2525, %v2968, %v2792
      %v2977 = vsel %vm2525, %v2969, %v2793
      %v2978 = vsel %vm2525, %v2970, %v2794
      %v2979 = vsel %vm2525, %v2971, %v2795
      %v2980 = vsel %vm2525, %v2972, %v2796
      %v2981 = vsel %vm2525, %v2973, %v2797
      %v2982 = vsel %vm2525, %v2974, %v2798
      %v2983 = vsel %vm2534, %v2975, %v2807
      %v2984 = vsel %vm2534, %v2976, %v2808
      %v2985 = vsel %vm2534, %v2977, %v2809
      %v2986 = vsel %vm2534, %v2978, %v2810
      %v2987 = vsel %vm2534, %v2979, %v2811
      %v2988 = vsel %vm2534, %v2980, %v2812
      %v2989 = vsel %vm2534, %v2981, %v2813
      %v2990 = vsel %vm2534, %v2982, %v2814
      %v2991 = vsel %vm834, %v2983, %v2823
      %v2992 = vsel %vm834, %v2984, %v2824
      %v2993 = vsel %vm834, %v2985, %v2825
      %v2994 = vsel %vm834, %v2986, %v2826
      %v2995 = vsel %vm834, %v2987, %v2827
      %v2996 = vsel %vm834, %v2988, %v2828
      %v2997 = vsel %vm834, %v2989, %v2829
      %v2998 = vsel %vm834, %v2990, %v2830
      %v2999 = vsel %vm414, %v2991, %v2341
      %v3000 = vsel %vm414, %v2992, %v2345
      %v3001 = vsel %vm414, %v2993, %v2349
      %v3002 = vsel %vm414, %v2994, %v2353
      %v3003 = vsel %vm414, %v2995, %v2357
      %v3004 = vsel %vm414, %v2996, %v2361
      %v3005 = vsel %vm414, %v2997, %v2365
      %v3006 = vsel %vm414, %v2998, %v2369
      %v3015 = vrot.slane %v2999, 7
      %v3016 = vrot.slane %v3000, 7
      %v3017 = vrot.slane %v3001, 7
      %v3018 = vrot.slane %v3002, 7
      %v3019 = vrot.slane %v3003, 7
      %v3020 = vrot.slane %v3004, 7
      %v3021 = vrot.slane %v3005, 7
      %v3022 = vrot.slane %v3006, 7
      %v3031 = vsel %vm2498, 0.0, %v3015
      %v3032 = vsel %vm2498, 0.0, %v3016
      %v3033 = vsel %vm2498, 0.0, %v3017
      %v3034 = vsel %vm2498, 0.0, %v3018
      %v3035 = vsel %vm2498, 0.0, %v3019
      %v3036 = vsel %vm2498, 0.0, %v3020
      %v3037 = vsel %vm2498, 0.0, %v3021
      %v3038 = vsel %vm2498, 0.0, %v3022
      %v3039 = vsel %vm2498, %v3015, 0.0
      %v3040 = vsel %vm2498, %v3016, 0.0
      %v3041 = vsel %vm2498, %v3017, 0.0
      %v3042 = vsel %vm2498, %v3018, 0.0
      %v3043 = vsel %vm2498, %v3019, 0.0
      %v3044 = vsel %vm2498, %v3020, 0.0
      %v3045 = vsel %vm2498, %v3021, 0.0
      %v3046 = vsel %vm2498, %v3022, 0.0
      %v3047 = vpack.c.bf16 %v2583, 0.0
      %v3048 = vpack.c.bf16 %v2585, %v2584
      %v3049 = vpack.c.bf16 %v2587, %v2586
      %v3050 = vpack.c.bf16 %v2589, %v2588
      %v3051 = vld [vmem:[%s2] sm:$0xf]
      %v3052 = vld [vmem:[%s2 + $0x4] sm:$0xf]
      %v3053 = vld [vmem:[%s2 + $0x8] sm:$0xf]
      %v3054 = vld [vmem:[%s2 + $0xc] sm:$0xf]
      %v3055 = vld [vmem:[%s2 + $0x10] sm:$0xf]
      %v3056 = vld [vmem:[%s2 + $0x14] sm:$0xf]
      %v3057 = vld [vmem:[%s2 + $0x18] sm:$0xf]
      %v3058 = vld [vmem:[%s2 + $0x1c] sm:$0xf]
      %v3059 = vld [vmem:[%s2 + $0x20] sm:$0xf]
      %v3060 = vld [vmem:[%s2 + $0x24] sm:$0xf]
      %v3061 = vld [vmem:[%s2 + $0x28] sm:$0xf]
      %v3062 = vld [vmem:[%s2 + $0x2c] sm:$0xf]
      %v3063 = vld [vmem:[%s2 + $0x30] sm:$0xf]
      %v3064 = vld [vmem:[%s2 + $0x34] sm:$0xf]
      %v3065 = vld [vmem:[%s2 + $0x38] sm:$0xf]
      %v3066 = vld [vmem:[%s2 + $0x3c] sm:$0xf]
      %v3067 = vpack.c.bf16 %v2695, 0.0
      %v3068 = vpack.c.bf16 %v2697, %v2696
      %v3069 = vpack.c.bf16 %v2699, %v2698
      %v3070 = vpack.c.bf16 %v2701, %v2700
      %s3071 = scalar_lea.vmem %s2, 64
      %v3072 = vld [vmem:[%s3071] sm:$0xf]
      %v3073 = vld [vmem:[%s3071 + $0x4] sm:$0xf]
      %v3074 = vld [vmem:[%s3071 + $0x8] sm:$0xf]
      %v3075 = vld [vmem:[%s3071 + $0xc] sm:$0xf]
      %v3076 = vld [vmem:[%s3071 + $0x10] sm:$0xf]
      %v3077 = vld [vmem:[%s3071 + $0x14] sm:$0xf]
      %v3078 = vld [vmem:[%s3071 + $0x18] sm:$0xf]
      %v3079 = vld [vmem:[%s3071 + $0x1c] sm:$0xf]
      %v3080 = vld [vmem:[%s3071 + $0x20] sm:$0xf]
      %v3081 = vld [vmem:[%s3071 + $0x24] sm:$0xf]
      %v3082 = vld [vmem:[%s3071 + $0x28] sm:$0xf]
      %v3083 = vld [vmem:[%s3071 + $0x2c] sm:$0xf]
      %v3084 = vld [vmem:[%s3071 + $0x30] sm:$0xf]
      %v3085 = vld [vmem:[%s3071 + $0x34] sm:$0xf]
      %v3086 = vld [vmem:[%s3071 + $0x38] sm:$0xf]
      %v3087 = vld [vmem:[%s3071 + $0x3c] sm:$0xf]
      %v3104 = vunpack.c.l.b16 %v3072
      %v3105 = vunpack.c.l.b16 %v3073
      %v3106 = vunpack.c.l.b16 %v3074
      %v3107 = vunpack.c.l.b16 %v3075
      %v3108 = vunpack.c.l.b16 %v3076
      %v3109 = vunpack.c.l.b16 %v3077
      %v3110 = vunpack.c.l.b16 %v3078
      %v3111 = vunpack.c.l.b16 %v3079
      %v3112 = vunpack.c.l.b16 %v3080
      %v3113 = vunpack.c.l.b16 %v3081
      %v3114 = vunpack.c.l.b16 %v3082
      %v3115 = vunpack.c.l.b16 %v3083
      %v3116 = vunpack.c.l.b16 %v3084
      %v3117 = vunpack.c.l.b16 %v3085
      %v3118 = vunpack.c.l.b16 %v3086
      %v3119 = vunpack.c.l.b16 %v3087
      %v3120 = vpack.c.b16 %v3105, %v3104
      %v3121 = vpack.c.b16 %v3107, %v3106
      %v3122 = vpack.c.b16 %v3109, %v3108
      %v3123 = vpack.c.b16 %v3111, %v3110
      %v3124 = vpack.c.b16 %v3113, %v3112
      %v3125 = vpack.c.b16 %v3115, %v3114
      %v3126 = vpack.c.b16 %v3117, %v3116
      %v3127 = vpack.c.b16 %v3119, %v3118
      %3136 = vmatpush.bf16.msra.mxu0 %v3127
      %3137 = vmatpush.bf16.msra.mxu0 %v3126
      %3138 = vmatpush.bf16.msra.mxu0 %v3125
      %3139 = vmatpush.bf16.msra.mxu0 %v3124
      %3140 = vmatpush.bf16.msra.mxu0 %v3123
      %3141 = vmatpush.bf16.msra.mxu0 %v3122
      %3142 = vmatpush.bf16.msra.mxu0 %v3121
      %3143 = vmatpush.bf16.msra.mxu0 %v3120
      %3144 = vmatmul.bf16.gmra.mxu0 %v3067
      %v3145 = vpop.f32.mrf.mxu0
      %v3146 = vadd.f32 0.0, %v3145
      %v3147 = vpop.f32.mrf.mxu0
      %v3148 = vadd.f32 0.0, %v3147
      %3149 = vmatmul.bf16.gmra.mxu0 %v3068
      %v3150 = vpop.f32.mrf.mxu0
      %v3151 = vadd.f32 0.0, %v3150
      %v3152 = vpop.f32.mrf.mxu0
      %v3153 = vadd.f32 0.0, %v3152
      %3154 = vmatmul.bf16.gmra.mxu0 %v3069
      %v3155 = vpop.f32.mrf.mxu0
      %v3156 = vadd.f32 0.0, %v3155
      %v3157 = vpop.f32.mrf.mxu0
      %v3158 = vadd.f32 0.0, %v3157
      %3159 = vmatmul.bf16.gmra.mxu0 %v3070
      %v3160 = vpop.f32.mrf.mxu0
      %v3161 = vadd.f32 0.0, %v3160
      %v3162 = vpop.f32.mrf.mxu0
      %v3163 = vadd.f32 0.0, %v3162
      %3164 = vdwg.mxu0
      %v3181 = vunpack.c.l.b16 %v3051
      %v3182 = vunpack.c.l.b16 %v3052
      %v3183 = vunpack.c.l.b16 %v3053
      %v3184 = vunpack.c.l.b16 %v3054
      %v3185 = vunpack.c.l.b16 %v3055
      %v3186 = vunpack.c.l.b16 %v3056
      %v3187 = vunpack.c.l.b16 %v3057
      %v3188 = vunpack.c.l.b16 %v3058
      %v3189 = vunpack.c.l.b16 %v3059
      %v3190 = vunpack.c.l.b16 %v3060
      %v3191 = vunpack.c.l.b16 %v3061
      %v3192 = vunpack.c.l.b16 %v3062
      %v3193 = vunpack.c.l.b16 %v3063
      %v3194 = vunpack.c.l.b16 %v3064
      %v3195 = vunpack.c.l.b16 %v3065
      %v3196 = vunpack.c.l.b16 %v3066
      %v3197 = vpack.c.b16 %v3182, %v3181
      %v3198 = vpack.c.b16 %v3184, %v3183
      %v3199 = vpack.c.b16 %v3186, %v3185
      %v3200 = vpack.c.b16 %v3188, %v3187
      %v3201 = vpack.c.b16 %v3190, %v3189
      %v3202 = vpack.c.b16 %v3192, %v3191
      %v3203 = vpack.c.b16 %v3194, %v3193
      %v3204 = vpack.c.b16 %v3196, %v3195
      %3213 = vmatpush.bf16.msra.mxu0 %v3204
      %3214 = vmatpush.bf16.msra.mxu0 %v3203
      %3215 = vmatpush.bf16.msra.mxu0 %v3202
      %3216 = vmatpush.bf16.msra.mxu0 %v3201
      %3217 = vmatpush.bf16.msra.mxu0 %v3200
      %3218 = vmatpush.bf16.msra.mxu0 %v3199
      %3219 = vmatpush.bf16.msra.mxu0 %v3198
      %3220 = vmatpush.bf16.msra.mxu0 %v3197
      %3221 = vmatmul.bf16.gmra.mxu0 %v3047
      %v3222 = vpop.f32.mrf.mxu0
      %v3223 = vadd.f32 %v3146, %v3222
      %v3224 = vpop.f32.mrf.mxu0
      %v3225 = vadd.f32 %v3148, %v3224
      %3226 = vmatmul.bf16.gmra.mxu0 %v3048
      %v3227 = vpop.f32.mrf.mxu0
      %v3228 = vadd.f32 %v3151, %v3227
      %v3229 = vpop.f32.mrf.mxu0
      %v3230 = vadd.f32 %v3153, %v3229
      %3231 = vmatmul.bf16.gmra.mxu0 %v3049
      %v3232 = vpop.f32.mrf.mxu0
      %v3233 = vadd.f32 %v3156, %v3232
      %v3234 = vpop.f32.mrf.mxu0
      %v3235 = vadd.f32 %v3158, %v3234
      %3236 = vmatmul.bf16.gmra.mxu0 %v3050
      %v3237 = vpop.f32.mrf.mxu0
      %v3238 = vadd.f32 %v3161, %v3237
      %v3239 = vpop.f32.mrf.mxu0
      %v3240 = vadd.f32 %v3163, %v3239
      %3241 = vdwg.mxu0
      %v3257 = vrot.slane 0.0, 1
      %v3258 = vsel %vm414, %v3257, %v3257
      %v3259 = vrot.slane %v2583, 1
      %v3260 = vrot.slane %v2591, 1
      %v3261 = vsel %vm414, %v3259, %v3260
      %v3262 = vrot.slane %v2584, 1
      %v3263 = vrot.slane %v2592, 1
      %v3264 = vsel %vm414, %v3262, %v3263
      %v3265 = vrot.slane %v2585, 1
      %v3266 = vrot.slane %v2593, 1
      %v3267 = vsel %vm414, %v3265, %v3266
      %v3268 = vrot.slane %v2586, 1
      %v3269 = vrot.slane %v2594, 1
      %v3270 = vsel %vm414, %v3268, %v3269
      %v3271 = vrot.slane %v2587, 1
      %v3272 = vrot.slane %v2595, 1
      %v3273 = vsel %vm414, %v3271, %v3272
      %v3274 = vrot.slane %v2588, 1
      %v3275 = vrot.slane %v2596, 1
      %v3276 = vsel %vm414, %v3274, %v3275
      %v3277 = vrot.slane %v2589, 1
      %v3278 = vrot.slane %v2597, 1
      %v3279 = vsel %vm414, %v3277, %v3278
      %v3288 = vpack.c.bf16 %v3261, %v3258
      %v3289 = vpack.c.bf16 %v3267, %v3264
      %v3290 = vpack.c.bf16 %v3273, %v3270
      %v3291 = vpack.c.bf16 %v3279, %v3276
      %s3292 = scalar_lea.vmem %s2, 128
      %v3293 = vld [vmem:[%s3292] sm:$0xf]
      %v3294 = vld [vmem:[%s3292 + $0x4] sm:$0xf]
      %v3295 = vld [vmem:[%s3292 + $0x8] sm:$0xf]
      %v3296 = vld [vmem:[%s3292 + $0xc] sm:$0xf]
      %v3297 = vld [vmem:[%s3292 + $0x10] sm:$0xf]
      %v3298 = vld [vmem:[%s3292 + $0x14] sm:$0xf]
      %v3299 = vld [vmem:[%s3292 + $0x18] sm:$0xf]
      %v3300 = vld [vmem:[%s3292 + $0x1c] sm:$0xf]
      %v3301 = vld [vmem:[%s3292 + $0x20] sm:$0xf]
      %v3302 = vld [vmem:[%s3292 + $0x24] sm:$0xf]
      %v3303 = vld [vmem:[%s3292 + $0x28] sm:$0xf]
      %v3304 = vld [vmem:[%s3292 + $0x2c] sm:$0xf]
      %v3305 = vld [vmem:[%s3292 + $0x30] sm:$0xf]
      %v3306 = vld [vmem:[%s3292 + $0x34] sm:$0xf]
      %v3307 = vld [vmem:[%s3292 + $0x38] sm:$0xf]
      %v3308 = vld [vmem:[%s3292 + $0x3c] sm:$0xf]
      %v3325 = vunpack.c.l.b16 %v3293
      %v3326 = vunpack.c.l.b16 %v3294
      %v3327 = vunpack.c.l.b16 %v3295
      %v3328 = vunpack.c.l.b16 %v3296
      %v3329 = vunpack.c.l.b16 %v3297
      %v3330 = vunpack.c.l.b16 %v3298
      %v3331 = vunpack.c.l.b16 %v3299
      %v3332 = vunpack.c.l.b16 %v3300
      %v3333 = vunpack.c.l.b16 %v3301
      %v3334 = vunpack.c.l.b16 %v3302
      %v3335 = vunpack.c.l.b16 %v3303
      %v3336 = vunpack.c.l.b16 %v3304
      %v3337 = vunpack.c.l.b16 %v3305
      %v3338 = vunpack.c.l.b16 %v3306
      %v3339 = vunpack.c.l.b16 %v3307
      %v3340 = vunpack.c.l.b16 %v3308
      %v3341 = vpack.c.b16 %v3326, %v3325
      %v3342 = vpack.c.b16 %v3328, %v3327
      %v3343 = vpack.c.b16 %v3330, %v3329
      %v3344 = vpack.c.b16 %v3332, %v3331
      %v3345 = vpack.c.b16 %v3334, %v3333
      %v3346 = vpack.c.b16 %v3336, %v3335
      %v3347 = vpack.c.b16 %v3338, %v3337
      %v3348 = vpack.c.b16 %v3340, %v3339
      %3357 = vmatpush.bf16.msra.mxu0 %v3348
      %3358 = vmatpush.bf16.msra.mxu0 %v3347
      %3359 = vmatpush.bf16.msra.mxu0 %v3346
      %3360 = vmatpush.bf16.msra.mxu0 %v3345
      %3361 = vmatpush.bf16.msra.mxu0 %v3344
      %3362 = vmatpush.bf16.msra.mxu0 %v3343
      %3363 = vmatpush.bf16.msra.mxu0 %v3342
      %3364 = vmatpush.bf16.msra.mxu0 %v3341
      %3365 = vmatmul.bf16.gmra.mxu0 %v3288
      %v3366 = vpop.f32.mrf.mxu0
      %v3367 = vadd.f32 0.0, %v3366
      %v3368 = vpop.f32.mrf.mxu0
      %v3369 = vadd.f32 0.0, %v3368
      %3370 = vmatmul.bf16.gmra.mxu0 %v3289
      %v3371 = vpop.f32.mrf.mxu0
      %v3372 = vadd.f32 0.0, %v3371
      %v3373 = vpop.f32.mrf.mxu0
      %v3374 = vadd.f32 0.0, %v3373
      %3375 = vmatmul.bf16.gmra.mxu0 %v3290
      %v3376 = vpop.f32.mrf.mxu0
      %v3377 = vadd.f32 0.0, %v3376
      %v3378 = vpop.f32.mrf.mxu0
      %v3379 = vadd.f32 0.0, %v3378
      %3380 = vmatmul.bf16.gmra.mxu0 %v3291
      %v3381 = vpop.f32.mrf.mxu0
      %v3382 = vadd.f32 0.0, %v3381
      %v3383 = vpop.f32.mrf.mxu0
      %v3384 = vadd.f32 0.0, %v3383
      %3385 = vdwg.mxu0
      %v3386 = vadd.f32 %v3223, %v3367
      %v3387 = vadd.f32 %v3225, %v3369
      %v3388 = vadd.f32 %v3228, %v3372
      %v3389 = vadd.f32 %v3230, %v3374
      %v3390 = vadd.f32 %v3233, %v3377
      %v3391 = vadd.f32 %v3235, %v3379
      %v3392 = vadd.f32 %v3238, %v3382
      %v3393 = vadd.f32 %v3240, %v3384
      %v3408 = vrot.slane %v2695, 1
      %v3409 = vrot.slane %v2703, 1
      %v3410 = vsel %vm414, %v3408, %v3409
      %v3411 = vrot.slane %v2696, 1
      %v3412 = vrot.slane %v2704, 1
      %v3413 = vsel %vm414, %v3411, %v3412
      %v3414 = vrot.slane %v2697, 1
      %v3415 = vrot.slane %v2705, 1
      %v3416 = vsel %vm414, %v3414, %v3415
      %v3417 = vrot.slane %v2698, 1
      %v3418 = vrot.slane %v2706, 1
      %v3419 = vsel %vm414, %v3417, %v3418
      %v3420 = vrot.slane %v2699, 1
      %v3421 = vrot.slane %v2707, 1
      %v3422 = vsel %vm414, %v3420, %v3421
      %v3423 = vrot.slane %v2700, 1
      %v3424 = vrot.slane %v2708, 1
      %v3425 = vsel %vm414, %v3423, %v3424
      %v3426 = vrot.slane %v2701, 1
      %v3427 = vrot.slane %v2709, 1
      %v3428 = vsel %vm414, %v3426, %v3427
      %v3436 = vpack.c.bf16 %v3410, %v3258
      %v3437 = vpack.c.bf16 %v3416, %v3413
      %v3438 = vpack.c.bf16 %v3422, %v3419
      %v3439 = vpack.c.bf16 %v3428, %v3425
      %s3440 = scalar_lea.vmem %s2, 192
      %v3441 = vld [vmem:[%s3440] sm:$0xf]
      %v3442 = vld [vmem:[%s3440 + $0x4] sm:$0xf]
      %v3443 = vld [vmem:[%s3440 + $0x8] sm:$0xf]
      %v3444 = vld [vmem:[%s3440 + $0xc] sm:$0xf]
      %v3445 = vld [vmem:[%s3440 + $0x10] sm:$0xf]
      %v3446 = vld [vmem:[%s3440 + $0x14] sm:$0xf]
      %v3447 = vld [vmem:[%s3440 + $0x18] sm:$0xf]
      %v3448 = vld [vmem:[%s3440 + $0x1c] sm:$0xf]
      %v3449 = vld [vmem:[%s3440 + $0x20] sm:$0xf]
      %v3450 = vld [vmem:[%s3440 + $0x24] sm:$0xf]
      %v3451 = vld [vmem:[%s3440 + $0x28] sm:$0xf]
      %v3452 = vld [vmem:[%s3440 + $0x2c] sm:$0xf]
      %v3453 = vld [vmem:[%s3440 + $0x30] sm:$0xf]
      %v3454 = vld [vmem:[%s3440 + $0x34] sm:$0xf]
      %v3455 = vld [vmem:[%s3440 + $0x38] sm:$0xf]
      %v3456 = vld [vmem:[%s3440 + $0x3c] sm:$0xf]
      %v3473 = vunpack.c.l.b16 %v3441
      %v3474 = vunpack.c.l.b16 %v3442
      %v3475 = vunpack.c.l.b16 %v3443
      %v3476 = vunpack.c.l.b16 %v3444
      %v3477 = vunpack.c.l.b16 %v3445
      %v3478 = vunpack.c.l.b16 %v3446
      %v3479 = vunpack.c.l.b16 %v3447
      %v3480 = vunpack.c.l.b16 %v3448
      %v3481 = vunpack.c.l.b16 %v3449
      %v3482 = vunpack.c.l.b16 %v3450
      %v3483 = vunpack.c.l.b16 %v3451
      %v3484 = vunpack.c.l.b16 %v3452
      %v3485 = vunpack.c.l.b16 %v3453
      %v3486 = vunpack.c.l.b16 %v3454
      %v3487 = vunpack.c.l.b16 %v3455
      %v3488 = vunpack.c.l.b16 %v3456
      %v3489 = vpack.c.b16 %v3474, %v3473
      %v3490 = vpack.c.b16 %v3476, %v3475
      %v3491 = vpack.c.b16 %v3478, %v3477
      %v3492 = vpack.c.b16 %v3480, %v3479
      %v3493 = vpack.c.b16 %v3482, %v3481
      %v3494 = vpack.c.b16 %v3484, %v3483
      %v3495 = vpack.c.b16 %v3486, %v3485
      %v3496 = vpack.c.b16 %v3488, %v3487
      %3505 = vmatpush.bf16.msra.mxu0 %v3496
      %3506 = vmatpush.bf16.msra.mxu0 %v3495
      %3507 = vmatpush.bf16.msra.mxu0 %v3494
      %3508 = vmatpush.bf16.msra.mxu0 %v3493
      %3509 = vmatpush.bf16.msra.mxu0 %v3492
      %3510 = vmatpush.bf16.msra.mxu0 %v3491
      %3511 = vmatpush.bf16.msra.mxu0 %v3490
      %3512 = vmatpush.bf16.msra.mxu0 %v3489
      %3513 = vmatmul.bf16.gmra.mxu0 %v3436
      %v3514 = vpop.f32.mrf.mxu0
      %v3515 = vadd.f32 0.0, %v3514
      %v3516 = vpop.f32.mrf.mxu0
      %v3517 = vadd.f32 0.0, %v3516
      %3518 = vmatmul.bf16.gmra.mxu0 %v3437
      %v3519 = vpop.f32.mrf.mxu0
      %v3520 = vadd.f32 0.0, %v3519
      %v3521 = vpop.f32.mrf.mxu0
      %v3522 = vadd.f32 0.0, %v3521
      %3523 = vmatmul.bf16.gmra.mxu0 %v3438
      %v3524 = vpop.f32.mrf.mxu0
      %v3525 = vadd.f32 0.0, %v3524
      %v3526 = vpop.f32.mrf.mxu0
      %v3527 = vadd.f32 0.0, %v3526
      %3528 = vmatmul.bf16.gmra.mxu0 %v3439
      %v3529 = vpop.f32.mrf.mxu0
      %v3530 = vadd.f32 0.0, %v3529
      %v3531 = vpop.f32.mrf.mxu0
      %v3532 = vadd.f32 0.0, %v3531
      %3533 = vdwg.mxu0
      %v3534 = vadd.f32 %v3386, %v3515
      %v3535 = vadd.f32 %v3387, %v3517
      %v3536 = vadd.f32 %v3388, %v3520
      %v3537 = vadd.f32 %v3389, %v3522
      %v3538 = vadd.f32 %v3390, %v3525
      %v3539 = vadd.f32 %v3391, %v3527
      %v3540 = vadd.f32 %v3392, %v3530
      %v3541 = vadd.f32 %v3393, %v3532
      %v3542 = vrot.slane 0.0, 2
      %v3543 = vsel %vm834, %v3542, %v3542
      %v3544 = vrot.slane %v2583, 2
      %v3545 = vrot.slane %v2591, 2
      %v3546 = vsel %vm834, %v3544, %v3545
      %v3547 = vrot.slane %v2584, 2
      %v3548 = vrot.slane %v2592, 2
      %v3549 = vsel %vm834, %v3547, %v3548
      %v3550 = vrot.slane %v2585, 2
      %v3551 = vrot.slane %v2593, 2
      %v3552 = vsel %vm834, %v3550, %v3551
      %v3553 = vrot.slane %v2586, 2
      %v3554 = vrot.slane %v2594, 2
      %v3555 = vsel %vm834, %v3553, %v3554
      %v3556 = vrot.slane %v2587, 2
      %v3557 = vrot.slane %v2595, 2
      %v3558 = vsel %vm834, %v3556, %v3557
      %v3559 = vrot.slane %v2588, 2
      %v3560 = vrot.slane %v2596, 2
      %v3561 = vsel %vm834, %v3559, %v3560
      %v3562 = vrot.slane %v2589, 2
      %v3563 = vrot.slane %v2597, 2
      %v3564 = vsel %vm834, %v3562, %v3563
      %v3573 = vpack.c.bf16 %v3546, %v3543
      %v3574 = vpack.c.bf16 %v3552, %v3549
      %v3575 = vpack.c.bf16 %v3558, %v3555
      %v3576 = vpack.c.bf16 %v3564, %v3561
      %s3577 = scalar_lea.vmem %s2, 256
      %v3578 = vld [vmem:[%s3577] sm:$0xf]
      %v3579 = vld [vmem:[%s3577 + $0x4] sm:$0xf]
      %v3580 = vld [vmem:[%s3577 + $0x8] sm:$0xf]
      %v3581 = vld [vmem:[%s3577 + $0xc] sm:$0xf]
      %v3582 = vld [vmem:[%s3577 + $0x10] sm:$0xf]
      %v3583 = vld [vmem:[%s3577 + $0x14] sm:$0xf]
      %v3584 = vld [vmem:[%s3577 + $0x18] sm:$0xf]
      %v3585 = vld [vmem:[%s3577 + $0x1c] sm:$0xf]
      %v3586 = vld [vmem:[%s3577 + $0x20] sm:$0xf]
      %v3587 = vld [vmem:[%s3577 + $0x24] sm:$0xf]
      %v3588 = vld [vmem:[%s3577 + $0x28] sm:$0xf]
      %v3589 = vld [vmem:[%s3577 + $0x2c] sm:$0xf]
      %v3590 = vld [vmem:[%s3577 + $0x30] sm:$0xf]
      %v3591 = vld [vmem:[%s3577 + $0x34] sm:$0xf]
      %v3592 = vld [vmem:[%s3577 + $0x38] sm:$0xf]
      %v3593 = vld [vmem:[%s3577 + $0x3c] sm:$0xf]
      %v3610 = vunpack.c.l.b16 %v3578
      %v3611 = vunpack.c.l.b16 %v3579
      %v3612 = vunpack.c.l.b16 %v3580
      %v3613 = vunpack.c.l.b16 %v3581
      %v3614 = vunpack.c.l.b16 %v3582
      %v3615 = vunpack.c.l.b16 %v3583
      %v3616 = vunpack.c.l.b16 %v3584
      %v3617 = vunpack.c.l.b16 %v3585
      %v3618 = vunpack.c.l.b16 %v3586
      %v3619 = vunpack.c.l.b16 %v3587
      %v3620 = vunpack.c.l.b16 %v3588
      %v3621 = vunpack.c.l.b16 %v3589
      %v3622 = vunpack.c.l.b16 %v3590
      %v3623 = vunpack.c.l.b16 %v3591
      %v3624 = vunpack.c.l.b16 %v3592
      %v3625 = vunpack.c.l.b16 %v3593
      %v3626 = vpack.c.b16 %v3611, %v3610
      %v3627 = vpack.c.b16 %v3613, %v3612
      %v3628 = vpack.c.b16 %v3615, %v3614
      %v3629 = vpack.c.b16 %v3617, %v3616
      %v3630 = vpack.c.b16 %v3619, %v3618
      %v3631 = vpack.c.b16 %v3621, %v3620
      %v3632 = vpack.c.b16 %v3623, %v3622
      %v3633 = vpack.c.b16 %v3625, %v3624
      %3642 = vmatpush.bf16.msra.mxu0 %v3633
      %3643 = vmatpush.bf16.msra.mxu0 %v3632
      %3644 = vmatpush.bf16.msra.mxu0 %v3631
      %3645 = vmatpush.bf16.msra.mxu0 %v3630
      %3646 = vmatpush.bf16.msra.mxu0 %v3629
      %3647 = vmatpush.bf16.msra.mxu0 %v3628
      %3648 = vmatpush.bf16.msra.mxu0 %v3627
      %3649 = vmatpush.bf16.msra.mxu0 %v3626
      %3650 = vmatmul.bf16.gmra.mxu0 %v3573
      %v3651 = vpop.f32.mrf.mxu0
      %v3652 = vadd.f32 0.0, %v3651
      %v3653 = vpop.f32.mrf.mxu0
      %v3654 = vadd.f32 0.0, %v3653
      %3655 = vmatmul.bf16.gmra.mxu0 %v3574
      %v3656 = vpop.f32.mrf.mxu0
      %v3657 = vadd.f32 0.0, %v3656
      %v3658 = vpop.f32.mrf.mxu0
      %v3659 = vadd.f32 0.0, %v3658
      %3660 = vmatmul.bf16.gmra.mxu0 %v3575
      %v3661 = vpop.f32.mrf.mxu0
      %v3662 = vadd.f32 0.0, %v3661
      %v3663 = vpop.f32.mrf.mxu0
      %v3664 = vadd.f32 0.0, %v3663
      %3665 = vmatmul.bf16.gmra.mxu0 %v3576
      %v3666 = vpop.f32.mrf.mxu0
      %v3667 = vadd.f32 0.0, %v3666
      %v3668 = vpop.f32.mrf.mxu0
      %v3669 = vadd.f32 0.0, %v3668
      %3670 = vdwg.mxu0
      %v3671 = vadd.f32 %v3534, %v3652
      %v3672 = vadd.f32 %v3535, %v3654
      %v3673 = vadd.f32 %v3536, %v3657
      %v3674 = vadd.f32 %v3537, %v3659
      %v3675 = vadd.f32 %v3538, %v3662
      %v3676 = vadd.f32 %v3539, %v3664
      %v3677 = vadd.f32 %v3540, %v3667
      %v3678 = vadd.f32 %v3541, %v3669
      %v3679 = vpack.c.bf16 %v2919, 0.0
      %v3680 = vpack.c.bf16 %v2921, %v2920
      %v3681 = vpack.c.bf16 %v2923, %v2922
      %v3682 = vpack.c.bf16 %v2925, %v2924
      %s3683 = scalar_lea.vmem %s2, 320
      %v3684 = vld [vmem:[%s3683] sm:$0xf]
      %v3685 = vld [vmem:[%s3683 + $0x4] sm:$0xf]
      %v3686 = vld [vmem:[%s3683 + $0x8] sm:$0xf]
      %v3687 = vld [vmem:[%s3683 + $0xc] sm:$0xf]
      %v3688 = vld [vmem:[%s3683 + $0x10] sm:$0xf]
      %v3689 = vld [vmem:[%s3683 + $0x14] sm:$0xf]
      %v3690 = vld [vmem:[%s3683 + $0x18] sm:$0xf]
      %v3691 = vld [vmem:[%s3683 + $0x1c] sm:$0xf]
      %v3692 = vld [vmem:[%s3683 + $0x20] sm:$0xf]
      %v3693 = vld [vmem:[%s3683 + $0x24] sm:$0xf]
      %v3694 = vld [vmem:[%s3683 + $0x28] sm:$0xf]
      %v3695 = vld [vmem:[%s3683 + $0x2c] sm:$0xf]
      %v3696 = vld [vmem:[%s3683 + $0x30] sm:$0xf]
      %v3697 = vld [vmem:[%s3683 + $0x34] sm:$0xf]
      %v3698 = vld [vmem:[%s3683 + $0x38] sm:$0xf]
      %v3699 = vld [vmem:[%s3683 + $0x3c] sm:$0xf]
      %v3716 = vunpack.c.l.b16 %v3684
      %v3717 = vunpack.c.l.b16 %v3685
      %v3718 = vunpack.c.l.b16 %v3686
      %v3719 = vunpack.c.l.b16 %v3687
      %v3720 = vunpack.c.l.b16 %v3688
      %v3721 = vunpack.c.l.b16 %v3689
      %v3722 = vunpack.c.l.b16 %v3690
      %v3723 = vunpack.c.l.b16 %v3691
      %v3724 = vunpack.c.l.b16 %v3692
      %v3725 = vunpack.c.l.b16 %v3693
      %v3726 = vunpack.c.l.b16 %v3694
      %v3727 = vunpack.c.l.b16 %v3695
      %v3728 = vunpack.c.l.b16 %v3696
      %v3729 = vunpack.c.l.b16 %v3697
      %v3730 = vunpack.c.l.b16 %v3698
      %v3731 = vunpack.c.l.b16 %v3699
      %v3732 = vpack.c.b16 %v3717, %v3716
      %v3733 = vpack.c.b16 %v3719, %v3718
      %v3734 = vpack.c.b16 %v3721, %v3720
      %v3735 = vpack.c.b16 %v3723, %v3722
      %v3736 = vpack.c.b16 %v3725, %v3724
      %v3737 = vpack.c.b16 %v3727, %v3726
      %v3738 = vpack.c.b16 %v3729, %v3728
      %v3739 = vpack.c.b16 %v3731, %v3730
      %3748 = vmatpush.bf16.msra.mxu0 %v3739
      %3749 = vmatpush.bf16.msra.mxu0 %v3738
      %3750 = vmatpush.bf16.msra.mxu0 %v3737
      %3751 = vmatpush.bf16.msra.mxu0 %v3736
      %3752 = vmatpush.bf16.msra.mxu0 %v3735
      %3753 = vmatpush.bf16.msra.mxu0 %v3734
      %3754 = vmatpush.bf16.msra.mxu0 %v3733
      %3755 = vmatpush.bf16.msra.mxu0 %v3732
      %3756 = vmatmul.bf16.gmra.mxu0 %v3679
      %v3757 = vpop.f32.mrf.mxu0
      %v3758 = vadd.f32 0.0, %v3757
      %v3759 = vpop.f32.mrf.mxu0
      %v3760 = vadd.f32 0.0, %v3759
      %3761 = vmatmul.bf16.gmra.mxu0 %v3680
      %v3762 = vpop.f32.mrf.mxu0
      %v3763 = vadd.f32 0.0, %v3762
      %v3764 = vpop.f32.mrf.mxu0
      %v3765 = vadd.f32 0.0, %v3764
      %3766 = vmatmul.bf16.gmra.mxu0 %v3681
      %v3767 = vpop.f32.mrf.mxu0
      %v3768 = vadd.f32 0.0, %v3767
      %v3769 = vpop.f32.mrf.mxu0
      %v3770 = vadd.f32 0.0, %v3769
      %3771 = vmatmul.bf16.gmra.mxu0 %v3682
      %v3772 = vpop.f32.mrf.mxu0
      %v3773 = vadd.f32 0.0, %v3772
      %v3774 = vpop.f32.mrf.mxu0
      %v3775 = vadd.f32 0.0, %v3774
      %3776 = vdwg.mxu0
      %v3777 = vadd.f32 %v3671, %v3758
      %v3778 = vadd.f32 %v3672, %v3760
      %v3779 = vadd.f32 %v3673, %v3763
      %v3780 = vadd.f32 %v3674, %v3765
      %v3781 = vadd.f32 %v3675, %v3768
      %v3782 = vadd.f32 %v3676, %v3770
      %v3783 = vadd.f32 %v3677, %v3773
      %v3784 = vadd.f32 %v3678, %v3775
      %v3785 = vpack.c.bf16 %v3031, 0.0
      %v3786 = vpack.c.bf16 %v3033, %v3032
      %v3787 = vpack.c.bf16 %v3035, %v3034
      %v3788 = vpack.c.bf16 %v3037, %v3036
      %s3789 = scalar_lea.vmem %s2, 384
      %v3790 = vld [vmem:[%s3789] sm:$0xf]
      %v3791 = vld [vmem:[%s3789 + $0x4] sm:$0xf]
      %v3792 = vld [vmem:[%s3789 + $0x8] sm:$0xf]
      %v3793 = vld [vmem:[%s3789 + $0xc] sm:$0xf]
      %v3794 = vld [vmem:[%s3789 + $0x10] sm:$0xf]
      %v3795 = vld [vmem:[%s3789 + $0x14] sm:$0xf]
      %v3796 = vld [vmem:[%s3789 + $0x18] sm:$0xf]
      %v3797 = vld [vmem:[%s3789 + $0x1c] sm:$0xf]
      %v3798 = vld [vmem:[%s3789 + $0x20] sm:$0xf]
      %v3799 = vld [vmem:[%s3789 + $0x24] sm:$0xf]
      %v3800 = vld [vmem:[%s3789 + $0x28] sm:$0xf]
      %v3801 = vld [vmem:[%s3789 + $0x2c] sm:$0xf]
      %v3802 = vld [vmem:[%s3789 + $0x30] sm:$0xf]
      %v3803 = vld [vmem:[%s3789 + $0x34] sm:$0xf]
      %v3804 = vld [vmem:[%s3789 + $0x38] sm:$0xf]
      %v3805 = vld [vmem:[%s3789 + $0x3c] sm:$0xf]
      %v3822 = vunpack.c.l.b16 %v3790
      %v3823 = vunpack.c.l.b16 %v3791
      %v3824 = vunpack.c.l.b16 %v3792
      %v3825 = vunpack.c.l.b16 %v3793
      %v3826 = vunpack.c.l.b16 %v3794
      %v3827 = vunpack.c.l.b16 %v3795
      %v3828 = vunpack.c.l.b16 %v3796
      %v3829 = vunpack.c.l.b16 %v3797
      %v3830 = vunpack.c.l.b16 %v3798
      %v3831 = vunpack.c.l.b16 %v3799
      %v3832 = vunpack.c.l.b16 %v3800
      %v3833 = vunpack.c.l.b16 %v3801
      %v3834 = vunpack.c.l.b16 %v3802
      %v3835 = vunpack.c.l.b16 %v3803
      %v3836 = vunpack.c.l.b16 %v3804
      %v3837 = vunpack.c.l.b16 %v3805
      %v3838 = vpack.c.b16 %v3823, %v3822
      %v3839 = vpack.c.b16 %v3825, %v3824
      %v3840 = vpack.c.b16 %v3827, %v3826
      %v3841 = vpack.c.b16 %v3829, %v3828
      %v3842 = vpack.c.b16 %v3831, %v3830
      %v3843 = vpack.c.b16 %v3833, %v3832
      %v3844 = vpack.c.b16 %v3835, %v3834
      %v3845 = vpack.c.b16 %v3837, %v3836
      %3854 = vmatpush.bf16.msra.mxu0 %v3845
      %3855 = vmatpush.bf16.msra.mxu0 %v3844
      %3856 = vmatpush.bf16.msra.mxu0 %v3843
      %3857 = vmatpush.bf16.msra.mxu0 %v3842
      %3858 = vmatpush.bf16.msra.mxu0 %v3841
      %3859 = vmatpush.bf16.msra.mxu0 %v3840
      %3860 = vmatpush.bf16.msra.mxu0 %v3839
      %3861 = vmatpush.bf16.msra.mxu0 %v3838
      %3862 = vmatmul.bf16.gmra.mxu0 %v3785
      %v3863 = vpop.f32.mrf.mxu0
      %v3864 = vadd.f32 0.0, %v3863
      %v3865 = vpop.f32.mrf.mxu0
      %v3866 = vadd.f32 0.0, %v3865
      %3867 = vmatmul.bf16.gmra.mxu0 %v3786
      %v3868 = vpop.f32.mrf.mxu0
      %v3869 = vadd.f32 0.0, %v3868
      %v3870 = vpop.f32.mrf.mxu0
      %v3871 = vadd.f32 0.0, %v3870
      %3872 = vmatmul.bf16.gmra.mxu0 %v3787
      %v3873 = vpop.f32.mrf.mxu0
      %v3874 = vadd.f32 0.0, %v3873
      %v3875 = vpop.f32.mrf.mxu0
      %v3876 = vadd.f32 0.0, %v3875
      %3877 = vmatmul.bf16.gmra.mxu0 %v3788
      %v3878 = vpop.f32.mrf.mxu0
      %v3879 = vadd.f32 0.0, %v3878
      %v3880 = vpop.f32.mrf.mxu0
      %v3881 = vadd.f32 0.0, %v3880
      %3882 = vdwg.mxu0
      %v3883 = vadd.f32 %v3777, %v3864
      %v3884 = vadd.f32 %v3778, %v3866
      %v3885 = vadd.f32 %v3779, %v3869
      %v3886 = vadd.f32 %v3780, %v3871
      %v3887 = vadd.f32 %v3781, %v3874
      %v3888 = vadd.f32 %v3782, %v3876
      %v3889 = vadd.f32 %v3783, %v3879
      %v3890 = vadd.f32 %v3784, %v3881
      %v3905 = vrot.slane %v2919, 1
      %v3906 = vrot.slane %v2927, 1
      %v3907 = vsel %vm414, %v3905, %v3906
      %v3908 = vrot.slane %v2920, 1
      %v3909 = vrot.slane %v2928, 1
      %v3910 = vsel %vm414, %v3908, %v3909
      %v3911 = vrot.slane %v2921, 1
      %v3912 = vrot.slane %v2929, 1
      %v3913 = vsel %vm414, %v3911, %v3912
      %v3914 = vrot.slane %v2922, 1
      %v3915 = vrot.slane %v2930, 1
      %v3916 = vsel %vm414, %v3914, %v3915
      %v3917 = vrot.slane %v2923, 1
      %v3918 = vrot.slane %v2931, 1
      %v3919 = vsel %vm414, %v3917, %v3918
      %v3920 = vrot.slane %v2924, 1
      %v3921 = vrot.slane %v2932, 1
      %v3922 = vsel %vm414, %v3920, %v3921
      %v3923 = vrot.slane %v2925, 1
      %v3924 = vrot.slane %v2933, 1
      %v3925 = vsel %vm414, %v3923, %v3924
      %v3933 = vpack.c.bf16 %v3907, %v3258
      %v3934 = vpack.c.bf16 %v3913, %v3910
      %v3935 = vpack.c.bf16 %v3919, %v3916
      %v3936 = vpack.c.bf16 %v3925, %v3922
      %s3937 = scalar_lea.vmem %s2, 448
      %v3938 = vld [vmem:[%s3937] sm:$0xf]
      %v3939 = vld [vmem:[%s3937 + $0x4] sm:$0xf]
      %v3940 = vld [vmem:[%s3937 + $0x8] sm:$0xf]
      %v3941 = vld [vmem:[%s3937 + $0xc] sm:$0xf]
      %v3942 = vld [vmem:[%s3937 + $0x10] sm:$0xf]
      %v3943 = vld [vmem:[%s3937 + $0x14] sm:$0xf]
      %v3944 = vld [vmem:[%s3937 + $0x18] sm:$0xf]
      %v3945 = vld [vmem:[%s3937 + $0x1c] sm:$0xf]
      %v3946 = vld [vmem:[%s3937 + $0x20] sm:$0xf]
      %v3947 = vld [vmem:[%s3937 + $0x24] sm:$0xf]
      %v3948 = vld [vmem:[%s3937 + $0x28] sm:$0xf]
      %v3949 = vld [vmem:[%s3937 + $0x2c] sm:$0xf]
      %v3950 = vld [vmem:[%s3937 + $0x30] sm:$0xf]
      %v3951 = vld [vmem:[%s3937 + $0x34] sm:$0xf]
      %v3952 = vld [vmem:[%s3937 + $0x38] sm:$0xf]
      %v3953 = vld [vmem:[%s3937 + $0x3c] sm:$0xf]
      %v3970 = vunpack.c.l.b16 %v3938
      %v3971 = vunpack.c.l.b16 %v3939
      %v3972 = vunpack.c.l.b16 %v3940
      %v3973 = vunpack.c.l.b16 %v3941
      %v3974 = vunpack.c.l.b16 %v3942
      %v3975 = vunpack.c.l.b16 %v3943
      %v3976 = vunpack.c.l.b16 %v3944
      %v3977 = vunpack.c.l.b16 %v3945
      %v3978 = vunpack.c.l.b16 %v3946
      %v3979 = vunpack.c.l.b16 %v3947
      %v3980 = vunpack.c.l.b16 %v3948
      %v3981 = vunpack.c.l.b16 %v3949
      %v3982 = vunpack.c.l.b16 %v3950
      %v3983 = vunpack.c.l.b16 %v3951
      %v3984 = vunpack.c.l.b16 %v3952
      %v3985 = vunpack.c.l.b16 %v3953
      %v3986 = vpack.c.b16 %v3971, %v3970
      %v3987 = vpack.c.b16 %v3973, %v3972
      %v3988 = vpack.c.b16 %v3975, %v3974
      %v3989 = vpack.c.b16 %v3977, %v3976
      %v3990 = vpack.c.b16 %v3979, %v3978
      %v3991 = vpack.c.b16 %v3981, %v3980
      %v3992 = vpack.c.b16 %v3983, %v3982
      %v3993 = vpack.c.b16 %v3985, %v3984
      %4002 = vmatpush.bf16.msra.mxu0 %v3993
      %4003 = vmatpush.bf16.msra.mxu0 %v3992
      %4004 = vmatpush.bf16.msra.mxu0 %v3991
      %4005 = vmatpush.bf16.msra.mxu0 %v3990
      %4006 = vmatpush.bf16.msra.mxu0 %v3989
      %4007 = vmatpush.bf16.msra.mxu0 %v3988
      %4008 = vmatpush.bf16.msra.mxu0 %v3987
      %4009 = vmatpush.bf16.msra.mxu0 %v3986
      %4010 = vmatmul.bf16.gmra.mxu0 %v3933
      %v4011 = vpop.f32.mrf.mxu0
      %v4012 = vadd.f32 0.0, %v4011
      %v4013 = vpop.f32.mrf.mxu0
      %v4014 = vadd.f32 0.0, %v4013
      %4015 = vmatmul.bf16.gmra.mxu0 %v3934
      %v4016 = vpop.f32.mrf.mxu0
      %v4017 = vadd.f32 0.0, %v4016
      %v4018 = vpop.f32.mrf.mxu0
      %v4019 = vadd.f32 0.0, %v4018
      %4020 = vmatmul.bf16.gmra.mxu0 %v3935
      %v4021 = vpop.f32.mrf.mxu0
      %v4022 = vadd.f32 0.0, %v4021
      %v4023 = vpop.f32.mrf.mxu0
      %v4024 = vadd.f32 0.0, %v4023
      %4025 = vmatmul.bf16.gmra.mxu0 %v3936
      %v4026 = vpop.f32.mrf.mxu0
      %v4027 = vadd.f32 0.0, %v4026
      %v4028 = vpop.f32.mrf.mxu0
      %v4029 = vadd.f32 0.0, %v4028
      %4030 = vdwg.mxu0
      %v4031 = vadd.f32 %v3883, %v4012
      %v4032 = vadd.f32 %v3884, %v4014
      %v4033 = vadd.f32 %v3885, %v4017
      %v4034 = vadd.f32 %v3886, %v4019
      %v4035 = vadd.f32 %v3887, %v4022
      %v4036 = vadd.f32 %v3888, %v4024
      %v4037 = vadd.f32 %v3889, %v4027
      %v4038 = vadd.f32 %v3890, %v4029
      %v4053 = vrot.slane %v3031, 1
      %v4054 = vrot.slane %v3039, 1
      %v4055 = vsel %vm414, %v4053, %v4054
      %v4056 = vrot.slane %v3032, 1
      %v4057 = vrot.slane %v3040, 1
      %v4058 = vsel %vm414, %v4056, %v4057
      %v4059 = vrot.slane %v3033, 1
      %v4060 = vrot.slane %v3041, 1
      %v4061 = vsel %vm414, %v4059, %v4060
      %v4062 = vrot.slane %v3034, 1
      %v4063 = vrot.slane %v3042, 1
      %v4064 = vsel %vm414, %v4062, %v4063
      %v4065 = vrot.slane %v3035, 1
      %v4066 = vrot.slane %v3043, 1
      %v4067 = vsel %vm414, %v4065, %v4066
      %v4068 = vrot.slane %v3036, 1
      %v4069 = vrot.slane %v3044, 1
      %v4070 = vsel %vm414, %v4068, %v4069
      %v4071 = vrot.slane %v3037, 1
      %v4072 = vrot.slane %v3045, 1
      %v4073 = vsel %vm414, %v4071, %v4072
      %v4081 = vpack.c.bf16 %v4055, %v3258
      %v4082 = vpack.c.bf16 %v4061, %v4058
      %v4083 = vpack.c.bf16 %v4067, %v4064
      %v4084 = vpack.c.bf16 %v4073, %v4070
      %s4085 = scalar_lea.vmem %s2, 512
      %v4086 = vld [vmem:[%s4085] sm:$0xf]
      %v4087 = vld [vmem:[%s4085 + $0x4] sm:$0xf]
      %v4088 = vld [vmem:[%s4085 + $0x8] sm:$0xf]
      %v4089 = vld [vmem:[%s4085 + $0xc] sm:$0xf]
      %v4090 = vld [vmem:[%s4085 + $0x10] sm:$0xf]
      %v4091 = vld [vmem:[%s4085 + $0x14] sm:$0xf]
      %v4092 = vld [vmem:[%s4085 + $0x18] sm:$0xf]
      %v4093 = vld [vmem:[%s4085 + $0x1c] sm:$0xf]
      %v4094 = vld [vmem:[%s4085 + $0x20] sm:$0xf]
      %v4095 = vld [vmem:[%s4085 + $0x24] sm:$0xf]
      %v4096 = vld [vmem:[%s4085 + $0x28] sm:$0xf]
      %v4097 = vld [vmem:[%s4085 + $0x2c] sm:$0xf]
      %v4098 = vld [vmem:[%s4085 + $0x30] sm:$0xf]
      %v4099 = vld [vmem:[%s4085 + $0x34] sm:$0xf]
      %v4100 = vld [vmem:[%s4085 + $0x38] sm:$0xf]
      %v4101 = vld [vmem:[%s4085 + $0x3c] sm:$0xf]
      %v4118 = vunpack.c.l.b16 %v4086
      %v4119 = vunpack.c.l.b16 %v4087
      %v4120 = vunpack.c.l.b16 %v4088
      %v4121 = vunpack.c.l.b16 %v4089
      %v4122 = vunpack.c.l.b16 %v4090
      %v4123 = vunpack.c.l.b16 %v4091
      %v4124 = vunpack.c.l.b16 %v4092
      %v4125 = vunpack.c.l.b16 %v4093
      %v4126 = vunpack.c.l.b16 %v4094
      %v4127 = vunpack.c.l.b16 %v4095
      %v4128 = vunpack.c.l.b16 %v4096
      %v4129 = vunpack.c.l.b16 %v4097
      %v4130 = vunpack.c.l.b16 %v4098
      %v4131 = vunpack.c.l.b16 %v4099
      %v4132 = vunpack.c.l.b16 %v4100
      %v4133 = vunpack.c.l.b16 %v4101
      %v4134 = vpack.c.b16 %v4119, %v4118
      %v4135 = vpack.c.b16 %v4121, %v4120
      %v4136 = vpack.c.b16 %v4123, %v4122
      %v4137 = vpack.c.b16 %v4125, %v4124
      %v4138 = vpack.c.b16 %v4127, %v4126
      %v4139 = vpack.c.b16 %v4129, %v4128
      %v4140 = vpack.c.b16 %v4131, %v4130
      %v4141 = vpack.c.b16 %v4133, %v4132
      %4150 = vmatpush.bf16.msra.mxu0 %v4141
      %4151 = vmatpush.bf16.msra.mxu0 %v4140
      %4152 = vmatpush.bf16.msra.mxu0 %v4139
      %4153 = vmatpush.bf16.msra.mxu0 %v4138
      %4154 = vmatpush.bf16.msra.mxu0 %v4137
      %4155 = vmatpush.bf16.msra.mxu0 %v4136
      %4156 = vmatpush.bf16.msra.mxu0 %v4135
      %4157 = vmatpush.bf16.msra.mxu0 %v4134
      %4158 = vmatmul.bf16.gmra.mxu0 %v4081
      %v4159 = vpop.f32.mrf.mxu0
      %v4160 = vadd.f32 0.0, %v4159
      %v4161 = vpop.f32.mrf.mxu0
      %v4162 = vadd.f32 0.0, %v4161
      %4163 = vmatmul.bf16.gmra.mxu0 %v4082
      %v4164 = vpop.f32.mrf.mxu0
      %v4165 = vadd.f32 0.0, %v4164
      %v4166 = vpop.f32.mrf.mxu0
      %v4167 = vadd.f32 0.0, %v4166
      %4168 = vmatmul.bf16.gmra.mxu0 %v4083
      %v4169 = vpop.f32.mrf.mxu0
      %v4170 = vadd.f32 0.0, %v4169
      %v4171 = vpop.f32.mrf.mxu0
      %v4172 = vadd.f32 0.0, %v4171
      %4173 = vmatmul.bf16.gmra.mxu0 %v4084
      %v4174 = vpop.f32.mrf.mxu0
      %v4175 = vadd.f32 0.0, %v4174
      %v4176 = vpop.f32.mrf.mxu0
      %v4177 = vadd.f32 0.0, %v4176
      %4178 = vdwg.mxu0
      %v4179 = vadd.f32 %v4031, %v4160
      %v4180 = vadd.f32 %v4032, %v4162
      %v4181 = vadd.f32 %v4033, %v4165
      %v4182 = vadd.f32 %v4034, %v4167
      %v4183 = vadd.f32 %v4035, %v4170
      %v4184 = vadd.f32 %v4036, %v4172
      %v4185 = vadd.f32 %v4037, %v4175
      %v4186 = vadd.f32 %v4038, %v4177
      %v4187 = vrot.slane %v2919, 2
      %v4188 = vrot.slane %v2927, 2
      %v4189 = vsel %vm834, %v4187, %v4188
      %v4190 = vrot.slane %v2920, 2
      %v4191 = vrot.slane %v2928, 2
      %v4192 = vsel %vm834, %v4190, %v4191
      %v4193 = vrot.slane %v2921, 2
      %v4194 = vrot.slane %v2929, 2
      %v4195 = vsel %vm834, %v4193, %v4194
      %v4196 = vrot.slane %v2922, 2
      %v4197 = vrot.slane %v2930, 2
      %v4198 = vsel %vm834, %v4196, %v4197
      %v4199 = vrot.slane %v2923, 2
      %v4200 = vrot.slane %v2931, 2
      %v4201 = vsel %vm834, %v4199, %v4200
      %v4202 = vrot.slane %v2924, 2
      %v4203 = vrot.slane %v2932, 2
      %v4204 = vsel %vm834, %v4202, %v4203
      %v4205 = vrot.slane %v2925, 2
      %v4206 = vrot.slane %v2933, 2
      %v4207 = vsel %vm834, %v4205, %v4206
      %v4215 = vpack.c.bf16 %v4189, %v3543
      %v4216 = vpack.c.bf16 %v4195, %v4192
      %v4217 = vpack.c.bf16 %v4201, %v4198
      %v4218 = vpack.c.bf16 %v4207, %v4204
      %s4219 = scalar_lea.vmem %s2, 576
      %v4220 = vld [vmem:[%s4219] sm:$0xf]
      %v4221 = vld [vmem:[%s4219 + $0x4] sm:$0xf]
      %v4222 = vld [vmem:[%s4219 + $0x8] sm:$0xf]
      %v4223 = vld [vmem:[%s4219 + $0xc] sm:$0xf]
      %v4224 = vld [vmem:[%s4219 + $0x10] sm:$0xf]
      %v4225 = vld [vmem:[%s4219 + $0x14] sm:$0xf]
      %v4226 = vld [vmem:[%s4219 + $0x18] sm:$0xf]
      %v4227 = vld [vmem:[%s4219 + $0x1c] sm:$0xf]
      %v4228 = vld [vmem:[%s4219 + $0x20] sm:$0xf]
      %v4229 = vld [vmem:[%s4219 + $0x24] sm:$0xf]
      %v4230 = vld [vmem:[%s4219 + $0x28] sm:$0xf]
      %v4231 = vld [vmem:[%s4219 + $0x2c] sm:$0xf]
      %v4232 = vld [vmem:[%s4219 + $0x30] sm:$0xf]
      %v4233 = vld [vmem:[%s4219 + $0x34] sm:$0xf]
      %v4234 = vld [vmem:[%s4219 + $0x38] sm:$0xf]
      %v4235 = vld [vmem:[%s4219 + $0x3c] sm:$0xf]
      %v4252 = vunpack.c.l.b16 %v4220
      %v4253 = vunpack.c.l.b16 %v4221
      %v4254 = vunpack.c.l.b16 %v4222
      %v4255 = vunpack.c.l.b16 %v4223
      %v4256 = vunpack.c.l.b16 %v4224
      %v4257 = vunpack.c.l.b16 %v4225
      %v4258 = vunpack.c.l.b16 %v4226
      %v4259 = vunpack.c.l.b16 %v4227
      %v4260 = vunpack.c.l.b16 %v4228
      %v4261 = vunpack.c.l.b16 %v4229
      %v4262 = vunpack.c.l.b16 %v4230
      %v4263 = vunpack.c.l.b16 %v4231
      %v4264 = vunpack.c.l.b16 %v4232
      %v4265 = vunpack.c.l.b16 %v4233
      %v4266 = vunpack.c.l.b16 %v4234
      %v4267 = vunpack.c.l.b16 %v4235
      %v4268 = vpack.c.b16 %v4253, %v4252
      %v4269 = vpack.c.b16 %v4255, %v4254
      %v4270 = vpack.c.b16 %v4257, %v4256
      %v4271 = vpack.c.b16 %v4259, %v4258
      %v4272 = vpack.c.b16 %v4261, %v4260
      %v4273 = vpack.c.b16 %v4263, %v4262
      %v4274 = vpack.c.b16 %v4265, %v4264
      %v4275 = vpack.c.b16 %v4267, %v4266
      %4284 = vmatpush.bf16.msra.mxu0 %v4275
      %4285 = vmatpush.bf16.msra.mxu0 %v4274
      %4286 = vmatpush.bf16.msra.mxu0 %v4273
      %4287 = vmatpush.bf16.msra.mxu0 %v4272
      %4288 = vmatpush.bf16.msra.mxu0 %v4271
      %4289 = vmatpush.bf16.msra.mxu0 %v4270
      %4290 = vmatpush.bf16.msra.mxu0 %v4269
      %4291 = vmatpush.bf16.msra.mxu0 %v4268
      %4292 = vmatmul.bf16.gmra.mxu0 %v4215
      %v4293 = vpop.f32.mrf.mxu0
      %v4294 = vadd.f32 0.0, %v4293
      %v4295 = vpop.f32.mrf.mxu0
      %v4296 = vadd.f32 0.0, %v4295
      %4297 = vmatmul.bf16.gmra.mxu0 %v4216
      %v4298 = vpop.f32.mrf.mxu0
      %v4299 = vadd.f32 0.0, %v4298
      %v4300 = vpop.f32.mrf.mxu0
      %v4301 = vadd.f32 0.0, %v4300
      %4302 = vmatmul.bf16.gmra.mxu0 %v4217
      %v4303 = vpop.f32.mrf.mxu0
      %v4304 = vadd.f32 0.0, %v4303
      %v4305 = vpop.f32.mrf.mxu0
      %v4306 = vadd.f32 0.0, %v4305
      %4307 = vmatmul.bf16.gmra.mxu0 %v4218
      %v4308 = vpop.f32.mrf.mxu0
      %v4309 = vadd.f32 0.0, %v4308
      %v4310 = vpop.f32.mrf.mxu0
      %v4311 = vadd.f32 0.0, %v4310
      %4312 = vdwg.mxu0
      %v4313 = vadd.f32 %v4179, %v4294
      %v4314 = vadd.f32 %v4180, %v4296
      %v4315 = vadd.f32 %v4181, %v4299
      %v4316 = vadd.f32 %v4182, %v4301
      %v4317 = vadd.f32 %v4183, %v4304
      %v4318 = vadd.f32 %v4184, %v4306
      %v4319 = vadd.f32 %v4185, %v4309
      %v4320 = vadd.f32 %v4186, %v4311
      %v4321 = vpack.c.bf16 %v2584, %v2583
      %v4322 = vpack.c.bf16 %v2586, %v2585
      %v4323 = vpack.c.bf16 %v2588, %v2587
      %v4324 = vpack.c.bf16 %v2590, %v2589
      %s4325 = scalar_lea.vmem %s2, 640
      %v4326 = vld [vmem:[%s4325] sm:$0xf]
      %v4327 = vld [vmem:[%s4325 + $0x4] sm:$0xf]
      %v4328 = vld [vmem:[%s4325 + $0x8] sm:$0xf]
      %v4329 = vld [vmem:[%s4325 + $0xc] sm:$0xf]
      %v4330 = vld [vmem:[%s4325 + $0x10] sm:$0xf]
      %v4331 = vld [vmem:[%s4325 + $0x14] sm:$0xf]
      %v4332 = vld [vmem:[%s4325 + $0x18] sm:$0xf]
      %v4333 = vld [vmem:[%s4325 + $0x1c] sm:$0xf]
      %v4334 = vld [vmem:[%s4325 + $0x20] sm:$0xf]
      %v4335 = vld [vmem:[%s4325 + $0x24] sm:$0xf]
      %v4336 = vld [vmem:[%s4325 + $0x28] sm:$0xf]
      %v4337 = vld [vmem:[%s4325 + $0x2c] sm:$0xf]
      %v4338 = vld [vmem:[%s4325 + $0x30] sm:$0xf]
      %v4339 = vld [vmem:[%s4325 + $0x34] sm:$0xf]
      %v4340 = vld [vmem:[%s4325 + $0x38] sm:$0xf]
      %v4341 = vld [vmem:[%s4325 + $0x3c] sm:$0xf]
      %v4358 = vunpack.c.l.b16 %v4326
      %v4359 = vunpack.c.l.b16 %v4327
      %v4360 = vunpack.c.l.b16 %v4328
      %v4361 = vunpack.c.l.b16 %v4329
      %v4362 = vunpack.c.l.b16 %v4330
      %v4363 = vunpack.c.l.b16 %v4331
      %v4364 = vunpack.c.l.b16 %v4332
      %v4365 = vunpack.c.l.b16 %v4333
      %v4366 = vunpack.c.l.b16 %v4334
      %v4367 = vunpack.c.l.b16 %v4335
      %v4368 = vunpack.c.l.b16 %v4336
      %v4369 = vunpack.c.l.b16 %v4337
      %v4370 = vunpack.c.l.b16 %v4338
      %v4371 = vunpack.c.l.b16 %v4339
      %v4372 = vunpack.c.l.b16 %v4340
      %v4373 = vunpack.c.l.b16 %v4341
      %v4374 = vpack.c.b16 %v4359, %v4358
      %v4375 = vpack.c.b16 %v4361, %v4360
      %v4376 = vpack.c.b16 %v4363, %v4362
      %v4377 = vpack.c.b16 %v4365, %v4364
      %v4378 = vpack.c.b16 %v4367, %v4366
      %v4379 = vpack.c.b16 %v4369, %v4368
      %v4380 = vpack.c.b16 %v4371, %v4370
      %v4381 = vpack.c.b16 %v4373, %v4372
      %4390 = vmatpush.bf16.msra.mxu0 %v4381
      %4391 = vmatpush.bf16.msra.mxu0 %v4380
      %4392 = vmatpush.bf16.msra.mxu0 %v4379
      %4393 = vmatpush.bf16.msra.mxu0 %v4378
      %4394 = vmatpush.bf16.msra.mxu0 %v4377
      %4395 = vmatpush.bf16.msra.mxu0 %v4376
      %4396 = vmatpush.bf16.msra.mxu0 %v4375
      %4397 = vmatpush.bf16.msra.mxu0 %v4374
      %4398 = vmatmul.bf16.gmra.mxu0 %v4321
      %v4399 = vpop.f32.mrf.mxu0
      %v4400 = vadd.f32 0.0, %v4399
      %v4401 = vpop.f32.mrf.mxu0
      %v4402 = vadd.f32 0.0, %v4401
      %4403 = vmatmul.bf16.gmra.mxu0 %v4322
      %v4404 = vpop.f32.mrf.mxu0
      %v4405 = vadd.f32 0.0, %v4404
      %v4406 = vpop.f32.mrf.mxu0
      %v4407 = vadd.f32 0.0, %v4406
      %4408 = vmatmul.bf16.gmra.mxu0 %v4323
      %v4409 = vpop.f32.mrf.mxu0
      %v4410 = vadd.f32 0.0, %v4409
      %v4411 = vpop.f32.mrf.mxu0
      %v4412 = vadd.f32 0.0, %v4411
      %4413 = vmatmul.bf16.gmra.mxu0 %v4324
      %v4414 = vpop.f32.mrf.mxu0
      %v4415 = vadd.f32 0.0, %v4414
      %v4416 = vpop.f32.mrf.mxu0
      %v4417 = vadd.f32 0.0, %v4416
      %4418 = vdwg.mxu0
      %v4419 = vadd.f32 %v4313, %v4400
      %v4420 = vadd.f32 %v4314, %v4402
      %v4421 = vadd.f32 %v4315, %v4405
      %v4422 = vadd.f32 %v4316, %v4407
      %v4423 = vadd.f32 %v4317, %v4410
      %v4424 = vadd.f32 %v4318, %v4412
      %v4425 = vadd.f32 %v4319, %v4415
      %v4426 = vadd.f32 %v4320, %v4417
      %v4427 = vpack.c.bf16 %v2696, %v2695
      %v4428 = vpack.c.bf16 %v2698, %v2697
      %v4429 = vpack.c.bf16 %v2700, %v2699
      %v4430 = vpack.c.bf16 %v2702, %v2701
      %s4431 = scalar_lea.vmem %s2, 704
      %v4432 = vld [vmem:[%s4431] sm:$0xf]
      %v4433 = vld [vmem:[%s4431 + $0x4] sm:$0xf]
      %v4434 = vld [vmem:[%s4431 + $0x8] sm:$0xf]
      %v4435 = vld [vmem:[%s4431 + $0xc] sm:$0xf]
      %v4436 = vld [vmem:[%s4431 + $0x10] sm:$0xf]
      %v4437 = vld [vmem:[%s4431 + $0x14] sm:$0xf]
      %v4438 = vld [vmem:[%s4431 + $0x18] sm:$0xf]
      %v4439 = vld [vmem:[%s4431 + $0x1c] sm:$0xf]
      %v4440 = vld [vmem:[%s4431 + $0x20] sm:$0xf]
      %v4441 = vld [vmem:[%s4431 + $0x24] sm:$0xf]
      %v4442 = vld [vmem:[%s4431 + $0x28] sm:$0xf]
      %v4443 = vld [vmem:[%s4431 + $0x2c] sm:$0xf]
      %v4444 = vld [vmem:[%s4431 + $0x30] sm:$0xf]
      %v4445 = vld [vmem:[%s4431 + $0x34] sm:$0xf]
      %v4446 = vld [vmem:[%s4431 + $0x38] sm:$0xf]
      %v4447 = vld [vmem:[%s4431 + $0x3c] sm:$0xf]
      %v4464 = vunpack.c.l.b16 %v4432
      %v4465 = vunpack.c.l.b16 %v4433
      %v4466 = vunpack.c.l.b16 %v4434
      %v4467 = vunpack.c.l.b16 %v4435
      %v4468 = vunpack.c.l.b16 %v4436
      %v4469 = vunpack.c.l.b16 %v4437
      %v4470 = vunpack.c.l.b16 %v4438
      %v4471 = vunpack.c.l.b16 %v4439
      %v4472 = vunpack.c.l.b16 %v4440
      %v4473 = vunpack.c.l.b16 %v4441
      %v4474 = vunpack.c.l.b16 %v4442
      %v4475 = vunpack.c.l.b16 %v4443
      %v4476 = vunpack.c.l.b16 %v4444
      %v4477 = vunpack.c.l.b16 %v4445
      %v4478 = vunpack.c.l.b16 %v4446
      %v4479 = vunpack.c.l.b16 %v4447
      %v4480 = vpack.c.b16 %v4465, %v4464
      %v4481 = vpack.c.b16 %v4467, %v4466
      %v4482 = vpack.c.b16 %v4469, %v4468
      %v4483 = vpack.c.b16 %v4471, %v4470
      %v4484 = vpack.c.b16 %v4473, %v4472
      %v4485 = vpack.c.b16 %v4475, %v4474
      %v4486 = vpack.c.b16 %v4477, %v4476
      %v4487 = vpack.c.b16 %v4479, %v4478
      %4496 = vmatpush.bf16.msra.mxu0 %v4487
      %4497 = vmatpush.bf16.msra.mxu0 %v4486
      %4498 = vmatpush.bf16.msra.mxu0 %v4485
      %4499 = vmatpush.bf16.msra.mxu0 %v4484
      %4500 = vmatpush.bf16.msra.mxu0 %v4483
      %4501 = vmatpush.bf16.msra.mxu0 %v4482
      %4502 = vmatpush.bf16.msra.mxu0 %v4481
      %4503 = vmatpush.bf16.msra.mxu0 %v4480
      %4504 = vmatmul.bf16.gmra.mxu0 %v4427
      %v4505 = vpop.f32.mrf.mxu0
      %v4506 = vadd.f32 0.0, %v4505
      %v4507 = vpop.f32.mrf.mxu0
      %v4508 = vadd.f32 0.0, %v4507
      %4509 = vmatmul.bf16.gmra.mxu0 %v4428
      %v4510 = vpop.f32.mrf.mxu0
      %v4511 = vadd.f32 0.0, %v4510
      %v4512 = vpop.f32.mrf.mxu0
      %v4513 = vadd.f32 0.0, %v4512
      %4514 = vmatmul.bf16.gmra.mxu0 %v4429
      %v4515 = vpop.f32.mrf.mxu0
      %v4516 = vadd.f32 0.0, %v4515
      %v4517 = vpop.f32.mrf.mxu0
      %v4518 = vadd.f32 0.0, %v4517
      %4519 = vmatmul.bf16.gmra.mxu0 %v4430
      %v4520 = vpop.f32.mrf.mxu0
      %v4521 = vadd.f32 0.0, %v4520
      %v4522 = vpop.f32.mrf.mxu0
      %v4523 = vadd.f32 0.0, %v4522
      %4524 = vdwg.mxu0
      %v4525 = vadd.f32 %v4419, %v4506
      %v4526 = vadd.f32 %v4420, %v4508
      %v4527 = vadd.f32 %v4421, %v4511
      %v4528 = vadd.f32 %v4422, %v4513
      %v4529 = vadd.f32 %v4423, %v4516
      %v4530 = vadd.f32 %v4424, %v4518
      %v4531 = vadd.f32 %v4425, %v4521
      %v4532 = vadd.f32 %v4426, %v4523
      %v4535 = vrot.slane %v2590, 1
      %v4536 = vrot.slane %v2598, 1
      %v4537 = vsel %vm414, %v4535, %v4536
      %v4539 = vpack.c.bf16 %v3264, %v3261
      %v4540 = vpack.c.bf16 %v3270, %v3267
      %v4541 = vpack.c.bf16 %v3276, %v3273
      %v4542 = vpack.c.bf16 %v4537, %v3279
      %s4543 = scalar_lea.vmem %s2, 768
      %v4544 = vld [vmem:[%s4543] sm:$0xf]
      %v4545 = vld [vmem:[%s4543 + $0x4] sm:$0xf]
      %v4546 = vld [vmem:[%s4543 + $0x8] sm:$0xf]
      %v4547 = vld [vmem:[%s4543 + $0xc] sm:$0xf]
      %v4548 = vld [vmem:[%s4543 + $0x10] sm:$0xf]
      %v4549 = vld [vmem:[%s4543 + $0x14] sm:$0xf]
      %v4550 = vld [vmem:[%s4543 + $0x18] sm:$0xf]
      %v4551 = vld [vmem:[%s4543 + $0x1c] sm:$0xf]
      %v4552 = vld [vmem:[%s4543 + $0x20] sm:$0xf]
      %v4553 = vld [vmem:[%s4543 + $0x24] sm:$0xf]
      %v4554 = vld [vmem:[%s4543 + $0x28] sm:$0xf]
      %v4555 = vld [vmem:[%s4543 + $0x2c] sm:$0xf]
      %v4556 = vld [vmem:[%s4543 + $0x30] sm:$0xf]
      %v4557 = vld [vmem:[%s4543 + $0x34] sm:$0xf]
      %v4558 = vld [vmem:[%s4543 + $0x38] sm:$0xf]
      %v4559 = vld [vmem:[%s4543 + $0x3c] sm:$0xf]
      %v4576 = vunpack.c.l.b16 %v4544
      %v4577 = vunpack.c.l.b16 %v4545
      %v4578 = vunpack.c.l.b16 %v4546
      %v4579 = vunpack.c.l.b16 %v4547
      %v4580 = vunpack.c.l.b16 %v4548
      %v4581 = vunpack.c.l.b16 %v4549
      %v4582 = vunpack.c.l.b16 %v4550
      %v4583 = vunpack.c.l.b16 %v4551
      %v4584 = vunpack.c.l.b16 %v4552
      %v4585 = vunpack.c.l.b16 %v4553
      %v4586 = vunpack.c.l.b16 %v4554
      %v4587 = vunpack.c.l.b16 %v4555
      %v4588 = vunpack.c.l.b16 %v4556
      %v4589 = vunpack.c.l.b16 %v4557
      %v4590 = vunpack.c.l.b16 %v4558
      %v4591 = vunpack.c.l.b16 %v4559
      %v4592 = vpack.c.b16 %v4577, %v4576
      %v4593 = vpack.c.b16 %v4579, %v4578
      %v4594 = vpack.c.b16 %v4581, %v4580
      %v4595 = vpack.c.b16 %v4583, %v4582
      %v4596 = vpack.c.b16 %v4585, %v4584
      %v4597 = vpack.c.b16 %v4587, %v4586
      %v4598 = vpack.c.b16 %v4589, %v4588
      %v4599 = vpack.c.b16 %v4591, %v4590
      %4608 = vmatpush.bf16.msra.mxu0 %v4599
      %4609 = vmatpush.bf16.msra.mxu0 %v4598
      %4610 = vmatpush.bf16.msra.mxu0 %v4597
      %4611 = vmatpush.bf16.msra.mxu0 %v4596
      %4612 = vmatpush.bf16.msra.mxu0 %v4595
      %4613 = vmatpush.bf16.msra.mxu0 %v4594
      %4614 = vmatpush.bf16.msra.mxu0 %v4593
      %4615 = vmatpush.bf16.msra.mxu0 %v4592
      %4616 = vmatmul.bf16.gmra.mxu0 %v4539
      %v4617 = vpop.f32.mrf.mxu0
      %v4618 = vadd.f32 0.0, %v4617
      %v4619 = vpop.f32.mrf.mxu0
      %v4620 = vadd.f32 0.0, %v4619
      %4621 = vmatmul.bf16.gmra.mxu0 %v4540
      %v4622 = vpop.f32.mrf.mxu0
      %v4623 = vadd.f32 0.0, %v4622
      %v4624 = vpop.f32.mrf.mxu0
      %v4625 = vadd.f32 0.0, %v4624
      %4626 = vmatmul.bf16.gmra.mxu0 %v4541
      %v4627 = vpop.f32.mrf.mxu0
      %v4628 = vadd.f32 0.0, %v4627
      %v4629 = vpop.f32.mrf.mxu0
      %v4630 = vadd.f32 0.0, %v4629
      %4631 = vmatmul.bf16.gmra.mxu0 %v4542
      %v4632 = vpop.f32.mrf.mxu0
      %v4633 = vadd.f32 0.0, %v4632
      %v4634 = vpop.f32.mrf.mxu0
      %v4635 = vadd.f32 0.0, %v4634
      %4636 = vdwg.mxu0
      %v4637 = vadd.f32 %v4525, %v4618
      %v4638 = vadd.f32 %v4526, %v4620
      %v4639 = vadd.f32 %v4527, %v4623
      %v4640 = vadd.f32 %v4528, %v4625
      %v4641 = vadd.f32 %v4529, %v4628
      %v4642 = vadd.f32 %v4530, %v4630
      %v4643 = vadd.f32 %v4531, %v4633
      %v4644 = vadd.f32 %v4532, %v4635
      %v4647 = vrot.slane %v2702, 1
      %v4648 = vrot.slane %v2710, 1
      %v4649 = vsel %vm414, %v4647, %v4648
      %v4651 = vpack.c.bf16 %v3413, %v3410
      %v4652 = vpack.c.bf16 %v3419, %v3416
      %v4653 = vpack.c.bf16 %v3425, %v3422
      %v4654 = vpack.c.bf16 %v4649, %v3428
      %s4655 = scalar_lea.vmem %s2, 832
      %v4656 = vld [vmem:[%s4655] sm:$0xf]
      %v4657 = vld [vmem:[%s4655 + $0x4] sm:$0xf]
      %v4658 = vld [vmem:[%s4655 + $0x8] sm:$0xf]
      %v4659 = vld [vmem:[%s4655 + $0xc] sm:$0xf]
      %v4660 = vld [vmem:[%s4655 + $0x10] sm:$0xf]
      %v4661 = vld [vmem:[%s4655 + $0x14] sm:$0xf]
      %v4662 = vld [vmem:[%s4655 + $0x18] sm:$0xf]
      %v4663 = vld [vmem:[%s4655 + $0x1c] sm:$0xf]
      %v4664 = vld [vmem:[%s4655 + $0x20] sm:$0xf]
      %v4665 = vld [vmem:[%s4655 + $0x24] sm:$0xf]
      %v4666 = vld [vmem:[%s4655 + $0x28] sm:$0xf]
      %v4667 = vld [vmem:[%s4655 + $0x2c] sm:$0xf]
      %v4668 = vld [vmem:[%s4655 + $0x30] sm:$0xf]
      %v4669 = vld [vmem:[%s4655 + $0x34] sm:$0xf]
      %v4670 = vld [vmem:[%s4655 + $0x38] sm:$0xf]
      %v4671 = vld [vmem:[%s4655 + $0x3c] sm:$0xf]
      %v4688 = vunpack.c.l.b16 %v4656
      %v4689 = vunpack.c.l.b16 %v4657
      %v4690 = vunpack.c.l.b16 %v4658
      %v4691 = vunpack.c.l.b16 %v4659
      %v4692 = vunpack.c.l.b16 %v4660
      %v4693 = vunpack.c.l.b16 %v4661
      %v4694 = vunpack.c.l.b16 %v4662
      %v4695 = vunpack.c.l.b16 %v4663
      %v4696 = vunpack.c.l.b16 %v4664
      %v4697 = vunpack.c.l.b16 %v4665
      %v4698 = vunpack.c.l.b16 %v4666
      %v4699 = vunpack.c.l.b16 %v4667
      %v4700 = vunpack.c.l.b16 %v4668
      %v4701 = vunpack.c.l.b16 %v4669
      %v4702 = vunpack.c.l.b16 %v4670
      %v4703 = vunpack.c.l.b16 %v4671
      %v4704 = vpack.c.b16 %v4689, %v4688
      %v4705 = vpack.c.b16 %v4691, %v4690
      %v4706 = vpack.c.b16 %v4693, %v4692
      %v4707 = vpack.c.b16 %v4695, %v4694
      %v4708 = vpack.c.b16 %v4697, %v4696
      %v4709 = vpack.c.b16 %v4699, %v4698
      %v4710 = vpack.c.b16 %v4701, %v4700
      %v4711 = vpack.c.b16 %v4703, %v4702
      %4720 = vmatpush.bf16.msra.mxu0 %v4711
      %4721 = vmatpush.bf16.msra.mxu0 %v4710
      %4722 = vmatpush.bf16.msra.mxu0 %v4709
      %4723 = vmatpush.bf16.msra.mxu0 %v4708
      %4724 = vmatpush.bf16.msra.mxu0 %v4707
      %4725 = vmatpush.bf16.msra.mxu0 %v4706
      %4726 = vmatpush.bf16.msra.mxu0 %v4705
      %4727 = vmatpush.bf16.msra.mxu0 %v4704
      %4728 = vmatmul.bf16.gmra.mxu0 %v4651
      %v4729 = vpop.f32.mrf.mxu0
      %v4730 = vadd.f32 0.0, %v4729
      %v4731 = vpop.f32.mrf.mxu0
      %v4732 = vadd.f32 0.0, %v4731
      %4733 = vmatmul.bf16.gmra.mxu0 %v4652
      %v4734 = vpop.f32.mrf.mxu0
      %v4735 = vadd.f32 0.0, %v4734
      %v4736 = vpop.f32.mrf.mxu0
      %v4737 = vadd.f32 0.0, %v4736
      %4738 = vmatmul.bf16.gmra.mxu0 %v4653
      %v4739 = vpop.f32.mrf.mxu0
      %v4740 = vadd.f32 0.0, %v4739
      %v4741 = vpop.f32.mrf.mxu0
      %v4742 = vadd.f32 0.0, %v4741
      %4743 = vmatmul.bf16.gmra.mxu0 %v4654
      %v4744 = vpop.f32.mrf.mxu0
      %v4745 = vadd.f32 0.0, %v4744
      %v4746 = vpop.f32.mrf.mxu0
      %v4747 = vadd.f32 0.0, %v4746
      %4748 = vdwg.mxu0
      %v4749 = vadd.f32 %v4637, %v4730
      %v4750 = vadd.f32 %v4638, %v4732
      %v4751 = vadd.f32 %v4639, %v4735
      %v4752 = vadd.f32 %v4640, %v4737
      %v4753 = vadd.f32 %v4641, %v4740
      %v4754 = vadd.f32 %v4642, %v4742
      %v4755 = vadd.f32 %v4643, %v4745
      %v4756 = vadd.f32 %v4644, %v4747
      %v4757 = vrot.slane %v2590, 2
      %v4758 = vrot.slane %v2598, 2
      %v4759 = vsel %vm834, %v4757, %v4758
      %v4761 = vpack.c.bf16 %v3549, %v3546
      %v4762 = vpack.c.bf16 %v3555, %v3552
      %v4763 = vpack.c.bf16 %v3561, %v3558
      %v4764 = vpack.c.bf16 %v4759, %v3564
      %s4765 = scalar_lea.vmem %s2, 896
      %v4766 = vld [vmem:[%s4765] sm:$0xf]
      %v4767 = vld [vmem:[%s4765 + $0x4] sm:$0xf]
      %v4768 = vld [vmem:[%s4765 + $0x8] sm:$0xf]
      %v4769 = vld [vmem:[%s4765 + $0xc] sm:$0xf]
      %v4770 = vld [vmem:[%s4765 + $0x10] sm:$0xf]
      %v4771 = vld [vmem:[%s4765 + $0x14] sm:$0xf]
      %v4772 = vld [vmem:[%s4765 + $0x18] sm:$0xf]
      %v4773 = vld [vmem:[%s4765 + $0x1c] sm:$0xf]
      %v4774 = vld [vmem:[%s4765 + $0x20] sm:$0xf]
      %v4775 = vld [vmem:[%s4765 + $0x24] sm:$0xf]
      %v4776 = vld [vmem:[%s4765 + $0x28] sm:$0xf]
      %v4777 = vld [vmem:[%s4765 + $0x2c] sm:$0xf]
      %v4778 = vld [vmem:[%s4765 + $0x30] sm:$0xf]
      %v4779 = vld [vmem:[%s4765 + $0x34] sm:$0xf]
      %v4780 = vld [vmem:[%s4765 + $0x38] sm:$0xf]
      %v4781 = vld [vmem:[%s4765 + $0x3c] sm:$0xf]
      %v4798 = vunpack.c.l.b16 %v4766
      %v4799 = vunpack.c.l.b16 %v4767
      %v4800 = vunpack.c.l.b16 %v4768
      %v4801 = vunpack.c.l.b16 %v4769
      %v4802 = vunpack.c.l.b16 %v4770
      %v4803 = vunpack.c.l.b16 %v4771
      %v4804 = vunpack.c.l.b16 %v4772
      %v4805 = vunpack.c.l.b16 %v4773
      %v4806 = vunpack.c.l.b16 %v4774
      %v4807 = vunpack.c.l.b16 %v4775
      %v4808 = vunpack.c.l.b16 %v4776
      %v4809 = vunpack.c.l.b16 %v4777
      %v4810 = vunpack.c.l.b16 %v4778
      %v4811 = vunpack.c.l.b16 %v4779
      %v4812 = vunpack.c.l.b16 %v4780
      %v4813 = vunpack.c.l.b16 %v4781
      %v4814 = vpack.c.b16 %v4799, %v4798
      %v4815 = vpack.c.b16 %v4801, %v4800
      %v4816 = vpack.c.b16 %v4803, %v4802
      %v4817 = vpack.c.b16 %v4805, %v4804
      %v4818 = vpack.c.b16 %v4807, %v4806
      %v4819 = vpack.c.b16 %v4809, %v4808
      %v4820 = vpack.c.b16 %v4811, %v4810
      %v4821 = vpack.c.b16 %v4813, %v4812
      %4830 = vmatpush.bf16.msra.mxu0 %v4821
      %4831 = vmatpush.bf16.msra.mxu0 %v4820
      %4832 = vmatpush.bf16.msra.mxu0 %v4819
      %4833 = vmatpush.bf16.msra.mxu0 %v4818
      %4834 = vmatpush.bf16.msra.mxu0 %v4817
      %4835 = vmatpush.bf16.msra.mxu0 %v4816
      %4836 = vmatpush.bf16.msra.mxu0 %v4815
      %4837 = vmatpush.bf16.msra.mxu0 %v4814
      %4838 = vmatmul.bf16.gmra.mxu0 %v4761
      %v4839 = vpop.f32.mrf.mxu0
      %v4840 = vadd.f32 0.0, %v4839
      %v4841 = vpop.f32.mrf.mxu0
      %v4842 = vadd.f32 0.0, %v4841
      %4843 = vmatmul.bf16.gmra.mxu0 %v4762
      %v4844 = vpop.f32.mrf.mxu0
      %v4845 = vadd.f32 0.0, %v4844
      %v4846 = vpop.f32.mrf.mxu0
      %v4847 = vadd.f32 0.0, %v4846
      %4848 = vmatmul.bf16.gmra.mxu0 %v4763
      %v4849 = vpop.f32.mrf.mxu0
      %v4850 = vadd.f32 0.0, %v4849
      %v4851 = vpop.f32.mrf.mxu0
      %v4852 = vadd.f32 0.0, %v4851
      %4853 = vmatmul.bf16.gmra.mxu0 %v4764
      %v4854 = vpop.f32.mrf.mxu0
      %v4855 = vadd.f32 0.0, %v4854
      %v4856 = vpop.f32.mrf.mxu0
      %v4857 = vadd.f32 0.0, %v4856
      %4858 = vdwg.mxu0
      %v4859 = vadd.f32 %v4749, %v4840
      %v4860 = vadd.f32 %v4750, %v4842
      %v4861 = vadd.f32 %v4751, %v4845
      %v4862 = vadd.f32 %v4752, %v4847
      %v4863 = vadd.f32 %v4753, %v4850
      %v4864 = vadd.f32 %v4754, %v4852
      %v4865 = vadd.f32 %v4755, %v4855
      %v4866 = vadd.f32 %v4756, %v4857
      %v4867 = vpack.c.bf16 %v2920, %v2919
      %v4868 = vpack.c.bf16 %v2922, %v2921
      %v4869 = vpack.c.bf16 %v2924, %v2923
      %v4870 = vpack.c.bf16 %v2926, %v2925
      %s4871 = scalar_lea.vmem %s2, 960
      %v4872 = vld [vmem:[%s4871] sm:$0xf]
      %v4873 = vld [vmem:[%s4871 + $0x4] sm:$0xf]
      %v4874 = vld [vmem:[%s4871 + $0x8] sm:$0xf]
      %v4875 = vld [vmem:[%s4871 + $0xc] sm:$0xf]
      %v4876 = vld [vmem:[%s4871 + $0x10] sm:$0xf]
      %v4877 = vld [vmem:[%s4871 + $0x14] sm:$0xf]
      %v4878 = vld [vmem:[%s4871 + $0x18] sm:$0xf]
      %v4879 = vld [vmem:[%s4871 + $0x1c] sm:$0xf]
      %v4880 = vld [vmem:[%s4871 + $0x20] sm:$0xf]
      %v4881 = vld [vmem:[%s4871 + $0x24] sm:$0xf]
      %v4882 = vld [vmem:[%s4871 + $0x28] sm:$0xf]
      %v4883 = vld [vmem:[%s4871 + $0x2c] sm:$0xf]
      %v4884 = vld [vmem:[%s4871 + $0x30] sm:$0xf]
      %v4885 = vld [vmem:[%s4871 + $0x34] sm:$0xf]
      %v4886 = vld [vmem:[%s4871 + $0x38] sm:$0xf]
      %v4887 = vld [vmem:[%s4871 + $0x3c] sm:$0xf]
      %v4904 = vunpack.c.l.b16 %v4872
      %v4905 = vunpack.c.l.b16 %v4873
      %v4906 = vunpack.c.l.b16 %v4874
      %v4907 = vunpack.c.l.b16 %v4875
      %v4908 = vunpack.c.l.b16 %v4876
      %v4909 = vunpack.c.l.b16 %v4877
      %v4910 = vunpack.c.l.b16 %v4878
      %v4911 = vunpack.c.l.b16 %v4879
      %v4912 = vunpack.c.l.b16 %v4880
      %v4913 = vunpack.c.l.b16 %v4881
      %v4914 = vunpack.c.l.b16 %v4882
      %v4915 = vunpack.c.l.b16 %v4883
      %v4916 = vunpack.c.l.b16 %v4884
      %v4917 = vunpack.c.l.b16 %v4885
      %v4918 = vunpack.c.l.b16 %v4886
      %v4919 = vunpack.c.l.b16 %v4887
      %v4920 = vpack.c.b16 %v4905, %v4904
      %v4921 = vpack.c.b16 %v4907, %v4906
      %v4922 = vpack.c.b16 %v4909, %v4908
      %v4923 = vpack.c.b16 %v4911, %v4910
      %v4924 = vpack.c.b16 %v4913, %v4912
      %v4925 = vpack.c.b16 %v4915, %v4914
      %v4926 = vpack.c.b16 %v4917, %v4916
      %v4927 = vpack.c.b16 %v4919, %v4918
      %4936 = vmatpush.bf16.msra.mxu0 %v4927
      %4937 = vmatpush.bf16.msra.mxu0 %v4926
      %4938 = vmatpush.bf16.msra.mxu0 %v4925
      %4939 = vmatpush.bf16.msra.mxu0 %v4924
      %4940 = vmatpush.bf16.msra.mxu0 %v4923
      %4941 = vmatpush.bf16.msra.mxu0 %v4922
      %4942 = vmatpush.bf16.msra.mxu0 %v4921
      %4943 = vmatpush.bf16.msra.mxu0 %v4920
      %4944 = vmatmul.bf16.gmra.mxu0 %v4867
      %v4945 = vpop.f32.mrf.mxu0
      %v4946 = vadd.f32 0.0, %v4945
      %v4947 = vpop.f32.mrf.mxu0
      %v4948 = vadd.f32 0.0, %v4947
      %4949 = vmatmul.bf16.gmra.mxu0 %v4868
      %v4950 = vpop.f32.mrf.mxu0
      %v4951 = vadd.f32 0.0, %v4950
      %v4952 = vpop.f32.mrf.mxu0
      %v4953 = vadd.f32 0.0, %v4952
      %4954 = vmatmul.bf16.gmra.mxu0 %v4869
      %v4955 = vpop.f32.mrf.mxu0
      %v4956 = vadd.f32 0.0, %v4955
      %v4957 = vpop.f32.mrf.mxu0
      %v4958 = vadd.f32 0.0, %v4957
      %4959 = vmatmul.bf16.gmra.mxu0 %v4870
      %v4960 = vpop.f32.mrf.mxu0
      %v4961 = vadd.f32 0.0, %v4960
      %v4962 = vpop.f32.mrf.mxu0
      %v4963 = vadd.f32 0.0, %v4962
      %4964 = vdwg.mxu0
      %v4965 = vadd.f32 %v4859, %v4946
      %v4966 = vadd.f32 %v4860, %v4948
      %v4967 = vadd.f32 %v4861, %v4951
      %v4968 = vadd.f32 %v4862, %v4953
      %v4969 = vadd.f32 %v4863, %v4956
      %v4970 = vadd.f32 %v4864, %v4958
      %v4971 = vadd.f32 %v4865, %v4961
      %v4972 = vadd.f32 %v4866, %v4963
      %v4973 = vpack.c.bf16 %v3032, %v3031
      %v4974 = vpack.c.bf16 %v3034, %v3033
      %v4975 = vpack.c.bf16 %v3036, %v3035
      %v4976 = vpack.c.bf16 %v3038, %v3037
      %s4977 = scalar_lea.vmem %s2, 1024
      %v4978 = vld [vmem:[%s4977] sm:$0xf]
      %v4979 = vld [vmem:[%s4977 + $0x4] sm:$0xf]
      %v4980 = vld [vmem:[%s4977 + $0x8] sm:$0xf]
      %v4981 = vld [vmem:[%s4977 + $0xc] sm:$0xf]
      %v4982 = vld [vmem:[%s4977 + $0x10] sm:$0xf]
      %v4983 = vld [vmem:[%s4977 + $0x14] sm:$0xf]
      %v4984 = vld [vmem:[%s4977 + $0x18] sm:$0xf]
      %v4985 = vld [vmem:[%s4977 + $0x1c] sm:$0xf]
      %v4986 = vld [vmem:[%s4977 + $0x20] sm:$0xf]
      %v4987 = vld [vmem:[%s4977 + $0x24] sm:$0xf]
      %v4988 = vld [vmem:[%s4977 + $0x28] sm:$0xf]
      %v4989 = vld [vmem:[%s4977 + $0x2c] sm:$0xf]
      %v4990 = vld [vmem:[%s4977 + $0x30] sm:$0xf]
      %v4991 = vld [vmem:[%s4977 + $0x34] sm:$0xf]
      %v4992 = vld [vmem:[%s4977 + $0x38] sm:$0xf]
      %v4993 = vld [vmem:[%s4977 + $0x3c] sm:$0xf]
      %v5010 = vunpack.c.l.b16 %v4978
      %v5011 = vunpack.c.l.b16 %v4979
      %v5012 = vunpack.c.l.b16 %v4980
      %v5013 = vunpack.c.l.b16 %v4981
      %v5014 = vunpack.c.l.b16 %v4982
      %v5015 = vunpack.c.l.b16 %v4983
      %v5016 = vunpack.c.l.b16 %v4984
      %v5017 = vunpack.c.l.b16 %v4985
      %v5018 = vunpack.c.l.b16 %v4986
      %v5019 = vunpack.c.l.b16 %v4987
      %v5020 = vunpack.c.l.b16 %v4988
      %v5021 = vunpack.c.l.b16 %v4989
      %v5022 = vunpack.c.l.b16 %v4990
      %v5023 = vunpack.c.l.b16 %v4991
      %v5024 = vunpack.c.l.b16 %v4992
      %v5025 = vunpack.c.l.b16 %v4993
      %v5026 = vpack.c.b16 %v5011, %v5010
      %v5027 = vpack.c.b16 %v5013, %v5012
      %v5028 = vpack.c.b16 %v5015, %v5014
      %v5029 = vpack.c.b16 %v5017, %v5016
      %v5030 = vpack.c.b16 %v5019, %v5018
      %v5031 = vpack.c.b16 %v5021, %v5020
      %v5032 = vpack.c.b16 %v5023, %v5022
      %v5033 = vpack.c.b16 %v5025, %v5024
      %5042 = vmatpush.bf16.msra.mxu0 %v5033
      %5043 = vmatpush.bf16.msra.mxu0 %v5032
      %5044 = vmatpush.bf16.msra.mxu0 %v5031
      %5045 = vmatpush.bf16.msra.mxu0 %v5030
      %5046 = vmatpush.bf16.msra.mxu0 %v5029
      %5047 = vmatpush.bf16.msra.mxu0 %v5028
      %5048 = vmatpush.bf16.msra.mxu0 %v5027
      %5049 = vmatpush.bf16.msra.mxu0 %v5026
      %5050 = vmatmul.bf16.gmra.mxu0 %v4973
      %v5051 = vpop.f32.mrf.mxu0
      %v5052 = vadd.f32 0.0, %v5051
      %v5053 = vpop.f32.mrf.mxu0
      %v5054 = vadd.f32 0.0, %v5053
      %5055 = vmatmul.bf16.gmra.mxu0 %v4974
      %v5056 = vpop.f32.mrf.mxu0
      %v5057 = vadd.f32 0.0, %v5056
      %v5058 = vpop.f32.mrf.mxu0
      %v5059 = vadd.f32 0.0, %v5058
      %5060 = vmatmul.bf16.gmra.mxu0 %v4975
      %v5061 = vpop.f32.mrf.mxu0
      %v5062 = vadd.f32 0.0, %v5061
      %v5063 = vpop.f32.mrf.mxu0
      %v5064 = vadd.f32 0.0, %v5063
      %5065 = vmatmul.bf16.gmra.mxu0 %v4976
      %v5066 = vpop.f32.mrf.mxu0
      %v5067 = vadd.f32 0.0, %v5066
      %v5068 = vpop.f32.mrf.mxu0
      %v5069 = vadd.f32 0.0, %v5068
      %5070 = vdwg.mxu0
      %v5071 = vadd.f32 %v4965, %v5052
      %v5072 = vadd.f32 %v4966, %v5054
      %v5073 = vadd.f32 %v4967, %v5057
      %v5074 = vadd.f32 %v4968, %v5059
      %v5075 = vadd.f32 %v4969, %v5062
      %v5076 = vadd.f32 %v4970, %v5064
      %v5077 = vadd.f32 %v4971, %v5067
      %v5078 = vadd.f32 %v4972, %v5069
      %v5081 = vrot.slane %v2926, 1
      %v5082 = vrot.slane %v2934, 1
      %v5083 = vsel %vm414, %v5081, %v5082
      %v5085 = vpack.c.bf16 %v3910, %v3907
      %v5086 = vpack.c.bf16 %v3916, %v3913
      %v5087 = vpack.c.bf16 %v3922, %v3919
      %v5088 = vpack.c.bf16 %v5083, %v3925
      %s5089 = scalar_lea.vmem %s2, 1088
      %v5090 = vld [vmem:[%s5089] sm:$0xf]
      %v5091 = vld [vmem:[%s5089 + $0x4] sm:$0xf]
      %v5092 = vld [vmem:[%s5089 + $0x8] sm:$0xf]
      %v5093 = vld [vmem:[%s5089 + $0xc] sm:$0xf]
      %v5094 = vld [vmem:[%s5089 + $0x10] sm:$0xf]
      %v5095 = vld [vmem:[%s5089 + $0x14] sm:$0xf]
      %v5096 = vld [vmem:[%s5089 + $0x18] sm:$0xf]
      %v5097 = vld [vmem:[%s5089 + $0x1c] sm:$0xf]
      %v5098 = vld [vmem:[%s5089 + $0x20] sm:$0xf]
      %v5099 = vld [vmem:[%s5089 + $0x24] sm:$0xf]
      %v5100 = vld [vmem:[%s5089 + $0x28] sm:$0xf]
      %v5101 = vld [vmem:[%s5089 + $0x2c] sm:$0xf]
      %v5102 = vld [vmem:[%s5089 + $0x30] sm:$0xf]
      %v5103 = vld [vmem:[%s5089 + $0x34] sm:$0xf]
      %v5104 = vld [vmem:[%s5089 + $0x38] sm:$0xf]
      %v5105 = vld [vmem:[%s5089 + $0x3c] sm:$0xf]
      %v5122 = vunpack.c.l.b16 %v5090
      %v5123 = vunpack.c.l.b16 %v5091
      %v5124 = vunpack.c.l.b16 %v5092
      %v5125 = vunpack.c.l.b16 %v5093
      %v5126 = vunpack.c.l.b16 %v5094
      %v5127 = vunpack.c.l.b16 %v5095
      %v5128 = vunpack.c.l.b16 %v5096
      %v5129 = vunpack.c.l.b16 %v5097
      %v5130 = vunpack.c.l.b16 %v5098
      %v5131 = vunpack.c.l.b16 %v5099
      %v5132 = vunpack.c.l.b16 %v5100
      %v5133 = vunpack.c.l.b16 %v5101
      %v5134 = vunpack.c.l.b16 %v5102
      %v5135 = vunpack.c.l.b16 %v5103
      %v5136 = vunpack.c.l.b16 %v5104
      %v5137 = vunpack.c.l.b16 %v5105
      %v5138 = vpack.c.b16 %v5123, %v5122
      %v5139 = vpack.c.b16 %v5125, %v5124
      %v5140 = vpack.c.b16 %v5127, %v5126
      %v5141 = vpack.c.b16 %v5129, %v5128
      %v5142 = vpack.c.b16 %v5131, %v5130
      %v5143 = vpack.c.b16 %v5133, %v5132
      %v5144 = vpack.c.b16 %v5135, %v5134
      %v5145 = vpack.c.b16 %v5137, %v5136
      %5154 = vmatpush.bf16.msra.mxu0 %v5145
      %5155 = vmatpush.bf16.msra.mxu0 %v5144
      %5156 = vmatpush.bf16.msra.mxu0 %v5143
      %5157 = vmatpush.bf16.msra.mxu0 %v5142
      %5158 = vmatpush.bf16.msra.mxu0 %v5141
      %5159 = vmatpush.bf16.msra.mxu0 %v5140
      %5160 = vmatpush.bf16.msra.mxu0 %v5139
      %5161 = vmatpush.bf16.msra.mxu0 %v5138
      %5162 = vmatmul.bf16.gmra.mxu0 %v5085
      %v5163 = vpop.f32.mrf.mxu0
      %v5164 = vadd.f32 0.0, %v5163
      %v5165 = vpop.f32.mrf.mxu0
      %v5166 = vadd.f32 0.0, %v5165
      %5167 = vmatmul.bf16.gmra.mxu0 %v5086
      %v5168 = vpop.f32.mrf.mxu0
      %v5169 = vadd.f32 0.0, %v5168
      %v5170 = vpop.f32.mrf.mxu0
      %v5171 = vadd.f32 0.0, %v5170
      %5172 = vmatmul.bf16.gmra.mxu0 %v5087
      %v5173 = vpop.f32.mrf.mxu0
      %v5174 = vadd.f32 0.0, %v5173
      %v5175 = vpop.f32.mrf.mxu0
      %v5176 = vadd.f32 0.0, %v5175
      %5177 = vmatmul.bf16.gmra.mxu0 %v5088
      %v5178 = vpop.f32.mrf.mxu0
      %v5179 = vadd.f32 0.0, %v5178
      %v5180 = vpop.f32.mrf.mxu0
      %v5181 = vadd.f32 0.0, %v5180
      %5182 = vdwg.mxu0
      %v5183 = vadd.f32 %v5071, %v5164
      %v5184 = vadd.f32 %v5072, %v5166
      %v5185 = vadd.f32 %v5073, %v5169
      %v5186 = vadd.f32 %v5074, %v5171
      %v5187 = vadd.f32 %v5075, %v5174
      %v5188 = vadd.f32 %v5076, %v5176
      %v5189 = vadd.f32 %v5077, %v5179
      %v5190 = vadd.f32 %v5078, %v5181
      %v5193 = vrot.slane %v3038, 1
      %v5194 = vrot.slane %v3046, 1
      %v5195 = vsel %vm414, %v5193, %v5194
      %v5197 = vpack.c.bf16 %v4058, %v4055
      %v5198 = vpack.c.bf16 %v4064, %v4061
      %v5199 = vpack.c.bf16 %v4070, %v4067
      %v5200 = vpack.c.bf16 %v5195, %v4073
      %s5201 = scalar_lea.vmem %s2, 1152
      %v5202 = vld [vmem:[%s5201] sm:$0xf]
      %v5203 = vld [vmem:[%s5201 + $0x4] sm:$0xf]
      %v5204 = vld [vmem:[%s5201 + $0x8] sm:$0xf]
      %v5205 = vld [vmem:[%s5201 + $0xc] sm:$0xf]
      %v5206 = vld [vmem:[%s5201 + $0x10] sm:$0xf]
      %v5207 = vld [vmem:[%s5201 + $0x14] sm:$0xf]
      %v5208 = vld [vmem:[%s5201 + $0x18] sm:$0xf]
      %v5209 = vld [vmem:[%s5201 + $0x1c] sm:$0xf]
      %v5210 = vld [vmem:[%s5201 + $0x20] sm:$0xf]
      %v5211 = vld [vmem:[%s5201 + $0x24] sm:$0xf]
      %v5212 = vld [vmem:[%s5201 + $0x28] sm:$0xf]
      %v5213 = vld [vmem:[%s5201 + $0x2c] sm:$0xf]
      %v5214 = vld [vmem:[%s5201 + $0x30] sm:$0xf]
      %v5215 = vld [vmem:[%s5201 + $0x34] sm:$0xf]
      %v5216 = vld [vmem:[%s5201 + $0x38] sm:$0xf]
      %v5217 = vld [vmem:[%s5201 + $0x3c] sm:$0xf]
      %v5234 = vunpack.c.l.b16 %v5202
      %v5235 = vunpack.c.l.b16 %v5203
      %v5236 = vunpack.c.l.b16 %v5204
      %v5237 = vunpack.c.l.b16 %v5205
      %v5238 = vunpack.c.l.b16 %v5206
      %v5239 = vunpack.c.l.b16 %v5207
      %v5240 = vunpack.c.l.b16 %v5208
      %v5241 = vunpack.c.l.b16 %v5209
      %v5242 = vunpack.c.l.b16 %v5210
      %v5243 = vunpack.c.l.b16 %v5211
      %v5244 = vunpack.c.l.b16 %v5212
      %v5245 = vunpack.c.l.b16 %v5213
      %v5246 = vunpack.c.l.b16 %v5214
      %v5247 = vunpack.c.l.b16 %v5215
      %v5248 = vunpack.c.l.b16 %v5216
      %v5249 = vunpack.c.l.b16 %v5217
      %v5250 = vpack.c.b16 %v5235, %v5234
      %v5251 = vpack.c.b16 %v5237, %v5236
      %v5252 = vpack.c.b16 %v5239, %v5238
      %v5253 = vpack.c.b16 %v5241, %v5240
      %v5254 = vpack.c.b16 %v5243, %v5242
      %v5255 = vpack.c.b16 %v5245, %v5244
      %v5256 = vpack.c.b16 %v5247, %v5246
      %v5257 = vpack.c.b16 %v5249, %v5248
      %5266 = vmatpush.bf16.msra.mxu0 %v5257
      %5267 = vmatpush.bf16.msra.mxu0 %v5256
      %5268 = vmatpush.bf16.msra.mxu0 %v5255
      %5269 = vmatpush.bf16.msra.mxu0 %v5254
      %5270 = vmatpush.bf16.msra.mxu0 %v5253
      %5271 = vmatpush.bf16.msra.mxu0 %v5252
      %5272 = vmatpush.bf16.msra.mxu0 %v5251
      %5273 = vmatpush.bf16.msra.mxu0 %v5250
      %5274 = vmatmul.bf16.gmra.mxu0 %v5197
      %v5275 = vpop.f32.mrf.mxu0
      %v5276 = vadd.f32 0.0, %v5275
      %v5277 = vpop.f32.mrf.mxu0
      %v5278 = vadd.f32 0.0, %v5277
      %5279 = vmatmul.bf16.gmra.mxu0 %v5198
      %v5280 = vpop.f32.mrf.mxu0
      %v5281 = vadd.f32 0.0, %v5280
      %v5282 = vpop.f32.mrf.mxu0
      %v5283 = vadd.f32 0.0, %v5282
      %5284 = vmatmul.bf16.gmra.mxu0 %v5199
      %v5285 = vpop.f32.mrf.mxu0
      %v5286 = vadd.f32 0.0, %v5285
      %v5287 = vpop.f32.mrf.mxu0
      %v5288 = vadd.f32 0.0, %v5287
      %5289 = vmatmul.bf16.gmra.mxu0 %v5200
      %v5290 = vpop.f32.mrf.mxu0
      %v5291 = vadd.f32 0.0, %v5290
      %v5292 = vpop.f32.mrf.mxu0
      %v5293 = vadd.f32 0.0, %v5292
      %5294 = vdwg.mxu0
      %v5295 = vadd.f32 %v5183, %v5276
      %v5296 = vadd.f32 %v5184, %v5278
      %v5297 = vadd.f32 %v5185, %v5281
      %v5298 = vadd.f32 %v5186, %v5283
      %v5299 = vadd.f32 %v5187, %v5286
      %v5300 = vadd.f32 %v5188, %v5288
      %v5301 = vadd.f32 %v5189, %v5291
      %v5302 = vadd.f32 %v5190, %v5293
      %v5303 = vrot.slane %v2926, 2
      %v5304 = vrot.slane %v2934, 2
      %v5305 = vsel %vm834, %v5303, %v5304
      %v5307 = vpack.c.bf16 %v4192, %v4189
      %v5308 = vpack.c.bf16 %v4198, %v4195
      %v5309 = vpack.c.bf16 %v4204, %v4201
      %v5310 = vpack.c.bf16 %v5305, %v4207
      %s5311 = scalar_lea.vmem %s2, 1216
      %v5312 = vld [vmem:[%s5311] sm:$0xf]
      %v5313 = vld [vmem:[%s5311 + $0x4] sm:$0xf]
      %v5314 = vld [vmem:[%s5311 + $0x8] sm:$0xf]
      %v5315 = vld [vmem:[%s5311 + $0xc] sm:$0xf]
      %v5316 = vld [vmem:[%s5311 + $0x10] sm:$0xf]
      %v5317 = vld [vmem:[%s5311 + $0x14] sm:$0xf]
      %v5318 = vld [vmem:[%s5311 + $0x18] sm:$0xf]
      %v5319 = vld [vmem:[%s5311 + $0x1c] sm:$0xf]
      %v5320 = vld [vmem:[%s5311 + $0x20] sm:$0xf]
      %v5321 = vld [vmem:[%s5311 + $0x24] sm:$0xf]
      %v5322 = vld [vmem:[%s5311 + $0x28] sm:$0xf]
      %v5323 = vld [vmem:[%s5311 + $0x2c] sm:$0xf]
      %v5324 = vld [vmem:[%s5311 + $0x30] sm:$0xf]
      %v5325 = vld [vmem:[%s5311 + $0x34] sm:$0xf]
      %v5326 = vld [vmem:[%s5311 + $0x38] sm:$0xf]
      %v5327 = vld [vmem:[%s5311 + $0x3c] sm:$0xf]
      %v5344 = vunpack.c.l.b16 %v5312
      %v5345 = vunpack.c.l.b16 %v5313
      %v5346 = vunpack.c.l.b16 %v5314
      %v5347 = vunpack.c.l.b16 %v5315
      %v5348 = vunpack.c.l.b16 %v5316
      %v5349 = vunpack.c.l.b16 %v5317
      %v5350 = vunpack.c.l.b16 %v5318
      %v5351 = vunpack.c.l.b16 %v5319
      %v5352 = vunpack.c.l.b16 %v5320
      %v5353 = vunpack.c.l.b16 %v5321
      %v5354 = vunpack.c.l.b16 %v5322
      %v5355 = vunpack.c.l.b16 %v5323
      %v5356 = vunpack.c.l.b16 %v5324
      %v5357 = vunpack.c.l.b16 %v5325
      %v5358 = vunpack.c.l.b16 %v5326
      %v5359 = vunpack.c.l.b16 %v5327
      %v5360 = vpack.c.b16 %v5345, %v5344
      %v5361 = vpack.c.b16 %v5347, %v5346
      %v5362 = vpack.c.b16 %v5349, %v5348
      %v5363 = vpack.c.b16 %v5351, %v5350
      %v5364 = vpack.c.b16 %v5353, %v5352
      %v5365 = vpack.c.b16 %v5355, %v5354
      %v5366 = vpack.c.b16 %v5357, %v5356
      %v5367 = vpack.c.b16 %v5359, %v5358
      %5376 = vmatpush.bf16.msra.mxu0 %v5367
      %5377 = vmatpush.bf16.msra.mxu0 %v5366
      %5378 = vmatpush.bf16.msra.mxu0 %v5365
      %5379 = vmatpush.bf16.msra.mxu0 %v5364
      %5380 = vmatpush.bf16.msra.mxu0 %v5363
      %5381 = vmatpush.bf16.msra.mxu0 %v5362
      %5382 = vmatpush.bf16.msra.mxu0 %v5361
      %5383 = vmatpush.bf16.msra.mxu0 %v5360
      %5384 = vmatmul.bf16.gmra.mxu0 %v5307
      %v5385 = vpop.f32.mrf.mxu0
      %v5386 = vadd.f32 0.0, %v5385
      %v5387 = vpop.f32.mrf.mxu0
      %v5388 = vadd.f32 0.0, %v5387
      %5389 = vmatmul.bf16.gmra.mxu0 %v5308
      %v5390 = vpop.f32.mrf.mxu0
      %v5391 = vadd.f32 0.0, %v5390
      %v5392 = vpop.f32.mrf.mxu0
      %v5393 = vadd.f32 0.0, %v5392
      %5394 = vmatmul.bf16.gmra.mxu0 %v5309
      %v5395 = vpop.f32.mrf.mxu0
      %v5396 = vadd.f32 0.0, %v5395
      %v5397 = vpop.f32.mrf.mxu0
      %v5398 = vadd.f32 0.0, %v5397
      %5399 = vmatmul.bf16.gmra.mxu0 %v5310
      %v5400 = vpop.f32.mrf.mxu0
      %v5401 = vadd.f32 0.0, %v5400
      %v5402 = vpop.f32.mrf.mxu0
      %v5403 = vadd.f32 0.0, %v5402
      %5404 = vdwg.mxu0
      %v5405 = vadd.f32 %v5295, %v5386
      %v5406 = vadd.f32 %v5296, %v5388
      %v5407 = vadd.f32 %v5297, %v5391
      %v5408 = vadd.f32 %v5298, %v5393
      %v5409 = vadd.f32 %v5299, %v5396
      %v5410 = vadd.f32 %v5300, %v5398
      %v5411 = vadd.f32 %v5301, %v5401
      %v5412 = vadd.f32 %v5302, %v5403
      %v5413 = vpack.c.bf16 0.0, %v2590
      %s5414 = scalar_lea.vmem %s2, 1280
      %v5415 = vld [vmem:[%s5414] sm:$0xf]
      %v5416 = vld [vmem:[%s5414 + $0x4] sm:$0xf]
      %v5417 = vld [vmem:[%s5414 + $0x8] sm:$0xf]
      %v5418 = vld [vmem:[%s5414 + $0xc] sm:$0xf]
      %v5419 = vld [vmem:[%s5414 + $0x10] sm:$0xf]
      %v5420 = vld [vmem:[%s5414 + $0x14] sm:$0xf]
      %v5421 = vld [vmem:[%s5414 + $0x18] sm:$0xf]
      %v5422 = vld [vmem:[%s5414 + $0x1c] sm:$0xf]
      %v5423 = vld [vmem:[%s5414 + $0x20] sm:$0xf]
      %v5424 = vld [vmem:[%s5414 + $0x24] sm:$0xf]
      %v5425 = vld [vmem:[%s5414 + $0x28] sm:$0xf]
      %v5426 = vld [vmem:[%s5414 + $0x2c] sm:$0xf]
      %v5427 = vld [vmem:[%s5414 + $0x30] sm:$0xf]
      %v5428 = vld [vmem:[%s5414 + $0x34] sm:$0xf]
      %v5429 = vld [vmem:[%s5414 + $0x38] sm:$0xf]
      %v5430 = vld [vmem:[%s5414 + $0x3c] sm:$0xf]
      %v5447 = vunpack.c.l.b16 %v5415
      %v5448 = vunpack.c.l.b16 %v5416
      %v5449 = vunpack.c.l.b16 %v5417
      %v5450 = vunpack.c.l.b16 %v5418
      %v5451 = vunpack.c.l.b16 %v5419
      %v5452 = vunpack.c.l.b16 %v5420
      %v5453 = vunpack.c.l.b16 %v5421
      %v5454 = vunpack.c.l.b16 %v5422
      %v5455 = vunpack.c.l.b16 %v5423
      %v5456 = vunpack.c.l.b16 %v5424
      %v5457 = vunpack.c.l.b16 %v5425
      %v5458 = vunpack.c.l.b16 %v5426
      %v5459 = vunpack.c.l.b16 %v5427
      %v5460 = vunpack.c.l.b16 %v5428
      %v5461 = vunpack.c.l.b16 %v5429
      %v5462 = vunpack.c.l.b16 %v5430
      %v5463 = vpack.c.b16 %v5448, %v5447
      %v5464 = vpack.c.b16 %v5450, %v5449
      %v5465 = vpack.c.b16 %v5452, %v5451
      %v5466 = vpack.c.b16 %v5454, %v5453
      %v5467 = vpack.c.b16 %v5456, %v5455
      %v5468 = vpack.c.b16 %v5458, %v5457
      %v5469 = vpack.c.b16 %v5460, %v5459
      %v5470 = vpack.c.b16 %v5462, %v5461
      %5479 = vmatpush.bf16.msra.mxu0 %v5470
      %5480 = vmatpush.bf16.msra.mxu0 %v5469
      %5481 = vmatpush.bf16.msra.mxu0 %v5468
      %5482 = vmatpush.bf16.msra.mxu0 %v5467
      %5483 = vmatpush.bf16.msra.mxu0 %v5466
      %5484 = vmatpush.bf16.msra.mxu0 %v5465
      %5485 = vmatpush.bf16.msra.mxu0 %v5464
      %5486 = vmatpush.bf16.msra.mxu0 %v5463
      %5487 = vmatmul.bf16.gmra.mxu0 %v3048
      %v5488 = vpop.f32.mrf.mxu0
      %v5489 = vadd.f32 0.0, %v5488
      %v5490 = vpop.f32.mrf.mxu0
      %v5491 = vadd.f32 0.0, %v5490
      %5492 = vmatmul.bf16.gmra.mxu0 %v3049
      %v5493 = vpop.f32.mrf.mxu0
      %v5494 = vadd.f32 0.0, %v5493
      %v5495 = vpop.f32.mrf.mxu0
      %v5496 = vadd.f32 0.0, %v5495
      %5497 = vmatmul.bf16.gmra.mxu0 %v3050
      %v5498 = vpop.f32.mrf.mxu0
      %v5499 = vadd.f32 0.0, %v5498
      %v5500 = vpop.f32.mrf.mxu0
      %v5501 = vadd.f32 0.0, %v5500
      %5502 = vmatmul.bf16.gmra.mxu0 %v5413
      %v5503 = vpop.f32.mrf.mxu0
      %v5504 = vadd.f32 0.0, %v5503
      %v5505 = vpop.f32.mrf.mxu0
      %v5506 = vadd.f32 0.0, %v5505
      %5507 = vdwg.mxu0
      %v5508 = vadd.f32 %v5405, %v5489
      %v5509 = vadd.f32 %v5406, %v5491
      %v5510 = vadd.f32 %v5407, %v5494
      %v5511 = vadd.f32 %v5408, %v5496
      %v5512 = vadd.f32 %v5409, %v5499
      %v5513 = vadd.f32 %v5410, %v5501
      %v5514 = vadd.f32 %v5411, %v5504
      %v5515 = vadd.f32 %v5412, %v5506
      %v5516 = vpack.c.bf16 0.0, %v2702
      %s5517 = scalar_lea.vmem %s2, 1344
      %v5518 = vld [vmem:[%s5517] sm:$0xf]
      %v5519 = vld [vmem:[%s5517 + $0x4] sm:$0xf]
      %v5520 = vld [vmem:[%s5517 + $0x8] sm:$0xf]
      %v5521 = vld [vmem:[%s5517 + $0xc] sm:$0xf]
      %v5522 = vld [vmem:[%s5517 + $0x10] sm:$0xf]
      %v5523 = vld [vmem:[%s5517 + $0x14] sm:$0xf]
      %v5524 = vld [vmem:[%s5517 + $0x18] sm:$0xf]
      %v5525 = vld [vmem:[%s5517 + $0x1c] sm:$0xf]
      %v5526 = vld [vmem:[%s5517 + $0x20] sm:$0xf]
      %v5527 = vld [vmem:[%s5517 + $0x24] sm:$0xf]
      %v5528 = vld [vmem:[%s5517 + $0x28] sm:$0xf]
      %v5529 = vld [vmem:[%s5517 + $0x2c] sm:$0xf]
      %v5530 = vld [vmem:[%s5517 + $0x30] sm:$0xf]
      %v5531 = vld [vmem:[%s5517 + $0x34] sm:$0xf]
      %v5532 = vld [vmem:[%s5517 + $0x38] sm:$0xf]
      %v5533 = vld [vmem:[%s5517 + $0x3c] sm:$0xf]
      %v5550 = vunpack.c.l.b16 %v5518
      %v5551 = vunpack.c.l.b16 %v5519
      %v5552 = vunpack.c.l.b16 %v5520
      %v5553 = vunpack.c.l.b16 %v5521
      %v5554 = vunpack.c.l.b16 %v5522
      %v5555 = vunpack.c.l.b16 %v5523
      %v5556 = vunpack.c.l.b16 %v5524
      %v5557 = vunpack.c.l.b16 %v5525
      %v5558 = vunpack.c.l.b16 %v5526
      %v5559 = vunpack.c.l.b16 %v5527
      %v5560 = vunpack.c.l.b16 %v5528
      %v5561 = vunpack.c.l.b16 %v5529
      %v5562 = vunpack.c.l.b16 %v5530
      %v5563 = vunpack.c.l.b16 %v5531
      %v5564 = vunpack.c.l.b16 %v5532
      %v5565 = vunpack.c.l.b16 %v5533
      %v5566 = vpack.c.b16 %v5551, %v5550
      %v5567 = vpack.c.b16 %v5553, %v5552
      %v5568 = vpack.c.b16 %v5555, %v5554
      %v5569 = vpack.c.b16 %v5557, %v5556
      %v5570 = vpack.c.b16 %v5559, %v5558
      %v5571 = vpack.c.b16 %v5561, %v5560
      %v5572 = vpack.c.b16 %v5563, %v5562
      %v5573 = vpack.c.b16 %v5565, %v5564
      %5582 = vmatpush.bf16.msra.mxu0 %v5573
      %5583 = vmatpush.bf16.msra.mxu0 %v5572
      %5584 = vmatpush.bf16.msra.mxu0 %v5571
      %5585 = vmatpush.bf16.msra.mxu0 %v5570
      %5586 = vmatpush.bf16.msra.mxu0 %v5569
      %5587 = vmatpush.bf16.msra.mxu0 %v5568
      %5588 = vmatpush.bf16.msra.mxu0 %v5567
      %5589 = vmatpush.bf16.msra.mxu0 %v5566
      %5590 = vmatmul.bf16.gmra.mxu0 %v3068
      %v5591 = vpop.f32.mrf.mxu0
      %v5592 = vadd.f32 0.0, %v5591
      %v5593 = vpop.f32.mrf.mxu0
      %v5594 = vadd.f32 0.0, %v5593
      %5595 = vmatmul.bf16.gmra.mxu0 %v3069
      %v5596 = vpop.f32.mrf.mxu0
      %v5597 = vadd.f32 0.0, %v5596
      %v5598 = vpop.f32.mrf.mxu0
      %v5599 = vadd.f32 0.0, %v5598
      %5600 = vmatmul.bf16.gmra.mxu0 %v3070
      %v5601 = vpop.f32.mrf.mxu0
      %v5602 = vadd.f32 0.0, %v5601
      %v5603 = vpop.f32.mrf.mxu0
      %v5604 = vadd.f32 0.0, %v5603
      %5605 = vmatmul.bf16.gmra.mxu0 %v5516
      %v5606 = vpop.f32.mrf.mxu0
      %v5607 = vadd.f32 0.0, %v5606
      %v5608 = vpop.f32.mrf.mxu0
      %v5609 = vadd.f32 0.0, %v5608
      %5610 = vdwg.mxu0
      %v5611 = vadd.f32 %v5508, %v5592
      %v5612 = vadd.f32 %v5509, %v5594
      %v5613 = vadd.f32 %v5510, %v5597
      %v5614 = vadd.f32 %v5511, %v5599
      %v5615 = vadd.f32 %v5512, %v5602
      %v5616 = vadd.f32 %v5513, %v5604
      %v5617 = vadd.f32 %v5514, %v5607
      %v5618 = vadd.f32 %v5515, %v5609
      %v5619 = vpack.c.bf16 %v3258, %v4537
      %s5620 = scalar_lea.vmem %s2, 1408
      %v5621 = vld [vmem:[%s5620] sm:$0xf]
      %v5622 = vld [vmem:[%s5620 + $0x4] sm:$0xf]
      %v5623 = vld [vmem:[%s5620 + $0x8] sm:$0xf]
      %v5624 = vld [vmem:[%s5620 + $0xc] sm:$0xf]
      %v5625 = vld [vmem:[%s5620 + $0x10] sm:$0xf]
      %v5626 = vld [vmem:[%s5620 + $0x14] sm:$0xf]
      %v5627 = vld [vmem:[%s5620 + $0x18] sm:$0xf]
      %v5628 = vld [vmem:[%s5620 + $0x1c] sm:$0xf]
      %v5629 = vld [vmem:[%s5620 + $0x20] sm:$0xf]
      %v5630 = vld [vmem:[%s5620 + $0x24] sm:$0xf]
      %v5631 = vld [vmem:[%s5620 + $0x28] sm:$0xf]
      %v5632 = vld [vmem:[%s5620 + $0x2c] sm:$0xf]
      %v5633 = vld [vmem:[%s5620 + $0x30] sm:$0xf]
      %v5634 = vld [vmem:[%s5620 + $0x34] sm:$0xf]
      %v5635 = vld [vmem:[%s5620 + $0x38] sm:$0xf]
      %v5636 = vld [vmem:[%s5620 + $0x3c] sm:$0xf]
      %v5653 = vunpack.c.l.b16 %v5621
      %v5654 = vunpack.c.l.b16 %v5622
      %v5655 = vunpack.c.l.b16 %v5623
      %v5656 = vunpack.c.l.b16 %v5624
      %v5657 = vunpack.c.l.b16 %v5625
      %v5658 = vunpack.c.l.b16 %v5626
      %v5659 = vunpack.c.l.b16 %v5627
      %v5660 = vunpack.c.l.b16 %v5628
      %v5661 = vunpack.c.l.b16 %v5629
      %v5662 = vunpack.c.l.b16 %v5630
      %v5663 = vunpack.c.l.b16 %v5631
      %v5664 = vunpack.c.l.b16 %v5632
      %v5665 = vunpack.c.l.b16 %v5633
      %v5666 = vunpack.c.l.b16 %v5634
      %v5667 = vunpack.c.l.b16 %v5635
      %v5668 = vunpack.c.l.b16 %v5636
      %v5669 = vpack.c.b16 %v5654, %v5653
      %v5670 = vpack.c.b16 %v5656, %v5655
      %v5671 = vpack.c.b16 %v5658, %v5657
      %v5672 = vpack.c.b16 %v5660, %v5659
      %v5673 = vpack.c.b16 %v5662, %v5661
      %v5674 = vpack.c.b16 %v5664, %v5663
      %v5675 = vpack.c.b16 %v5666, %v5665
      %v5676 = vpack.c.b16 %v5668, %v5667
      %5685 = vmatpush.bf16.msra.mxu0 %v5676
      %5686 = vmatpush.bf16.msra.mxu0 %v5675
      %5687 = vmatpush.bf16.msra.mxu0 %v5674
      %5688 = vmatpush.bf16.msra.mxu0 %v5673
      %5689 = vmatpush.bf16.msra.mxu0 %v5672
      %5690 = vmatpush.bf16.msra.mxu0 %v5671
      %5691 = vmatpush.bf16.msra.mxu0 %v5670
      %5692 = vmatpush.bf16.msra.mxu0 %v5669
      %5693 = vmatmul.bf16.gmra.mxu0 %v3289
      %v5694 = vpop.f32.mrf.mxu0
      %v5695 = vadd.f32 0.0, %v5694
      %v5696 = vpop.f32.mrf.mxu0
      %v5697 = vadd.f32 0.0, %v5696
      %5698 = vmatmul.bf16.gmra.mxu0 %v3290
      %v5699 = vpop.f32.mrf.mxu0
      %v5700 = vadd.f32 0.0, %v5699
      %v5701 = vpop.f32.mrf.mxu0
      %v5702 = vadd.f32 0.0, %v5701
      %5703 = vmatmul.bf16.gmra.mxu0 %v3291
      %v5704 = vpop.f32.mrf.mxu0
      %v5705 = vadd.f32 0.0, %v5704
      %v5706 = vpop.f32.mrf.mxu0
      %v5707 = vadd.f32 0.0, %v5706
      %5708 = vmatmul.bf16.gmra.mxu0 %v5619
      %v5709 = vpop.f32.mrf.mxu0
      %v5710 = vadd.f32 0.0, %v5709
      %v5711 = vpop.f32.mrf.mxu0
      %v5712 = vadd.f32 0.0, %v5711
      %5713 = vdwg.mxu0
      %v5714 = vadd.f32 %v5611, %v5695
      %v5715 = vadd.f32 %v5612, %v5697
      %v5716 = vadd.f32 %v5613, %v5700
      %v5717 = vadd.f32 %v5614, %v5702
      %v5718 = vadd.f32 %v5615, %v5705
      %v5719 = vadd.f32 %v5616, %v5707
      %v5720 = vadd.f32 %v5617, %v5710
      %v5721 = vadd.f32 %v5618, %v5712
      %v5722 = vpack.c.bf16 %v3258, %v4649
      %s5723 = scalar_lea.vmem %s2, 1472
      %v5724 = vld [vmem:[%s5723] sm:$0xf]
      %v5725 = vld [vmem:[%s5723 + $0x4] sm:$0xf]
      %v5726 = vld [vmem:[%s5723 + $0x8] sm:$0xf]
      %v5727 = vld [vmem:[%s5723 + $0xc] sm:$0xf]
      %v5728 = vld [vmem:[%s5723 + $0x10] sm:$0xf]
      %v5729 = vld [vmem:[%s5723 + $0x14] sm:$0xf]
      %v5730 = vld [vmem:[%s5723 + $0x18] sm:$0xf]
      %v5731 = vld [vmem:[%s5723 + $0x1c] sm:$0xf]
      %v5732 = vld [vmem:[%s5723 + $0x20] sm:$0xf]
      %v5733 = vld [vmem:[%s5723 + $0x24] sm:$0xf]
      %v5734 = vld [vmem:[%s5723 + $0x28] sm:$0xf]
      %v5735 = vld [vmem:[%s5723 + $0x2c] sm:$0xf]
      %v5736 = vld [vmem:[%s5723 + $0x30] sm:$0xf]
      %v5737 = vld [vmem:[%s5723 + $0x34] sm:$0xf]
      %v5738 = vld [vmem:[%s5723 + $0x38] sm:$0xf]
      %v5739 = vld [vmem:[%s5723 + $0x3c] sm:$0xf]
      %v5756 = vunpack.c.l.b16 %v5724
      %v5757 = vunpack.c.l.b16 %v5725
      %v5758 = vunpack.c.l.b16 %v5726
      %v5759 = vunpack.c.l.b16 %v5727
      %v5760 = vunpack.c.l.b16 %v5728
      %v5761 = vunpack.c.l.b16 %v5729
      %v5762 = vunpack.c.l.b16 %v5730
      %v5763 = vunpack.c.l.b16 %v5731
      %v5764 = vunpack.c.l.b16 %v5732
      %v5765 = vunpack.c.l.b16 %v5733
      %v5766 = vunpack.c.l.b16 %v5734
      %v5767 = vunpack.c.l.b16 %v5735
      %v5768 = vunpack.c.l.b16 %v5736
      %v5769 = vunpack.c.l.b16 %v5737
      %v5770 = vunpack.c.l.b16 %v5738
      %v5771 = vunpack.c.l.b16 %v5739
      %v5772 = vpack.c.b16 %v5757, %v5756
      %v5773 = vpack.c.b16 %v5759, %v5758
      %v5774 = vpack.c.b16 %v5761, %v5760
      %v5775 = vpack.c.b16 %v5763, %v5762
      %v5776 = vpack.c.b16 %v5765, %v5764
      %v5777 = vpack.c.b16 %v5767, %v5766
      %v5778 = vpack.c.b16 %v5769, %v5768
      %v5779 = vpack.c.b16 %v5771, %v5770
      %5788 = vmatpush.bf16.msra.mxu0 %v5779
      %5789 = vmatpush.bf16.msra.mxu0 %v5778
      %5790 = vmatpush.bf16.msra.mxu0 %v5777
      %5791 = vmatpush.bf16.msra.mxu0 %v5776
      %5792 = vmatpush.bf16.msra.mxu0 %v5775
      %5793 = vmatpush.bf16.msra.mxu0 %v5774
      %5794 = vmatpush.bf16.msra.mxu0 %v5773
      %5795 = vmatpush.bf16.msra.mxu0 %v5772
      %5796 = vmatmul.bf16.gmra.mxu0 %v3437
      %v5797 = vpop.f32.mrf.mxu0
      %v5798 = vadd.f32 0.0, %v5797
      %v5799 = vpop.f32.mrf.mxu0
      %v5800 = vadd.f32 0.0, %v5799
      %5801 = vmatmul.bf16.gmra.mxu0 %v3438
      %v5802 = vpop.f32.mrf.mxu0
      %v5803 = vadd.f32 0.0, %v5802
      %v5804 = vpop.f32.mrf.mxu0
      %v5805 = vadd.f32 0.0, %v5804
      %5806 = vmatmul.bf16.gmra.mxu0 %v3439
      %v5807 = vpop.f32.mrf.mxu0
      %v5808 = vadd.f32 0.0, %v5807
      %v5809 = vpop.f32.mrf.mxu0
      %v5810 = vadd.f32 0.0, %v5809
      %5811 = vmatmul.bf16.gmra.mxu0 %v5722
      %v5812 = vpop.f32.mrf.mxu0
      %v5813 = vadd.f32 0.0, %v5812
      %v5814 = vpop.f32.mrf.mxu0
      %v5815 = vadd.f32 0.0, %v5814
      %5816 = vdwg.mxu0
      %v5817 = vadd.f32 %v5714, %v5798
      %v5818 = vadd.f32 %v5715, %v5800
      %v5819 = vadd.f32 %v5716, %v5803
      %v5820 = vadd.f32 %v5717, %v5805
      %v5821 = vadd.f32 %v5718, %v5808
      %v5822 = vadd.f32 %v5719, %v5810
      %v5823 = vadd.f32 %v5720, %v5813
      %v5824 = vadd.f32 %v5721, %v5815
      %v5825 = vpack.c.bf16 %v3543, %v4759
      %s5826 = scalar_lea.vmem %s2, 1536
      %v5827 = vld [vmem:[%s5826] sm:$0xf]
      %v5828 = vld [vmem:[%s5826 + $0x4] sm:$0xf]
      %v5829 = vld [vmem:[%s5826 + $0x8] sm:$0xf]
      %v5830 = vld [vmem:[%s5826 + $0xc] sm:$0xf]
      %v5831 = vld [vmem:[%s5826 + $0x10] sm:$0xf]
      %v5832 = vld [vmem:[%s5826 + $0x14] sm:$0xf]
      %v5833 = vld [vmem:[%s5826 + $0x18] sm:$0xf]
      %v5834 = vld [vmem:[%s5826 + $0x1c] sm:$0xf]
      %v5835 = vld [vmem:[%s5826 + $0x20] sm:$0xf]
      %v5836 = vld [vmem:[%s5826 + $0x24] sm:$0xf]
      %v5837 = vld [vmem:[%s5826 + $0x28] sm:$0xf]
      %v5838 = vld [vmem:[%s5826 + $0x2c] sm:$0xf]
      %v5839 = vld [vmem:[%s5826 + $0x30] sm:$0xf]
      %v5840 = vld [vmem:[%s5826 + $0x34] sm:$0xf]
      %v5841 = vld [vmem:[%s5826 + $0x38] sm:$0xf]
      %v5842 = vld [vmem:[%s5826 + $0x3c] sm:$0xf]
      %v5859 = vunpack.c.l.b16 %v5827
      %v5860 = vunpack.c.l.b16 %v5828
      %v5861 = vunpack.c.l.b16 %v5829
      %v5862 = vunpack.c.l.b16 %v5830
      %v5863 = vunpack.c.l.b16 %v5831
      %v5864 = vunpack.c.l.b16 %v5832
      %v5865 = vunpack.c.l.b16 %v5833
      %v5866 = vunpack.c.l.b16 %v5834
      %v5867 = vunpack.c.l.b16 %v5835
      %v5868 = vunpack.c.l.b16 %v5836
      %v5869 = vunpack.c.l.b16 %v5837
      %v5870 = vunpack.c.l.b16 %v5838
      %v5871 = vunpack.c.l.b16 %v5839
      %v5872 = vunpack.c.l.b16 %v5840
      %v5873 = vunpack.c.l.b16 %v5841
      %v5874 = vunpack.c.l.b16 %v5842
      %v5875 = vpack.c.b16 %v5860, %v5859
      %v5876 = vpack.c.b16 %v5862, %v5861
      %v5877 = vpack.c.b16 %v5864, %v5863
      %v5878 = vpack.c.b16 %v5866, %v5865
      %v5879 = vpack.c.b16 %v5868, %v5867
      %v5880 = vpack.c.b16 %v5870, %v5869
      %v5881 = vpack.c.b16 %v5872, %v5871
      %v5882 = vpack.c.b16 %v5874, %v5873
      %5891 = vmatpush.bf16.msra.mxu0 %v5882
      %5892 = vmatpush.bf16.msra.mxu0 %v5881
      %5893 = vmatpush.bf16.msra.mxu0 %v5880
      %5894 = vmatpush.bf16.msra.mxu0 %v5879
      %5895 = vmatpush.bf16.msra.mxu0 %v5878
      %5896 = vmatpush.bf16.msra.mxu0 %v5877
      %5897 = vmatpush.bf16.msra.mxu0 %v5876
      %5898 = vmatpush.bf16.msra.mxu0 %v5875
      %5899 = vmatmul.bf16.gmra.mxu0 %v3574
      %v5900 = vpop.f32.mrf.mxu0
      %v5901 = vadd.f32 0.0, %v5900
      %v5902 = vpop.f32.mrf.mxu0
      %v5903 = vadd.f32 0.0, %v5902
      %5904 = vmatmul.bf16.gmra.mxu0 %v3575
      %v5905 = vpop.f32.mrf.mxu0
      %v5906 = vadd.f32 0.0, %v5905
      %v5907 = vpop.f32.mrf.mxu0
      %v5908 = vadd.f32 0.0, %v5907
      %5909 = vmatmul.bf16.gmra.mxu0 %v3576
      %v5910 = vpop.f32.mrf.mxu0
      %v5911 = vadd.f32 0.0, %v5910
      %v5912 = vpop.f32.mrf.mxu0
      %v5913 = vadd.f32 0.0, %v5912
      %5914 = vmatmul.bf16.gmra.mxu0 %v5825
      %v5915 = vpop.f32.mrf.mxu0
      %v5916 = vadd.f32 0.0, %v5915
      %v5917 = vpop.f32.mrf.mxu0
      %v5918 = vadd.f32 0.0, %v5917
      %5919 = vdwg.mxu0
      %v5920 = vadd.f32 %v5817, %v5901
      %v5921 = vadd.f32 %v5818, %v5903
      %v5922 = vadd.f32 %v5819, %v5906
      %v5923 = vadd.f32 %v5820, %v5908
      %v5924 = vadd.f32 %v5821, %v5911
      %v5925 = vadd.f32 %v5822, %v5913
      %v5926 = vadd.f32 %v5823, %v5916
      %v5927 = vadd.f32 %v5824, %v5918
      %v5928 = vperm.slane %v225, 1
      %v5929 = vadd.f32 %v5920, %v5928
      %v5930 = vadd.f32 %v5921, %v5928
      %v5931 = vadd.f32 %v5922, %v5928
      %v5932 = vadd.f32 %v5923, %v5928
      %v5933 = vadd.f32 %v5924, %v5928
      %v5934 = vadd.f32 %v5925, %v5928
      %v5935 = vadd.f32 %v5926, %v5928
      %v5936 = vadd.f32 %v5927, %v5928
      %v5937 = vmax.f32 %v5929, 0.0
      %v5938 = vmax.f32 %v5930, 0.0
      %v5939 = vmax.f32 %v5931, 0.0
      %v5940 = vmax.f32 %v5932, 0.0
      %v5941 = vmax.f32 %v5933, 0.0
      %v5942 = vmax.f32 %v5934, 0.0
      %v5943 = vmax.f32 %v5935, 0.0
      %v5944 = vmax.f32 %v5936, 0.0
      %v5949 = vrot.slane %v5937, 1
      %v5950 = vrot.slane %v5939, 1
      %v5951 = vrot.slane %v5941, 1
      %v5952 = vrot.slane %v5943, 1
      %v5957 = vrot.slane %v5937, 2
      %v5958 = vrot.slane %v5939, 2
      %v5959 = vrot.slane %v5941, 2
      %v5960 = vrot.slane %v5943, 2
      %v5965 = vrot.slane %v5937, 3
      %v5966 = vrot.slane %v5939, 3
      %v5967 = vrot.slane %v5941, 3
      %v5968 = vrot.slane %v5943, 3
      %v5973 = vsel %vm2498, %v5937, %v5949
      %v5974 = vsel %vm2498, %v5939, %v5950
      %v5975 = vsel %vm2498, %v5941, %v5951
      %v5976 = vsel %vm2498, %v5943, %v5952
      %v5977 = vsel %vm2507, %v5973, %v5957
      %v5978 = vsel %vm2507, %v5974, %v5958
      %v5979 = vsel %vm2507, %v5975, %v5959
      %v5980 = vsel %vm2507, %v5976, %v5960
      %v5981 = vsel %vm2516, %v5977, %v5965
      %v5982 = vsel %vm2516, %v5978, %v5966
      %v5983 = vsel %vm2516, %v5979, %v5967
      %v5984 = vsel %vm2516, %v5980, %v5968
      %v5989 = vrot.slane %v5981, 7
      %v5990 = vrot.slane %v5982, 7
      %v5991 = vrot.slane %v5983, 7
      %v5992 = vrot.slane %v5984, 7
      %v5997 = vsel %vm2498, 0.0, %v5989
      %v5998 = vsel %vm2498, 0.0, %v5990
      %v5999 = vsel %vm2498, 0.0, %v5991
      %v6000 = vsel %vm2498, 0.0, %v5992
      %v6001 = vsel %vm2534, %v5997, 0.0
      %v6002 = vsel %vm2534, %v5998, 0.0
      %v6003 = vsel %vm2534, %v5999, 0.0
      %v6004 = vsel %vm2534, %v6000, 0.0
      %v6005 = vrot.slane %v5937, 4
      %v6006 = vrot.slane %v5939, 4
      %v6007 = vrot.slane %v5941, 4
      %v6008 = vrot.slane %v5943, 4
      %v6013 = vsel %vm2498, %v5949, %v5957
      %v6014 = vsel %vm2498, %v5950, %v5958
      %v6015 = vsel %vm2498, %v5951, %v5959
      %v6016 = vsel %vm2498, %v5952, %v5960
      %v6017 = vsel %vm2507, %v6013, %v5965
      %v6018 = vsel %vm2507, %v6014, %v5966
      %v6019 = vsel %vm2507, %v6015, %v5967
      %v6020 = vsel %vm2507, %v6016, %v5968
      %v6021 = vsel %vm2516, %v6017, %v6005
      %v6022 = vsel %vm2516, %v6018, %v6006
      %v6023 = vsel %vm2516, %v6019, %v6007
      %v6024 = vsel %vm2516, %v6020, %v6008
      %v6029 = vrot.slane %v6021, 7
      %v6030 = vrot.slane %v6022, 7
      %v6031 = vrot.slane %v6023, 7
      %v6032 = vrot.slane %v6024, 7
      %v6037 = vsel %vm2498, 0.0, %v6029
      %v6038 = vsel %vm2498, 0.0, %v6030
      %v6039 = vsel %vm2498, 0.0, %v6031
      %v6040 = vsel %vm2498, 0.0, %v6032
      %v6041 = vsel %vm2534, %v6037, 0.0
      %v6042 = vsel %vm2534, %v6038, 0.0
      %v6043 = vsel %vm2534, %v6039, 0.0
      %v6044 = vsel %vm2534, %v6040, 0.0
      %v6049 = vrot.slane %v5938, 1
      %v6050 = vrot.slane %v5940, 1
      %v6051 = vrot.slane %v5942, 1
      %v6052 = vrot.slane %v5944, 1
      %v6057 = vrot.slane %v5938, 2
      %v6058 = vrot.slane %v5940, 2
      %v6059 = vrot.slane %v5942, 2
      %v6060 = vrot.slane %v5944, 2
      %v6065 = vrot.slane %v5938, 3
      %v6066 = vrot.slane %v5940, 3
      %v6067 = vrot.slane %v5942, 3
      %v6068 = vrot.slane %v5944, 3
      %v6073 = vsel %vm2498, %v5938, %v6049
      %v6074 = vsel %vm2498, %v5940, %v6050
      %v6075 = vsel %vm2498, %v5942, %v6051
      %v6076 = vsel %vm2498, %v5944, %v6052
      %v6077 = vsel %vm2507, %v6073, %v6057
      %v6078 = vsel %vm2507, %v6074, %v6058
      %v6079 = vsel %vm2507, %v6075, %v6059
      %v6080 = vsel %vm2507, %v6076, %v6060
      %v6081 = vsel %vm2516, %v6077, %v6065
      %v6082 = vsel %vm2516, %v6078, %v6066
      %v6083 = vsel %vm2516, %v6079, %v6067
      %v6084 = vsel %vm2516, %v6080, %v6068
      %v6089 = vrot.slane %v6081, 7
      %v6090 = vrot.slane %v6082, 7
      %v6091 = vrot.slane %v6083, 7
      %v6092 = vrot.slane %v6084, 7
      %v6097 = vsel %vm2498, 0.0, %v6089
      %v6098 = vsel %vm2498, 0.0, %v6090
      %v6099 = vsel %vm2498, 0.0, %v6091
      %v6100 = vsel %vm2498, 0.0, %v6092
      %v6101 = vsel %vm2534, %v6097, 0.0
      %v6102 = vsel %vm2534, %v6098, 0.0
      %v6103 = vsel %vm2534, %v6099, 0.0
      %v6104 = vsel %vm2534, %v6100, 0.0
      %v6105 = vrot.slane %v5938, 4
      %v6106 = vrot.slane %v5940, 4
      %v6107 = vrot.slane %v5942, 4
      %v6108 = vrot.slane %v5944, 4
      %v6113 = vsel %vm2498, %v6049, %v6057
      %v6114 = vsel %vm2498, %v6050, %v6058
      %v6115 = vsel %vm2498, %v6051, %v6059
      %v6116 = vsel %vm2498, %v6052, %v6060
      %v6117 = vsel %vm2507, %v6113, %v6065
      %v6118 = vsel %vm2507, %v6114, %v6066
      %v6119 = vsel %vm2507, %v6115, %v6067
      %v6120 = vsel %vm2507, %v6116, %v6068
      %v6121 = vsel %vm2516, %v6117, %v6105
      %v6122 = vsel %vm2516, %v6118, %v6106
      %v6123 = vsel %vm2516, %v6119, %v6107
      %v6124 = vsel %vm2516, %v6120, %v6108
      %v6129 = vrot.slane %v6121, 7
      %v6130 = vrot.slane %v6122, 7
      %v6131 = vrot.slane %v6123, 7
      %v6132 = vrot.slane %v6124, 7
      %v6137 = vsel %vm2498, 0.0, %v6129
      %v6138 = vsel %vm2498, 0.0, %v6130
      %v6139 = vsel %vm2498, 0.0, %v6131
      %v6140 = vsel %vm2498, 0.0, %v6132
      %v6141 = vsel %vm2534, %v6137, 0.0
      %v6142 = vsel %vm2534, %v6138, 0.0
      %v6143 = vsel %vm2534, %v6139, 0.0
      %v6144 = vsel %vm2534, %v6140, 0.0
      %v6146 = vrot.slane %v6001, 4
      %v6149 = vrot.slane %v6003, 4
      %v6151 = vsel %vm2525, 0.0, %v6146
      %v6152 = vsel %vm2525, %v6002, %v6149
      %v6153 = vpack.c.bf16 %v6152, %v6151
      %v6154 = vld [vmem:[%s3] sm:$0xf]
      %v6155 = vld [vmem:[%s3 + $0x4] sm:$0xf]
      %v6156 = vld [vmem:[%s3 + $0x8] sm:$0xf]
      %v6157 = vld [vmem:[%s3 + $0xc] sm:$0xf]
      %v6158 = vld [vmem:[%s3 + $0x10] sm:$0xf]
      %v6159 = vld [vmem:[%s3 + $0x14] sm:$0xf]
      %v6160 = vld [vmem:[%s3 + $0x18] sm:$0xf]
      %v6161 = vld [vmem:[%s3 + $0x1c] sm:$0xf]
      %v6162 = vld [vmem:[%s3 + $0x20] sm:$0xf]
      %v6163 = vld [vmem:[%s3 + $0x24] sm:$0xf]
      %v6164 = vld [vmem:[%s3 + $0x28] sm:$0xf]
      %v6165 = vld [vmem:[%s3 + $0x2c] sm:$0xf]
      %v6166 = vld [vmem:[%s3 + $0x30] sm:$0xf]
      %v6167 = vld [vmem:[%s3 + $0x34] sm:$0xf]
      %v6168 = vld [vmem:[%s3 + $0x38] sm:$0xf]
      %v6169 = vld [vmem:[%s3 + $0x3c] sm:$0xf]
      %v6171 = vrot.slane %v6041, 4
      %v6174 = vrot.slane %v6043, 4
      %v6176 = vsel %vm2525, 0.0, %v6171
      %v6177 = vsel %vm2525, %v6042, %v6174
      %v6178 = vpack.c.bf16 %v6177, %v6176
      %s6179 = scalar_lea.vmem %s3, 64
      %v6180 = vld [vmem:[%s6179] sm:$0xf]
      %v6181 = vld [vmem:[%s6179 + $0x4] sm:$0xf]
      %v6182 = vld [vmem:[%s6179 + $0x8] sm:$0xf]
      %v6183 = vld [vmem:[%s6179 + $0xc] sm:$0xf]
      %v6184 = vld [vmem:[%s6179 + $0x10] sm:$0xf]
      %v6185 = vld [vmem:[%s6179 + $0x14] sm:$0xf]
      %v6186 = vld [vmem:[%s6179 + $0x18] sm:$0xf]
      %v6187 = vld [vmem:[%s6179 + $0x1c] sm:$0xf]
      %v6188 = vld [vmem:[%s6179 + $0x20] sm:$0xf]
      %v6189 = vld [vmem:[%s6179 + $0x24] sm:$0xf]
      %v6190 = vld [vmem:[%s6179 + $0x28] sm:$0xf]
      %v6191 = vld [vmem:[%s6179 + $0x2c] sm:$0xf]
      %v6192 = vld [vmem:[%s6179 + $0x30] sm:$0xf]
      %v6193 = vld [vmem:[%s6179 + $0x34] sm:$0xf]
      %v6194 = vld [vmem:[%s6179 + $0x38] sm:$0xf]
      %v6195 = vld [vmem:[%s6179 + $0x3c] sm:$0xf]
      %v6212 = vunpack.c.l.b16 %v6180
      %v6213 = vunpack.c.l.b16 %v6181
      %v6214 = vunpack.c.l.b16 %v6182
      %v6215 = vunpack.c.l.b16 %v6183
      %v6216 = vunpack.c.l.b16 %v6184
      %v6217 = vunpack.c.l.b16 %v6185
      %v6218 = vunpack.c.l.b16 %v6186
      %v6219 = vunpack.c.l.b16 %v6187
      %v6220 = vunpack.c.l.b16 %v6188
      %v6221 = vunpack.c.l.b16 %v6189
      %v6222 = vunpack.c.l.b16 %v6190
      %v6223 = vunpack.c.l.b16 %v6191
      %v6224 = vunpack.c.l.b16 %v6192
      %v6225 = vunpack.c.l.b16 %v6193
      %v6226 = vunpack.c.l.b16 %v6194
      %v6227 = vunpack.c.l.b16 %v6195
      %v6228 = vpack.c.b16 %v6213, %v6212
      %v6229 = vpack.c.b16 %v6215, %v6214
      %v6230 = vpack.c.b16 %v6217, %v6216
      %v6231 = vpack.c.b16 %v6219, %v6218
      %v6232 = vpack.c.b16 %v6221, %v6220
      %v6233 = vpack.c.b16 %v6223, %v6222
      %v6234 = vpack.c.b16 %v6225, %v6224
      %v6235 = vpack.c.b16 %v6227, %v6226
      %6244 = vmatpush.bf16.msra.mxu0 %v6235
      %6245 = vmatpush.bf16.msra.mxu0 %v6234
      %6246 = vmatpush.bf16.msra.mxu0 %v6233
      %6247 = vmatpush.bf16.msra.mxu0 %v6232
      %6248 = vmatpush.bf16.msra.mxu0 %v6231
      %6249 = vmatpush.bf16.msra.mxu0 %v6230
      %6250 = vmatpush.bf16.msra.mxu0 %v6229
      %6251 = vmatpush.bf16.msra.mxu0 %v6228
      %6252 = vmatmul.bf16.gmra.mxu0 %v6178
      %v6253 = vpop.f32.mrf.mxu0
      %v6254 = vadd.f32 0.0, %v6253
      %v6255 = vpop.f32.mrf.mxu0
      %v6256 = vadd.f32 0.0, %v6255
      %6257 = vdwg.mxu0
      %v6274 = vunpack.c.l.b16 %v6154
      %v6275 = vunpack.c.l.b16 %v6155
      %v6276 = vunpack.c.l.b16 %v6156
      %v6277 = vunpack.c.l.b16 %v6157
      %v6278 = vunpack.c.l.b16 %v6158
      %v6279 = vunpack.c.l.b16 %v6159
      %v6280 = vunpack.c.l.b16 %v6160
      %v6281 = vunpack.c.l.b16 %v6161
      %v6282 = vunpack.c.l.b16 %v6162
      %v6283 = vunpack.c.l.b16 %v6163
      %v6284 = vunpack.c.l.b16 %v6164
      %v6285 = vunpack.c.l.b16 %v6165
      %v6286 = vunpack.c.l.b16 %v6166
      %v6287 = vunpack.c.l.b16 %v6167
      %v6288 = vunpack.c.l.b16 %v6168
      %v6289 = vunpack.c.l.b16 %v6169
      %v6290 = vpack.c.b16 %v6275, %v6274
      %v6291 = vpack.c.b16 %v6277, %v6276
      %v6292 = vpack.c.b16 %v6279, %v6278
      %v6293 = vpack.c.b16 %v6281, %v6280
      %v6294 = vpack.c.b16 %v6283, %v6282
      %v6295 = vpack.c.b16 %v6285, %v6284
      %v6296 = vpack.c.b16 %v6287, %v6286
      %v6297 = vpack.c.b16 %v6289, %v6288
      %6306 = vmatpush.bf16.msra.mxu0 %v6297
      %6307 = vmatpush.bf16.msra.mxu0 %v6296
      %6308 = vmatpush.bf16.msra.mxu0 %v6295
      %6309 = vmatpush.bf16.msra.mxu0 %v6294
      %6310 = vmatpush.bf16.msra.mxu0 %v6293
      %6311 = vmatpush.bf16.msra.mxu0 %v6292
      %6312 = vmatpush.bf16.msra.mxu0 %v6291
      %6313 = vmatpush.bf16.msra.mxu0 %v6290
      %6314 = vmatmul.bf16.gmra.mxu0 %v6153
      %v6315 = vpop.f32.mrf.mxu0
      %v6316 = vadd.f32 %v6254, %v6315
      %v6317 = vpop.f32.mrf.mxu0
      %v6318 = vadd.f32 %v6256, %v6317
      %6319 = vdwg.mxu0
      %v6321 = vrot.slane %v6001, 5
      %v6324 = vrot.slane %v6002, 1
      %v6326 = vrot.slane %v6003, 5
      %v6328 = vsel %vm2525, %v3257, %v6321
      %v6329 = vsel %vm2525, %v6324, %v6326
      %v6330 = vpack.c.bf16 %v6329, %v6328
      %s6331 = scalar_lea.vmem %s3, 128
      %v6332 = vld [vmem:[%s6331] sm:$0xf]
      %v6333 = vld [vmem:[%s6331 + $0x4] sm:$0xf]
      %v6334 = vld [vmem:[%s6331 + $0x8] sm:$0xf]
      %v6335 = vld [vmem:[%s6331 + $0xc] sm:$0xf]
      %v6336 = vld [vmem:[%s6331 + $0x10] sm:$0xf]
      %v6337 = vld [vmem:[%s6331 + $0x14] sm:$0xf]
      %v6338 = vld [vmem:[%s6331 + $0x18] sm:$0xf]
      %v6339 = vld [vmem:[%s6331 + $0x1c] sm:$0xf]
      %v6340 = vld [vmem:[%s6331 + $0x20] sm:$0xf]
      %v6341 = vld [vmem:[%s6331 + $0x24] sm:$0xf]
      %v6342 = vld [vmem:[%s6331 + $0x28] sm:$0xf]
      %v6343 = vld [vmem:[%s6331 + $0x2c] sm:$0xf]
      %v6344 = vld [vmem:[%s6331 + $0x30] sm:$0xf]
      %v6345 = vld [vmem:[%s6331 + $0x34] sm:$0xf]
      %v6346 = vld [vmem:[%s6331 + $0x38] sm:$0xf]
      %v6347 = vld [vmem:[%s6331 + $0x3c] sm:$0xf]
      %v6364 = vunpack.c.l.b16 %v6332
      %v6365 = vunpack.c.l.b16 %v6333
      %v6366 = vunpack.c.l.b16 %v6334
      %v6367 = vunpack.c.l.b16 %v6335
      %v6368 = vunpack.c.l.b16 %v6336
      %v6369 = vunpack.c.l.b16 %v6337
      %v6370 = vunpack.c.l.b16 %v6338
      %v6371 = vunpack.c.l.b16 %v6339
      %v6372 = vunpack.c.l.b16 %v6340
      %v6373 = vunpack.c.l.b16 %v6341
      %v6374 = vunpack.c.l.b16 %v6342
      %v6375 = vunpack.c.l.b16 %v6343
      %v6376 = vunpack.c.l.b16 %v6344
      %v6377 = vunpack.c.l.b16 %v6345
      %v6378 = vunpack.c.l.b16 %v6346
      %v6379 = vunpack.c.l.b16 %v6347
      %v6380 = vpack.c.b16 %v6365, %v6364
      %v6381 = vpack.c.b16 %v6367, %v6366
      %v6382 = vpack.c.b16 %v6369, %v6368
      %v6383 = vpack.c.b16 %v6371, %v6370
      %v6384 = vpack.c.b16 %v6373, %v6372
      %v6385 = vpack.c.b16 %v6375, %v6374
      %v6386 = vpack.c.b16 %v6377, %v6376
      %v6387 = vpack.c.b16 %v6379, %v6378
      %6396 = vmatpush.bf16.msra.mxu0 %v6387
      %6397 = vmatpush.bf16.msra.mxu0 %v6386
      %6398 = vmatpush.bf16.msra.mxu0 %v6385
      %6399 = vmatpush.bf16.msra.mxu0 %v6384
      %6400 = vmatpush.bf16.msra.mxu0 %v6383
      %6401 = vmatpush.bf16.msra.mxu0 %v6382
      %6402 = vmatpush.bf16.msra.mxu0 %v6381
      %6403 = vmatpush.bf16.msra.mxu0 %v6380
      %6404 = vmatmul.bf16.gmra.mxu0 %v6330
      %v6405 = vpop.f32.mrf.mxu0
      %v6406 = vadd.f32 0.0, %v6405
      %v6407 = vpop.f32.mrf.mxu0
      %v6408 = vadd.f32 0.0, %v6407
      %6409 = vdwg.mxu0
      %v6410 = vadd.f32 %v6316, %v6406
      %v6411 = vadd.f32 %v6318, %v6408
      %v6412 = vrot.slane %v6041, 5
      %v6415 = vrot.slane %v6042, 1
      %v6417 = vrot.slane %v6043, 5
      %v6419 = vsel %vm2525, %v3257, %v6412
      %v6420 = vsel %vm2525, %v6415, %v6417
      %v6421 = vpack.c.bf16 %v6420, %v6419
      %s6422 = scalar_lea.vmem %s3, 192
      %v6423 = vld [vmem:[%s6422] sm:$0xf]
      %v6424 = vld [vmem:[%s6422 + $0x4] sm:$0xf]
      %v6425 = vld [vmem:[%s6422 + $0x8] sm:$0xf]
      %v6426 = vld [vmem:[%s6422 + $0xc] sm:$0xf]
      %v6427 = vld [vmem:[%s6422 + $0x10] sm:$0xf]
      %v6428 = vld [vmem:[%s6422 + $0x14] sm:$0xf]
      %v6429 = vld [vmem:[%s6422 + $0x18] sm:$0xf]
      %v6430 = vld [vmem:[%s6422 + $0x1c] sm:$0xf]
      %v6431 = vld [vmem:[%s6422 + $0x20] sm:$0xf]
      %v6432 = vld [vmem:[%s6422 + $0x24] sm:$0xf]
      %v6433 = vld [vmem:[%s6422 + $0x28] sm:$0xf]
      %v6434 = vld [vmem:[%s6422 + $0x2c] sm:$0xf]
      %v6435 = vld [vmem:[%s6422 + $0x30] sm:$0xf]
      %v6436 = vld [vmem:[%s6422 + $0x34] sm:$0xf]
      %v6437 = vld [vmem:[%s6422 + $0x38] sm:$0xf]
      %v6438 = vld [vmem:[%s6422 + $0x3c] sm:$0xf]
      %v6455 = vunpack.c.l.b16 %v6423
      %v6456 = vunpack.c.l.b16 %v6424
      %v6457 = vunpack.c.l.b16 %v6425
      %v6458 = vunpack.c.l.b16 %v6426
      %v6459 = vunpack.c.l.b16 %v6427
      %v6460 = vunpack.c.l.b16 %v6428
      %v6461 = vunpack.c.l.b16 %v6429
      %v6462 = vunpack.c.l.b16 %v6430
      %v6463 = vunpack.c.l.b16 %v6431
      %v6464 = vunpack.c.l.b16 %v6432
      %v6465 = vunpack.c.l.b16 %v6433
      %v6466 = vunpack.c.l.b16 %v6434
      %v6467 = vunpack.c.l.b16 %v6435
      %v6468 = vunpack.c.l.b16 %v6436
      %v6469 = vunpack.c.l.b16 %v6437
      %v6470 = vunpack.c.l.b16 %v6438
      %v6471 = vpack.c.b16 %v6456, %v6455
      %v6472 = vpack.c.b16 %v6458, %v6457
      %v6473 = vpack.c.b16 %v6460, %v6459
      %v6474 = vpack.c.b16 %v6462, %v6461
      %v6475 = vpack.c.b16 %v6464, %v6463
      %v6476 = vpack.c.b16 %v6466, %v6465
      %v6477 = vpack.c.b16 %v6468, %v6467
      %v6478 = vpack.c.b16 %v6470, %v6469
      %6487 = vmatpush.bf16.msra.mxu0 %v6478
      %6488 = vmatpush.bf16.msra.mxu0 %v6477
      %6489 = vmatpush.bf16.msra.mxu0 %v6476
      %6490 = vmatpush.bf16.msra.mxu0 %v6475
      %6491 = vmatpush.bf16.msra.mxu0 %v6474
      %6492 = vmatpush.bf16.msra.mxu0 %v6473
      %6493 = vmatpush.bf16.msra.mxu0 %v6472
      %6494 = vmatpush.bf16.msra.mxu0 %v6471
      %6495 = vmatmul.bf16.gmra.mxu0 %v6421
      %v6496 = vpop.f32.mrf.mxu0
      %v6497 = vadd.f32 0.0, %v6496
      %v6498 = vpop.f32.mrf.mxu0
      %v6499 = vadd.f32 0.0, %v6498
      %6500 = vdwg.mxu0
      %v6501 = vadd.f32 %v6410, %v6497
      %v6502 = vadd.f32 %v6411, %v6499
      %v6504 = vrot.slane %v6001, 6
      %v6506 = vrot.slane %v6002, 2
      %v6508 = vrot.slane %v6003, 6
      %v6510 = vsel %vm2525, %v3542, %v6504
      %v6511 = vsel %vm2525, %v6506, %v6508
      %v6512 = vpack.c.bf16 %v6511, %v6510
      %s6513 = scalar_lea.vmem %s3, 256
      %v6514 = vld [vmem:[%s6513] sm:$0xf]
      %v6515 = vld [vmem:[%s6513 + $0x4] sm:$0xf]
      %v6516 = vld [vmem:[%s6513 + $0x8] sm:$0xf]
      %v6517 = vld [vmem:[%s6513 + $0xc] sm:$0xf]
      %v6518 = vld [vmem:[%s6513 + $0x10] sm:$0xf]
      %v6519 = vld [vmem:[%s6513 + $0x14] sm:$0xf]
      %v6520 = vld [vmem:[%s6513 + $0x18] sm:$0xf]
      %v6521 = vld [vmem:[%s6513 + $0x1c] sm:$0xf]
      %v6522 = vld [vmem:[%s6513 + $0x20] sm:$0xf]
      %v6523 = vld [vmem:[%s6513 + $0x24] sm:$0xf]
      %v6524 = vld [vmem:[%s6513 + $0x28] sm:$0xf]
      %v6525 = vld [vmem:[%s6513 + $0x2c] sm:$0xf]
      %v6526 = vld [vmem:[%s6513 + $0x30] sm:$0xf]
      %v6527 = vld [vmem:[%s6513 + $0x34] sm:$0xf]
      %v6528 = vld [vmem:[%s6513 + $0x38] sm:$0xf]
      %v6529 = vld [vmem:[%s6513 + $0x3c] sm:$0xf]
      %v6546 = vunpack.c.l.b16 %v6514
      %v6547 = vunpack.c.l.b16 %v6515
      %v6548 = vunpack.c.l.b16 %v6516
      %v6549 = vunpack.c.l.b16 %v6517
      %v6550 = vunpack.c.l.b16 %v6518
      %v6551 = vunpack.c.l.b16 %v6519
      %v6552 = vunpack.c.l.b16 %v6520
      %v6553 = vunpack.c.l.b16 %v6521
      %v6554 = vunpack.c.l.b16 %v6522
      %v6555 = vunpack.c.l.b16 %v6523
      %v6556 = vunpack.c.l.b16 %v6524
      %v6557 = vunpack.c.l.b16 %v6525
      %v6558 = vunpack.c.l.b16 %v6526
      %v6559 = vunpack.c.l.b16 %v6527
      %v6560 = vunpack.c.l.b16 %v6528
      %v6561 = vunpack.c.l.b16 %v6529
      %v6562 = vpack.c.b16 %v6547, %v6546
      %v6563 = vpack.c.b16 %v6549, %v6548
      %v6564 = vpack.c.b16 %v6551, %v6550
      %v6565 = vpack.c.b16 %v6553, %v6552
      %v6566 = vpack.c.b16 %v6555, %v6554
      %v6567 = vpack.c.b16 %v6557, %v6556
      %v6568 = vpack.c.b16 %v6559, %v6558
      %v6569 = vpack.c.b16 %v6561, %v6560
      %6578 = vmatpush.bf16.msra.mxu0 %v6569
      %6579 = vmatpush.bf16.msra.mxu0 %v6568
      %6580 = vmatpush.bf16.msra.mxu0 %v6567
      %6581 = vmatpush.bf16.msra.mxu0 %v6566
      %6582 = vmatpush.bf16.msra.mxu0 %v6565
      %6583 = vmatpush.bf16.msra.mxu0 %v6564
      %6584 = vmatpush.bf16.msra.mxu0 %v6563
      %6585 = vmatpush.bf16.msra.mxu0 %v6562
      %6586 = vmatmul.bf16.gmra.mxu0 %v6512
      %v6587 = vpop.f32.mrf.mxu0
      %v6588 = vadd.f32 0.0, %v6587
      %v6589 = vpop.f32.mrf.mxu0
      %v6590 = vadd.f32 0.0, %v6589
      %6591 = vdwg.mxu0
      %v6592 = vadd.f32 %v6501, %v6588
      %v6593 = vadd.f32 %v6502, %v6590
      %v6595 = vrot.slane %v6101, 4
      %v6598 = vrot.slane %v6103, 4
      %v6600 = vsel %vm2525, 0.0, %v6595
      %v6601 = vsel %vm2525, %v6102, %v6598
      %v6602 = vpack.c.bf16 %v6601, %v6600
      %s6603 = scalar_lea.vmem %s3, 320
      %v6604 = vld [vmem:[%s6603] sm:$0xf]
      %v6605 = vld [vmem:[%s6603 + $0x4] sm:$0xf]
      %v6606 = vld [vmem:[%s6603 + $0x8] sm:$0xf]
      %v6607 = vld [vmem:[%s6603 + $0xc] sm:$0xf]
      %v6608 = vld [vmem:[%s6603 + $0x10] sm:$0xf]
      %v6609 = vld [vmem:[%s6603 + $0x14] sm:$0xf]
      %v6610 = vld [vmem:[%s6603 + $0x18] sm:$0xf]
      %v6611 = vld [vmem:[%s6603 + $0x1c] sm:$0xf]
      %v6612 = vld [vmem:[%s6603 + $0x20] sm:$0xf]
      %v6613 = vld [vmem:[%s6603 + $0x24] sm:$0xf]
      %v6614 = vld [vmem:[%s6603 + $0x28] sm:$0xf]
      %v6615 = vld [vmem:[%s6603 + $0x2c] sm:$0xf]
      %v6616 = vld [vmem:[%s6603 + $0x30] sm:$0xf]
      %v6617 = vld [vmem:[%s6603 + $0x34] sm:$0xf]
      %v6618 = vld [vmem:[%s6603 + $0x38] sm:$0xf]
      %v6619 = vld [vmem:[%s6603 + $0x3c] sm:$0xf]
      %v6636 = vunpack.c.l.b16 %v6604
      %v6637 = vunpack.c.l.b16 %v6605
      %v6638 = vunpack.c.l.b16 %v6606
      %v6639 = vunpack.c.l.b16 %v6607
      %v6640 = vunpack.c.l.b16 %v6608
      %v6641 = vunpack.c.l.b16 %v6609
      %v6642 = vunpack.c.l.b16 %v6610
      %v6643 = vunpack.c.l.b16 %v6611
      %v6644 = vunpack.c.l.b16 %v6612
      %v6645 = vunpack.c.l.b16 %v6613
      %v6646 = vunpack.c.l.b16 %v6614
      %v6647 = vunpack.c.l.b16 %v6615
      %v6648 = vunpack.c.l.b16 %v6616
      %v6649 = vunpack.c.l.b16 %v6617
      %v6650 = vunpack.c.l.b16 %v6618
      %v6651 = vunpack.c.l.b16 %v6619
      %v6652 = vpack.c.b16 %v6637, %v6636
      %v6653 = vpack.c.b16 %v6639, %v6638
      %v6654 = vpack.c.b16 %v6641, %v6640
      %v6655 = vpack.c.b16 %v6643, %v6642
      %v6656 = vpack.c.b16 %v6645, %v6644
      %v6657 = vpack.c.b16 %v6647, %v6646
      %v6658 = vpack.c.b16 %v6649, %v6648
      %v6659 = vpack.c.b16 %v6651, %v6650
      %6668 = vmatpush.bf16.msra.mxu0 %v6659
      %6669 = vmatpush.bf16.msra.mxu0 %v6658
      %6670 = vmatpush.bf16.msra.mxu0 %v6657
      %6671 = vmatpush.bf16.msra.mxu0 %v6656
      %6672 = vmatpush.bf16.msra.mxu0 %v6655
      %6673 = vmatpush.bf16.msra.mxu0 %v6654
      %6674 = vmatpush.bf16.msra.mxu0 %v6653
      %6675 = vmatpush.bf16.msra.mxu0 %v6652
      %6676 = vmatmul.bf16.gmra.mxu0 %v6602
      %v6677 = vpop.f32.mrf.mxu0
      %v6678 = vadd.f32 0.0, %v6677
      %v6679 = vpop.f32.mrf.mxu0
      %v6680 = vadd.f32 0.0, %v6679
      %6681 = vdwg.mxu0
      %v6682 = vadd.f32 %v6592, %v6678
      %v6683 = vadd.f32 %v6593, %v6680
      %v6685 = vrot.slane %v6141, 4
      %v6688 = vrot.slane %v6143, 4
      %v6690 = vsel %vm2525, 0.0, %v6685
      %v6691 = vsel %vm2525, %v6142, %v6688
      %v6692 = vpack.c.bf16 %v6691, %v6690
      %s6693 = scalar_lea.vmem %s3, 384
      %v6694 = vld [vmem:[%s6693] sm:$0xf]
      %v6695 = vld [vmem:[%s6693 + $0x4] sm:$0xf]
      %v6696 = vld [vmem:[%s6693 + $0x8] sm:$0xf]
      %v6697 = vld [vmem:[%s6693 + $0xc] sm:$0xf]
      %v6698 = vld [vmem:[%s6693 + $0x10] sm:$0xf]
      %v6699 = vld [vmem:[%s6693 + $0x14] sm:$0xf]
      %v6700 = vld [vmem:[%s6693 + $0x18] sm:$0xf]
      %v6701 = vld [vmem:[%s6693 + $0x1c] sm:$0xf]
      %v6702 = vld [vmem:[%s6693 + $0x20] sm:$0xf]
      %v6703 = vld [vmem:[%s6693 + $0x24] sm:$0xf]
      %v6704 = vld [vmem:[%s6693 + $0x28] sm:$0xf]
      %v6705 = vld [vmem:[%s6693 + $0x2c] sm:$0xf]
      %v6706 = vld [vmem:[%s6693 + $0x30] sm:$0xf]
      %v6707 = vld [vmem:[%s6693 + $0x34] sm:$0xf]
      %v6708 = vld [vmem:[%s6693 + $0x38] sm:$0xf]
      %v6709 = vld [vmem:[%s6693 + $0x3c] sm:$0xf]
      %v6726 = vunpack.c.l.b16 %v6694
      %v6727 = vunpack.c.l.b16 %v6695
      %v6728 = vunpack.c.l.b16 %v6696
      %v6729 = vunpack.c.l.b16 %v6697
      %v6730 = vunpack.c.l.b16 %v6698
      %v6731 = vunpack.c.l.b16 %v6699
      %v6732 = vunpack.c.l.b16 %v6700
      %v6733 = vunpack.c.l.b16 %v6701
      %v6734 = vunpack.c.l.b16 %v6702
      %v6735 = vunpack.c.l.b16 %v6703
      %v6736 = vunpack.c.l.b16 %v6704
      %v6737 = vunpack.c.l.b16 %v6705
      %v6738 = vunpack.c.l.b16 %v6706
      %v6739 = vunpack.c.l.b16 %v6707
      %v6740 = vunpack.c.l.b16 %v6708
      %v6741 = vunpack.c.l.b16 %v6709
      %v6742 = vpack.c.b16 %v6727, %v6726
      %v6743 = vpack.c.b16 %v6729, %v6728
      %v6744 = vpack.c.b16 %v6731, %v6730
      %v6745 = vpack.c.b16 %v6733, %v6732
      %v6746 = vpack.c.b16 %v6735, %v6734
      %v6747 = vpack.c.b16 %v6737, %v6736
      %v6748 = vpack.c.b16 %v6739, %v6738
      %v6749 = vpack.c.b16 %v6741, %v6740
      %6758 = vmatpush.bf16.msra.mxu0 %v6749
      %6759 = vmatpush.bf16.msra.mxu0 %v6748
      %6760 = vmatpush.bf16.msra.mxu0 %v6747
      %6761 = vmatpush.bf16.msra.mxu0 %v6746
      %6762 = vmatpush.bf16.msra.mxu0 %v6745
      %6763 = vmatpush.bf16.msra.mxu0 %v6744
      %6764 = vmatpush.bf16.msra.mxu0 %v6743
      %6765 = vmatpush.bf16.msra.mxu0 %v6742
      %6766 = vmatmul.bf16.gmra.mxu0 %v6692
      %v6767 = vpop.f32.mrf.mxu0
      %v6768 = vadd.f32 0.0, %v6767
      %v6769 = vpop.f32.mrf.mxu0
      %v6770 = vadd.f32 0.0, %v6769
      %6771 = vdwg.mxu0
      %v6772 = vadd.f32 %v6682, %v6768
      %v6773 = vadd.f32 %v6683, %v6770
      %v6774 = vrot.slane %v6101, 5
      %v6777 = vrot.slane %v6102, 1
      %v6779 = vrot.slane %v6103, 5
      %v6781 = vsel %vm2525, %v3257, %v6774
      %v6782 = vsel %vm2525, %v6777, %v6779
      %v6783 = vpack.c.bf16 %v6782, %v6781
      %s6784 = scalar_lea.vmem %s3, 448
      %v6785 = vld [vmem:[%s6784] sm:$0xf]
      %v6786 = vld [vmem:[%s6784 + $0x4] sm:$0xf]
      %v6787 = vld [vmem:[%s6784 + $0x8] sm:$0xf]
      %v6788 = vld [vmem:[%s6784 + $0xc] sm:$0xf]
      %v6789 = vld [vmem:[%s6784 + $0x10] sm:$0xf]
      %v6790 = vld [vmem:[%s6784 + $0x14] sm:$0xf]
      %v6791 = vld [vmem:[%s6784 + $0x18] sm:$0xf]
      %v6792 = vld [vmem:[%s6784 + $0x1c] sm:$0xf]
      %v6793 = vld [vmem:[%s6784 + $0x20] sm:$0xf]
      %v6794 = vld [vmem:[%s6784 + $0x24] sm:$0xf]
      %v6795 = vld [vmem:[%s6784 + $0x28] sm:$0xf]
      %v6796 = vld [vmem:[%s6784 + $0x2c] sm:$0xf]
      %v6797 = vld [vmem:[%s6784 + $0x30] sm:$0xf]
      %v6798 = vld [vmem:[%s6784 + $0x34] sm:$0xf]
      %v6799 = vld [vmem:[%s6784 + $0x38] sm:$0xf]
      %v6800 = vld [vmem:[%s6784 + $0x3c] sm:$0xf]
      %v6817 = vunpack.c.l.b16 %v6785
      %v6818 = vunpack.c.l.b16 %v6786
      %v6819 = vunpack.c.l.b16 %v6787
      %v6820 = vunpack.c.l.b16 %v6788
      %v6821 = vunpack.c.l.b16 %v6789
      %v6822 = vunpack.c.l.b16 %v6790
      %v6823 = vunpack.c.l.b16 %v6791
      %v6824 = vunpack.c.l.b16 %v6792
      %v6825 = vunpack.c.l.b16 %v6793
      %v6826 = vunpack.c.l.b16 %v6794
      %v6827 = vunpack.c.l.b16 %v6795
      %v6828 = vunpack.c.l.b16 %v6796
      %v6829 = vunpack.c.l.b16 %v6797
      %v6830 = vunpack.c.l.b16 %v6798
      %v6831 = vunpack.c.l.b16 %v6799
      %v6832 = vunpack.c.l.b16 %v6800
      %v6833 = vpack.c.b16 %v6818, %v6817
      %v6834 = vpack.c.b16 %v6820, %v6819
      %v6835 = vpack.c.b16 %v6822, %v6821
      %v6836 = vpack.c.b16 %v6824, %v6823
      %v6837 = vpack.c.b16 %v6826, %v6825
      %v6838 = vpack.c.b16 %v6828, %v6827
      %v6839 = vpack.c.b16 %v6830, %v6829
      %v6840 = vpack.c.b16 %v6832, %v6831
      %6849 = vmatpush.bf16.msra.mxu0 %v6840
      %6850 = vmatpush.bf16.msra.mxu0 %v6839
      %6851 = vmatpush.bf16.msra.mxu0 %v6838
      %6852 = vmatpush.bf16.msra.mxu0 %v6837
      %6853 = vmatpush.bf16.msra.mxu0 %v6836
      %6854 = vmatpush.bf16.msra.mxu0 %v6835
      %6855 = vmatpush.bf16.msra.mxu0 %v6834
      %6856 = vmatpush.bf16.msra.mxu0 %v6833
      %6857 = vmatmul.bf16.gmra.mxu0 %v6783
      %v6858 = vpop.f32.mrf.mxu0
      %v6859 = vadd.f32 0.0, %v6858
      %v6860 = vpop.f32.mrf.mxu0
      %v6861 = vadd.f32 0.0, %v6860
      %6862 = vdwg.mxu0
      %v6863 = vadd.f32 %v6772, %v6859
      %v6864 = vadd.f32 %v6773, %v6861
      %v6865 = vrot.slane %v6141, 5
      %v6868 = vrot.slane %v6142, 1
      %v6870 = vrot.slane %v6143, 5
      %v6872 = vsel %vm2525, %v3257, %v6865
      %v6873 = vsel %vm2525, %v6868, %v6870
      %v6874 = vpack.c.bf16 %v6873, %v6872
      %s6875 = scalar_lea.vmem %s3, 512
      %v6876 = vld [vmem:[%s6875] sm:$0xf]
      %v6877 = vld [vmem:[%s6875 + $0x4] sm:$0xf]
      %v6878 = vld [vmem:[%s6875 + $0x8] sm:$0xf]
      %v6879 = vld [vmem:[%s6875 + $0xc] sm:$0xf]
      %v6880 = vld [vmem:[%s6875 + $0x10] sm:$0xf]
      %v6881 = vld [vmem:[%s6875 + $0x14] sm:$0xf]
      %v6882 = vld [vmem:[%s6875 + $0x18] sm:$0xf]
      %v6883 = vld [vmem:[%s6875 + $0x1c] sm:$0xf]
      %v6884 = vld [vmem:[%s6875 + $0x20] sm:$0xf]
      %v6885 = vld [vmem:[%s6875 + $0x24] sm:$0xf]
      %v6886 = vld [vmem:[%s6875 + $0x28] sm:$0xf]
      %v6887 = vld [vmem:[%s6875 + $0x2c] sm:$0xf]
      %v6888 = vld [vmem:[%s6875 + $0x30] sm:$0xf]
      %v6889 = vld [vmem:[%s6875 + $0x34] sm:$0xf]
      %v6890 = vld [vmem:[%s6875 + $0x38] sm:$0xf]
      %v6891 = vld [vmem:[%s6875 + $0x3c] sm:$0xf]
      %v6908 = vunpack.c.l.b16 %v6876
      %v6909 = vunpack.c.l.b16 %v6877
      %v6910 = vunpack.c.l.b16 %v6878
      %v6911 = vunpack.c.l.b16 %v6879
      %v6912 = vunpack.c.l.b16 %v6880
      %v6913 = vunpack.c.l.b16 %v6881
      %v6914 = vunpack.c.l.b16 %v6882
      %v6915 = vunpack.c.l.b16 %v6883
      %v6916 = vunpack.c.l.b16 %v6884
      %v6917 = vunpack.c.l.b16 %v6885
      %v6918 = vunpack.c.l.b16 %v6886
      %v6919 = vunpack.c.l.b16 %v6887
      %v6920 = vunpack.c.l.b16 %v6888
      %v6921 = vunpack.c.l.b16 %v6889
      %v6922 = vunpack.c.l.b16 %v6890
      %v6923 = vunpack.c.l.b16 %v6891
      %v6924 = vpack.c.b16 %v6909, %v6908
      %v6925 = vpack.c.b16 %v6911, %v6910
      %v6926 = vpack.c.b16 %v6913, %v6912
      %v6927 = vpack.c.b16 %v6915, %v6914
      %v6928 = vpack.c.b16 %v6917, %v6916
      %v6929 = vpack.c.b16 %v6919, %v6918
      %v6930 = vpack.c.b16 %v6921, %v6920
      %v6931 = vpack.c.b16 %v6923, %v6922
      %6940 = vmatpush.bf16.msra.mxu0 %v6931
      %6941 = vmatpush.bf16.msra.mxu0 %v6930
      %6942 = vmatpush.bf16.msra.mxu0 %v6929
      %6943 = vmatpush.bf16.msra.mxu0 %v6928
      %6944 = vmatpush.bf16.msra.mxu0 %v6927
      %6945 = vmatpush.bf16.msra.mxu0 %v6926
      %6946 = vmatpush.bf16.msra.mxu0 %v6925
      %6947 = vmatpush.bf16.msra.mxu0 %v6924
      %6948 = vmatmul.bf16.gmra.mxu0 %v6874
      %v6949 = vpop.f32.mrf.mxu0
      %v6950 = vadd.f32 0.0, %v6949
      %v6951 = vpop.f32.mrf.mxu0
      %v6952 = vadd.f32 0.0, %v6951
      %6953 = vdwg.mxu0
      %v6954 = vadd.f32 %v6863, %v6950
      %v6955 = vadd.f32 %v6864, %v6952
      %v6956 = vrot.slane %v6101, 6
      %v6958 = vrot.slane %v6102, 2
      %v6960 = vrot.slane %v6103, 6
      %v6962 = vsel %vm2525, %v3542, %v6956
      %v6963 = vsel %vm2525, %v6958, %v6960
      %v6964 = vpack.c.bf16 %v6963, %v6962
      %s6965 = scalar_lea.vmem %s3, 576
      %v6966 = vld [vmem:[%s6965] sm:$0xf]
      %v6967 = vld [vmem:[%s6965 + $0x4] sm:$0xf]
      %v6968 = vld [vmem:[%s6965 + $0x8] sm:$0xf]
      %v6969 = vld [vmem:[%s6965 + $0xc] sm:$0xf]
      %v6970 = vld [vmem:[%s6965 + $0x10] sm:$0xf]
      %v6971 = vld [vmem:[%s6965 + $0x14] sm:$0xf]
      %v6972 = vld [vmem:[%s6965 + $0x18] sm:$0xf]
      %v6973 = vld [vmem:[%s6965 + $0x1c] sm:$0xf]
      %v6974 = vld [vmem:[%s6965 + $0x20] sm:$0xf]
      %v6975 = vld [vmem:[%s6965 + $0x24] sm:$0xf]
      %v6976 = vld [vmem:[%s6965 + $0x28] sm:$0xf]
      %v6977 = vld [vmem:[%s6965 + $0x2c] sm:$0xf]
      %v6978 = vld [vmem:[%s6965 + $0x30] sm:$0xf]
      %v6979 = vld [vmem:[%s6965 + $0x34] sm:$0xf]
      %v6980 = vld [vmem:[%s6965 + $0x38] sm:$0xf]
      %v6981 = vld [vmem:[%s6965 + $0x3c] sm:$0xf]
      %v6998 = vunpack.c.l.b16 %v6966
      %v6999 = vunpack.c.l.b16 %v6967
      %v7000 = vunpack.c.l.b16 %v6968
      %v7001 = vunpack.c.l.b16 %v6969
      %v7002 = vunpack.c.l.b16 %v6970
      %v7003 = vunpack.c.l.b16 %v6971
      %v7004 = vunpack.c.l.b16 %v6972
      %v7005 = vunpack.c.l.b16 %v6973
      %v7006 = vunpack.c.l.b16 %v6974
      %v7007 = vunpack.c.l.b16 %v6975
      %v7008 = vunpack.c.l.b16 %v6976
      %v7009 = vunpack.c.l.b16 %v6977
      %v7010 = vunpack.c.l.b16 %v6978
      %v7011 = vunpack.c.l.b16 %v6979
      %v7012 = vunpack.c.l.b16 %v6980
      %v7013 = vunpack.c.l.b16 %v6981
      %v7014 = vpack.c.b16 %v6999, %v6998
      %v7015 = vpack.c.b16 %v7001, %v7000
      %v7016 = vpack.c.b16 %v7003, %v7002
      %v7017 = vpack.c.b16 %v7005, %v7004
      %v7018 = vpack.c.b16 %v7007, %v7006
      %v7019 = vpack.c.b16 %v7009, %v7008
      %v7020 = vpack.c.b16 %v7011, %v7010
      %v7021 = vpack.c.b16 %v7013, %v7012
      %7030 = vmatpush.bf16.msra.mxu0 %v7021
      %7031 = vmatpush.bf16.msra.mxu0 %v7020
      %7032 = vmatpush.bf16.msra.mxu0 %v7019
      %7033 = vmatpush.bf16.msra.mxu0 %v7018
      %7034 = vmatpush.bf16.msra.mxu0 %v7017
      %7035 = vmatpush.bf16.msra.mxu0 %v7016
      %7036 = vmatpush.bf16.msra.mxu0 %v7015
      %7037 = vmatpush.bf16.msra.mxu0 %v7014
      %7038 = vmatmul.bf16.gmra.mxu0 %v6964
      %v7039 = vpop.f32.mrf.mxu0
      %v7040 = vadd.f32 0.0, %v7039
      %v7041 = vpop.f32.mrf.mxu0
      %v7042 = vadd.f32 0.0, %v7041
      %7043 = vdwg.mxu0
      %v7044 = vadd.f32 %v6954, %v7040
      %v7045 = vadd.f32 %v6955, %v7042
      %v7046 = vrot.slane %v6002, 4
      %v7049 = vrot.slane %v6004, 4
      %v7051 = vsel %vm2525, %v6001, %v7046
      %v7052 = vsel %vm2525, %v6003, %v7049
      %v7053 = vpack.c.bf16 %v7052, %v7051
      %s7054 = scalar_lea.vmem %s3, 640
      %v7055 = vld [vmem:[%s7054] sm:$0xf]
      %v7056 = vld [vmem:[%s7054 + $0x4] sm:$0xf]
      %v7057 = vld [vmem:[%s7054 + $0x8] sm:$0xf]
      %v7058 = vld [vmem:[%s7054 + $0xc] sm:$0xf]
      %v7059 = vld [vmem:[%s7054 + $0x10] sm:$0xf]
      %v7060 = vld [vmem:[%s7054 + $0x14] sm:$0xf]
      %v7061 = vld [vmem:[%s7054 + $0x18] sm:$0xf]
      %v7062 = vld [vmem:[%s7054 + $0x1c] sm:$0xf]
      %v7063 = vld [vmem:[%s7054 + $0x20] sm:$0xf]
      %v7064 = vld [vmem:[%s7054 + $0x24] sm:$0xf]
      %v7065 = vld [vmem:[%s7054 + $0x28] sm:$0xf]
      %v7066 = vld [vmem:[%s7054 + $0x2c] sm:$0xf]
      %v7067 = vld [vmem:[%s7054 + $0x30] sm:$0xf]
      %v7068 = vld [vmem:[%s7054 + $0x34] sm:$0xf]
      %v7069 = vld [vmem:[%s7054 + $0x38] sm:$0xf]
      %v7070 = vld [vmem:[%s7054 + $0x3c] sm:$0xf]
      %v7087 = vunpack.c.l.b16 %v7055
      %v7088 = vunpack.c.l.b16 %v7056
      %v7089 = vunpack.c.l.b16 %v7057
      %v7090 = vunpack.c.l.b16 %v7058
      %v7091 = vunpack.c.l.b16 %v7059
      %v7092 = vunpack.c.l.b16 %v7060
      %v7093 = vunpack.c.l.b16 %v7061
      %v7094 = vunpack.c.l.b16 %v7062
      %v7095 = vunpack.c.l.b16 %v7063
      %v7096 = vunpack.c.l.b16 %v7064
      %v7097 = vunpack.c.l.b16 %v7065
      %v7098 = vunpack.c.l.b16 %v7066
      %v7099 = vunpack.c.l.b16 %v7067
      %v7100 = vunpack.c.l.b16 %v7068
      %v7101 = vunpack.c.l.b16 %v7069
      %v7102 = vunpack.c.l.b16 %v7070
      %v7103 = vpack.c.b16 %v7088, %v7087
      %v7104 = vpack.c.b16 %v7090, %v7089
      %v7105 = vpack.c.b16 %v7092, %v7091
      %v7106 = vpack.c.b16 %v7094, %v7093
      %v7107 = vpack.c.b16 %v7096, %v7095
      %v7108 = vpack.c.b16 %v7098, %v7097
      %v7109 = vpack.c.b16 %v7100, %v7099
      %v7110 = vpack.c.b16 %v7102, %v7101
      %7119 = vmatpush.bf16.msra.mxu0 %v7110
      %7120 = vmatpush.bf16.msra.mxu0 %v7109
      %7121 = vmatpush.bf16.msra.mxu0 %v7108
      %7122 = vmatpush.bf16.msra.mxu0 %v7107
      %7123 = vmatpush.bf16.msra.mxu0 %v7106
      %7124 = vmatpush.bf16.msra.mxu0 %v7105
      %7125 = vmatpush.bf16.msra.mxu0 %v7104
      %7126 = vmatpush.bf16.msra.mxu0 %v7103
      %7127 = vmatmul.bf16.gmra.mxu0 %v7053
      %v7128 = vpop.f32.mrf.mxu0
      %v7129 = vadd.f32 0.0, %v7128
      %v7130 = vpop.f32.mrf.mxu0
      %v7131 = vadd.f32 0.0, %v7130
      %7132 = vdwg.mxu0
      %v7133 = vadd.f32 %v7044, %v7129
      %v7134 = vadd.f32 %v7045, %v7131
      %v7135 = vrot.slane %v6042, 4
      %v7138 = vrot.slane %v6044, 4
      %v7140 = vsel %vm2525, %v6041, %v7135
      %v7141 = vsel %vm2525, %v6043, %v7138
      %v7142 = vpack.c.bf16 %v7141, %v7140
      %s7143 = scalar_lea.vmem %s3, 704
      %v7144 = vld [vmem:[%s7143] sm:$0xf]
      %v7145 = vld [vmem:[%s7143 + $0x4] sm:$0xf]
      %v7146 = vld [vmem:[%s7143 + $0x8] sm:$0xf]
      %v7147 = vld [vmem:[%s7143 + $0xc] sm:$0xf]
      %v7148 = vld [vmem:[%s7143 + $0x10] sm:$0xf]
      %v7149 = vld [vmem:[%s7143 + $0x14] sm:$0xf]
      %v7150 = vld [vmem:[%s7143 + $0x18] sm:$0xf]
      %v7151 = vld [vmem:[%s7143 + $0x1c] sm:$0xf]
      %v7152 = vld [vmem:[%s7143 + $0x20] sm:$0xf]
      %v7153 = vld [vmem:[%s7143 + $0x24] sm:$0xf]
      %v7154 = vld [vmem:[%s7143 + $0x28] sm:$0xf]
      %v7155 = vld [vmem:[%s7143 + $0x2c] sm:$0xf]
      %v7156 = vld [vmem:[%s7143 + $0x30] sm:$0xf]
      %v7157 = vld [vmem:[%s7143 + $0x34] sm:$0xf]
      %v7158 = vld [vmem:[%s7143 + $0x38] sm:$0xf]
      %v7159 = vld [vmem:[%s7143 + $0x3c] sm:$0xf]
      %v7176 = vunpack.c.l.b16 %v7144
      %v7177 = vunpack.c.l.b16 %v7145
      %v7178 = vunpack.c.l.b16 %v7146
      %v7179 = vunpack.c.l.b16 %v7147
      %v7180 = vunpack.c.l.b16 %v7148
      %v7181 = vunpack.c.l.b16 %v7149
      %v7182 = vunpack.c.l.b16 %v7150
      %v7183 = vunpack.c.l.b16 %v7151
      %v7184 = vunpack.c.l.b16 %v7152
      %v7185 = vunpack.c.l.b16 %v7153
      %v7186 = vunpack.c.l.b16 %v7154
      %v7187 = vunpack.c.l.b16 %v7155
      %v7188 = vunpack.c.l.b16 %v7156
      %v7189 = vunpack.c.l.b16 %v7157
      %v7190 = vunpack.c.l.b16 %v7158
      %v7191 = vunpack.c.l.b16 %v7159
      %v7192 = vpack.c.b16 %v7177, %v7176
      %v7193 = vpack.c.b16 %v7179, %v7178
      %v7194 = vpack.c.b16 %v7181, %v7180
      %v7195 = vpack.c.b16 %v7183, %v7182
      %v7196 = vpack.c.b16 %v7185, %v7184
      %v7197 = vpack.c.b16 %v7187, %v7186
      %v7198 = vpack.c.b16 %v7189, %v7188
      %v7199 = vpack.c.b16 %v7191, %v7190
      %7208 = vmatpush.bf16.msra.mxu0 %v7199
      %7209 = vmatpush.bf16.msra.mxu0 %v7198
      %7210 = vmatpush.bf16.msra.mxu0 %v7197
      %7211 = vmatpush.bf16.msra.mxu0 %v7196
      %7212 = vmatpush.bf16.msra.mxu0 %v7195
      %7213 = vmatpush.bf16.msra.mxu0 %v7194
      %7214 = vmatpush.bf16.msra.mxu0 %v7193
      %7215 = vmatpush.bf16.msra.mxu0 %v7192
      %7216 = vmatmul.bf16.gmra.mxu0 %v7142
      %v7217 = vpop.f32.mrf.mxu0
      %v7218 = vadd.f32 0.0, %v7217
      %v7219 = vpop.f32.mrf.mxu0
      %v7220 = vadd.f32 0.0, %v7219
      %7221 = vdwg.mxu0
      %v7222 = vadd.f32 %v7133, %v7218
      %v7223 = vadd.f32 %v7134, %v7220
      %v7224 = vrot.slane %v6001, 1
      %v7226 = vrot.slane %v6002, 5
      %v7228 = vrot.slane %v6003, 1
      %v7230 = vrot.slane %v6004, 5
      %v7232 = vsel %vm2525, %v7224, %v7226
      %v7233 = vsel %vm2525, %v7228, %v7230
      %v7234 = vpack.c.bf16 %v7233, %v7232
      %s7235 = scalar_lea.vmem %s3, 768
      %v7236 = vld [vmem:[%s7235] sm:$0xf]
      %v7237 = vld [vmem:[%s7235 + $0x4] sm:$0xf]
      %v7238 = vld [vmem:[%s7235 + $0x8] sm:$0xf]
      %v7239 = vld [vmem:[%s7235 + $0xc] sm:$0xf]
      %v7240 = vld [vmem:[%s7235 + $0x10] sm:$0xf]
      %v7241 = vld [vmem:[%s7235 + $0x14] sm:$0xf]
      %v7242 = vld [vmem:[%s7235 + $0x18] sm:$0xf]
      %v7243 = vld [vmem:[%s7235 + $0x1c] sm:$0xf]
      %v7244 = vld [vmem:[%s7235 + $0x20] sm:$0xf]
      %v7245 = vld [vmem:[%s7235 + $0x24] sm:$0xf]
      %v7246 = vld [vmem:[%s7235 + $0x28] sm:$0xf]
      %v7247 = vld [vmem:[%s7235 + $0x2c] sm:$0xf]
      %v7248 = vld [vmem:[%s7235 + $0x30] sm:$0xf]
      %v7249 = vld [vmem:[%s7235 + $0x34] sm:$0xf]
      %v7250 = vld [vmem:[%s7235 + $0x38] sm:$0xf]
      %v7251 = vld [vmem:[%s7235 + $0x3c] sm:$0xf]
      %v7268 = vunpack.c.l.b16 %v7236
      %v7269 = vunpack.c.l.b16 %v7237
      %v7270 = vunpack.c.l.b16 %v7238
      %v7271 = vunpack.c.l.b16 %v7239
      %v7272 = vunpack.c.l.b16 %v7240
      %v7273 = vunpack.c.l.b16 %v7241
      %v7274 = vunpack.c.l.b16 %v7242
      %v7275 = vunpack.c.l.b16 %v7243
      %v7276 = vunpack.c.l.b16 %v7244
      %v7277 = vunpack.c.l.b16 %v7245
      %v7278 = vunpack.c.l.b16 %v7246
      %v7279 = vunpack.c.l.b16 %v7247
      %v7280 = vunpack.c.l.b16 %v7248
      %v7281 = vunpack.c.l.b16 %v7249
      %v7282 = vunpack.c.l.b16 %v7250
      %v7283 = vunpack.c.l.b16 %v7251
      %v7284 = vpack.c.b16 %v7269, %v7268
      %v7285 = vpack.c.b16 %v7271, %v7270
      %v7286 = vpack.c.b16 %v7273, %v7272
      %v7287 = vpack.c.b16 %v7275, %v7274
      %v7288 = vpack.c.b16 %v7277, %v7276
      %v7289 = vpack.c.b16 %v7279, %v7278
      %v7290 = vpack.c.b16 %v7281, %v7280
      %v7291 = vpack.c.b16 %v7283, %v7282
      %7300 = vmatpush.bf16.msra.mxu0 %v7291
      %7301 = vmatpush.bf16.msra.mxu0 %v7290
      %7302 = vmatpush.bf16.msra.mxu0 %v7289
      %7303 = vmatpush.bf16.msra.mxu0 %v7288
      %7304 = vmatpush.bf16.msra.mxu0 %v7287
      %7305 = vmatpush.bf16.msra.mxu0 %v7286
      %7306 = vmatpush.bf16.msra.mxu0 %v7285
      %7307 = vmatpush.bf16.msra.mxu0 %v7284
      %7308 = vmatmul.bf16.gmra.mxu0 %v7234
      %v7309 = vpop.f32.mrf.mxu0
      %v7310 = vadd.f32 0.0, %v7309
      %v7311 = vpop.f32.mrf.mxu0
      %v7312 = vadd.f32 0.0, %v7311
      %7313 = vdwg.mxu0
      %v7314 = vadd.f32 %v7222, %v7310
      %v7315 = vadd.f32 %v7223, %v7312
      %v7316 = vrot.slane %v6041, 1
      %v7318 = vrot.slane %v6042, 5
      %v7320 = vrot.slane %v6043, 1
      %v7322 = vrot.slane %v6044, 5
      %v7324 = vsel %vm2525, %v7316, %v7318
      %v7325 = vsel %vm2525, %v7320, %v7322
      %v7326 = vpack.c.bf16 %v7325, %v7324
      %s7327 = scalar_lea.vmem %s3, 832
      %v7328 = vld [vmem:[%s7327] sm:$0xf]
      %v7329 = vld [vmem:[%s7327 + $0x4] sm:$0xf]
      %v7330 = vld [vmem:[%s7327 + $0x8] sm:$0xf]
      %v7331 = vld [vmem:[%s7327 + $0xc] sm:$0xf]
      %v7332 = vld [vmem:[%s7327 + $0x10] sm:$0xf]
      %v7333 = vld [vmem:[%s7327 + $0x14] sm:$0xf]
      %v7334 = vld [vmem:[%s7327 + $0x18] sm:$0xf]
      %v7335 = vld [vmem:[%s7327 + $0x1c] sm:$0xf]
      %v7336 = vld [vmem:[%s7327 + $0x20] sm:$0xf]
      %v7337 = vld [vmem:[%s7327 + $0x24] sm:$0xf]
      %v7338 = vld [vmem:[%s7327 + $0x28] sm:$0xf]
      %v7339 = vld [vmem:[%s7327 + $0x2c] sm:$0xf]
      %v7340 = vld [vmem:[%s7327 + $0x30] sm:$0xf]
      %v7341 = vld [vmem:[%s7327 + $0x34] sm:$0xf]
      %v7342 = vld [vmem:[%s7327 + $0x38] sm:$0xf]
      %v7343 = vld [vmem:[%s7327 + $0x3c] sm:$0xf]
      %v7360 = vunpack.c.l.b16 %v7328
      %v7361 = vunpack.c.l.b16 %v7329
      %v7362 = vunpack.c.l.b16 %v7330
      %v7363 = vunpack.c.l.b16 %v7331
      %v7364 = vunpack.c.l.b16 %v7332
      %v7365 = vunpack.c.l.b16 %v7333
      %v7366 = vunpack.c.l.b16 %v7334
      %v7367 = vunpack.c.l.b16 %v7335
      %v7368 = vunpack.c.l.b16 %v7336
      %v7369 = vunpack.c.l.b16 %v7337
      %v7370 = vunpack.c.l.b16 %v7338
      %v7371 = vunpack.c.l.b16 %v7339
      %v7372 = vunpack.c.l.b16 %v7340
      %v7373 = vunpack.c.l.b16 %v7341
      %v7374 = vunpack.c.l.b16 %v7342
      %v7375 = vunpack.c.l.b16 %v7343
      %v7376 = vpack.c.b16 %v7361, %v7360
      %v7377 = vpack.c.b16 %v7363, %v7362
      %v7378 = vpack.c.b16 %v7365, %v7364
      %v7379 = vpack.c.b16 %v7367, %v7366
      %v7380 = vpack.c.b16 %v7369, %v7368
      %v7381 = vpack.c.b16 %v7371, %v7370
      %v7382 = vpack.c.b16 %v7373, %v7372
      %v7383 = vpack.c.b16 %v7375, %v7374
      %7392 = vmatpush.bf16.msra.mxu0 %v7383
      %7393 = vmatpush.bf16.msra.mxu0 %v7382
      %7394 = vmatpush.bf16.msra.mxu0 %v7381
      %7395 = vmatpush.bf16.msra.mxu0 %v7380
      %7396 = vmatpush.bf16.msra.mxu0 %v7379
      %7397 = vmatpush.bf16.msra.mxu0 %v7378
      %7398 = vmatpush.bf16.msra.mxu0 %v7377
      %7399 = vmatpush.bf16.msra.mxu0 %v7376
      %7400 = vmatmul.bf16.gmra.mxu0 %v7326
      %v7401 = vpop.f32.mrf.mxu0
      %v7402 = vadd.f32 0.0, %v7401
      %v7403 = vpop.f32.mrf.mxu0
      %v7404 = vadd.f32 0.0, %v7403
      %7405 = vdwg.mxu0
      %v7406 = vadd.f32 %v7314, %v7402
      %v7407 = vadd.f32 %v7315, %v7404
      %v7408 = vrot.slane %v6001, 2
      %v7410 = vrot.slane %v6002, 6
      %v7412 = vrot.slane %v6003, 2
      %v7414 = vrot.slane %v6004, 6
      %v7416 = vsel %vm2525, %v7408, %v7410
      %v7417 = vsel %vm2525, %v7412, %v7414
      %v7418 = vpack.c.bf16 %v7417, %v7416
      %s7419 = scalar_lea.vmem %s3, 896
      %v7420 = vld [vmem:[%s7419] sm:$0xf]
      %v7421 = vld [vmem:[%s7419 + $0x4] sm:$0xf]
      %v7422 = vld [vmem:[%s7419 + $0x8] sm:$0xf]
      %v7423 = vld [vmem:[%s7419 + $0xc] sm:$0xf]
      %v7424 = vld [vmem:[%s7419 + $0x10] sm:$0xf]
      %v7425 = vld [vmem:[%s7419 + $0x14] sm:$0xf]
      %v7426 = vld [vmem:[%s7419 + $0x18] sm:$0xf]
      %v7427 = vld [vmem:[%s7419 + $0x1c] sm:$0xf]
      %v7428 = vld [vmem:[%s7419 + $0x20] sm:$0xf]
      %v7429 = vld [vmem:[%s7419 + $0x24] sm:$0xf]
      %v7430 = vld [vmem:[%s7419 + $0x28] sm:$0xf]
      %v7431 = vld [vmem:[%s7419 + $0x2c] sm:$0xf]
      %v7432 = vld [vmem:[%s7419 + $0x30] sm:$0xf]
      %v7433 = vld [vmem:[%s7419 + $0x34] sm:$0xf]
      %v7434 = vld [vmem:[%s7419 + $0x38] sm:$0xf]
      %v7435 = vld [vmem:[%s7419 + $0x3c] sm:$0xf]
      %v7452 = vunpack.c.l.b16 %v7420
      %v7453 = vunpack.c.l.b16 %v7421
      %v7454 = vunpack.c.l.b16 %v7422
      %v7455 = vunpack.c.l.b16 %v7423
      %v7456 = vunpack.c.l.b16 %v7424
      %v7457 = vunpack.c.l.b16 %v7425
      %v7458 = vunpack.c.l.b16 %v7426
      %v7459 = vunpack.c.l.b16 %v7427
      %v7460 = vunpack.c.l.b16 %v7428
      %v7461 = vunpack.c.l.b16 %v7429
      %v7462 = vunpack.c.l.b16 %v7430
      %v7463 = vunpack.c.l.b16 %v7431
      %v7464 = vunpack.c.l.b16 %v7432
      %v7465 = vunpack.c.l.b16 %v7433
      %v7466 = vunpack.c.l.b16 %v7434
      %v7467 = vunpack.c.l.b16 %v7435
      %v7468 = vpack.c.b16 %v7453, %v7452
      %v7469 = vpack.c.b16 %v7455, %v7454
      %v7470 = vpack.c.b16 %v7457, %v7456
      %v7471 = vpack.c.b16 %v7459, %v7458
      %v7472 = vpack.c.b16 %v7461, %v7460
      %v7473 = vpack.c.b16 %v7463, %v7462
      %v7474 = vpack.c.b16 %v7465, %v7464
      %v7475 = vpack.c.b16 %v7467, %v7466
      %7484 = vmatpush.bf16.msra.mxu0 %v7475
      %7485 = vmatpush.bf16.msra.mxu0 %v7474
      %7486 = vmatpush.bf16.msra.mxu0 %v7473
      %7487 = vmatpush.bf16.msra.mxu0 %v7472
      %7488 = vmatpush.bf16.msra.mxu0 %v7471
      %7489 = vmatpush.bf16.msra.mxu0 %v7470
      %7490 = vmatpush.bf16.msra.mxu0 %v7469
      %7491 = vmatpush.bf16.msra.mxu0 %v7468
      %7492 = vmatmul.bf16.gmra.mxu0 %v7418
      %v7493 = vpop.f32.mrf.mxu0
      %v7494 = vadd.f32 0.0, %v7493
      %v7495 = vpop.f32.mrf.mxu0
      %v7496 = vadd.f32 0.0, %v7495
      %7497 = vdwg.mxu0
      %v7498 = vadd.f32 %v7406, %v7494
      %v7499 = vadd.f32 %v7407, %v7496
      %v7500 = vrot.slane %v6102, 4
      %v7503 = vrot.slane %v6104, 4
      %v7505 = vsel %vm2525, %v6101, %v7500
      %v7506 = vsel %vm2525, %v6103, %v7503
      %v7507 = vpack.c.bf16 %v7506, %v7505
      %s7508 = scalar_lea.vmem %s3, 960
      %v7509 = vld [vmem:[%s7508] sm:$0xf]
      %v7510 = vld [vmem:[%s7508 + $0x4] sm:$0xf]
      %v7511 = vld [vmem:[%s7508 + $0x8] sm:$0xf]
      %v7512 = vld [vmem:[%s7508 + $0xc] sm:$0xf]
      %v7513 = vld [vmem:[%s7508 + $0x10] sm:$0xf]
      %v7514 = vld [vmem:[%s7508 + $0x14] sm:$0xf]
      %v7515 = vld [vmem:[%s7508 + $0x18] sm:$0xf]
      %v7516 = vld [vmem:[%s7508 + $0x1c] sm:$0xf]
      %v7517 = vld [vmem:[%s7508 + $0x20] sm:$0xf]
      %v7518 = vld [vmem:[%s7508 + $0x24] sm:$0xf]
      %v7519 = vld [vmem:[%s7508 + $0x28] sm:$0xf]
      %v7520 = vld [vmem:[%s7508 + $0x2c] sm:$0xf]
      %v7521 = vld [vmem:[%s7508 + $0x30] sm:$0xf]
      %v7522 = vld [vmem:[%s7508 + $0x34] sm:$0xf]
      %v7523 = vld [vmem:[%s7508 + $0x38] sm:$0xf]
      %v7524 = vld [vmem:[%s7508 + $0x3c] sm:$0xf]
      %v7541 = vunpack.c.l.b16 %v7509
      %v7542 = vunpack.c.l.b16 %v7510
      %v7543 = vunpack.c.l.b16 %v7511
      %v7544 = vunpack.c.l.b16 %v7512
      %v7545 = vunpack.c.l.b16 %v7513
      %v7546 = vunpack.c.l.b16 %v7514
      %v7547 = vunpack.c.l.b16 %v7515
      %v7548 = vunpack.c.l.b16 %v7516
      %v7549 = vunpack.c.l.b16 %v7517
      %v7550 = vunpack.c.l.b16 %v7518
      %v7551 = vunpack.c.l.b16 %v7519
      %v7552 = vunpack.c.l.b16 %v7520
      %v7553 = vunpack.c.l.b16 %v7521
      %v7554 = vunpack.c.l.b16 %v7522
      %v7555 = vunpack.c.l.b16 %v7523
      %v7556 = vunpack.c.l.b16 %v7524
      %v7557 = vpack.c.b16 %v7542, %v7541
      %v7558 = vpack.c.b16 %v7544, %v7543
      %v7559 = vpack.c.b16 %v7546, %v7545
      %v7560 = vpack.c.b16 %v7548, %v7547
      %v7561 = vpack.c.b16 %v7550, %v7549
      %v7562 = vpack.c.b16 %v7552, %v7551
      %v7563 = vpack.c.b16 %v7554, %v7553
      %v7564 = vpack.c.b16 %v7556, %v7555
      %7573 = vmatpush.bf16.msra.mxu0 %v7564
      %7574 = vmatpush.bf16.msra.mxu0 %v7563
      %7575 = vmatpush.bf16.msra.mxu0 %v7562
      %7576 = vmatpush.bf16.msra.mxu0 %v7561
      %7577 = vmatpush.bf16.msra.mxu0 %v7560
      %7578 = vmatpush.bf16.msra.mxu0 %v7559
      %7579 = vmatpush.bf16.msra.mxu0 %v7558
      %7580 = vmatpush.bf16.msra.mxu0 %v7557
      %7581 = vmatmul.bf16.gmra.mxu0 %v7507
      %v7582 = vpop.f32.mrf.mxu0
      %v7583 = vadd.f32 0.0, %v7582
      %v7584 = vpop.f32.mrf.mxu0
      %v7585 = vadd.f32 0.0, %v7584
      %7586 = vdwg.mxu0
      %v7587 = vadd.f32 %v7498, %v7583
      %v7588 = vadd.f32 %v7499, %v7585
      %v7589 = vrot.slane %v6142, 4
      %v7592 = vrot.slane %v6144, 4
      %v7594 = vsel %vm2525, %v6141, %v7589
      %v7595 = vsel %vm2525, %v6143, %v7592
      %v7596 = vpack.c.bf16 %v7595, %v7594
      %s7597 = scalar_lea.vmem %s3, 1024
      %v7598 = vld [vmem:[%s7597] sm:$0xf]
      %v7599 = vld [vmem:[%s7597 + $0x4] sm:$0xf]
      %v7600 = vld [vmem:[%s7597 + $0x8] sm:$0xf]
      %v7601 = vld [vmem:[%s7597 + $0xc] sm:$0xf]
      %v7602 = vld [vmem:[%s7597 + $0x10] sm:$0xf]
      %v7603 = vld [vmem:[%s7597 + $0x14] sm:$0xf]
      %v7604 = vld [vmem:[%s7597 + $0x18] sm:$0xf]
      %v7605 = vld [vmem:[%s7597 + $0x1c] sm:$0xf]
      %v7606 = vld [vmem:[%s7597 + $0x20] sm:$0xf]
      %v7607 = vld [vmem:[%s7597 + $0x24] sm:$0xf]
      %v7608 = vld [vmem:[%s7597 + $0x28] sm:$0xf]
      %v7609 = vld [vmem:[%s7597 + $0x2c] sm:$0xf]
      %v7610 = vld [vmem:[%s7597 + $0x30] sm:$0xf]
      %v7611 = vld [vmem:[%s7597 + $0x34] sm:$0xf]
      %v7612 = vld [vmem:[%s7597 + $0x38] sm:$0xf]
      %v7613 = vld [vmem:[%s7597 + $0x3c] sm:$0xf]
      %v7630 = vunpack.c.l.b16 %v7598
      %v7631 = vunpack.c.l.b16 %v7599
      %v7632 = vunpack.c.l.b16 %v7600
      %v7633 = vunpack.c.l.b16 %v7601
      %v7634 = vunpack.c.l.b16 %v7602
      %v7635 = vunpack.c.l.b16 %v7603
      %v7636 = vunpack.c.l.b16 %v7604
      %v7637 = vunpack.c.l.b16 %v7605
      %v7638 = vunpack.c.l.b16 %v7606
      %v7639 = vunpack.c.l.b16 %v7607
      %v7640 = vunpack.c.l.b16 %v7608
      %v7641 = vunpack.c.l.b16 %v7609
      %v7642 = vunpack.c.l.b16 %v7610
      %v7643 = vunpack.c.l.b16 %v7611
      %v7644 = vunpack.c.l.b16 %v7612
      %v7645 = vunpack.c.l.b16 %v7613
      %v7646 = vpack.c.b16 %v7631, %v7630
      %v7647 = vpack.c.b16 %v7633, %v7632
      %v7648 = vpack.c.b16 %v7635, %v7634
      %v7649 = vpack.c.b16 %v7637, %v7636
      %v7650 = vpack.c.b16 %v7639, %v7638
      %v7651 = vpack.c.b16 %v7641, %v7640
      %v7652 = vpack.c.b16 %v7643, %v7642
      %v7653 = vpack.c.b16 %v7645, %v7644
      %7662 = vmatpush.bf16.msra.mxu0 %v7653
      %7663 = vmatpush.bf16.msra.mxu0 %v7652
      %7664 = vmatpush.bf16.msra.mxu0 %v7651
      %7665 = vmatpush.bf16.msra.mxu0 %v7650
      %7666 = vmatpush.bf16.msra.mxu0 %v7649
      %7667 = vmatpush.bf16.msra.mxu0 %v7648
      %7668 = vmatpush.bf16.msra.mxu0 %v7647
      %7669 = vmatpush.bf16.msra.mxu0 %v7646
      %7670 = vmatmul.bf16.gmra.mxu0 %v7596
      %v7671 = vpop.f32.mrf.mxu0
      %v7672 = vadd.f32 0.0, %v7671
      %v7673 = vpop.f32.mrf.mxu0
      %v7674 = vadd.f32 0.0, %v7673
      %7675 = vdwg.mxu0
      %v7676 = vadd.f32 %v7587, %v7672
      %v7677 = vadd.f32 %v7588, %v7674
      %v7678 = vrot.slane %v6101, 1
      %v7680 = vrot.slane %v6102, 5
      %v7682 = vrot.slane %v6103, 1
      %v7684 = vrot.slane %v6104, 5
      %v7686 = vsel %vm2525, %v7678, %v7680
      %v7687 = vsel %vm2525, %v7682, %v7684
      %v7688 = vpack.c.bf16 %v7687, %v7686
      %s7689 = scalar_lea.vmem %s3, 1088
      %v7690 = vld [vmem:[%s7689] sm:$0xf]
      %v7691 = vld [vmem:[%s7689 + $0x4] sm:$0xf]
      %v7692 = vld [vmem:[%s7689 + $0x8] sm:$0xf]
      %v7693 = vld [vmem:[%s7689 + $0xc] sm:$0xf]
      %v7694 = vld [vmem:[%s7689 + $0x10] sm:$0xf]
      %v7695 = vld [vmem:[%s7689 + $0x14] sm:$0xf]
      %v7696 = vld [vmem:[%s7689 + $0x18] sm:$0xf]
      %v7697 = vld [vmem:[%s7689 + $0x1c] sm:$0xf]
      %v7698 = vld [vmem:[%s7689 + $0x20] sm:$0xf]
      %v7699 = vld [vmem:[%s7689 + $0x24] sm:$0xf]
      %v7700 = vld [vmem:[%s7689 + $0x28] sm:$0xf]
      %v7701 = vld [vmem:[%s7689 + $0x2c] sm:$0xf]
      %v7702 = vld [vmem:[%s7689 + $0x30] sm:$0xf]
      %v7703 = vld [vmem:[%s7689 + $0x34] sm:$0xf]
      %v7704 = vld [vmem:[%s7689 + $0x38] sm:$0xf]
      %v7705 = vld [vmem:[%s7689 + $0x3c] sm:$0xf]
      %v7722 = vunpack.c.l.b16 %v7690
      %v7723 = vunpack.c.l.b16 %v7691
      %v7724 = vunpack.c.l.b16 %v7692
      %v7725 = vunpack.c.l.b16 %v7693
      %v7726 = vunpack.c.l.b16 %v7694
      %v7727 = vunpack.c.l.b16 %v7695
      %v7728 = vunpack.c.l.b16 %v7696
      %v7729 = vunpack.c.l.b16 %v7697
      %v7730 = vunpack.c.l.b16 %v7698
      %v7731 = vunpack.c.l.b16 %v7699
      %v7732 = vunpack.c.l.b16 %v7700
      %v7733 = vunpack.c.l.b16 %v7701
      %v7734 = vunpack.c.l.b16 %v7702
      %v7735 = vunpack.c.l.b16 %v7703
      %v7736 = vunpack.c.l.b16 %v7704
      %v7737 = vunpack.c.l.b16 %v7705
      %v7738 = vpack.c.b16 %v7723, %v7722
      %v7739 = vpack.c.b16 %v7725, %v7724
      %v7740 = vpack.c.b16 %v7727, %v7726
      %v7741 = vpack.c.b16 %v7729, %v7728
      %v7742 = vpack.c.b16 %v7731, %v7730
      %v7743 = vpack.c.b16 %v7733, %v7732
      %v7744 = vpack.c.b16 %v7735, %v7734
      %v7745 = vpack.c.b16 %v7737, %v7736
      %7754 = vmatpush.bf16.msra.mxu0 %v7745
      %7755 = vmatpush.bf16.msra.mxu0 %v7744
      %7756 = vmatpush.bf16.msra.mxu0 %v7743
      %7757 = vmatpush.bf16.msra.mxu0 %v7742
      %7758 = vmatpush.bf16.msra.mxu0 %v7741
      %7759 = vmatpush.bf16.msra.mxu0 %v7740
      %7760 = vmatpush.bf16.msra.mxu0 %v7739
      %7761 = vmatpush.bf16.msra.mxu0 %v7738
      %7762 = vmatmul.bf16.gmra.mxu0 %v7688
      %v7763 = vpop.f32.mrf.mxu0
      %v7764 = vadd.f32 0.0, %v7763
      %v7765 = vpop.f32.mrf.mxu0
      %v7766 = vadd.f32 0.0, %v7765
      %7767 = vdwg.mxu0
      %v7768 = vadd.f32 %v7676, %v7764
      %v7769 = vadd.f32 %v7677, %v7766
      %v7770 = vrot.slane %v6141, 1
      %v7772 = vrot.slane %v6142, 5
      %v7774 = vrot.slane %v6143, 1
      %v7776 = vrot.slane %v6144, 5
      %v7778 = vsel %vm2525, %v7770, %v7772
      %v7779 = vsel %vm2525, %v7774, %v7776
      %v7780 = vpack.c.bf16 %v7779, %v7778
      %s7781 = scalar_lea.vmem %s3, 1152
      %v7782 = vld [vmem:[%s7781] sm:$0xf]
      %v7783 = vld [vmem:[%s7781 + $0x4] sm:$0xf]
      %v7784 = vld [vmem:[%s7781 + $0x8] sm:$0xf]
      %v7785 = vld [vmem:[%s7781 + $0xc] sm:$0xf]
      %v7786 = vld [vmem:[%s7781 + $0x10] sm:$0xf]
      %v7787 = vld [vmem:[%s7781 + $0x14] sm:$0xf]
      %v7788 = vld [vmem:[%s7781 + $0x18] sm:$0xf]
      %v7789 = vld [vmem:[%s7781 + $0x1c] sm:$0xf]
      %v7790 = vld [vmem:[%s7781 + $0x20] sm:$0xf]
      %v7791 = vld [vmem:[%s7781 + $0x24] sm:$0xf]
      %v7792 = vld [vmem:[%s7781 + $0x28] sm:$0xf]
      %v7793 = vld [vmem:[%s7781 + $0x2c] sm:$0xf]
      %v7794 = vld [vmem:[%s7781 + $0x30] sm:$0xf]
      %v7795 = vld [vmem:[%s7781 + $0x34] sm:$0xf]
      %v7796 = vld [vmem:[%s7781 + $0x38] sm:$0xf]
      %v7797 = vld [vmem:[%s7781 + $0x3c] sm:$0xf]
      %v7814 = vunpack.c.l.b16 %v7782
      %v7815 = vunpack.c.l.b16 %v7783
      %v7816 = vunpack.c.l.b16 %v7784
      %v7817 = vunpack.c.l.b16 %v7785
      %v7818 = vunpack.c.l.b16 %v7786
      %v7819 = vunpack.c.l.b16 %v7787
      %v7820 = vunpack.c.l.b16 %v7788
      %v7821 = vunpack.c.l.b16 %v7789
      %v7822 = vunpack.c.l.b16 %v7790
      %v7823 = vunpack.c.l.b16 %v7791
      %v7824 = vunpack.c.l.b16 %v7792
      %v7825 = vunpack.c.l.b16 %v7793
      %v7826 = vunpack.c.l.b16 %v7794
      %v7827 = vunpack.c.l.b16 %v7795
      %v7828 = vunpack.c.l.b16 %v7796
      %v7829 = vunpack.c.l.b16 %v7797
      %v7830 = vpack.c.b16 %v7815, %v7814
      %v7831 = vpack.c.b16 %v7817, %v7816
      %v7832 = vpack.c.b16 %v7819, %v7818
      %v7833 = vpack.c.b16 %v7821, %v7820
      %v7834 = vpack.c.b16 %v7823, %v7822
      %v7835 = vpack.c.b16 %v7825, %v7824
      %v7836 = vpack.c.b16 %v7827, %v7826
      %v7837 = vpack.c.b16 %v7829, %v7828
      %7846 = vmatpush.bf16.msra.mxu0 %v7837
      %7847 = vmatpush.bf16.msra.mxu0 %v7836
      %7848 = vmatpush.bf16.msra.mxu0 %v7835
      %7849 = vmatpush.bf16.msra.mxu0 %v7834
      %7850 = vmatpush.bf16.msra.mxu0 %v7833
      %7851 = vmatpush.bf16.msra.mxu0 %v7832
      %7852 = vmatpush.bf16.msra.mxu0 %v7831
      %7853 = vmatpush.bf16.msra.mxu0 %v7830
      %7854 = vmatmul.bf16.gmra.mxu0 %v7780
      %v7855 = vpop.f32.mrf.mxu0
      %v7856 = vadd.f32 0.0, %v7855
      %v7857 = vpop.f32.mrf.mxu0
      %v7858 = vadd.f32 0.0, %v7857
      %7859 = vdwg.mxu0
      %v7860 = vadd.f32 %v7768, %v7856
      %v7861 = vadd.f32 %v7769, %v7858
      %v7862 = vrot.slane %v6101, 2
      %v7864 = vrot.slane %v6102, 6
      %v7866 = vrot.slane %v6103, 2
      %v7868 = vrot.slane %v6104, 6
      %v7870 = vsel %vm2525, %v7862, %v7864
      %v7871 = vsel %vm2525, %v7866, %v7868
      %v7872 = vpack.c.bf16 %v7871, %v7870
      %s7873 = scalar_lea.vmem %s3, 1216
      %v7874 = vld [vmem:[%s7873] sm:$0xf]
      %v7875 = vld [vmem:[%s7873 + $0x4] sm:$0xf]
      %v7876 = vld [vmem:[%s7873 + $0x8] sm:$0xf]
      %v7877 = vld [vmem:[%s7873 + $0xc] sm:$0xf]
      %v7878 = vld [vmem:[%s7873 + $0x10] sm:$0xf]
      %v7879 = vld [vmem:[%s7873 + $0x14] sm:$0xf]
      %v7880 = vld [vmem:[%s7873 + $0x18] sm:$0xf]
      %v7881 = vld [vmem:[%s7873 + $0x1c] sm:$0xf]
      %v7882 = vld [vmem:[%s7873 + $0x20] sm:$0xf]
      %v7883 = vld [vmem:[%s7873 + $0x24] sm:$0xf]
      %v7884 = vld [vmem:[%s7873 + $0x28] sm:$0xf]
      %v7885 = vld [vmem:[%s7873 + $0x2c] sm:$0xf]
      %v7886 = vld [vmem:[%s7873 + $0x30] sm:$0xf]
      %v7887 = vld [vmem:[%s7873 + $0x34] sm:$0xf]
      %v7888 = vld [vmem:[%s7873 + $0x38] sm:$0xf]
      %v7889 = vld [vmem:[%s7873 + $0x3c] sm:$0xf]
      %v7906 = vunpack.c.l.b16 %v7874
      %v7907 = vunpack.c.l.b16 %v7875
      %v7908 = vunpack.c.l.b16 %v7876
      %v7909 = vunpack.c.l.b16 %v7877
      %v7910 = vunpack.c.l.b16 %v7878
      %v7911 = vunpack.c.l.b16 %v7879
      %v7912 = vunpack.c.l.b16 %v7880
      %v7913 = vunpack.c.l.b16 %v7881
      %v7914 = vunpack.c.l.b16 %v7882
      %v7915 = vunpack.c.l.b16 %v7883
      %v7916 = vunpack.c.l.b16 %v7884
      %v7917 = vunpack.c.l.b16 %v7885
      %v7918 = vunpack.c.l.b16 %v7886
      %v7919 = vunpack.c.l.b16 %v7887
      %v7920 = vunpack.c.l.b16 %v7888
      %v7921 = vunpack.c.l.b16 %v7889
      %v7922 = vpack.c.b16 %v7907, %v7906
      %v7923 = vpack.c.b16 %v7909, %v7908
      %v7924 = vpack.c.b16 %v7911, %v7910
      %v7925 = vpack.c.b16 %v7913, %v7912
      %v7926 = vpack.c.b16 %v7915, %v7914
      %v7927 = vpack.c.b16 %v7917, %v7916
      %v7928 = vpack.c.b16 %v7919, %v7918
      %v7929 = vpack.c.b16 %v7921, %v7920
      %7938 = vmatpush.bf16.msra.mxu0 %v7929
      %7939 = vmatpush.bf16.msra.mxu0 %v7928
      %7940 = vmatpush.bf16.msra.mxu0 %v7927
      %7941 = vmatpush.bf16.msra.mxu0 %v7926
      %7942 = vmatpush.bf16.msra.mxu0 %v7925
      %7943 = vmatpush.bf16.msra.mxu0 %v7924
      %7944 = vmatpush.bf16.msra.mxu0 %v7923
      %7945 = vmatpush.bf16.msra.mxu0 %v7922
      %7946 = vmatmul.bf16.gmra.mxu0 %v7872
      %v7947 = vpop.f32.mrf.mxu0
      %v7948 = vadd.f32 0.0, %v7947
      %v7949 = vpop.f32.mrf.mxu0
      %v7950 = vadd.f32 0.0, %v7949
      %7951 = vdwg.mxu0
      %v7952 = vadd.f32 %v7860, %v7948
      %v7953 = vadd.f32 %v7861, %v7950
      %v7954 = vrot.slane 0.0, 4
      %v7956 = vsel %vm2525, %v6004, %v7954
      %v7957 = vpack.c.bf16 %v7956, %v6152
      %s7958 = scalar_lea.vmem %s3, 1280
      %v7959 = vld [vmem:[%s7958] sm:$0xf]
      %v7960 = vld [vmem:[%s7958 + $0x4] sm:$0xf]
      %v7961 = vld [vmem:[%s7958 + $0x8] sm:$0xf]
      %v7962 = vld [vmem:[%s7958 + $0xc] sm:$0xf]
      %v7963 = vld [vmem:[%s7958 + $0x10] sm:$0xf]
      %v7964 = vld [vmem:[%s7958 + $0x14] sm:$0xf]
      %v7965 = vld [vmem:[%s7958 + $0x18] sm:$0xf]
      %v7966 = vld [vmem:[%s7958 + $0x1c] sm:$0xf]
      %v7967 = vld [vmem:[%s7958 + $0x20] sm:$0xf]
      %v7968 = vld [vmem:[%s7958 + $0x24] sm:$0xf]
      %v7969 = vld [vmem:[%s7958 + $0x28] sm:$0xf]
      %v7970 = vld [vmem:[%s7958 + $0x2c] sm:$0xf]
      %v7971 = vld [vmem:[%s7958 + $0x30] sm:$0xf]
      %v7972 = vld [vmem:[%s7958 + $0x34] sm:$0xf]
      %v7973 = vld [vmem:[%s7958 + $0x38] sm:$0xf]
      %v7974 = vld [vmem:[%s7958 + $0x3c] sm:$0xf]
      %v7991 = vunpack.c.l.b16 %v7959
      %v7992 = vunpack.c.l.b16 %v7960
      %v7993 = vunpack.c.l.b16 %v7961
      %v7994 = vunpack.c.l.b16 %v7962
      %v7995 = vunpack.c.l.b16 %v7963
      %v7996 = vunpack.c.l.b16 %v7964
      %v7997 = vunpack.c.l.b16 %v7965
      %v7998 = vunpack.c.l.b16 %v7966
      %v7999 = vunpack.c.l.b16 %v7967
      %v8000 = vunpack.c.l.b16 %v7968
      %v8001 = vunpack.c.l.b16 %v7969
      %v8002 = vunpack.c.l.b16 %v7970
      %v8003 = vunpack.c.l.b16 %v7971
      %v8004 = vunpack.c.l.b16 %v7972
      %v8005 = vunpack.c.l.b16 %v7973
      %v8006 = vunpack.c.l.b16 %v7974
      %v8007 = vpack.c.b16 %v7992, %v7991
      %v8008 = vpack.c.b16 %v7994, %v7993
      %v8009 = vpack.c.b16 %v7996, %v7995
      %v8010 = vpack.c.b16 %v7998, %v7997
      %v8011 = vpack.c.b16 %v8000, %v7999
      %v8012 = vpack.c.b16 %v8002, %v8001
      %v8013 = vpack.c.b16 %v8004, %v8003
      %v8014 = vpack.c.b16 %v8006, %v8005
      %8023 = vmatpush.bf16.msra.mxu0 %v8014
      %8024 = vmatpush.bf16.msra.mxu0 %v8013
      %8025 = vmatpush.bf16.msra.mxu0 %v8012
      %8026 = vmatpush.bf16.msra.mxu0 %v8011
      %8027 = vmatpush.bf16.msra.mxu0 %v8010
      %8028 = vmatpush.bf16.msra.mxu0 %v8009
      %8029 = vmatpush.bf16.msra.mxu0 %v8008
      %8030 = vmatpush.bf16.msra.mxu0 %v8007
      %8031 = vmatmul.bf16.gmra.mxu0 %v7957
      %v8032 = vpop.f32.mrf.mxu0
      %v8033 = vadd.f32 0.0, %v8032
      %v8034 = vpop.f32.mrf.mxu0
      %v8035 = vadd.f32 0.0, %v8034
      %8036 = vdwg.mxu0
      %v8037 = vadd.f32 %v7952, %v8033
      %v8038 = vadd.f32 %v7953, %v8035
      %v8039 = vsel %vm2525, %v6044, %v7954
      %v8040 = vpack.c.bf16 %v8039, %v6177
      %s8041 = scalar_lea.vmem %s3, 1344
      %v8042 = vld [vmem:[%s8041] sm:$0xf]
      %v8043 = vld [vmem:[%s8041 + $0x4] sm:$0xf]
      %v8044 = vld [vmem:[%s8041 + $0x8] sm:$0xf]
      %v8045 = vld [vmem:[%s8041 + $0xc] sm:$0xf]
      %v8046 = vld [vmem:[%s8041 + $0x10] sm:$0xf]
      %v8047 = vld [vmem:[%s8041 + $0x14] sm:$0xf]
      %v8048 = vld [vmem:[%s8041 + $0x18] sm:$0xf]
      %v8049 = vld [vmem:[%s8041 + $0x1c] sm:$0xf]
      %v8050 = vld [vmem:[%s8041 + $0x20] sm:$0xf]
      %v8051 = vld [vmem:[%s8041 + $0x24] sm:$0xf]
      %v8052 = vld [vmem:[%s8041 + $0x28] sm:$0xf]
      %v8053 = vld [vmem:[%s8041 + $0x2c] sm:$0xf]
      %v8054 = vld [vmem:[%s8041 + $0x30] sm:$0xf]
      %v8055 = vld [vmem:[%s8041 + $0x34] sm:$0xf]
      %v8056 = vld [vmem:[%s8041 + $0x38] sm:$0xf]
      %v8057 = vld [vmem:[%s8041 + $0x3c] sm:$0xf]
      %v8074 = vunpack.c.l.b16 %v8042
      %v8075 = vunpack.c.l.b16 %v8043
      %v8076 = vunpack.c.l.b16 %v8044
      %v8077 = vunpack.c.l.b16 %v8045
      %v8078 = vunpack.c.l.b16 %v8046
      %v8079 = vunpack.c.l.b16 %v8047
      %v8080 = vunpack.c.l.b16 %v8048
      %v8081 = vunpack.c.l.b16 %v8049
      %v8082 = vunpack.c.l.b16 %v8050
      %v8083 = vunpack.c.l.b16 %v8051
      %v8084 = vunpack.c.l.b16 %v8052
      %v8085 = vunpack.c.l.b16 %v8053
      %v8086 = vunpack.c.l.b16 %v8054
      %v8087 = vunpack.c.l.b16 %v8055
      %v8088 = vunpack.c.l.b16 %v8056
      %v8089 = vunpack.c.l.b16 %v8057
      %v8090 = vpack.c.b16 %v8075, %v8074
      %v8091 = vpack.c.b16 %v8077, %v8076
      %v8092 = vpack.c.b16 %v8079, %v8078
      %v8093 = vpack.c.b16 %v8081, %v8080
      %v8094 = vpack.c.b16 %v8083, %v8082
      %v8095 = vpack.c.b16 %v8085, %v8084
      %v8096 = vpack.c.b16 %v8087, %v8086
      %v8097 = vpack.c.b16 %v8089, %v8088
      %8106 = vmatpush.bf16.msra.mxu0 %v8097
      %8107 = vmatpush.bf16.msra.mxu0 %v8096
      %8108 = vmatpush.bf16.msra.mxu0 %v8095
      %8109 = vmatpush.bf16.msra.mxu0 %v8094
      %8110 = vmatpush.bf16.msra.mxu0 %v8093
      %8111 = vmatpush.bf16.msra.mxu0 %v8092
      %8112 = vmatpush.bf16.msra.mxu0 %v8091
      %8113 = vmatpush.bf16.msra.mxu0 %v8090
      %8114 = vmatmul.bf16.gmra.mxu0 %v8040
      %v8115 = vpop.f32.mrf.mxu0
      %v8116 = vadd.f32 0.0, %v8115
      %v8117 = vpop.f32.mrf.mxu0
      %v8118 = vadd.f32 0.0, %v8117
      %8119 = vdwg.mxu0
      %v8120 = vadd.f32 %v8037, %v8116
      %v8121 = vadd.f32 %v8038, %v8118
      %v8122 = vrot.slane %v6004, 1
      %v8124 = vrot.slane 0.0, 5
      %v8126 = vsel %vm2525, %v8122, %v8124
      %v8127 = vpack.c.bf16 %v8126, %v6329
      %s8128 = scalar_lea.vmem %s3, 1408
      %v8129 = vld [vmem:[%s8128] sm:$0xf]
      %v8130 = vld [vmem:[%s8128 + $0x4] sm:$0xf]
      %v8131 = vld [vmem:[%s8128 + $0x8] sm:$0xf]
      %v8132 = vld [vmem:[%s8128 + $0xc] sm:$0xf]
      %v8133 = vld [vmem:[%s8128 + $0x10] sm:$0xf]
      %v8134 = vld [vmem:[%s8128 + $0x14] sm:$0xf]
      %v8135 = vld [vmem:[%s8128 + $0x18] sm:$0xf]
      %v8136 = vld [vmem:[%s8128 + $0x1c] sm:$0xf]
      %v8137 = vld [vmem:[%s8128 + $0x20] sm:$0xf]
      %v8138 = vld [vmem:[%s8128 + $0x24] sm:$0xf]
      %v8139 = vld [vmem:[%s8128 + $0x28] sm:$0xf]
      %v8140 = vld [vmem:[%s8128 + $0x2c] sm:$0xf]
      %v8141 = vld [vmem:[%s8128 + $0x30] sm:$0xf]
      %v8142 = vld [vmem:[%s8128 + $0x34] sm:$0xf]
      %v8143 = vld [vmem:[%s8128 + $0x38] sm:$0xf]
      %v8144 = vld [vmem:[%s8128 + $0x3c] sm:$0xf]
      %v8161 = vunpack.c.l.b16 %v8129
      %v8162 = vunpack.c.l.b16 %v8130
      %v8163 = vunpack.c.l.b16 %v8131
      %v8164 = vunpack.c.l.b16 %v8132
      %v8165 = vunpack.c.l.b16 %v8133
      %v8166 = vunpack.c.l.b16 %v8134
      %v8167 = vunpack.c.l.b16 %v8135
      %v8168 = vunpack.c.l.b16 %v8136
      %v8169 = vunpack.c.l.b16 %v8137
      %v8170 = vunpack.c.l.b16 %v8138
      %v8171 = vunpack.c.l.b16 %v8139
      %v8172 = vunpack.c.l.b16 %v8140
      %v8173 = vunpack.c.l.b16 %v8141
      %v8174 = vunpack.c.l.b16 %v8142
      %v8175 = vunpack.c.l.b16 %v8143
      %v8176 = vunpack.c.l.b16 %v8144
      %v8177 = vpack.c.b16 %v8162, %v8161
      %v8178 = vpack.c.b16 %v8164, %v8163
      %v8179 = vpack.c.b16 %v8166, %v8165
      %v8180 = vpack.c.b16 %v8168, %v8167
      %v8181 = vpack.c.b16 %v8170, %v8169
      %v8182 = vpack.c.b16 %v8172, %v8171
      %v8183 = vpack.c.b16 %v8174, %v8173
      %v8184 = vpack.c.b16 %v8176, %v8175
      %8193 = vmatpush.bf16.msra.mxu0 %v8184
      %8194 = vmatpush.bf16.msra.mxu0 %v8183
      %8195 = vmatpush.bf16.msra.mxu0 %v8182
      %8196 = vmatpush.bf16.msra.mxu0 %v8181
      %8197 = vmatpush.bf16.msra.mxu0 %v8180
      %8198 = vmatpush.bf16.msra.mxu0 %v8179
      %8199 = vmatpush.bf16.msra.mxu0 %v8178
      %8200 = vmatpush.bf16.msra.mxu0 %v8177
      %8201 = vmatmul.bf16.gmra.mxu0 %v8127
      %v8202 = vpop.f32.mrf.mxu0
      %v8203 = vadd.f32 0.0, %v8202
      %v8204 = vpop.f32.mrf.mxu0
      %v8205 = vadd.f32 0.0, %v8204
      %8206 = vdwg.mxu0
      %v8207 = vadd.f32 %v8120, %v8203
      %v8208 = vadd.f32 %v8121, %v8205
      %v8209 = vrot.slane %v6044, 1
      %v8211 = vsel %vm2525, %v8209, %v8124
      %v8212 = vpack.c.bf16 %v8211, %v6420
      %s8213 = scalar_lea.vmem %s3, 1472
      %v8214 = vld [vmem:[%s8213] sm:$0xf]
      %v8215 = vld [vmem:[%s8213 + $0x4] sm:$0xf]
      %v8216 = vld [vmem:[%s8213 + $0x8] sm:$0xf]
      %v8217 = vld [vmem:[%s8213 + $0xc] sm:$0xf]
      %v8218 = vld [vmem:[%s8213 + $0x10] sm:$0xf]
      %v8219 = vld [vmem:[%s8213 + $0x14] sm:$0xf]
      %v8220 = vld [vmem:[%s8213 + $0x18] sm:$0xf]
      %v8221 = vld [vmem:[%s8213 + $0x1c] sm:$0xf]
      %v8222 = vld [vmem:[%s8213 + $0x20] sm:$0xf]
      %v8223 = vld [vmem:[%s8213 + $0x24] sm:$0xf]
      %v8224 = vld [vmem:[%s8213 + $0x28] sm:$0xf]
      %v8225 = vld [vmem:[%s8213 + $0x2c] sm:$0xf]
      %v8226 = vld [vmem:[%s8213 + $0x30] sm:$0xf]
      %v8227 = vld [vmem:[%s8213 + $0x34] sm:$0xf]
      %v8228 = vld [vmem:[%s8213 + $0x38] sm:$0xf]
      %v8229 = vld [vmem:[%s8213 + $0x3c] sm:$0xf]
      %v8246 = vunpack.c.l.b16 %v8214
      %v8247 = vunpack.c.l.b16 %v8215
      %v8248 = vunpack.c.l.b16 %v8216
      %v8249 = vunpack.c.l.b16 %v8217
      %v8250 = vunpack.c.l.b16 %v8218
      %v8251 = vunpack.c.l.b16 %v8219
      %v8252 = vunpack.c.l.b16 %v8220
      %v8253 = vunpack.c.l.b16 %v8221
      %v8254 = vunpack.c.l.b16 %v8222
      %v8255 = vunpack.c.l.b16 %v8223
      %v8256 = vunpack.c.l.b16 %v8224
      %v8257 = vunpack.c.l.b16 %v8225
      %v8258 = vunpack.c.l.b16 %v8226
      %v8259 = vunpack.c.l.b16 %v8227
      %v8260 = vunpack.c.l.b16 %v8228
      %v8261 = vunpack.c.l.b16 %v8229
      %v8262 = vpack.c.b16 %v8247, %v8246
      %v8263 = vpack.c.b16 %v8249, %v8248
      %v8264 = vpack.c.b16 %v8251, %v8250
      %v8265 = vpack.c.b16 %v8253, %v8252
      %v8266 = vpack.c.b16 %v8255, %v8254
      %v8267 = vpack.c.b16 %v8257, %v8256
      %v8268 = vpack.c.b16 %v8259, %v8258
      %v8269 = vpack.c.b16 %v8261, %v8260
      %8278 = vmatpush.bf16.msra.mxu0 %v8269
      %8279 = vmatpush.bf16.msra.mxu0 %v8268
      %8280 = vmatpush.bf16.msra.mxu0 %v8267
      %8281 = vmatpush.bf16.msra.mxu0 %v8266
      %8282 = vmatpush.bf16.msra.mxu0 %v8265
      %8283 = vmatpush.bf16.msra.mxu0 %v8264
      %8284 = vmatpush.bf16.msra.mxu0 %v8263
      %8285 = vmatpush.bf16.msra.mxu0 %v8262
      %8286 = vmatmul.bf16.gmra.mxu0 %v8212
      %v8287 = vpop.f32.mrf.mxu0
      %v8288 = vadd.f32 0.0, %v8287
      %v8289 = vpop.f32.mrf.mxu0
      %v8290 = vadd.f32 0.0, %v8289
      %8291 = vdwg.mxu0
      %v8292 = vadd.f32 %v8207, %v8288
      %v8293 = vadd.f32 %v8208, %v8290
      %v8294 = vrot.slane %v6004, 2
      %v8296 = vrot.slane 0.0, 6
      %v8298 = vsel %vm2525, %v8294, %v8296
      %v8299 = vpack.c.bf16 %v8298, %v6511
      %s8300 = scalar_lea.vmem %s3, 1536
      %v8301 = vld [vmem:[%s8300] sm:$0xf]
      %v8302 = vld [vmem:[%s8300 + $0x4] sm:$0xf]
      %v8303 = vld [vmem:[%s8300 + $0x8] sm:$0xf]
      %v8304 = vld [vmem:[%s8300 + $0xc] sm:$0xf]
      %v8305 = vld [vmem:[%s8300 + $0x10] sm:$0xf]
      %v8306 = vld [vmem:[%s8300 + $0x14] sm:$0xf]
      %v8307 = vld [vmem:[%s8300 + $0x18] sm:$0xf]
      %v8308 = vld [vmem:[%s8300 + $0x1c] sm:$0xf]
      %v8309 = vld [vmem:[%s8300 + $0x20] sm:$0xf]
      %v8310 = vld [vmem:[%s8300 + $0x24] sm:$0xf]
      %v8311 = vld [vmem:[%s8300 + $0x28] sm:$0xf]
      %v8312 = vld [vmem:[%s8300 + $0x2c] sm:$0xf]
      %v8313 = vld [vmem:[%s8300 + $0x30] sm:$0xf]
      %v8314 = vld [vmem:[%s8300 + $0x34] sm:$0xf]
      %v8315 = vld [vmem:[%s8300 + $0x38] sm:$0xf]
      %v8316 = vld [vmem:[%s8300 + $0x3c] sm:$0xf]
      %v8333 = vunpack.c.l.b16 %v8301
      %v8334 = vunpack.c.l.b16 %v8302
      %v8335 = vunpack.c.l.b16 %v8303
      %v8336 = vunpack.c.l.b16 %v8304
      %v8337 = vunpack.c.l.b16 %v8305
      %v8338 = vunpack.c.l.b16 %v8306
      %v8339 = vunpack.c.l.b16 %v8307
      %v8340 = vunpack.c.l.b16 %v8308
      %v8341 = vunpack.c.l.b16 %v8309
      %v8342 = vunpack.c.l.b16 %v8310
      %v8343 = vunpack.c.l.b16 %v8311
      %v8344 = vunpack.c.l.b16 %v8312
      %v8345 = vunpack.c.l.b16 %v8313
      %v8346 = vunpack.c.l.b16 %v8314
      %v8347 = vunpack.c.l.b16 %v8315
      %v8348 = vunpack.c.l.b16 %v8316
      %v8349 = vpack.c.b16 %v8334, %v8333
      %v8350 = vpack.c.b16 %v8336, %v8335
      %v8351 = vpack.c.b16 %v8338, %v8337
      %v8352 = vpack.c.b16 %v8340, %v8339
      %v8353 = vpack.c.b16 %v8342, %v8341
      %v8354 = vpack.c.b16 %v8344, %v8343
      %v8355 = vpack.c.b16 %v8346, %v8345
      %v8356 = vpack.c.b16 %v8348, %v8347
      %8365 = vmatpush.bf16.msra.mxu0 %v8356
      %8366 = vmatpush.bf16.msra.mxu0 %v8355
      %8367 = vmatpush.bf16.msra.mxu0 %v8354
      %8368 = vmatpush.bf16.msra.mxu0 %v8353
      %8369 = vmatpush.bf16.msra.mxu0 %v8352
      %8370 = vmatpush.bf16.msra.mxu0 %v8351
      %8371 = vmatpush.bf16.msra.mxu0 %v8350
      %8372 = vmatpush.bf16.msra.mxu0 %v8349
      %8373 = vmatmul.bf16.gmra.mxu0 %v8299
      %v8374 = vpop.f32.mrf.mxu0
      %v8375 = vadd.f32 0.0, %v8374
      %v8376 = vpop.f32.mrf.mxu0
      %v8377 = vadd.f32 0.0, %v8376
      %8378 = vdwg.mxu0
      %v8379 = vadd.f32 %v8292, %v8375
      %v8380 = vadd.f32 %v8293, %v8377
      %v8381 = vperm.slane %v225, 2
      %v8382 = vadd.f32 %v8379, %v8381
      %v8383 = vadd.f32 %v8380, %v8381
      %8384 = vst [vmem:[%s224] sm:$0xff] %v8382
      %8385 = vst [vmem:[%s224 + $0x8] sm:$0xff] %v8383
      %p8386 = scmp.lt.s32.totalorder %s16, 1
      %s8387 = scalar_select %p8386, %s16, 1
      %s8388 = smul.addr %s8387, 2
      %s8389 = smul.addr %s8388, 8
      %s8390 = scalar_lea.vmem %s5, %s8389
      // Predicated region
      $region41: #{prior_encoder_forward.1} parent=39 // pred_check
        %p8391 = pneg %p144
      $region42: #{prior_encoder_forward.1} parent=39 // pred_check_branch
        %8393 = sbr.rel (%p8391) target = $region44
      $region43: #{prior_encoder_forward.1} parent=39 // pred_region
        _
      $region44: #{prior_encoder_forward.1} parent=39 // pred_fallthru
        _
    $region40: #{prior_encoder_forward.1} parent=5 // pred_fallthru
      _
    %p8394 = scmp.le.s32.totalorder 2, %s11
    // Predicated region
    $region45: #{prior_encoder_forward.1} parent=5 // pred_check
      %p8395 = pneg %p8394
    $region46: #{prior_encoder_forward.1} parent=5 // pred_check_branch
      %8397 = sbr.rel (%p8395) target = $region48
    $region47: #{prior_encoder_forward.1} parent=5 // pred_region
      %s8398 = ssub.s32 %s11, 2
      // Predicated region
      $region49: #{prior_encoder_forward.1} parent=47 // pred_check
        %p8399 = pneg %p150
      $region50: #{prior_encoder_forward.1} parent=47 // pred_check_branch
        %8401 = sbr.rel (%p8399) target = $region52
      $region51: #{prior_encoder_forward.1} parent=47 // pred_region
        %p8402 = scmp.lt.s32.totalorder %s17, 1
        %s8403 = scalar_select %p8402, %s17, 1
        %s8404 = smul.addr %s8403, 2
        %s8405 = smul.addr %s8404, 8
        %s8406 = scalar_lea.vmem %s5, %s8405
      $region52: #{prior_encoder_forward.1} parent=47 // pred_fallthru
        _
    $region48: #{prior_encoder_forward.1} parent=5 // pred_fallthru
      _
  $region6: #{prior_encoder_forward.1} parent=0 // loop_footer
    %s15 = sadd.s32 1, %s11
  $region7: #{prior_encoder_forward.1} parent=0 // loop_footer_branch
    %10 = sbr.rel target = $region3
  $region8: #{prior_encoder_forward.1} parent=0 // loop_exit
    _

</llo_original>
